<compile_context>
chip_gen: v7x
topology: tpu7x:2x2x1
jax: 0.10.0
libtpu: 0.0.40
codegen_flags: <defaults>
</compile_context>

<pallas_src>
import jax
import jax.numpy as jnp
from jax.experimental import pallas as pl
from jax.experimental.pallas import tpu as pltpu

LANE = 128       # TPU lane width
HIDDEN = 64      # module's hidden_dim
H_PAD = 128      # hidden padded to lane width
OUT_PAD = 128    # classifier output (2) padded to lane width
NUM_CLASSES = 2


def _round_up(x, m):
    return (x + m - 1) // m * m


def _choose_tiling(n):
    """Pick (n_pad, tm, tk) so big tiles always apply (perf review items 1-2)."""
    n128 = _round_up(max(n, 8), LANE)
    if n128 <= 512:
        return n128, n128, n128          # single tile; whole problem fits VMEM
    n_pad = _round_up(n128, 512)         # pad up to the tile size, not just 128
    tm = 512
    tk = 512
    for cand in (2048, 1024):
        if n_pad % cand == 0:
            tk = cand
            break
    return n_pad, tm, tk


# ----------------------------- Pallas kernels ------------------------------


def _sage_accumulate(a_ref, h_ref, acc_ref):
    """Shared k-step: acc[:, :d] += (int8 mask tile -> bf16) @ H rows.

    a_ref  : (TM, TK)     int8  unnormalized adjacency counts (streamed)
    h_ref  : (N_pad, D)   bf16  features, resident for the whole grid
    acc_ref: (TM, 2D)     f32   [:, :D] running mask@H, [:, D:] root rows
    """
    i = pl.program_id(0)
    k = pl.program_id(1)
    tm, two_d = acc_ref.shape
    d = two_d // 2
    tk = a_ref.shape[1]

    @pl.when(k == 0)
    def _init():
        acc_ref[:, :d] = jnp.zeros((tm, d), jnp.float32)
        row0 = pl.multiple_of(i * tm, tm)
        acc_ref[:, d:] = h_ref[pl.ds(row0, tm), :].astype(jnp.float32)

    koff = pl.multiple_of(k * tk, tk)
    a_bf16 = a_ref[...].astype(jnp.float32).astype(jnp.bfloat16)  # counts exact
    acc_ref[:, :d] += jnp.dot(a_bf16, h_ref[pl.ds(koff, tk), :],
                              preferred_element_type=jnp.float32)
    return d


def _sage_epilogue(acc_ref, inv_ref, wcat_ref, b_ref):
    """Apply exact f32 mean scale, then bf16 x bf16 MXU matmul with [[Wl],[Wr]]."""
    d = acc_ref.shape[1] // 2
    acc_ref[:, :d] = acc_ref[:, :d] * inv_ref[...]      # per-row 1/deg in f32
    slab = acc_ref[...].astype(jnp.bfloat16)             # [mean_agg | root]
    return jnp.dot(slab, wcat_ref[...],
                   preferred_element_type=jnp.float32) + b_ref[...]


def _sage_kernel(a_ref, h_ref, inv_ref, wcat_ref, b_ref, o_ref, acc_ref):
    """One SAGEConv layer with mean aggregation + ReLU."""
    _sage_accumulate(a_ref, h_ref, acc_ref)

    @pl.when(pl.program_id(1) == pl.num_programs(1) - 1)
    def _finalize():
        h = _sage_epilogue(acc_ref, inv_ref, wcat_ref, b_ref)
        o_ref[...] = jnp.maximum(h, 0.0).astype(o_ref.dtype)


def _sage_head_kernel(a_ref, h_ref, inv_ref, wcat_ref, b_ref,
                      wlin_ref, blin_ref, o_ref, acc_ref):
    """Second SAGEConv fused with the Linear(hidden, 2) head (lane-padded)."""
    _sage_accumulate(a_ref, h_ref, acc_ref)

    @pl.when(pl.program_id(1) == pl.num_programs(1) - 1)
    def _finalize():
        h = jnp.maximum(_sage_epilogue(acc_ref, inv_ref, wcat_ref, b_ref), 0.0)
        logits = jnp.dot(h.astype(jnp.bfloat16), wlin_ref[...],
                         preferred_element_type=jnp.float32) + blin_ref[...]
        o_ref[...] = logits.astype(o_ref.dtype)


# ------------------------------- Wrappers ----------------------------------


def _sage_call(kernel_fn, a_mask, h_in, inv_deg, weights, out_dtype, out_width,
               tm, tk):
    """Launch a fused SAGE layer: grid = (node-row tiles, k tiles)."""
    n_pad = a_mask.shape[0]
    d = h_in.shape[1]
    grid = (n_pad // tm, n_pad // tk)

    in_specs = [
        pl.BlockSpec((tm, tk), lambda i, k: (i, k)),     # int8 A tile (streamed)
        pl.BlockSpec((n_pad, d), lambda i, k: (0, 0)),   # H resident (DMA'd once)
        pl.BlockSpec((tm, 1), lambda i, k: (i, 0)),      # 1/deg rows (f32)
    ]
    for w in weights:  # small weights/biases stay resident
        in_specs.append(pl.BlockSpec(w.shape, lambda i, k: (0, 0)))

    out_isz = jnp.dtype(out_dtype).itemsize
    flops = 2 * n_pad * n_pad * d
    for w in weights:
        flops += 2 * n_pad * w.shape[0] * w.shape[1]
    bytes_accessed = (a_mask.size * a_mask.dtype.itemsize
                      + h_in.size * h_in.dtype.itemsize
                      + inv_deg.size * 4
                      + sum(w.size * w.dtype.itemsize for w in weights)
                      + n_pad * out_width * out_isz)

    # Explicit VMEM budget for the enlarged tiles (double-buffered I/O + scratch).
    vmem_needed = (2 * tm * tk * a_mask.dtype.itemsize        # A tiles
                   + 2 * n_pad * d * h_in.dtype.itemsize      # resident H
                   + 2 * tm * 4                               # inv_deg
                   + 2 * sum(w.size * w.dtype.itemsize for w in weights)
                   + 2 * tm * out_width * out_isz             # output tiles
                   + tm * 2 * d * 4)                          # acc scratch
    vmem_limit = max(2 * int(vmem_needed) + (2 << 20), 16 << 20)

    return pl.pallas_call(
        kernel_fn,
        out_shape=jax.ShapeDtypeStruct((n_pad, out_width), out_dtype),
        grid_spec=pltpu.PrefetchScalarGridSpec(
            num_scalar_prefetch=0,
            grid=grid,
            in_specs=in_specs,
            out_specs=pl.BlockSpec((tm, out_width), lambda i, k: (i, 0)),
            scratch_shapes=[pltpu.VMEM((tm, 2 * d), jnp.float32)],
        ),
        compiler_params=pltpu.CompilerParams(
            dimension_semantics=("parallel", "arbitrary"),
            vmem_limit_bytes=int(vmem_limit)),
        cost_estimate=pl.CostEstimate(
            flops=int(flops), transcendentals=0,
            bytes_accessed=int(bytes_accessed)),
    )(a_mask, h_in, inv_deg, *weights)


def build_adjacency_int8(edge_index, n_pad):
    """int8 edge-count matrix (padded) + f32 per-row 1/deg (plain JAX glue).

    edge_index: (2, E) int32, row 0 = source j, row 1 = target i.
    counts[i, j] = #edges j->i  (matches PyG scatter-mean incl. duplicates);
    padded rows/cols stay exactly zero.
    """
    src = edge_index[0]
    dst = edge_index[1]
    counts = jnp.zeros((n_pad, n_pad), jnp.int32).at[dst, src].add(1)
    deg = jnp.sum(counts, axis=1)
    inv_deg = (1.0 / jnp.maximum(deg, 1).astype(jnp.float32)).reshape(n_pad, 1)
    # TODO(synk): scatter directly into int8 / CSR for very large graphs; >127
    # parallel edges between one node pair would overflow the int8 cast below.
    return counts.astype(jnp.int8), inv_deg


def pack_params(raw):
    """Pad/concat the PyG-style weights into lane-dense bf16 kernel operands."""
    def pad2(w, r, c, dt):
        return jnp.zeros((r, c), dt).at[:w.shape[0], :w.shape[1]].set(w.astype(dt))

    def pad_bias(b, c):
        return jnp.zeros((1, c), jnp.float32).at[0, :b.shape[0]].set(b)

    in_pad = _round_up(max(raw["wl1"].shape[0], 1), LANE)
    wcat1 = jnp.concatenate(
        [pad2(raw["wl1"], in_pad, H_PAD, jnp.bfloat16),
         pad2(raw["wr1"], in_pad, H_PAD, jnp.bfloat16)], axis=0)
    wcat2 = jnp.concatenate(
        [pad2(raw["wl2"], H_PAD, H_PAD, jnp.bfloat16),
         pad2(raw["wr2"], H_PAD, H_PAD, jnp.bfloat16)], axis=0)
    return {
        "wcat1": wcat1, "b1": pad_bias(raw["b1"], H_PAD),
        "wcat2": wcat2, "b2": pad_bias(raw["b2"], H_PAD),
        "w_lin": pad2(raw["w_lin"], H_PAD, OUT_PAD, jnp.bfloat16),
        "b_lin": pad_bias(raw["b_lin"], OUT_PAD),
    }


@jax.jit
def gnn_boundary_classifier_forward(packed, x, edge_index):
    """x = relu(SAGE1(x)); x = relu(SAGE2(x)); x = Linear(x)  -> (N, 2)."""
    n, d_in = x.shape
    in_pad = _round_up(max(d_in, 1), LANE)
    n_pad, tm, tk = _choose_tiling(n)

    a_mask, inv_deg = build_adjacency_int8(edge_index, n_pad)
    x_p = jnp.zeros((n_pad, in_pad), jnp.bfloat16).at[:n, :d_in].set(
        x.astype(jnp.bfloat16))

    h1 = _sage_call(_sage_kernel, a_mask, x_p, inv_deg,
                    (packed["wcat1"], packed["b1"]),
                    out_dtype=jnp.bfloat16, out_width=H_PAD, tm=tm, tk=tk)
    logits_pad = _sage_call(_sage_head_kernel, a_mask, h1, inv_deg,
                            (packed["wcat2"], packed["b2"],
                             packed["w_lin"], packed["b_lin"]),
                            out_dtype=jnp.float32, out_width=OUT_PAD,
                            tm=tm, tk=tk)
    return logits_pad[:n, :NUM_CLASSES]


# --------------------------------- Demo -------------------------------------


if __name__ == "__main__":
    key = jax.random.PRNGKey(0)
    k_x, k_e, *kw = jax.random.split(key, 10)

    num_nodes = 1500         # pads to 1536 -> grid (3, 3): exercises row & k tiling
    in_dim = 16
    hidden = HIDDEN          # 64, module default
    num_edges = 6000

    x = jax.random.normal(k_x, (num_nodes, in_dim), jnp.float32)
    edge_index = jax.random.randint(
        k_e, (2, num_edges), 0, num_nodes, dtype=jnp.int32)

    s = 0.1
    raw = {
        # SAGEConv1: lin_l (neighbor branch, has bias), lin_r (root, no bias)
        "wl1": s * jax.random.normal(kw[0], (in_dim, hidden), jnp.float32),
        "wr1": s * jax.random.normal(kw[1], (in_dim, hidden), jnp.float32),
        "b1": s * jax.random.normal(kw[2], (hidden,), jnp.float32),
        # SAGEConv2
        "wl2": s * jax.random.normal(kw[3], (hidden, hidden), jnp.float32),
        "wr2": s * jax.random.normal(kw[4], (hidden, hidden), jnp.float32),
        "b2": s * jax.random.normal(kw[5], (hidden,), jnp.float32),
        # Linear(hidden, 2)
        "w_lin": s * jax.random.normal(kw[6], (hidden, NUM_CLASSES), jnp.float32),
        "b_lin": s * jax.random.normal(kw[7], (NUM_CLASSES,), jnp.float32),
    }
    packed = pack_params(raw)

    out = gnn_boundary_classifier_forward(packed, x, edge_index)
    out = jax.block_until_ready(out)
    assert out.shape == (num_nodes, NUM_CLASSES)

    # Pure-JAX reference mirroring the kernel's quantization steps:
    # exact integer counts + f32 1/deg, bf16 activations/weights, f32 accumulation.
    def bq(v):
        return v.astype(jnp.bfloat16).astype(jnp.float32)

    hp = jax.lax.Precision.HIGHEST
    counts = jnp.zeros((num_nodes, num_nodes), jnp.float32).at[
        edge_index[1], edge_index[0]].add(1.0)
    inv = 1.0 / jnp.maximum(jnp.sum(counts, axis=1, keepdims=True), 1.0)
    x_q = bq(x)
    agg1 = jnp.dot(counts, x_q, precision=hp) * inv
    h1 = jnp.maximum(
        jnp.dot(bq(agg1), bq(raw["wl1"]), precision=hp)
        + jnp.dot(x_q, bq(raw["wr1"]), precision=hp) + raw["b1"], 0.0)
    h1_q = bq(h1)
    agg2 = jnp.dot(counts, h1_q, precision=hp) * inv
    h2 = jnp.maximum(
        jnp.dot(bq(agg2), bq(raw["wl2"]), precision=hp)
        + jnp.dot(h1_q, bq(raw["wr2"]), precision=hp) + raw["b2"], 0.0)
    ref = jnp.dot(bq(h2), bq(raw["w_lin"]), precision=hp) + raw["b_lin"]

    err = float(jnp.max(jnp.abs(out - ref)))
    assert jnp.allclose(out, ref, atol=1e-2, rtol=1e-2), err
    print("KERNEL_OK")
</pallas_src>

<mosaic_0001>
module attributes {stable_mosaic.version = 11 : i64} {
  func.func private @main(%arg0: i32) attributes {dimension_semantics = [#tpu.dimension_semantics<core_parallel>], iteration_bounds = array<i64: 2>, tpu.core_type = #tpu.core_type<sc_scalar_subcore>, window_params = []} {
    return
  }
}

module attributes {stable_mosaic.version = 11 : i64} {
  func.func private @main(%arg0: i32) attributes {dimension_semantics = [#tpu.dimension_semantics<core_parallel>], iteration_bounds = array<i64: 2>, tpu.core_type = #tpu.core_type<sc_scalar_subcore>, window_params = []} {
    return
  }
}

module attributes {stable_mosaic.version = 11 : i64} {
  func.func @_sage_kernel(%arg0: i32, %arg1: i32, %arg2: memref<512x512xi8, #tpu.memory_space<vmem>>, %arg3: memref<1536x128xbf16, #tpu.memory_space<vmem>>, %arg4: memref<512x1xf32, #tpu.memory_space<vmem>>, %arg5: memref<256x128xbf16, #tpu.memory_space<vmem>>, %arg6: memref<1x128xf32, #tpu.memory_space<vmem>>, %arg7: memref<512x128xbf16, #tpu.memory_space<vmem>>, %arg8: memref<512x256xf32, #tpu.memory_space<vmem>>) attributes {dimension_semantics = [#tpu.dimension_semantics<parallel>, #tpu.dimension_semantics<arbitrary>], iteration_bounds = array<i64: 3, 3>, scalar_prefetch = 0 : i64, scratch_operands = 1 : i64, tpu.core_type = #tpu.core_type<tc>, window_params = [{transform_indices = @transform_0, window_bounds = array<i64: 512, 512>}, {pipeline_mode = #tpu.pipeline_mode<synchronous>, transform_indices = @transform_1, window_bounds = array<i64: 1536, 128>}, {transform_indices = @transform_2, window_bounds = array<i64: 512, 1>}, {pipeline_mode = #tpu.pipeline_mode<synchronous>, transform_indices = @transform_3, window_bounds = array<i64: 256, 128>}, {pipeline_mode = #tpu.pipeline_mode<synchronous>, transform_indices = @transform_4, window_bounds = array<i64: 1, 128>}, {transform_indices = @transform_5, window_bounds = array<i64: 512, 128>}]} {
    %c0_i32 = arith.constant 0 : i32
    %0 = arith.cmpi eq, %arg1, %c0_i32 : i32
    %1 = arith.extui %0 : i1 to i32
    %c0_i32_0 = arith.constant 0 : i32
    %2 = arith.cmpi ne, %1, %c0_i32_0 : i32
    scf.if %2 {
      %cst_8 = arith.constant 0.000000e+00 : f32
      %17 = vector.broadcast %cst_8 : f32 to vector<512x128xf32>
      %c0_9 = arith.constant 0 : index
      %c0_10 = arith.constant 0 : index
      %18 = vector.load %arg8[%c0_9, %c0_10] : memref<512x256xf32, #tpu.memory_space<vmem>>, vector<512x128xf32>
      tpu.vector_store %arg8[%c0_9, %c0_10], %17 {strides = array<i32>} : memref<512x256xf32, #tpu.memory_space<vmem>>, vector<512x128xf32>,
      %c512_i32_11 = arith.constant 512 : i32
      %19 = arith.muli %arg0, %c512_i32_11 : i32
      %20 = tpu.assume_multiple %19, 512 : i32
      %21 = arith.index_cast %20 : i32 to index
      %c0_12 = arith.constant 0 : index
      %22 = vector.load %arg3[%21, %c0_12] : memref<1536x128xbf16, #tpu.memory_space<vmem>>, vector<512x128xbf16>
      %23 = arith.extf %22 : vector<512x128xbf16> to vector<512x128xf32>
      %c0_13 = arith.constant 0 : index
      %c128 = arith.constant 128 : index
      %24 = vector.load %arg8[%c0_13, %c128] : memref<512x256xf32, #tpu.memory_space<vmem>>, vector<512x128xf32>
      tpu.vector_store %arg8[%c0_13, %c128], %23 {strides = array<i32>} : memref<512x256xf32, #tpu.memory_space<vmem>>, vector<512x128xf32>,
    } else {
    }
    %c512_i32 = arith.constant 512 : i32
    %3 = arith.muli %arg1, %c512_i32 : i32
    %4 = tpu.assume_multiple %3, 512 : i32
    %c0 = arith.constant 0 : index
    %c0_1 = arith.constant 0 : index
    %5 = vector.load %arg2[%c0, %c0_1] : memref<512x512xi8, #tpu.memory_space<vmem>>, vector<512x512xi8>
    %6 = arith.sitofp %5 : vector<512x512xi8> to vector<512x512xf32>
    %7 = arith.truncf %6 : vector<512x512xf32> to vector<512x512xbf16>
    %c0_2 = arith.constant 0 : index
    %c0_3 = arith.constant 0 : index
    %8 = vector.load %arg8[%c0_2, %c0_3] : memref<512x256xf32, #tpu.memory_space<vmem>>, vector<512x128xf32>
    %9 = arith.index_cast %4 : i32 to index
    %c0_4 = arith.constant 0 : index
    %10 = vector.load %arg3[%9, %c0_4] : memref<1536x128xbf16, #tpu.memory_space<vmem>>, vector<512x128xbf16>
    %cst = arith.constant dense<0.000000e+00> : vector<512x128xf32>
    %11 = tpu.matmul %7, %10, %cst {dimension_numbers = #tpu.dot_dimension_numbers<[1], [0], [0], [1], [0, 0, 1, 1], [], []>} : vector<512x512xbf16>, vector<512x128xbf16>, vector<512x128xf32> -> vector<512x128xf32>
    %12 = arith.addf %8, %11 : vector<512x128xf32>
    %c0_5 = arith.constant 0 : index
    %c0_6 = arith.constant 0 : index
    %13 = vector.load %arg8[%c0_5, %c0_6] : memref<512x256xf32, #tpu.memory_space<vmem>>, vector<512x128xf32>
    tpu.vector_store %arg8[%c0_5, %c0_6], %12 {strides = array<i32>} : memref<512x256xf32, #tpu.memory_space<vmem>>, vector<512x128xf32>,
    %c2_i32 = arith.constant 2 : i32
    %14 = arith.cmpi eq, %arg1, %c2_i32 : i32
    %15 = arith.extui %14 : i1 to i32
    %c0_i32_7 = arith.constant 0 : i32
    %16 = arith.cmpi ne, %15, %c0_i32_7 : i32
    scf.if %16 {
      %c0_8 = arith.constant 0 : index
      %c0_9 = arith.constant 0 : index
      %17 = vector.load %arg8[%c0_8, %c0_9] : memref<512x256xf32, #tpu.memory_space<vmem>>, vector<512x128xf32>
      %c0_10 = arith.constant 0 : index
      %c0_11 = arith.constant 0 : index
      %18 = vector.load %arg4[%c0_10, %c0_11] : memref<512x1xf32, #tpu.memory_space<vmem>>, vector<512x1xf32>
      %19 = vector.broadcast %18 : vector<512x1xf32> to vector<512x128xf32>
      %20 = arith.mulf %17, %19 : vector<512x128xf32>
      %c0_12 = arith.constant 0 : index
      %c0_13 = arith.constant 0 : index
      %21 = vector.load %arg8[%c0_12, %c0_13] : memref<512x256xf32, #tpu.memory_space<vmem>>, vector<512x128xf32>
      tpu.vector_store %arg8[%c0_12, %c0_13], %20 {strides = array<i32>} : memref<512x256xf32, #tpu.memory_space<vmem>>, vector<512x128xf32>,
      %c0_14 = arith.constant 0 : index
      %c0_15 = arith.constant 0 : index
      %22 = vector.load %arg8[%c0_14, %c0_15] : memref<512x256xf32, #tpu.memory_space<vmem>>, vector<512x256xf32>
      %23 = arith.truncf %22 : vector<512x256xf32> to vector<512x256xbf16>
      %c0_16 = arith.constant 0 : index
      %c0_17 = arith.constant 0 : index
      %24 = vector.load %arg5[%c0_16, %c0_17] : memref<256x128xbf16, #tpu.memory_space<vmem>>, vector<256x128xbf16>
      %cst_18 = arith.constant dense<0.000000e+00> : vector<512x128xf32>
      %25 = tpu.matmul %23, %24, %cst_18 {dimension_numbers = #tpu.dot_dimension_numbers<[1], [0], [0], [1], [0, 0, 1, 1], [], []>} : vector<512x256xbf16>, vector<256x128xbf16>, vector<512x128xf32> -> vector<512x128xf32>
      %c0_19 = arith.constant 0 : index
      %c0_20 = arith.constant 0 : index
      %26 = vector.load %arg6[%c0_19, %c0_20] : memref<1x128xf32, #tpu.memory_space<vmem>>, vector<1x128xf32>
      %27 = vector.broadcast %26 : vector<1x128xf32> to vector<512x128xf32>
      %28 = arith.addf %25, %27 : vector<512x128xf32>
      %cst_21 = arith.constant 0.000000e+00 : f32
      %29 = vector.broadcast %cst_21 : f32 to vector<512x128xf32>
      %30 = arith.maximumf %28, %29 : vector<512x128xf32>
      %31 = arith.truncf %30 : vector<512x128xf32> to vector<512x128xbf16>
      %c0_22 = arith.constant 0 : index
      %c0_23 = arith.constant 0 : index
      %32 = vector.load %arg7[%c0_22, %c0_23] : memref<512x128xbf16, #tpu.memory_space<vmem>>, vector<512x128xbf16>
      tpu.vector_store %arg7[%c0_22, %c0_23], %31 {strides = array<i32>} : memref<512x128xbf16, #tpu.memory_space<vmem>>, vector<512x128xbf16>,
    } else {
    }
    return
  }
  func.func @transform_0(%arg0: i32, %arg1: i32) -> (i32, i32) {
    %c0_i32 = arith.constant 0 : i32
    return %arg0, %arg1 : i32, i32
  }
  func.func @transform_1(%arg0: i32, %arg1: i32) -> (i32, i32) {
    %c0_i32 = arith.constant 0 : i32
    %c0_i32_0 = arith.constant 0 : i32
    %c0_i32_1 = arith.constant 0 : i32
    return %c0_i32, %c0_i32_0 : i32, i32
  }
  func.func @transform_2(%arg0: i32, %arg1: i32) -> (i32, i32) {
    %c0_i32 = arith.constant 0 : i32
    %c0_i32_0 = arith.constant 0 : i32
    return %arg0, %c0_i32 : i32, i32
  }
  func.func @transform_3(%arg0: i32, %arg1: i32) -> (i32, i32) {
    %c0_i32 = arith.constant 0 : i32
    %c0_i32_0 = arith.constant 0 : i32
    %c0_i32_1 = arith.constant 0 : i32
    return %c0_i32, %c0_i32_0 : i32, i32
  }
  func.func @transform_4(%arg0: i32, %arg1: i32) -> (i32, i32) {
    %c0_i32 = arith.constant 0 : i32
    %c0_i32_0 = arith.constant 0 : i32
    %c0_i32_1 = arith.constant 0 : i32
    return %c0_i32, %c0_i32_0 : i32, i32
  }
  func.func @transform_5(%arg0: i32, %arg1: i32) -> (i32, i32) {
    %c0_i32 = arith.constant 0 : i32
    %c0_i32_0 = arith.constant 0 : i32
    return %arg0, %c0_i32 : i32, i32
  }
}

module attributes {stable_mosaic.version = 11 : i64} {
  func.func @_sage_head_kernel(%arg0: i32, %arg1: i32, %arg2: memref<512x512xi8, #tpu.memory_space<vmem>>, %arg3: memref<1536x128xbf16, #tpu.memory_space<vmem>>, %arg4: memref<512x1xf32, #tpu.memory_space<vmem>>, %arg5: memref<256x128xbf16, #tpu.memory_space<vmem>>, %arg6: memref<1x128xf32, #tpu.memory_space<vmem>>, %arg7: memref<128x128xbf16, #tpu.memory_space<vmem>>, %arg8: memref<1x128xf32, #tpu.memory_space<vmem>>, %arg9: memref<512x128xf32, #tpu.memory_space<vmem>>, %arg10: memref<512x256xf32, #tpu.memory_space<vmem>>) attributes {dimension_semantics = [#tpu.dimension_semantics<parallel>, #tpu.dimension_semantics<arbitrary>], iteration_bounds = array<i64: 3, 3>, scalar_prefetch = 0 : i64, scratch_operands = 1 : i64, tpu.core_type = #tpu.core_type<tc>, window_params = [{transform_indices = @transform_0, window_bounds = array<i64: 512, 512>}, {pipeline_mode = #tpu.pipeline_mode<synchronous>, transform_indices = @transform_1, window_bounds = array<i64: 1536, 128>}, {transform_indices = @transform_2, window_bounds = array<i64: 512, 1>}, {pipeline_mode = #tpu.pipeline_mode<synchronous>, transform_indices = @transform_3, window_bounds = array<i64: 256, 128>}, {pipeline_mode = #tpu.pipeline_mode<synchronous>, transform_indices = @transform_4, window_bounds = array<i64: 1, 128>}, {pipeline_mode = #tpu.pipeline_mode<synchronous>, transform_indices = @transform_5, window_bounds = array<i64: 128, 128>}, {pipeline_mode = #tpu.pipeline_mode<synchronous>, transform_indices = @transform_6, window_bounds = array<i64: 1, 128>}, {transform_indices = @transform_7, window_bounds = array<i64: 512, 128>}]} {
    %c0_i32 = arith.constant 0 : i32
    %0 = arith.cmpi eq, %arg1, %c0_i32 : i32
    %1 = arith.extui %0 : i1 to i32
    %c0_i32_0 = arith.constant 0 : i32
    %2 = arith.cmpi ne, %1, %c0_i32_0 : i32
    scf.if %2 {
      %cst_8 = arith.constant 0.000000e+00 : f32
      %17 = vector.broadcast %cst_8 : f32 to vector<512x128xf32>
      %c0_9 = arith.constant 0 : index
      %c0_10 = arith.constant 0 : index
      %18 = vector.load %arg10[%c0_9, %c0_10] : memref<512x256xf32, #tpu.memory_space<vmem>>, vector<512x128xf32>
      tpu.vector_store %arg10[%c0_9, %c0_10], %17 {strides = array<i32>} : memref<512x256xf32, #tpu.memory_space<vmem>>, vector<512x128xf32>,
      %c512_i32_11 = arith.constant 512 : i32
      %19 = arith.muli %arg0, %c512_i32_11 : i32
      %20 = tpu.assume_multiple %19, 512 : i32
      %21 = arith.index_cast %20 : i32 to index
      %c0_12 = arith.constant 0 : index
      %22 = vector.load %arg3[%21, %c0_12] : memref<1536x128xbf16, #tpu.memory_space<vmem>>, vector<512x128xbf16>
      %23 = arith.extf %22 : vector<512x128xbf16> to vector<512x128xf32>
      %c0_13 = arith.constant 0 : index
      %c128 = arith.constant 128 : index
      %24 = vector.load %arg10[%c0_13, %c128] : memref<512x256xf32, #tpu.memory_space<vmem>>, vector<512x128xf32>
      tpu.vector_store %arg10[%c0_13, %c128], %23 {strides = array<i32>} : memref<512x256xf32, #tpu.memory_space<vmem>>, vector<512x128xf32>,
    } else {
    }
    %c512_i32 = arith.constant 512 : i32
    %3 = arith.muli %arg1, %c512_i32 : i32
    %4 = tpu.assume_multiple %3, 512 : i32
    %c0 = arith.constant 0 : index
    %c0_1 = arith.constant 0 : index
    %5 = vector.load %arg2[%c0, %c0_1] : memref<512x512xi8, #tpu.memory_space<vmem>>, vector<512x512xi8>
    %6 = arith.sitofp %5 : vector<512x512xi8> to vector<512x512xf32>
    %7 = arith.truncf %6 : vector<512x512xf32> to vector<512x512xbf16>
    %c0_2 = arith.constant 0 : index
    %c0_3 = arith.constant 0 : index
    %8 = vector.load %arg10[%c0_2, %c0_3] : memref<512x256xf32, #tpu.memory_space<vmem>>, vector<512x128xf32>
    %9 = arith.index_cast %4 : i32 to index
    %c0_4 = arith.constant 0 : index
    %10 = vector.load %arg3[%9, %c0_4] : memref<1536x128xbf16, #tpu.memory_space<vmem>>, vector<512x128xbf16>
    %cst = arith.constant dense<0.000000e+00> : vector<512x128xf32>
    %11 = tpu.matmul %7, %10, %cst {dimension_numbers = #tpu.dot_dimension_numbers<[1], [0], [0], [1], [0, 0, 1, 1], [], []>} : vector<512x512xbf16>, vector<512x128xbf16>, vector<512x128xf32> -> vector<512x128xf32>
    %12 = arith.addf %8, %11 : vector<512x128xf32>
    %c0_5 = arith.constant 0 : index
    %c0_6 = arith.constant 0 : index
    %13 = vector.load %arg10[%c0_5, %c0_6] : memref<512x256xf32, #tpu.memory_space<vmem>>, vector<512x128xf32>
    tpu.vector_store %arg10[%c0_5, %c0_6], %12 {strides = array<i32>} : memref<512x256xf32, #tpu.memory_space<vmem>>, vector<512x128xf32>,
    %c2_i32 = arith.constant 2 : i32
    %14 = arith.cmpi eq, %arg1, %c2_i32 : i32
    %15 = arith.extui %14 : i1 to i32
    %c0_i32_7 = arith.constant 0 : i32
    %16 = arith.cmpi ne, %15, %c0_i32_7 : i32
    scf.if %16 {
      %c0_8 = arith.constant 0 : index
      %c0_9 = arith.constant 0 : index
      %17 = vector.load %arg10[%c0_8, %c0_9] : memref<512x256xf32, #tpu.memory_space<vmem>>, vector<512x128xf32>
      %c0_10 = arith.constant 0 : index
      %c0_11 = arith.constant 0 : index
      %18 = vector.load %arg4[%c0_10, %c0_11] : memref<512x1xf32, #tpu.memory_space<vmem>>, vector<512x1xf32>
      %19 = vector.broadcast %18 : vector<512x1xf32> to vector<512x128xf32>
      %20 = arith.mulf %17, %19 : vector<512x128xf32>
      %c0_12 = arith.constant 0 : index
      %c0_13 = arith.constant 0 : index
      %21 = vector.load %arg10[%c0_12, %c0_13] : memref<512x256xf32, #tpu.memory_space<vmem>>, vector<512x128xf32>
      tpu.vector_store %arg10[%c0_12, %c0_13], %20 {strides = array<i32>} : memref<512x256xf32, #tpu.memory_space<vmem>>, vector<512x128xf32>,
      %c0_14 = arith.constant 0 : index
      %c0_15 = arith.constant 0 : index
      %22 = vector.load %arg10[%c0_14, %c0_15] : memref<512x256xf32, #tpu.memory_space<vmem>>, vector<512x256xf32>
      %23 = arith.truncf %22 : vector<512x256xf32> to vector<512x256xbf16>
      %c0_16 = arith.constant 0 : index
      %c0_17 = arith.constant 0 : index
      %24 = vector.load %arg5[%c0_16, %c0_17] : memref<256x128xbf16, #tpu.memory_space<vmem>>, vector<256x128xbf16>
      %cst_18 = arith.constant dense<0.000000e+00> : vector<512x128xf32>
      %25 = tpu.matmul %23, %24, %cst_18 {dimension_numbers = #tpu.dot_dimension_numbers<[1], [0], [0], [1], [0, 0, 1, 1], [], []>} : vector<512x256xbf16>, vector<256x128xbf16>, vector<512x128xf32> -> vector<512x128xf32>
      %c0_19 = arith.constant 0 : index
      %c0_20 = arith.constant 0 : index
      %26 = vector.load %arg6[%c0_19, %c0_20] : memref<1x128xf32, #tpu.memory_space<vmem>>, vector<1x128xf32>
      %27 = vector.broadcast %26 : vector<1x128xf32> to vector<512x128xf32>
      %28 = arith.addf %25, %27 : vector<512x128xf32>
      %cst_21 = arith.constant 0.000000e+00 : f32
      %29 = vector.broadcast %cst_21 : f32 to vector<512x128xf32>
      %30 = arith.maximumf %28, %29 : vector<512x128xf32>
      %31 = arith.truncf %30 : vector<512x128xf32> to vector<512x128xbf16>
      %c0_22 = arith.constant 0 : index
      %c0_23 = arith.constant 0 : index
      %32 = vector.load %arg7[%c0_22, %c0_23] : memref<128x128xbf16, #tpu.memory_space<vmem>>, vector<128x128xbf16>
      %cst_24 = arith.constant dense<0.000000e+00> : vector<512x128xf32>
      %33 = tpu.matmul %31, %32, %cst_24 {dimension_numbers = #tpu.dot_dimension_numbers<[1], [0], [0], [1], [0, 0, 1, 1], [], []>} : vector<512x128xbf16>, vector<128x128xbf16>, vector<512x128xf32> -> vector<512x128xf32>
      %c0_25 = arith.constant 0 : index
      %c0_26 = arith.constant 0 : index
      %34 = vector.load %arg8[%c0_25, %c0_26] : memref<1x128xf32, #tpu.memory_space<vmem>>, vector<1x128xf32>
      %35 = vector.broadcast %34 : vector<1x128xf32> to vector<512x128xf32>
      %36 = arith.addf %33, %35 : vector<512x128xf32>
      %c0_27 = arith.constant 0 : index
      %c0_28 = arith.constant 0 : index
      %37 = vector.load %arg9[%c0_27, %c0_28] : memref<512x128xf32, #tpu.memory_space<vmem>>, vector<512x128xf32>
      tpu.vector_store %arg9[%c0_27, %c0_28], %36 {strides = array<i32>} : memref<512x128xf32, #tpu.memory_space<vmem>>, vector<512x128xf32>,
    } else {
    }
    return
  }
  func.func @transform_0(%arg0: i32, %arg1: i32) -> (i32, i32) {
    %c0_i32 = arith.constant 0 : i32
    return %arg0, %arg1 : i32, i32
  }
  func.func @transform_1(%arg0: i32, %arg1: i32) -> (i32, i32) {
    %c0_i32 = arith.constant 0 : i32
    %c0_i32_0 = arith.constant 0 : i32
    %c0_i32_1 = arith.constant 0 : i32
    return %c0_i32, %c0_i32_0 : i32, i32
  }
  func.func @transform_2(%arg0: i32, %arg1: i32) -> (i32, i32) {
    %c0_i32 = arith.constant 0 : i32
    %c0_i32_0 = arith.constant 0 : i32
    return %arg0, %c0_i32 : i32, i32
  }
  func.func @transform_3(%arg0: i32, %arg1: i32) -> (i32, i32) {
    %c0_i32 = arith.constant 0 : i32
    %c0_i32_0 = arith.constant 0 : i32
    %c0_i32_1 = arith.constant 0 : i32
    return %c0_i32, %c0_i32_0 : i32, i32
  }
  func.func @transform_4(%arg0: i32, %arg1: i32) -> (i32, i32) {
    %c0_i32 = arith.constant 0 : i32
    %c0_i32_0 = arith.constant 0 : i32
    %c0_i32_1 = arith.constant 0 : i32
    return %c0_i32, %c0_i32_0 : i32, i32
  }
  func.func @transform_5(%arg0: i32, %arg1: i32) -> (i32, i32) {
    %c0_i32 = arith.constant 0 : i32
    %c0_i32_0 = arith.constant 0 : i32
    %c0_i32_1 = arith.constant 0 : i32
    return %c0_i32, %c0_i32_0 : i32, i32
  }
  func.func @transform_6(%arg0: i32, %arg1: i32) -> (i32, i32) {
    %c0_i32 = arith.constant 0 : i32
    %c0_i32_0 = arith.constant 0 : i32
    %c0_i32_1 = arith.constant 0 : i32
    return %c0_i32, %c0_i32_0 : i32, i32
  }
  func.func @transform_7(%arg0: i32, %arg1: i32) -> (i32, i32) {
    %c0_i32 = arith.constant 0 : i32
    %c0_i32_0 = arith.constant 0 : i32
    return %arg0, %c0_i32 : i32, i32
  }
}

</mosaic_0001>

<llo_original>
// kernel: gnn_boundary_classifier_forward.3
$region0: #{gnn_boundary_classifier_forward.3}
  #allocation0 [shape = 'u32[]', space=smem, size = 0x4, offset = 0x4, fixed_abs, tag = 'smem constant byte address 0x4 - core index']
  #allocation1 [shape = 'u32[144,128]{1,0:T(1,128)}', space=vmem, size = 0x12000, scoped, tag = 'internal scratch']
  #allocation2 [shape = 'f32[512,256]{1,0:T(8,128)}', space=vmem, size = 0x80000, scoped, tag = 'scratch operand']
  %s0 = inlined_call_operand.vmem [shape: s8[1536,1536], index: 0, kind: input, shape index: {}]
  %s1 = inlined_call_operand.vmem [shape: bf16[1536,128], index: 1, kind: input, shape index: {}]
  %s2 = inlined_call_operand.vmem [shape: f32[1536,1], index: 2, kind: input, shape index: {}]
  %s3 = inlined_call_operand.vmem [shape: bf16[256,128], index: 3, kind: input, shape index: {}]
  %s4 = inlined_call_operand.vmem [shape: f32[1,128], index: 4, kind: input, shape index: {}]
  %s5 = inlined_call_operand.vmem [shape: bf16[128,128], index: 5, kind: input, shape index: {}]
  %s6 = inlined_call_operand.vmem [shape: f32[1,128], index: 6, kind: input, shape index: {}]
  %s7 = inlined_call_operand.vmem [shape: f32[1536,128], index: 7, kind: output, shape index: {}]
  %s8 = sld [smem:[#allocation0]]
  $region92: #{gnn_boundary_classifier_forward.3} parent=0
    _
  %s10 = ssub.s32 1, %s8
  %s11 = scalar_select 0, %s10, %s8
  $region1: #{gnn_boundary_classifier_forward.3} parent=0
    #allocation3 [shape = 'u8[524288]{0}', space=vmem, size = 0x80000, scoped, tag = 'input window, operand 0']
    loop: start=0, step=1, limit=11
    $region2: #{gnn_boundary_classifier_forward.3} parent=1 // loop_pre_header
      _
    $region3: #{gnn_boundary_classifier_forward.3} parent=1 // loop_header
      %s13 = sphi 0, %s17
      %p14 = scmp.ge.s32.totalorder %s13, 11
      %s20 = sphi 0, %s32
      %s21 = sphi 0, %s28
      %s22 = sphi 0, %s20
      %s23 = sphi 0, %s21
      %s24 = sphi 0, %s22
      %s25 = sphi 0, %s23
      %s37 = sphi 0, %s39
      %s40 = sphi 0, %s37
      %s41 = sphi 0, %s40
      %s57 = sphi 0, %s41
      %s61 = sphi 0, %s61
      %s63 = sphi 0, %s61
      %s64 = sphi 0, %s63
      %s78 = sphi 0, %s64
      %s84 = sphi 0, %s86
      %s87 = sphi 0, %s84
      %s88 = sphi 0, %s87
      %s104 = sphi 0, %s88
      %s108 = sphi 0, %s108
      %s110 = sphi 0, %s108
      %s111 = sphi 0, %s110
      %s125 = sphi 0, %s111
      %s129 = sphi 0, %s129
      %s131 = sphi 0, %s129
      %s132 = sphi 0, %s131
      %s146 = sphi 0, %s132
      %s150 = sphi 0, %s150
      %s152 = sphi 0, %s150
      %s153 = sphi 0, %s152
      %s167 = sphi 0, %s153
      %s171 = sphi 0, %s171
      %s173 = sphi 0, %s171
      %s174 = sphi 0, %s173
      %s188 = sphi 0, %s174
      %s194 = sphi 0, %s196
      %s197 = sphi 0, %s194
      %s198 = sphi 0, %s197
      %s214 = sphi 0, %s198
    $region4: #{gnn_boundary_classifier_forward.3} parent=1 // loop_header_branch
      %16 = sbr.rel (%p14) target = $region8
    $region5: #{gnn_boundary_classifier_forward.3} parent=1 // loop_body
      %s18 = ssub.s32 %s13, 1
      %s19 = ssub.s32 %s13, 2
      %s26 = sadd.s32 1, %s21
      %p27 = scmp.ge.s32.totalorder %s26, 3
      %s28 = scalar_select %p27, 0, %s26
      %s29 = sadd.s32 1, %s20
      %s30 = scalar_select %p27, %s29, %s20
      %p31 = scmp.ge.s32.totalorder %s30, 3
      %s32 = scalar_select %p31, 0, %s30
      %s33 = ssub.s32 %s20, %s32
      %s34 = ssub.s32 %s21, %s28
      %s35 = sor.u32 %s33, %s34
      %p36 = scmp.eq.s32.totalorder %s35, 0
      %s38 = sadd.s32 %s37, 1
      %s39 = scalar_select %p36, %s37, %s38
      %p42 = pneg %p36
      %p43 = scmp.eq.s32.totalorder %s13, 8
      %p44 = por %p42, %p43
      %p45 = scmp.ne.s32.totalorder %s37, %s40
      %p46 = scmp.eq.s32.totalorder %s13, 0
      %p47 = por %p45, %p46
      %p48 = scmp.ne.s32.totalorder %s37, %s40
      %p49 = scmp.eq.s32.totalorder %s18, 8
      %p50 = por %p48, %p49
      %p51 = scmp.ne.s32.totalorder %s40, %s41
      %p52 = scmp.eq.s32.totalorder %s18, 0
      %p53 = por %p51, %p52
      %p54 = scmp.ne.s32.totalorder %s40, %s41
      %p55 = scmp.eq.s32.totalorder %s19, 8
      %p56 = por %p54, %p55
      %p58 = scmp.ne.s32.totalorder %s41, %s57
      %p59 = scmp.eq.s32.totalorder %s19, 0
      %p60 = por %p58, %p59
      %s62 = sadd.s32 %s61, 1
      %p65 = scmp.eq.s32.totalorder %s13, 8
      %p66 = scmp.ne.s32.totalorder %s61, %s63
      %p67 = scmp.eq.s32.totalorder %s13, 0
      %p68 = por %p66, %p67
      %p69 = scmp.ne.s32.totalorder %s61, %s63
      %p70 = scmp.eq.s32.totalorder %s18, 8
      %p71 = por %p69, %p70
      %p72 = scmp.ne.s32.totalorder %s63, %s64
      %p73 = scmp.eq.s32.totalorder %s18, 0
      %p74 = por %p72, %p73
      %p75 = scmp.ne.s32.totalorder %s63, %s64
      %p76 = scmp.eq.s32.totalorder %s19, 8
      %p77 = por %p75, %p76
      %p79 = scmp.ne.s32.totalorder %s64, %s78
      %p80 = scmp.eq.s32.totalorder %s19, 0
      %p81 = por %p79, %p80
      %s82 = ssub.s32 %s20, %s32
      %p83 = scmp.eq.s32.totalorder %s82, 0
      %s85 = sadd.s32 %s84, 1
      %s86 = scalar_select %p83, %s84, %s85
      %p89 = pneg %p83
      %p90 = scmp.eq.s32.totalorder %s13, 8
      %p91 = por %p89, %p90
      %p92 = scmp.ne.s32.totalorder %s84, %s87
      %p93 = scmp.eq.s32.totalorder %s13, 0
      %p94 = por %p92, %p93
      %p95 = scmp.ne.s32.totalorder %s84, %s87
      %p96 = scmp.eq.s32.totalorder %s18, 8
      %p97 = por %p95, %p96
      %p98 = scmp.ne.s32.totalorder %s87, %s88
      %p99 = scmp.eq.s32.totalorder %s18, 0
      %p100 = por %p98, %p99
      %p101 = scmp.ne.s32.totalorder %s87, %s88
      %p102 = scmp.eq.s32.totalorder %s19, 8
      %p103 = por %p101, %p102
      %p105 = scmp.ne.s32.totalorder %s88, %s104
      %p106 = scmp.eq.s32.totalorder %s19, 0
      %p107 = por %p105, %p106
      %s109 = sadd.s32 %s108, 1
      %p112 = scmp.eq.s32.totalorder %s13, 8
      %p113 = scmp.ne.s32.totalorder %s108, %s110
      %p114 = scmp.eq.s32.totalorder %s13, 0
      %p115 = por %p113, %p114
      %p116 = scmp.ne.s32.totalorder %s108, %s110
      %p117 = scmp.eq.s32.totalorder %s18, 8
      %p118 = por %p116, %p117
      %p119 = scmp.ne.s32.totalorder %s110, %s111
      %p120 = scmp.eq.s32.totalorder %s18, 0
      %p121 = por %p119, %p120
      %p122 = scmp.ne.s32.totalorder %s110, %s111
      %p123 = scmp.eq.s32.totalorder %s19, 8
      %p124 = por %p122, %p123
      %p126 = scmp.ne.s32.totalorder %s111, %s125
      %p127 = scmp.eq.s32.totalorder %s19, 0
      %p128 = por %p126, %p127
      %s130 = sadd.s32 %s129, 1
      %p133 = scmp.eq.s32.totalorder %s13, 8
      %p134 = scmp.ne.s32.totalorder %s129, %s131
      %p135 = scmp.eq.s32.totalorder %s13, 0
      %p136 = por %p134, %p135
      %p137 = scmp.ne.s32.totalorder %s129, %s131
      %p138 = scmp.eq.s32.totalorder %s18, 8
      %p139 = por %p137, %p138
      %p140 = scmp.ne.s32.totalorder %s131, %s132
      %p141 = scmp.eq.s32.totalorder %s18, 0
      %p142 = por %p140, %p141
      %p143 = scmp.ne.s32.totalorder %s131, %s132
      %p144 = scmp.eq.s32.totalorder %s19, 8
      %p145 = por %p143, %p144
      %p147 = scmp.ne.s32.totalorder %s132, %s146
      %p148 = scmp.eq.s32.totalorder %s19, 0
      %p149 = por %p147, %p148
      %s151 = sadd.s32 %s150, 1
      %p154 = scmp.eq.s32.totalorder %s13, 8
      %p155 = scmp.ne.s32.totalorder %s150, %s152
      %p156 = scmp.eq.s32.totalorder %s13, 0
      %p157 = por %p155, %p156
      %p158 = scmp.ne.s32.totalorder %s150, %s152
      %p159 = scmp.eq.s32.totalorder %s18, 8
      %p160 = por %p158, %p159
      %p161 = scmp.ne.s32.totalorder %s152, %s153
      %p162 = scmp.eq.s32.totalorder %s18, 0
      %p163 = por %p161, %p162
      %p164 = scmp.ne.s32.totalorder %s152, %s153
      %p165 = scmp.eq.s32.totalorder %s19, 8
      %p166 = por %p164, %p165
      %p168 = scmp.ne.s32.totalorder %s153, %s167
      %p169 = scmp.eq.s32.totalorder %s19, 0
      %p170 = por %p168, %p169
      %s172 = sadd.s32 %s171, 1
      %p175 = scmp.eq.s32.totalorder %s13, 8
      %p176 = scmp.ne.s32.totalorder %s171, %s173
      %p177 = scmp.eq.s32.totalorder %s13, 0
      %p178 = por %p176, %p177
      %p179 = scmp.ne.s32.totalorder %s171, %s173
      %p180 = scmp.eq.s32.totalorder %s18, 8
      %p181 = por %p179, %p180
      %p182 = scmp.ne.s32.totalorder %s173, %s174
      %p183 = scmp.eq.s32.totalorder %s18, 0
      %p184 = por %p182, %p183
      %p185 = scmp.ne.s32.totalorder %s173, %s174
      %p186 = scmp.eq.s32.totalorder %s19, 8
      %p187 = por %p185, %p186
      %p189 = scmp.ne.s32.totalorder %s174, %s188
      %p190 = scmp.eq.s32.totalorder %s19, 0
      %p191 = por %p189, %p190
      %s192 = ssub.s32 %s20, %s32
      %p193 = scmp.eq.s32.totalorder %s192, 0
      %s195 = sadd.s32 %s194, 1
      %s196 = scalar_select %p193, %s194, %s195
      %p199 = pneg %p193
      %p200 = scmp.eq.s32.totalorder %s13, 8
      %p201 = por %p199, %p200
      %p202 = scmp.ne.s32.totalorder %s194, %s197
      %p203 = scmp.eq.s32.totalorder %s13, 0
      %p204 = por %p202, %p203
      %p205 = scmp.ne.s32.totalorder %s194, %s197
      %p206 = scmp.eq.s32.totalorder %s18, 8
      %p207 = por %p205, %p206
      %p208 = scmp.ne.s32.totalorder %s197, %s198
      %p209 = scmp.eq.s32.totalorder %s18, 0
      %p210 = por %p208, %p209
      %p211 = scmp.ne.s32.totalorder %s197, %s198
      %p212 = scmp.eq.s32.totalorder %s19, 8
      %p213 = por %p211, %p212
      %p215 = scmp.ne.s32.totalorder %s198, %s214
      %p216 = scmp.eq.s32.totalorder %s19, 0
      %p217 = por %p215, %p216
      %p218 = scmp.le.s32.totalorder 1, %s13
      %p219 = scmp.lt.s32.totalorder %s13, 10
      %p220 = pnand %p218, %p219
      %p221 = pneg %p220
      // Predicated region
      $region9: #{gnn_boundary_classifier_forward.3} parent=5 // pred_check
        _
      $region10: #{gnn_boundary_classifier_forward.3} parent=5 // pred_check_branch
        %223 = sbr.rel (%p220) target = $region12
      $region11: #{gnn_boundary_classifier_forward.3} parent=5 // pred_region
        %s224 = ssub.s32 %s13, 1
        // Predicated region
        $region13: #{gnn_boundary_classifier_forward.3} parent=11 // pred_check
          %p225 = pneg %p74
        $region14: #{gnn_boundary_classifier_forward.3} parent=11 // pred_check_branch
          %227 = sbr.rel (%p225) target = $region16
        $region15: #{gnn_boundary_classifier_forward.3} parent=11 // pred_region
          _
        $region16: #{gnn_boundary_classifier_forward.3} parent=11 // pred_fallthru
          _
        // Predicated region
        $region17: #{gnn_boundary_classifier_forward.3} parent=11 // pred_check
          %p228 = pneg %p121
        $region18: #{gnn_boundary_classifier_forward.3} parent=11 // pred_check_branch
          %230 = sbr.rel (%p228) target = $region20
        $region19: #{gnn_boundary_classifier_forward.3} parent=11 // pred_region
          _
        $region20: #{gnn_boundary_classifier_forward.3} parent=11 // pred_fallthru
          _
        // Predicated region
        $region21: #{gnn_boundary_classifier_forward.3} parent=11 // pred_check
          %p231 = pneg %p142
        $region22: #{gnn_boundary_classifier_forward.3} parent=11 // pred_check_branch
          %233 = sbr.rel (%p231) target = $region24
        $region23: #{gnn_boundary_classifier_forward.3} parent=11 // pred_region
          _
        $region24: #{gnn_boundary_classifier_forward.3} parent=11 // pred_fallthru
          _
        // Predicated region
        $region25: #{gnn_boundary_classifier_forward.3} parent=11 // pred_check
          %p234 = pneg %p163
        $region26: #{gnn_boundary_classifier_forward.3} parent=11 // pred_check_branch
          %236 = sbr.rel (%p234) target = $region28
        $region27: #{gnn_boundary_classifier_forward.3} parent=11 // pred_region
          _
        $region28: #{gnn_boundary_classifier_forward.3} parent=11 // pred_fallthru
          _
        // Predicated region
        $region29: #{gnn_boundary_classifier_forward.3} parent=11 // pred_check
          %p237 = pneg %p184
        $region30: #{gnn_boundary_classifier_forward.3} parent=11 // pred_check_branch
          %239 = sbr.rel (%p237) target = $region32
        $region31: #{gnn_boundary_classifier_forward.3} parent=11 // pred_region
          _
        $region32: #{gnn_boundary_classifier_forward.3} parent=11 // pred_fallthru
          _
      $region12: #{gnn_boundary_classifier_forward.3} parent=5 // pred_fallthru
        _
      %p240 = scmp.lt.s32.totalorder %s13, 9
      // Predicated region
      $region33: #{gnn_boundary_classifier_forward.3} parent=5 // pred_check
        %p241 = pneg %p240
      $region34: #{gnn_boundary_classifier_forward.3} parent=5 // pred_check_branch
        %243 = sbr.rel (%p241) target = $region36
      $region35: #{gnn_boundary_classifier_forward.3} parent=5 // pred_region
        // Predicated region
        $region37: #{gnn_boundary_classifier_forward.3} parent=35 // pred_check
          %p244 = pneg %p47
        $region38: #{gnn_boundary_classifier_forward.3} parent=35 // pred_check_branch
          %246 = sbr.rel (%p244) target = $region40
        $region39: #{gnn_boundary_classifier_forward.3} parent=35 // pred_region
          %s247 = sand.u32 %s37, 1
          %s248 = sand.u32 %s37, 1
          %s249 = smul.addr %s248, 512
          %s250 = scalar_lea.vmem [#allocation3], %s249
          %s251 = smul.u32 16, %s20
          %s252 = smul.u32 4, %s21
          %s253 = smul.addr %s251, 12
          %s254 = sadd.s32 %s252, %s253
          %s255 = smul.addr %s254, 8
          %s256 = scalar_lea.vmem %s0, %s255
          // Predicated region
          $region41: #{gnn_boundary_classifier_forward.3} parent=39 // pred_check
            _
          $region42: #{gnn_boundary_classifier_forward.3} parent=39 // pred_check_branch
            %258 = sbr.rel (0) target = $region44
          $region43: #{gnn_boundary_classifier_forward.3} parent=39 // pred_region
            // Predicated region
            $region45: #{gnn_boundary_classifier_forward.3} parent=43 // pred_check
              _
            $region46: #{gnn_boundary_classifier_forward.3} parent=43 // pred_check_branch
              %260 = sbr.rel (0) target = $region48
            $region47: #{gnn_boundary_classifier_forward.3} parent=43 // pred_region
              loop: start=0, step=1, limit=1
              $region49: #{gnn_boundary_classifier_forward.3} parent=47 // loop_pre_header
                _
              $region50: #{gnn_boundary_classifier_forward.3} parent=47 // loop_header
                %s262 = sphi 0, %s266
                %p263 = scmp.ge.s32.totalorder %s262, 1
                %s267 = sphi %s256, %s256
                %s268 = sphi %s250, %s250
              $region51: #{gnn_boundary_classifier_forward.3} parent=47 // loop_header_branch
                %265 = sbr.rel (%p263) target = $region55
              $region52: #{gnn_boundary_classifier_forward.3} parent=47 // loop_body
                %v269 = vld [vmem:[%s267] sm:$0xff]
                %270 = vst [vmem:[%s268] sm:$0xff] %v269
                %v271 = vld [vmem:[%s267 + $0x8] sm:$0xff]
                %272 = vst [vmem:[%s268 + $0x8] sm:$0xff] %v271
                %v273 = vld [vmem:[%s267 + $0x10] sm:$0xff]
                %274 = vst [vmem:[%s268 + $0x10] sm:$0xff] %v273
                %v275 = vld [vmem:[%s267 + $0x18] sm:$0xff]
                %276 = vst [vmem:[%s268 + $0x18] sm:$0xff] %v275
                %v277 = vld [vmem:[%s267 + $0x60] sm:$0xff]
                %278 = vst [vmem:[%s268 + $0x20] sm:$0xff] %v277
                %v279 = vld [vmem:[%s267 + $0x68] sm:$0xff]
                %280 = vst [vmem:[%s268 + $0x28] sm:$0xff] %v279
                %v281 = vld [vmem:[%s267 + $0x70] sm:$0xff]
                %282 = vst [vmem:[%s268 + $0x30] sm:$0xff] %v281
                %v283 = vld [vmem:[%s267 + $0x78] sm:$0xff]
                %284 = vst [vmem:[%s268 + $0x38] sm:$0xff] %v283
                %v285 = vld [vmem:[%s267 + $0xc0] sm:$0xff]
                %286 = vst [vmem:[%s268 + $0x40] sm:$0xff] %v285
                %v287 = vld [vmem:[%s267 + $0xc8] sm:$0xff]
                %288 = vst [vmem:[%s268 + $0x48] sm:$0xff] %v287
                %v289 = vld [vmem:[%s267 + $0xd0] sm:$0xff]
                %290 = vst [vmem:[%s268 + $0x50] sm:$0xff] %v289
                %v291 = vld [vmem:[%s267 + $0xd8] sm:$0xff]
                %292 = vst [vmem:[%s268 + $0x58] sm:$0xff] %v291
                %v293 = vld [vmem:[%s267 + $0x120] sm:$0xff]
                %294 = vst [vmem:[%s268 + $0x60] sm:$0xff] %v293
                %v295 = vld [vmem:[%s267 + $0x128] sm:$0xff]
                %296 = vst [vmem:[%s268 + $0x68] sm:$0xff] %v295
                %v297 = vld [vmem:[%s267 + $0x130] sm:$0xff]
                %298 = vst [vmem:[%s268 + $0x70] sm:$0xff] %v297
                %v299 = vld [vmem:[%s267 + $0x138] sm:$0xff]
                %300 = vst [vmem:[%s268 + $0x78] sm:$0xff] %v299
                %v301 = vld [vmem:[%s267 + $0x180] sm:$0xff]
                %302 = vst [vmem:[%s268 + $0x80] sm:$0xff] %v301
                %v303 = vld [vmem:[%s267 + $0x188] sm:$0xff]
                %304 = vst [vmem:[%s268 + $0x88] sm:$0xff] %v303
                %v305 = vld [vmem:[%s267 + $0x190] sm:$0xff]
                %306 = vst [vmem:[%s268 + $0x90] sm:$0xff] %v305
                %v307 = vld [vmem:[%s267 + $0x198] sm:$0xff]
                %308 = vst [vmem:[%s268 + $0x98] sm:$0xff] %v307
                %v309 = vld [vmem:[%s267 + $0x1e0] sm:$0xff]
                %310 = vst [vmem:[%s268 + $0xa0] sm:$0xff] %v309
                %v311 = vld [vmem:[%s267 + $0x1e8] sm:$0xff]
                %312 = vst [vmem:[%s268 + $0xa8] sm:$0xff] %v311
                %v313 = vld [vmem:[%s267 + $0x1f0] sm:$0xff]
                %314 = vst [vmem:[%s268 + $0xb0] sm:$0xff] %v313
                %v315 = vld [vmem:[%s267 + $0x1f8] sm:$0xff]
                %316 = vst [vmem:[%s268 + $0xb8] sm:$0xff] %v315
                %v317 = vld [vmem:[%s267 + $0x240] sm:$0xff]
                %318 = vst [vmem:[%s268 + $0xc0] sm:$0xff] %v317
                %v319 = vld [vmem:[%s267 + $0x248] sm:$0xff]
                %320 = vst [vmem:[%s268 + $0xc8] sm:$0xff] %v319
                %v321 = vld [vmem:[%s267 + $0x250] sm:$0xff]
                %322 = vst [vmem:[%s268 + $0xd0] sm:$0xff] %v321
                %v323 = vld [vmem:[%s267 + $0x258] sm:$0xff]
                %324 = vst [vmem:[%s268 + $0xd8] sm:$0xff] %v323
                %v325 = vld [vmem:[%s267 + $0x2a0] sm:$0xff]
                %326 = vst [vmem:[%s268 + $0xe0] sm:$0xff] %v325
                %v327 = vld [vmem:[%s267 + $0x2a8] sm:$0xff]
                %328 = vst [vmem:[%s268 + $0xe8] sm:$0xff] %v327
                %v329 = vld [vmem:[%s267 + $0x2b0] sm:$0xff]
                %330 = vst [vmem:[%s268 + $0xf0] sm:$0xff] %v329
                %v331 = vld [vmem:[%s267 + $0x2b8] sm:$0xff]
                %332 = vst [vmem:[%s268 + $0xf8] sm:$0xff] %v331
                %v333 = vld [vmem:[%s267 + $0x300] sm:$0xff]
                %334 = vst [vmem:[%s268 + $0x100] sm:$0xff] %v333
                %v335 = vld [vmem:[%s267 + $0x308] sm:$0xff]
                %336 = vst [vmem:[%s268 + $0x108] sm:$0xff] %v335
                %v337 = vld [vmem:[%s267 + $0x310] sm:$0xff]
                %338 = vst [vmem:[%s268 + $0x110] sm:$0xff] %v337
                %v339 = vld [vmem:[%s267 + $0x318] sm:$0xff]
                %340 = vst [vmem:[%s268 + $0x118] sm:$0xff] %v339
                %v341 = vld [vmem:[%s267 + $0x360] sm:$0xff]
                %342 = vst [vmem:[%s268 + $0x120] sm:$0xff] %v341
                %v343 = vld [vmem:[%s267 + $0x368] sm:$0xff]
                %344 = vst [vmem:[%s268 + $0x128] sm:$0xff] %v343
                %v345 = vld [vmem:[%s267 + $0x370] sm:$0xff]
                %346 = vst [vmem:[%s268 + $0x130] sm:$0xff] %v345
                %v347 = vld [vmem:[%s267 + $0x378] sm:$0xff]
                %348 = vst [vmem:[%s268 + $0x138] sm:$0xff] %v347
                %v349 = vld [vmem:[%s267 + $0x3c0] sm:$0xff]
                %350 = vst [vmem:[%s268 + $0x140] sm:$0xff] %v349
                %v351 = vld [vmem:[%s267 + $0x3c8] sm:$0xff]
                %352 = vst [vmem:[%s268 + $0x148] sm:$0xff] %v351
                %v353 = vld [vmem:[%s267 + $0x3d0] sm:$0xff]
                %354 = vst [vmem:[%s268 + $0x150] sm:$0xff] %v353
                %v355 = vld [vmem:[%s267 + $0x3d8] sm:$0xff]
                %356 = vst [vmem:[%s268 + $0x158] sm:$0xff] %v355
                %v357 = vld [vmem:[%s267 + $0x420] sm:$0xff]
                %358 = vst [vmem:[%s268 + $0x160] sm:$0xff] %v357
                %v359 = vld [vmem:[%s267 + $0x428] sm:$0xff]
                %360 = vst [vmem:[%s268 + $0x168] sm:$0xff] %v359
                %v361 = vld [vmem:[%s267 + $0x430] sm:$0xff]
                %362 = vst [vmem:[%s268 + $0x170] sm:$0xff] %v361
                %v363 = vld [vmem:[%s267 + $0x438] sm:$0xff]
                %364 = vst [vmem:[%s268 + $0x178] sm:$0xff] %v363
                %v365 = vld [vmem:[%s267 + $0x480] sm:$0xff]
                %366 = vst [vmem:[%s268 + $0x180] sm:$0xff] %v365
                %v367 = vld [vmem:[%s267 + $0x488] sm:$0xff]
                %368 = vst [vmem:[%s268 + $0x188] sm:$0xff] %v367
                %v369 = vld [vmem:[%s267 + $0x490] sm:$0xff]
                %370 = vst [vmem:[%s268 + $0x190] sm:$0xff] %v369
                %v371 = vld [vmem:[%s267 + $0x498] sm:$0xff]
                %372 = vst [vmem:[%s268 + $0x198] sm:$0xff] %v371
                %v373 = vld [vmem:[%s267 + $0x4e0] sm:$0xff]
                %374 = vst [vmem:[%s268 + $0x1a0] sm:$0xff] %v373
                %v375 = vld [vmem:[%s267 + $0x4e8] sm:$0xff]
                %376 = vst [vmem:[%s268 + $0x1a8] sm:$0xff] %v375
                %v377 = vld [vmem:[%s267 + $0x4f0] sm:$0xff]
                %378 = vst [vmem:[%s268 + $0x1b0] sm:$0xff] %v377
                %v379 = vld [vmem:[%s267 + $0x4f8] sm:$0xff]
                %380 = vst [vmem:[%s268 + $0x1b8] sm:$0xff] %v379
                %v381 = vld [vmem:[%s267 + $0x540] sm:$0xff]
                %382 = vst [vmem:[%s268 + $0x1c0] sm:$0xff] %v381
                %v383 = vld [vmem:[%s267 + $0x548] sm:$0xff]
                %384 = vst [vmem:[%s268 + $0x1c8] sm:$0xff] %v383
                %v385 = vld [vmem:[%s267 + $0x550] sm:$0xff]
                %386 = vst [vmem:[%s268 + $0x1d0] sm:$0xff] %v385
                %v387 = vld [vmem:[%s267 + $0x558] sm:$0xff]
                %388 = vst [vmem:[%s268 + $0x1d8] sm:$0xff] %v387
                %v389 = vld [vmem:[%s267 + $0x5a0] sm:$0xff]
                %390 = vst [vmem:[%s268 + $0x1e0] sm:$0xff] %v389
                %v391 = vld [vmem:[%s267 + $0x5a8] sm:$0xff]
                %392 = vst [vmem:[%s268 + $0x1e8] sm:$0xff] %v391
                %v393 = vld [vmem:[%s267 + $0x5b0] sm:$0xff]
                %394 = vst [vmem:[%s268 + $0x1f0] sm:$0xff] %v393
                %v395 = vld [vmem:[%s267 + $0x5b8] sm:$0xff]
                %396 = vst [vmem:[%s268 + $0x1f8] sm:$0xff] %v395
              $region53: #{gnn_boundary_classifier_forward.3} parent=47 // loop_footer
                %s266 = sadd.s32 1, %s262
              $region54: #{gnn_boundary_classifier_forward.3} parent=47 // loop_footer_branch
                %261 = sbr.rel target = $region50
              $region55: #{gnn_boundary_classifier_forward.3} parent=47 // loop_exit
                _
            $region48: #{gnn_boundary_classifier_forward.3} parent=43 // pred_fallthru
              _
            // Predicated region
            $region56: #{gnn_boundary_classifier_forward.3} parent=43 // pred_check
              _
            $region57: #{gnn_boundary_classifier_forward.3} parent=43 // pred_check_branch
              %398 = sbr.rel target = $region59
            $region58: #{gnn_boundary_classifier_forward.3} parent=43 // pred_region
              _
            $region59: #{gnn_boundary_classifier_forward.3} parent=43 // pred_fallthru
              _
          $region44: #{gnn_boundary_classifier_forward.3} parent=39 // pred_fallthru
            _
          %399 = vnop
        $region40: #{gnn_boundary_classifier_forward.3} parent=35 // pred_fallthru
          _
        // Predicated region
        $region60: #{gnn_boundary_classifier_forward.3} parent=35 // pred_check
          %p400 = pneg %p94
        $region61: #{gnn_boundary_classifier_forward.3} parent=35 // pred_check_branch
          %402 = sbr.rel (%p400) target = $region63
        $region62: #{gnn_boundary_classifier_forward.3} parent=35 // pred_region
          %s403 = smul.u32 64, %s20
          %p404 = scmp.lt.s32.totalorder %s403, 191
          %s405 = scalar_select %p404, %s403, 191
          %s406 = smul.addr %s405, 8
          %s407 = scalar_lea.vmem %s2, %s406
          %s408 = smul.u32 64, %s20
        $region63: #{gnn_boundary_classifier_forward.3} parent=35 // pred_fallthru
          _
      $region36: #{gnn_boundary_classifier_forward.3} parent=5 // pred_fallthru
        _
      %p409 = scmp.le.s32.totalorder 1, %s13
      %p410 = scmp.lt.s32.totalorder %s13, 10
      %p411 = pnand %p409, %p410
      %p412 = pneg %p411
      // Predicated region
      $region64: #{gnn_boundary_classifier_forward.3} parent=5 // pred_check
        _
      $region65: #{gnn_boundary_classifier_forward.3} parent=5 // pred_check_branch
        %414 = sbr.rel (%p411) target = $region67
      $region66: #{gnn_boundary_classifier_forward.3} parent=5 // pred_region
        %s415 = ssub.s32 %s13, 1
        %s416 = sand.u32 %s40, 1
        %s417 = sand.u32 %s40, 1
        %s418 = smul.addr %s417, 512
        %s419 = scalar_lea.vmem [#allocation3], %s418
        // Predicated region
        $region68: #{gnn_boundary_classifier_forward.3} parent=66 // pred_check
          %p420 = pneg %p53
        $region69: #{gnn_boundary_classifier_forward.3} parent=66 // pred_check_branch
          %422 = sbr.rel (%p420) target = $region71
        $region70: #{gnn_boundary_classifier_forward.3} parent=66 // pred_region
          _
        $region71: #{gnn_boundary_classifier_forward.3} parent=66 // pred_fallthru
          _
        %s423 = sand.u32 %s40, 1
        %s424 = sand.u32 %s40, 1
        %s425 = smul.addr %s424, 512
        %s426 = scalar_lea.vmem [#allocation3], %s425
        %p427 = pneg %p53
        %p428 = pneg %p50
        %p429 = pneg %p74
        %p430 = pneg %p71
        %s431 = smul.u32 64, %s22
        %p432 = scmp.lt.s32.totalorder %s431, 191
        %s433 = scalar_select %p432, %s431, 191
        %s434 = smul.addr %s433, 8
        %s435 = scalar_lea.vmem %s2, %s434
        %p436 = pneg %p100
        %p437 = pneg %p97
        %p438 = pneg %p121
        %p439 = pneg %p118
        %p440 = pneg %p142
        %p441 = pneg %p139
        %p442 = pneg %p163
        %p443 = pneg %p160
        %p444 = pneg %p184
        %p445 = pneg %p181
        %p446 = pneg %p210
        %p447 = pneg %p207
        %s448 = smul.u32 64, %s22
        %p449 = scmp.lt.s32.totalorder %s448, 191
        %s450 = scalar_select %p449, %s448, 191
        %s451 = smul.addr %s450, 8
        %s452 = scalar_lea.vmem %s7, %s451
        %s453 = smul.u32 16, %s22
        %s454 = smul.u32 4, %s23
        %s455 = smul.u32 64, %s22
        %p456 = scmp.lt.s32.totalorder %s455, 191
        %s457 = scalar_select %p456, %s455, 191
        %s458 = smul.addr %s457, 8
        %s459 = scalar_lea.vmem %s2, %s458
        %s460 = smul.u32 64, %s22
        %s461 = smul.u32 64, %s22
        %p462 = scmp.lt.s32.totalorder %s461, 191
        %s463 = scalar_select %p462, %s461, 191
        %s464 = smul.addr %s463, 8
        %s465 = scalar_lea.vmem %s7, %s464
        %s466 = smul.u32 64, %s22
        %p468 = scmp.eq.s32.totalorder %s23, 0
        // Predicated region
        $region72: #{gnn_boundary_classifier_forward.3} parent=66 // pred_check
          %p469 = pneg %p468
        $region73: #{gnn_boundary_classifier_forward.3} parent=66 // pred_check_branch
          %471 = sbr.rel (%p469) target = $region75
        $region74: #{gnn_boundary_classifier_forward.3} parent=66 // pred_region
          %472 = vst [vmem:[#allocation2] sm:$0xff] 0.0
          %473 = vst [vmem:[#allocation2 + $0x10] sm:$0xff] 0.0
          %474 = vst [vmem:[#allocation2 + $0x20] sm:$0xff] 0.0
          %475 = vst [vmem:[#allocation2 + $0x30] sm:$0xff] 0.0
          %476 = vst [vmem:[#allocation2 + $0x40] sm:$0xff] 0.0
          %477 = vst [vmem:[#allocation2 + $0x50] sm:$0xff] 0.0
          %478 = vst [vmem:[#allocation2 + $0x60] sm:$0xff] 0.0
          %479 = vst [vmem:[#allocation2 + $0x70] sm:$0xff] 0.0
          %480 = vst [vmem:[#allocation2 + $0x80] sm:$0xff] 0.0
          %481 = vst [vmem:[#allocation2 + $0x90] sm:$0xff] 0.0
          %482 = vst [vmem:[#allocation2 + $0xa0] sm:$0xff] 0.0
          %483 = vst [vmem:[#allocation2 + $0xb0] sm:$0xff] 0.0
          %484 = vst [vmem:[#allocation2 + $0xc0] sm:$0xff] 0.0
          %485 = vst [vmem:[#allocation2 + $0xd0] sm:$0xff] 0.0
          %486 = vst [vmem:[#allocation2 + $0xe0] sm:$0xff] 0.0
          %487 = vst [vmem:[#allocation2 + $0xf0] sm:$0xff] 0.0
          %488 = vst [vmem:[#allocation2 + $0x100] sm:$0xff] 0.0
          %489 = vst [vmem:[#allocation2 + $0x110] sm:$0xff] 0.0
          %490 = vst [vmem:[#allocation2 + $0x120] sm:$0xff] 0.0
          %491 = vst [vmem:[#allocation2 + $0x130] sm:$0xff] 0.0
          %492 = vst [vmem:[#allocation2 + $0x140] sm:$0xff] 0.0
          %493 = vst [vmem:[#allocation2 + $0x150] sm:$0xff] 0.0
          %494 = vst [vmem:[#allocation2 + $0x160] sm:$0xff] 0.0
          %495 = vst [vmem:[#allocation2 + $0x170] sm:$0xff] 0.0
          %496 = vst [vmem:[#allocation2 + $0x180] sm:$0xff] 0.0
          %497 = vst [vmem:[#allocation2 + $0x190] sm:$0xff] 0.0
          %498 = vst [vmem:[#allocation2 + $0x1a0] sm:$0xff] 0.0
          %499 = vst [vmem:[#allocation2 + $0x1b0] sm:$0xff] 0.0
          %500 = vst [vmem:[#allocation2 + $0x1c0] sm:$0xff] 0.0
          %501 = vst [vmem:[#allocation2 + $0x1d0] sm:$0xff] 0.0
          %502 = vst [vmem:[#allocation2 + $0x1e0] sm:$0xff] 0.0
          %503 = vst [vmem:[#allocation2 + $0x1f0] sm:$0xff] 0.0
          %504 = vst [vmem:[#allocation2 + $0x200] sm:$0xff] 0.0
          %505 = vst [vmem:[#allocation2 + $0x210] sm:$0xff] 0.0
          %506 = vst [vmem:[#allocation2 + $0x220] sm:$0xff] 0.0
          %507 = vst [vmem:[#allocation2 + $0x230] sm:$0xff] 0.0
          %508 = vst [vmem:[#allocation2 + $0x240] sm:$0xff] 0.0
          %509 = vst [vmem:[#allocation2 + $0x250] sm:$0xff] 0.0
          %510 = vst [vmem:[#allocation2 + $0x260] sm:$0xff] 0.0
          %511 = vst [vmem:[#allocation2 + $0x270] sm:$0xff] 0.0
          %512 = vst [vmem:[#allocation2 + $0x280] sm:$0xff] 0.0
          %513 = vst [vmem:[#allocation2 + $0x290] sm:$0xff] 0.0
          %514 = vst [vmem:[#allocation2 + $0x2a0] sm:$0xff] 0.0
          %515 = vst [vmem:[#allocation2 + $0x2b0] sm:$0xff] 0.0
          %516 = vst [vmem:[#allocation2 + $0x2c0] sm:$0xff] 0.0
          %517 = vst [vmem:[#allocation2 + $0x2d0] sm:$0xff] 0.0
          %518 = vst [vmem:[#allocation2 + $0x2e0] sm:$0xff] 0.0
          %519 = vst [vmem:[#allocation2 + $0x2f0] sm:$0xff] 0.0
          %520 = vst [vmem:[#allocation2 + $0x300] sm:$0xff] 0.0
          %521 = vst [vmem:[#allocation2 + $0x310] sm:$0xff] 0.0
          %522 = vst [vmem:[#allocation2 + $0x320] sm:$0xff] 0.0
          %523 = vst [vmem:[#allocation2 + $0x330] sm:$0xff] 0.0
          %524 = vst [vmem:[#allocation2 + $0x340] sm:$0xff] 0.0
          %525 = vst [vmem:[#allocation2 + $0x350] sm:$0xff] 0.0
          %526 = vst [vmem:[#allocation2 + $0x360] sm:$0xff] 0.0
          %527 = vst [vmem:[#allocation2 + $0x370] sm:$0xff] 0.0
          %528 = vst [vmem:[#allocation2 + $0x380] sm:$0xff] 0.0
          %529 = vst [vmem:[#allocation2 + $0x390] sm:$0xff] 0.0
          %530 = vst [vmem:[#allocation2 + $0x3a0] sm:$0xff] 0.0
          %531 = vst [vmem:[#allocation2 + $0x3b0] sm:$0xff] 0.0
          %532 = vst [vmem:[#allocation2 + $0x3c0] sm:$0xff] 0.0
          %533 = vst [vmem:[#allocation2 + $0x3d0] sm:$0xff] 0.0
          %534 = vst [vmem:[#allocation2 + $0x3e0] sm:$0xff] 0.0
          %535 = vst [vmem:[#allocation2 + $0x3f0] sm:$0xff] 0.0
          %s536 = smul.u32 %s22, 512
          %s537 = sshra.s32 %s536, 3
          %s538 = sand.u32 %s536, 7
          %s539 = smul.addr %s537, 4
          %s540 = scalar_lea.vmem %s1, %s539
          %v541 = vld [vmem:[%s540] sm:$0xf]
          %v542 = vld [vmem:[%s540 + $0x4] sm:$0xf]
          %v543 = vld [vmem:[%s540 + $0x8] sm:$0xf]
          %v544 = vld [vmem:[%s540 + $0xc] sm:$0xf]
          %v545 = vld [vmem:[%s540 + $0x10] sm:$0xf]
          %v546 = vld [vmem:[%s540 + $0x14] sm:$0xf]
          %v547 = vld [vmem:[%s540 + $0x18] sm:$0xf]
          %v548 = vld [vmem:[%s540 + $0x1c] sm:$0xf]
          %v549 = vld [vmem:[%s540 + $0x20] sm:$0xf]
          %v550 = vld [vmem:[%s540 + $0x24] sm:$0xf]
          %v551 = vld [vmem:[%s540 + $0x28] sm:$0xf]
          %v552 = vld [vmem:[%s540 + $0x2c] sm:$0xf]
          %v553 = vld [vmem:[%s540 + $0x30] sm:$0xf]
          %v554 = vld [vmem:[%s540 + $0x34] sm:$0xf]
          %v555 = vld [vmem:[%s540 + $0x38] sm:$0xf]
          %v556 = vld [vmem:[%s540 + $0x3c] sm:$0xf]
          %v557 = vld [vmem:[%s540 + $0x40] sm:$0xf]
          %v558 = vld [vmem:[%s540 + $0x44] sm:$0xf]
          %v559 = vld [vmem:[%s540 + $0x48] sm:$0xf]
          %v560 = vld [vmem:[%s540 + $0x4c] sm:$0xf]
          %v561 = vld [vmem:[%s540 + $0x50] sm:$0xf]
          %v562 = vld [vmem:[%s540 + $0x54] sm:$0xf]
          %v563 = vld [vmem:[%s540 + $0x58] sm:$0xf]
          %v564 = vld [vmem:[%s540 + $0x5c] sm:$0xf]
          %v565 = vld [vmem:[%s540 + $0x60] sm:$0xf]
          %v566 = vld [vmem:[%s540 + $0x64] sm:$0xf]
          %v567 = vld [vmem:[%s540 + $0x68] sm:$0xf]
          %v568 = vld [vmem:[%s540 + $0x6c] sm:$0xf]
          %v569 = vld [vmem:[%s540 + $0x70] sm:$0xf]
          %v570 = vld [vmem:[%s540 + $0x74] sm:$0xf]
          %v571 = vld [vmem:[%s540 + $0x78] sm:$0xf]
          %v572 = vld [vmem:[%s540 + $0x7c] sm:$0xf]
          %v573 = vld [vmem:[%s540 + $0x80] sm:$0xf]
          %v574 = vld [vmem:[%s540 + $0x84] sm:$0xf]
          %v575 = vld [vmem:[%s540 + $0x88] sm:$0xf]
          %v576 = vld [vmem:[%s540 + $0x8c] sm:$0xf]
          %v577 = vld [vmem:[%s540 + $0x90] sm:$0xf]
          %v578 = vld [vmem:[%s540 + $0x94] sm:$0xf]
          %v579 = vld [vmem:[%s540 + $0x98] sm:$0xf]
          %v580 = vld [vmem:[%s540 + $0x9c] sm:$0xf]
          %v581 = vld [vmem:[%s540 + $0xa0] sm:$0xf]
          %v582 = vld [vmem:[%s540 + $0xa4] sm:$0xf]
          %v583 = vld [vmem:[%s540 + $0xa8] sm:$0xf]
          %v584 = vld [vmem:[%s540 + $0xac] sm:$0xf]
          %v585 = vld [vmem:[%s540 + $0xb0] sm:$0xf]
          %v586 = vld [vmem:[%s540 + $0xb4] sm:$0xf]
          %v587 = vld [vmem:[%s540 + $0xb8] sm:$0xf]
          %v588 = vld [vmem:[%s540 + $0xbc] sm:$0xf]
          %v589 = vld [vmem:[%s540 + $0xc0] sm:$0xf]
          %v590 = vld [vmem:[%s540 + $0xc4] sm:$0xf]
          %v591 = vld [vmem:[%s540 + $0xc8] sm:$0xf]
          %v592 = vld [vmem:[%s540 + $0xcc] sm:$0xf]
          %v593 = vld [vmem:[%s540 + $0xd0] sm:$0xf]
          %v594 = vld [vmem:[%s540 + $0xd4] sm:$0xf]
          %v595 = vld [vmem:[%s540 + $0xd8] sm:$0xf]
          %v596 = vld [vmem:[%s540 + $0xdc] sm:$0xf]
          %v597 = vld [vmem:[%s540 + $0xe0] sm:$0xf]
          %v598 = vld [vmem:[%s540 + $0xe4] sm:$0xf]
          %v599 = vld [vmem:[%s540 + $0xe8] sm:$0xf]
          %v600 = vld [vmem:[%s540 + $0xec] sm:$0xf]
          %v601 = vld [vmem:[%s540 + $0xf0] sm:$0xf]
          %v602 = vld [vmem:[%s540 + $0xf4] sm:$0xf]
          %v603 = vld [vmem:[%s540 + $0xf8] sm:$0xf]
          %v604 = vld [vmem:[%s540 + $0xfc] sm:$0xf]
          %v605 = vunpack.c.l.bf16 %v541
          %v606 = vunpack.c.l.bf16 %v542
          %v607 = vunpack.c.l.bf16 %v543
          %v608 = vunpack.c.l.bf16 %v544
          %v609 = vunpack.c.l.bf16 %v545
          %v610 = vunpack.c.l.bf16 %v546
          %v611 = vunpack.c.l.bf16 %v547
          %v612 = vunpack.c.l.bf16 %v548
          %v613 = vunpack.c.l.bf16 %v549
          %v614 = vunpack.c.l.bf16 %v550
          %v615 = vunpack.c.l.bf16 %v551
          %v616 = vunpack.c.l.bf16 %v552
          %v617 = vunpack.c.l.bf16 %v553
          %v618 = vunpack.c.l.bf16 %v554
          %v619 = vunpack.c.l.bf16 %v555
          %v620 = vunpack.c.l.bf16 %v556
          %v621 = vunpack.c.l.bf16 %v557
          %v622 = vunpack.c.l.bf16 %v558
          %v623 = vunpack.c.l.bf16 %v559
          %v624 = vunpack.c.l.bf16 %v560
          %v625 = vunpack.c.l.bf16 %v561
          %v626 = vunpack.c.l.bf16 %v562
          %v627 = vunpack.c.l.bf16 %v563
          %v628 = vunpack.c.l.bf16 %v564
          %v629 = vunpack.c.l.bf16 %v565
          %v630 = vunpack.c.l.bf16 %v566
          %v631 = vunpack.c.l.bf16 %v567
          %v632 = vunpack.c.l.bf16 %v568
          %v633 = vunpack.c.l.bf16 %v569
          %v634 = vunpack.c.l.bf16 %v570
          %v635 = vunpack.c.l.bf16 %v571
          %v636 = vunpack.c.l.bf16 %v572
          %v637 = vunpack.c.l.bf16 %v573
          %v638 = vunpack.c.l.bf16 %v574
          %v639 = vunpack.c.l.bf16 %v575
          %v640 = vunpack.c.l.bf16 %v576
          %v641 = vunpack.c.l.bf16 %v577
          %v642 = vunpack.c.l.bf16 %v578
          %v643 = vunpack.c.l.bf16 %v579
          %v644 = vunpack.c.l.bf16 %v580
          %v645 = vunpack.c.l.bf16 %v581
          %v646 = vunpack.c.l.bf16 %v582
          %v647 = vunpack.c.l.bf16 %v583
          %v648 = vunpack.c.l.bf16 %v584
          %v649 = vunpack.c.l.bf16 %v585
          %v650 = vunpack.c.l.bf16 %v586
          %v651 = vunpack.c.l.bf16 %v587
          %v652 = vunpack.c.l.bf16 %v588
          %v653 = vunpack.c.l.bf16 %v589
          %v654 = vunpack.c.l.bf16 %v590
          %v655 = vunpack.c.l.bf16 %v591
          %v656 = vunpack.c.l.bf16 %v592
          %v657 = vunpack.c.l.bf16 %v593
          %v658 = vunpack.c.l.bf16 %v594
          %v659 = vunpack.c.l.bf16 %v595
          %v660 = vunpack.c.l.bf16 %v596
          %v661 = vunpack.c.l.bf16 %v597
          %v662 = vunpack.c.l.bf16 %v598
          %v663 = vunpack.c.l.bf16 %v599
          %v664 = vunpack.c.l.bf16 %v600
          %v665 = vunpack.c.l.bf16 %v601
          %v666 = vunpack.c.l.bf16 %v602
          %v667 = vunpack.c.l.bf16 %v603
          %v668 = vunpack.c.l.bf16 %v604
          %669 = vst [vmem:[#allocation2 + $0x8] sm:$0xff] %v605
          %670 = vst [vmem:[#allocation2 + $0x18] sm:$0xff] %v606
          %671 = vst [vmem:[#allocation2 + $0x28] sm:$0xff] %v607
          %672 = vst [vmem:[#allocation2 + $0x38] sm:$0xff] %v608
          %673 = vst [vmem:[#allocation2 + $0x48] sm:$0xff] %v609
          %674 = vst [vmem:[#allocation2 + $0x58] sm:$0xff] %v610
          %675 = vst [vmem:[#allocation2 + $0x68] sm:$0xff] %v611
          %676 = vst [vmem:[#allocation2 + $0x78] sm:$0xff] %v612
          %677 = vst [vmem:[#allocation2 + $0x88] sm:$0xff] %v613
          %678 = vst [vmem:[#allocation2 + $0x98] sm:$0xff] %v614
          %679 = vst [vmem:[#allocation2 + $0xa8] sm:$0xff] %v615
          %680 = vst [vmem:[#allocation2 + $0xb8] sm:$0xff] %v616
          %681 = vst [vmem:[#allocation2 + $0xc8] sm:$0xff] %v617
          %682 = vst [vmem:[#allocation2 + $0xd8] sm:$0xff] %v618
          %683 = vst [vmem:[#allocation2 + $0xe8] sm:$0xff] %v619
          %684 = vst [vmem:[#allocation2 + $0xf8] sm:$0xff] %v620
          %685 = vst [vmem:[#allocation2 + $0x108] sm:$0xff] %v621
          %686 = vst [vmem:[#allocation2 + $0x118] sm:$0xff] %v622
          %687 = vst [vmem:[#allocation2 + $0x128] sm:$0xff] %v623
          %688 = vst [vmem:[#allocation2 + $0x138] sm:$0xff] %v624
          %689 = vst [vmem:[#allocation2 + $0x148] sm:$0xff] %v625
          %690 = vst [vmem:[#allocation2 + $0x158] sm:$0xff] %v626
          %691 = vst [vmem:[#allocation2 + $0x168] sm:$0xff] %v627
          %692 = vst [vmem:[#allocation2 + $0x178] sm:$0xff] %v628
          %693 = vst [vmem:[#allocation2 + $0x188] sm:$0xff] %v629
          %694 = vst [vmem:[#allocation2 + $0x198] sm:$0xff] %v630
          %695 = vst [vmem:[#allocation2 + $0x1a8] sm:$0xff] %v631
          %696 = vst [vmem:[#allocation2 + $0x1b8] sm:$0xff] %v632
          %697 = vst [vmem:[#allocation2 + $0x1c8] sm:$0xff] %v633
          %698 = vst [vmem:[#allocation2 + $0x1d8] sm:$0xff] %v634
          %699 = vst [vmem:[#allocation2 + $0x1e8] sm:$0xff] %v635
          %700 = vst [vmem:[#allocation2 + $0x1f8] sm:$0xff] %v636
          %701 = vst [vmem:[#allocation2 + $0x208] sm:$0xff] %v637
          %702 = vst [vmem:[#allocation2 + $0x218] sm:$0xff] %v638
          %703 = vst [vmem:[#allocation2 + $0x228] sm:$0xff] %v639
          %704 = vst [vmem:[#allocation2 + $0x238] sm:$0xff] %v640
          %705 = vst [vmem:[#allocation2 + $0x248] sm:$0xff] %v641
          %706 = vst [vmem:[#allocation2 + $0x258] sm:$0xff] %v642
          %707 = vst [vmem:[#allocation2 + $0x268] sm:$0xff] %v643
          %708 = vst [vmem:[#allocation2 + $0x278] sm:$0xff] %v644
          %709 = vst [vmem:[#allocation2 + $0x288] sm:$0xff] %v645
          %710 = vst [vmem:[#allocation2 + $0x298] sm:$0xff] %v646
          %711 = vst [vmem:[#allocation2 + $0x2a8] sm:$0xff] %v647
          %712 = vst [vmem:[#allocation2 + $0x2b8] sm:$0xff] %v648
          %713 = vst [vmem:[#allocation2 + $0x2c8] sm:$0xff] %v649
          %714 = vst [vmem:[#allocation2 + $0x2d8] sm:$0xff] %v650
          %715 = vst [vmem:[#allocation2 + $0x2e8] sm:$0xff] %v651
          %716 = vst [vmem:[#allocation2 + $0x2f8] sm:$0xff] %v652
          %717 = vst [vmem:[#allocation2 + $0x308] sm:$0xff] %v653
          %718 = vst [vmem:[#allocation2 + $0x318] sm:$0xff] %v654
          %719 = vst [vmem:[#allocation2 + $0x328] sm:$0xff] %v655
          %720 = vst [vmem:[#allocation2 + $0x338] sm:$0xff] %v656
          %721 = vst [vmem:[#allocation2 + $0x348] sm:$0xff] %v657
          %722 = vst [vmem:[#allocation2 + $0x358] sm:$0xff] %v658
          %723 = vst [vmem:[#allocation2 + $0x368] sm:$0xff] %v659
          %724 = vst [vmem:[#allocation2 + $0x378] sm:$0xff] %v660
          %725 = vst [vmem:[#allocation2 + $0x388] sm:$0xff] %v661
          %726 = vst [vmem:[#allocation2 + $0x398] sm:$0xff] %v662
          %727 = vst [vmem:[#allocation2 + $0x3a8] sm:$0xff] %v663
          %728 = vst [vmem:[#allocation2 + $0x3b8] sm:$0xff] %v664
          %729 = vst [vmem:[#allocation2 + $0x3c8] sm:$0xff] %v665
          %730 = vst [vmem:[#allocation2 + $0x3d8] sm:$0xff] %v666
          %731 = vst [vmem:[#allocation2 + $0x3e8] sm:$0xff] %v667
          %732 = vst [vmem:[#allocation2 + $0x3f8] sm:$0xff] %v668
        $region75: #{gnn_boundary_classifier_forward.3} parent=66 // pred_fallthru
          _
        %s733 = smul.u32 %s23, 512
        %v734 = vld [vmem:[%s419] sm:$0xff]
        %v735 = vld [vmem:[%s419 + $0x8] sm:$0xff]
        %v736 = vld [vmem:[%s419 + $0x10] sm:$0xff]
        %v737 = vld [vmem:[%s419 + $0x18] sm:$0xff]
        %v738 = vld [vmem:[%s419 + $0x20] sm:$0xff]
        %v739 = vld [vmem:[%s419 + $0x28] sm:$0xff]
        %v740 = vld [vmem:[%s419 + $0x30] sm:$0xff]
        %v741 = vld [vmem:[%s419 + $0x38] sm:$0xff]
        %v742 = vld [vmem:[%s419 + $0x40] sm:$0xff]
        %v743 = vld [vmem:[%s419 + $0x48] sm:$0xff]
        %v744 = vld [vmem:[%s419 + $0x50] sm:$0xff]
        %v745 = vld [vmem:[%s419 + $0x58] sm:$0xff]
        %v746 = vld [vmem:[%s419 + $0x60] sm:$0xff]
        %v747 = vld [vmem:[%s419 + $0x68] sm:$0xff]
        %v748 = vld [vmem:[%s419 + $0x70] sm:$0xff]
        %v749 = vld [vmem:[%s419 + $0x78] sm:$0xff]
        %v750 = vld [vmem:[%s419 + $0x80] sm:$0xff]
        %v751 = vld [vmem:[%s419 + $0x88] sm:$0xff]
        %v752 = vld [vmem:[%s419 + $0x90] sm:$0xff]
        %v753 = vld [vmem:[%s419 + $0x98] sm:$0xff]
        %v754 = vld [vmem:[%s419 + $0xa0] sm:$0xff]
        %v755 = vld [vmem:[%s419 + $0xa8] sm:$0xff]
        %v756 = vld [vmem:[%s419 + $0xb0] sm:$0xff]
        %v757 = vld [vmem:[%s419 + $0xb8] sm:$0xff]
        %v758 = vld [vmem:[%s419 + $0xc0] sm:$0xff]
        %v759 = vld [vmem:[%s419 + $0xc8] sm:$0xff]
        %v760 = vld [vmem:[%s419 + $0xd0] sm:$0xff]
        %v761 = vld [vmem:[%s419 + $0xd8] sm:$0xff]
        %v762 = vld [vmem:[%s419 + $0xe0] sm:$0xff]
        %v763 = vld [vmem:[%s419 + $0xe8] sm:$0xff]
        %v764 = vld [vmem:[%s419 + $0xf0] sm:$0xff]
        %v765 = vld [vmem:[%s419 + $0xf8] sm:$0xff]
        %v766 = vld [vmem:[%s419 + $0x100] sm:$0xff]
        %v767 = vld [vmem:[%s419 + $0x108] sm:$0xff]
        %v768 = vld [vmem:[%s419 + $0x110] sm:$0xff]
        %v769 = vld [vmem:[%s419 + $0x118] sm:$0xff]
        %v770 = vld [vmem:[%s419 + $0x120] sm:$0xff]
        %v771 = vld [vmem:[%s419 + $0x128] sm:$0xff]
        %v772 = vld [vmem:[%s419 + $0x130] sm:$0xff]
        %v773 = vld [vmem:[%s419 + $0x138] sm:$0xff]
        %v774 = vld [vmem:[%s419 + $0x140] sm:$0xff]
        %v775 = vld [vmem:[%s419 + $0x148] sm:$0xff]
        %v776 = vld [vmem:[%s419 + $0x150] sm:$0xff]
        %v777 = vld [vmem:[%s419 + $0x158] sm:$0xff]
        %v778 = vld [vmem:[%s419 + $0x160] sm:$0xff]
        %v779 = vld [vmem:[%s419 + $0x168] sm:$0xff]
        %v780 = vld [vmem:[%s419 + $0x170] sm:$0xff]
        %v781 = vld [vmem:[%s419 + $0x178] sm:$0xff]
        %v782 = vld [vmem:[%s419 + $0x180] sm:$0xff]
        %v783 = vld [vmem:[%s419 + $0x188] sm:$0xff]
        %v784 = vld [vmem:[%s419 + $0x190] sm:$0xff]
        %v785 = vld [vmem:[%s419 + $0x198] sm:$0xff]
        %v786 = vld [vmem:[%s419 + $0x1a0] sm:$0xff]
        %v787 = vld [vmem:[%s419 + $0x1a8] sm:$0xff]
        %v788 = vld [vmem:[%s419 + $0x1b0] sm:$0xff]
        %v789 = vld [vmem:[%s419 + $0x1b8] sm:$0xff]
        %v790 = vld [vmem:[%s419 + $0x1c0] sm:$0xff]
        %v791 = vld [vmem:[%s419 + $0x1c8] sm:$0xff]
        %v792 = vld [vmem:[%s419 + $0x1d0] sm:$0xff]
        %v793 = vld [vmem:[%s419 + $0x1d8] sm:$0xff]
        %v794 = vld [vmem:[%s419 + $0x1e0] sm:$0xff]
        %v795 = vld [vmem:[%s419 + $0x1e8] sm:$0xff]
        %v796 = vld [vmem:[%s419 + $0x1f0] sm:$0xff]
        %v797 = vld [vmem:[%s419 + $0x1f8] sm:$0xff]
        %v798 = vunpack.c.l.s8.bf16 %v734
        %v799 = vunpack.c.l.s8.bf16 %v735
        %v800 = vunpack.c.l.s8.bf16 %v736
        %v801 = vunpack.c.l.s8.bf16 %v737
        %v802 = vunpack.c.h.s8.bf16 %v734
        %v803 = vunpack.c.h.s8.bf16 %v735
        %v804 = vunpack.c.h.s8.bf16 %v736
        %v805 = vunpack.c.h.s8.bf16 %v737
        %v806 = vunpack.c.l.s8.bf16 %v738
        %v807 = vunpack.c.l.s8.bf16 %v739
        %v808 = vunpack.c.l.s8.bf16 %v740
        %v809 = vunpack.c.l.s8.bf16 %v741
        %v810 = vunpack.c.h.s8.bf16 %v738
        %v811 = vunpack.c.h.s8.bf16 %v739
        %v812 = vunpack.c.h.s8.bf16 %v740
        %v813 = vunpack.c.h.s8.bf16 %v741
        %v814 = vunpack.c.l.s8.bf16 %v742
        %v815 = vunpack.c.l.s8.bf16 %v743
        %v816 = vunpack.c.l.s8.bf16 %v744
        %v817 = vunpack.c.l.s8.bf16 %v745
        %v818 = vunpack.c.h.s8.bf16 %v742
        %v819 = vunpack.c.h.s8.bf16 %v743
        %v820 = vunpack.c.h.s8.bf16 %v744
        %v821 = vunpack.c.h.s8.bf16 %v745
        %v822 = vunpack.c.l.s8.bf16 %v746
        %v823 = vunpack.c.l.s8.bf16 %v747
        %v824 = vunpack.c.l.s8.bf16 %v748
        %v825 = vunpack.c.l.s8.bf16 %v749
        %v826 = vunpack.c.h.s8.bf16 %v746
        %v827 = vunpack.c.h.s8.bf16 %v747
        %v828 = vunpack.c.h.s8.bf16 %v748
        %v829 = vunpack.c.h.s8.bf16 %v749
        %v830 = vunpack.c.l.s8.bf16 %v750
        %v831 = vunpack.c.l.s8.bf16 %v751
        %v832 = vunpack.c.l.s8.bf16 %v752
        %v833 = vunpack.c.l.s8.bf16 %v753
        %v834 = vunpack.c.h.s8.bf16 %v750
        %v835 = vunpack.c.h.s8.bf16 %v751
        %v836 = vunpack.c.h.s8.bf16 %v752
        %v837 = vunpack.c.h.s8.bf16 %v753
        %v838 = vunpack.c.l.s8.bf16 %v754
        %v839 = vunpack.c.l.s8.bf16 %v755
        %v840 = vunpack.c.l.s8.bf16 %v756
        %v841 = vunpack.c.l.s8.bf16 %v757
        %v842 = vunpack.c.h.s8.bf16 %v754
        %v843 = vunpack.c.h.s8.bf16 %v755
        %v844 = vunpack.c.h.s8.bf16 %v756
        %v845 = vunpack.c.h.s8.bf16 %v757
        %v846 = vunpack.c.l.s8.bf16 %v758
        %v847 = vunpack.c.l.s8.bf16 %v759
        %v848 = vunpack.c.l.s8.bf16 %v760
        %v849 = vunpack.c.l.s8.bf16 %v761
        %v850 = vunpack.c.h.s8.bf16 %v758
        %v851 = vunpack.c.h.s8.bf16 %v759
        %v852 = vunpack.c.h.s8.bf16 %v760
        %v853 = vunpack.c.h.s8.bf16 %v761
        %v854 = vunpack.c.l.s8.bf16 %v762
        %v855 = vunpack.c.l.s8.bf16 %v763
        %v856 = vunpack.c.l.s8.bf16 %v764
        %v857 = vunpack.c.l.s8.bf16 %v765
        %v858 = vunpack.c.h.s8.bf16 %v762
        %v859 = vunpack.c.h.s8.bf16 %v763
        %v860 = vunpack.c.h.s8.bf16 %v764
        %v861 = vunpack.c.h.s8.bf16 %v765
        %v862 = vunpack.c.l.s8.bf16 %v766
        %v863 = vunpack.c.l.s8.bf16 %v767
        %v864 = vunpack.c.l.s8.bf16 %v768
        %v865 = vunpack.c.l.s8.bf16 %v769
        %v866 = vunpack.c.h.s8.bf16 %v766
        %v867 = vunpack.c.h.s8.bf16 %v767
        %v868 = vunpack.c.h.s8.bf16 %v768
        %v869 = vunpack.c.h.s8.bf16 %v769
        %v870 = vunpack.c.l.s8.bf16 %v770
        %v871 = vunpack.c.l.s8.bf16 %v771
        %v872 = vunpack.c.l.s8.bf16 %v772
        %v873 = vunpack.c.l.s8.bf16 %v773
        %v874 = vunpack.c.h.s8.bf16 %v770
        %v875 = vunpack.c.h.s8.bf16 %v771
        %v876 = vunpack.c.h.s8.bf16 %v772
        %v877 = vunpack.c.h.s8.bf16 %v773
        %v878 = vunpack.c.l.s8.bf16 %v774
        %v879 = vunpack.c.l.s8.bf16 %v775
        %v880 = vunpack.c.l.s8.bf16 %v776
        %v881 = vunpack.c.l.s8.bf16 %v777
        %v882 = vunpack.c.h.s8.bf16 %v774
        %v883 = vunpack.c.h.s8.bf16 %v775
        %v884 = vunpack.c.h.s8.bf16 %v776
        %v885 = vunpack.c.h.s8.bf16 %v777
        %v886 = vunpack.c.l.s8.bf16 %v778
        %v887 = vunpack.c.l.s8.bf16 %v779
        %v888 = vunpack.c.l.s8.bf16 %v780
        %v889 = vunpack.c.l.s8.bf16 %v781
        %v890 = vunpack.c.h.s8.bf16 %v778
        %v891 = vunpack.c.h.s8.bf16 %v779
        %v892 = vunpack.c.h.s8.bf16 %v780
        %v893 = vunpack.c.h.s8.bf16 %v781
        %v894 = vunpack.c.l.s8.bf16 %v782
        %v895 = vunpack.c.l.s8.bf16 %v783
        %v896 = vunpack.c.l.s8.bf16 %v784
        %v897 = vunpack.c.l.s8.bf16 %v785
        %v898 = vunpack.c.h.s8.bf16 %v782
        %v899 = vunpack.c.h.s8.bf16 %v783
        %v900 = vunpack.c.h.s8.bf16 %v784
        %v901 = vunpack.c.h.s8.bf16 %v785
        %v902 = vunpack.c.l.s8.bf16 %v786
        %v903 = vunpack.c.l.s8.bf16 %v787
        %v904 = vunpack.c.l.s8.bf16 %v788
        %v905 = vunpack.c.l.s8.bf16 %v789
        %v906 = vunpack.c.h.s8.bf16 %v786
        %v907 = vunpack.c.h.s8.bf16 %v787
        %v908 = vunpack.c.h.s8.bf16 %v788
        %v909 = vunpack.c.h.s8.bf16 %v789
        %v910 = vunpack.c.l.s8.bf16 %v790
        %v911 = vunpack.c.l.s8.bf16 %v791
        %v912 = vunpack.c.l.s8.bf16 %v792
        %v913 = vunpack.c.l.s8.bf16 %v793
        %v914 = vunpack.c.h.s8.bf16 %v790
        %v915 = vunpack.c.h.s8.bf16 %v791
        %v916 = vunpack.c.h.s8.bf16 %v792
        %v917 = vunpack.c.h.s8.bf16 %v793
        %v918 = vunpack.c.l.s8.bf16 %v794
        %v919 = vunpack.c.l.s8.bf16 %v795
        %v920 = vunpack.c.l.s8.bf16 %v796
        %v921 = vunpack.c.l.s8.bf16 %v797
        %v922 = vunpack.c.h.s8.bf16 %v794
        %v923 = vunpack.c.h.s8.bf16 %v795
        %v924 = vunpack.c.h.s8.bf16 %v796
        %v925 = vunpack.c.h.s8.bf16 %v797
        %v926 = vld [vmem:[#allocation2] sm:$0xff]
        %v927 = vld [vmem:[#allocation2 + $0x10] sm:$0xff]
        %v928 = vld [vmem:[#allocation2 + $0x20] sm:$0xff]
        %v929 = vld [vmem:[#allocation2 + $0x30] sm:$0xff]
        %v930 = vld [vmem:[#allocation2 + $0x40] sm:$0xff]
        %v931 = vld [vmem:[#allocation2 + $0x50] sm:$0xff]
        %v932 = vld [vmem:[#allocation2 + $0x60] sm:$0xff]
        %v933 = vld [vmem:[#allocation2 + $0x70] sm:$0xff]
        %v934 = vld [vmem:[#allocation2 + $0x80] sm:$0xff]
        %v935 = vld [vmem:[#allocation2 + $0x90] sm:$0xff]
        %v936 = vld [vmem:[#allocation2 + $0xa0] sm:$0xff]
        %v937 = vld [vmem:[#allocation2 + $0xb0] sm:$0xff]
        %v938 = vld [vmem:[#allocation2 + $0xc0] sm:$0xff]
        %v939 = vld [vmem:[#allocation2 + $0xd0] sm:$0xff]
        %v940 = vld [vmem:[#allocation2 + $0xe0] sm:$0xff]
        %v941 = vld [vmem:[#allocation2 + $0xf0] sm:$0xff]
        %v942 = vld [vmem:[#allocation2 + $0x100] sm:$0xff]
        %v943 = vld [vmem:[#allocation2 + $0x110] sm:$0xff]
        %v944 = vld [vmem:[#allocation2 + $0x120] sm:$0xff]
        %v945 = vld [vmem:[#allocation2 + $0x130] sm:$0xff]
        %v946 = vld [vmem:[#allocation2 + $0x140] sm:$0xff]
        %v947 = vld [vmem:[#allocation2 + $0x150] sm:$0xff]
        %v948 = vld [vmem:[#allocation2 + $0x160] sm:$0xff]
        %v949 = vld [vmem:[#allocation2 + $0x170] sm:$0xff]
        %v950 = vld [vmem:[#allocation2 + $0x180] sm:$0xff]
        %v951 = vld [vmem:[#allocation2 + $0x190] sm:$0xff]
        %v952 = vld [vmem:[#allocation2 + $0x1a0] sm:$0xff]
        %v953 = vld [vmem:[#allocation2 + $0x1b0] sm:$0xff]
        %v954 = vld [vmem:[#allocation2 + $0x1c0] sm:$0xff]
        %v955 = vld [vmem:[#allocation2 + $0x1d0] sm:$0xff]
        %v956 = vld [vmem:[#allocation2 + $0x1e0] sm:$0xff]
        %v957 = vld [vmem:[#allocation2 + $0x1f0] sm:$0xff]
        %v958 = vld [vmem:[#allocation2 + $0x200] sm:$0xff]
        %v959 = vld [vmem:[#allocation2 + $0x210] sm:$0xff]
        %v960 = vld [vmem:[#allocation2 + $0x220] sm:$0xff]
        %v961 = vld [vmem:[#allocation2 + $0x230] sm:$0xff]
        %v962 = vld [vmem:[#allocation2 + $0x240] sm:$0xff]
        %v963 = vld [vmem:[#allocation2 + $0x250] sm:$0xff]
        %v964 = vld [vmem:[#allocation2 + $0x260] sm:$0xff]
        %v965 = vld [vmem:[#allocation2 + $0x270] sm:$0xff]
        %v966 = vld [vmem:[#allocation2 + $0x280] sm:$0xff]
        %v967 = vld [vmem:[#allocation2 + $0x290] sm:$0xff]
        %v968 = vld [vmem:[#allocation2 + $0x2a0] sm:$0xff]
        %v969 = vld [vmem:[#allocation2 + $0x2b0] sm:$0xff]
        %v970 = vld [vmem:[#allocation2 + $0x2c0] sm:$0xff]
        %v971 = vld [vmem:[#allocation2 + $0x2d0] sm:$0xff]
        %v972 = vld [vmem:[#allocation2 + $0x2e0] sm:$0xff]
        %v973 = vld [vmem:[#allocation2 + $0x2f0] sm:$0xff]
        %v974 = vld [vmem:[#allocation2 + $0x300] sm:$0xff]
        %v975 = vld [vmem:[#allocation2 + $0x310] sm:$0xff]
        %v976 = vld [vmem:[#allocation2 + $0x320] sm:$0xff]
        %v977 = vld [vmem:[#allocation2 + $0x330] sm:$0xff]
        %v978 = vld [vmem:[#allocation2 + $0x340] sm:$0xff]
        %v979 = vld [vmem:[#allocation2 + $0x350] sm:$0xff]
        %v980 = vld [vmem:[#allocation2 + $0x360] sm:$0xff]
        %v981 = vld [vmem:[#allocation2 + $0x370] sm:$0xff]
        %v982 = vld [vmem:[#allocation2 + $0x380] sm:$0xff]
        %v983 = vld [vmem:[#allocation2 + $0x390] sm:$0xff]
        %v984 = vld [vmem:[#allocation2 + $0x3a0] sm:$0xff]
        %v985 = vld [vmem:[#allocation2 + $0x3b0] sm:$0xff]
        %v986 = vld [vmem:[#allocation2 + $0x3c0] sm:$0xff]
        %v987 = vld [vmem:[#allocation2 + $0x3d0] sm:$0xff]
        %v988 = vld [vmem:[#allocation2 + $0x3e0] sm:$0xff]
        %v989 = vld [vmem:[#allocation2 + $0x3f0] sm:$0xff]
        %s990 = sshra.s32 %s733, 3
        %s991 = sand.u32 %s733, 7
        %s992 = smul.addr %s990, 4
        %s993 = scalar_lea.vmem %s1, %s992
        %v994 = vld [vmem:[%s993] sm:$0xf]
        %v995 = vld [vmem:[%s993 + $0x4] sm:$0xf]
        %v996 = vld [vmem:[%s993 + $0x8] sm:$0xf]
        %v997 = vld [vmem:[%s993 + $0xc] sm:$0xf]
        %v998 = vld [vmem:[%s993 + $0x10] sm:$0xf]
        %v999 = vld [vmem:[%s993 + $0x14] sm:$0xf]
        %v1000 = vld [vmem:[%s993 + $0x18] sm:$0xf]
        %v1001 = vld [vmem:[%s993 + $0x1c] sm:$0xf]
        %v1002 = vld [vmem:[%s993 + $0x20] sm:$0xf]
        %v1003 = vld [vmem:[%s993 + $0x24] sm:$0xf]
        %v1004 = vld [vmem:[%s993 + $0x28] sm:$0xf]
        %v1005 = vld [vmem:[%s993 + $0x2c] sm:$0xf]
        %v1006 = vld [vmem:[%s993 + $0x30] sm:$0xf]
        %v1007 = vld [vmem:[%s993 + $0x34] sm:$0xf]
        %v1008 = vld [vmem:[%s993 + $0x38] sm:$0xf]
        %v1009 = vld [vmem:[%s993 + $0x3c] sm:$0xf]
        %v1010 = vld [vmem:[%s993 + $0x40] sm:$0xf]
        %v1011 = vld [vmem:[%s993 + $0x44] sm:$0xf]
        %v1012 = vld [vmem:[%s993 + $0x48] sm:$0xf]
        %v1013 = vld [vmem:[%s993 + $0x4c] sm:$0xf]
        %v1014 = vld [vmem:[%s993 + $0x50] sm:$0xf]
        %v1015 = vld [vmem:[%s993 + $0x54] sm:$0xf]
        %v1016 = vld [vmem:[%s993 + $0x58] sm:$0xf]
        %v1017 = vld [vmem:[%s993 + $0x5c] sm:$0xf]
        %v1018 = vld [vmem:[%s993 + $0x60] sm:$0xf]
        %v1019 = vld [vmem:[%s993 + $0x64] sm:$0xf]
        %v1020 = vld [vmem:[%s993 + $0x68] sm:$0xf]
        %v1021 = vld [vmem:[%s993 + $0x6c] sm:$0xf]
        %v1022 = vld [vmem:[%s993 + $0x70] sm:$0xf]
        %v1023 = vld [vmem:[%s993 + $0x74] sm:$0xf]
        %v1024 = vld [vmem:[%s993 + $0x78] sm:$0xf]
        %v1025 = vld [vmem:[%s993 + $0x7c] sm:$0xf]
        %v1026 = vld [vmem:[%s993 + $0x80] sm:$0xf]
        %v1027 = vld [vmem:[%s993 + $0x84] sm:$0xf]
        %v1028 = vld [vmem:[%s993 + $0x88] sm:$0xf]
        %v1029 = vld [vmem:[%s993 + $0x8c] sm:$0xf]
        %v1030 = vld [vmem:[%s993 + $0x90] sm:$0xf]
        %v1031 = vld [vmem:[%s993 + $0x94] sm:$0xf]
        %v1032 = vld [vmem:[%s993 + $0x98] sm:$0xf]
        %v1033 = vld [vmem:[%s993 + $0x9c] sm:$0xf]
        %v1034 = vld [vmem:[%s993 + $0xa0] sm:$0xf]
        %v1035 = vld [vmem:[%s993 + $0xa4] sm:$0xf]
        %v1036 = vld [vmem:[%s993 + $0xa8] sm:$0xf]
        %v1037 = vld [vmem:[%s993 + $0xac] sm:$0xf]
        %v1038 = vld [vmem:[%s993 + $0xb0] sm:$0xf]
        %v1039 = vld [vmem:[%s993 + $0xb4] sm:$0xf]
        %v1040 = vld [vmem:[%s993 + $0xb8] sm:$0xf]
        %v1041 = vld [vmem:[%s993 + $0xbc] sm:$0xf]
        %v1042 = vld [vmem:[%s993 + $0xc0] sm:$0xf]
        %v1043 = vld [vmem:[%s993 + $0xc4] sm:$0xf]
        %v1044 = vld [vmem:[%s993 + $0xc8] sm:$0xf]
        %v1045 = vld [vmem:[%s993 + $0xcc] sm:$0xf]
        %v1046 = vld [vmem:[%s993 + $0xd0] sm:$0xf]
        %v1047 = vld [vmem:[%s993 + $0xd4] sm:$0xf]
        %v1048 = vld [vmem:[%s993 + $0xd8] sm:$0xf]
        %v1049 = vld [vmem:[%s993 + $0xdc] sm:$0xf]
        %v1050 = vld [vmem:[%s993 + $0xe0] sm:$0xf]
        %v1051 = vld [vmem:[%s993 + $0xe4] sm:$0xf]
        %v1052 = vld [vmem:[%s993 + $0xe8] sm:$0xf]
        %v1053 = vld [vmem:[%s993 + $0xec] sm:$0xf]
        %v1054 = vld [vmem:[%s993 + $0xf0] sm:$0xf]
        %v1055 = vld [vmem:[%s993 + $0xf4] sm:$0xf]
        %v1056 = vld [vmem:[%s993 + $0xf8] sm:$0xf]
        %v1057 = vld [vmem:[%s993 + $0xfc] sm:$0xf]
        %v1122 = vunpack.c.l.b16 %v994
        %v1123 = vunpack.c.l.b16 %v995
        %v1124 = vunpack.c.l.b16 %v996
        %v1125 = vunpack.c.l.b16 %v997
        %v1126 = vunpack.c.l.b16 %v998
        %v1127 = vunpack.c.l.b16 %v999
        %v1128 = vunpack.c.l.b16 %v1000
        %v1129 = vunpack.c.l.b16 %v1001
        %v1130 = vunpack.c.l.b16 %v1002
        %v1131 = vunpack.c.l.b16 %v1003
        %v1132 = vunpack.c.l.b16 %v1004
        %v1133 = vunpack.c.l.b16 %v1005
        %v1134 = vunpack.c.l.b16 %v1006
        %v1135 = vunpack.c.l.b16 %v1007
        %v1136 = vunpack.c.l.b16 %v1008
        %v1137 = vunpack.c.l.b16 %v1009
        %v1138 = vunpack.c.l.b16 %v1010
        %v1139 = vunpack.c.l.b16 %v1011
        %v1140 = vunpack.c.l.b16 %v1012
        %v1141 = vunpack.c.l.b16 %v1013
        %v1142 = vunpack.c.l.b16 %v1014
        %v1143 = vunpack.c.l.b16 %v1015
        %v1144 = vunpack.c.l.b16 %v1016
        %v1145 = vunpack.c.l.b16 %v1017
        %v1146 = vunpack.c.l.b16 %v1018
        %v1147 = vunpack.c.l.b16 %v1019
        %v1148 = vunpack.c.l.b16 %v1020
        %v1149 = vunpack.c.l.b16 %v1021
        %v1150 = vunpack.c.l.b16 %v1022
        %v1151 = vunpack.c.l.b16 %v1023
        %v1152 = vunpack.c.l.b16 %v1024
        %v1153 = vunpack.c.l.b16 %v1025
        %v1154 = vunpack.c.l.b16 %v1026
        %v1155 = vunpack.c.l.b16 %v1027
        %v1156 = vunpack.c.l.b16 %v1028
        %v1157 = vunpack.c.l.b16 %v1029
        %v1158 = vunpack.c.l.b16 %v1030
        %v1159 = vunpack.c.l.b16 %v1031
        %v1160 = vunpack.c.l.b16 %v1032
        %v1161 = vunpack.c.l.b16 %v1033
        %v1162 = vunpack.c.l.b16 %v1034
        %v1163 = vunpack.c.l.b16 %v1035
        %v1164 = vunpack.c.l.b16 %v1036
        %v1165 = vunpack.c.l.b16 %v1037
        %v1166 = vunpack.c.l.b16 %v1038
        %v1167 = vunpack.c.l.b16 %v1039
        %v1168 = vunpack.c.l.b16 %v1040
        %v1169 = vunpack.c.l.b16 %v1041
        %v1170 = vunpack.c.l.b16 %v1042
        %v1171 = vunpack.c.l.b16 %v1043
        %v1172 = vunpack.c.l.b16 %v1044
        %v1173 = vunpack.c.l.b16 %v1045
        %v1174 = vunpack.c.l.b16 %v1046
        %v1175 = vunpack.c.l.b16 %v1047
        %v1176 = vunpack.c.l.b16 %v1048
        %v1177 = vunpack.c.l.b16 %v1049
        %v1178 = vunpack.c.l.b16 %v1050
        %v1179 = vunpack.c.l.b16 %v1051
        %v1180 = vunpack.c.l.b16 %v1052
        %v1181 = vunpack.c.l.b16 %v1053
        %v1182 = vunpack.c.l.b16 %v1054
        %v1183 = vunpack.c.l.b16 %v1055
        %v1184 = vunpack.c.l.b16 %v1056
        %v1185 = vunpack.c.l.b16 %v1057
        %v1186 = vpack.c.b16 %v1123, %v1122
        %v1187 = vpack.c.b16 %v1125, %v1124
        %v1188 = vpack.c.b16 %v1127, %v1126
        %v1189 = vpack.c.b16 %v1129, %v1128
        %v1190 = vpack.c.b16 %v1131, %v1130
        %v1191 = vpack.c.b16 %v1133, %v1132
        %v1192 = vpack.c.b16 %v1135, %v1134
        %v1193 = vpack.c.b16 %v1137, %v1136
        %v1194 = vpack.c.b16 %v1139, %v1138
        %v1195 = vpack.c.b16 %v1141, %v1140
        %v1196 = vpack.c.b16 %v1143, %v1142
        %v1197 = vpack.c.b16 %v1145, %v1144
        %v1198 = vpack.c.b16 %v1147, %v1146
        %v1199 = vpack.c.b16 %v1149, %v1148
        %v1200 = vpack.c.b16 %v1151, %v1150
        %v1201 = vpack.c.b16 %v1153, %v1152
        %v1202 = vpack.c.b16 %v1155, %v1154
        %v1203 = vpack.c.b16 %v1157, %v1156
        %v1204 = vpack.c.b16 %v1159, %v1158
        %v1205 = vpack.c.b16 %v1161, %v1160
        %v1206 = vpack.c.b16 %v1163, %v1162
        %v1207 = vpack.c.b16 %v1165, %v1164
        %v1208 = vpack.c.b16 %v1167, %v1166
        %v1209 = vpack.c.b16 %v1169, %v1168
        %v1210 = vpack.c.b16 %v1171, %v1170
        %v1211 = vpack.c.b16 %v1173, %v1172
        %v1212 = vpack.c.b16 %v1175, %v1174
        %v1213 = vpack.c.b16 %v1177, %v1176
        %v1214 = vpack.c.b16 %v1179, %v1178
        %v1215 = vpack.c.b16 %v1181, %v1180
        %v1216 = vpack.c.b16 %v1183, %v1182
        %v1217 = vpack.c.b16 %v1185, %v1184
        %1250 = vmatprep.subr.bf16.mxu0 0
        %1251 = vmatpush1.bf16.msra.mxu0 %v1186
        %1252 = vmatprep.subr.bf16.mxu0 0
        %1253 = vmatpush1.bf16.msra.mxu0 %v1187
        %1254 = vmatprep.subr.bf16.mxu0 0
        %1255 = vmatpush1.bf16.msra.mxu0 %v1188
        %1256 = vmatprep.subr.bf16.mxu0 0
        %1257 = vmatpush1.bf16.msra.mxu0 %v1189
        %1258 = vmatprep.subr.bf16.mxu0 0
        %1259 = vmatpush1.bf16.msra.mxu0 %v1190
        %1260 = vmatprep.subr.bf16.mxu0 0
        %1261 = vmatpush1.bf16.msra.mxu0 %v1191
        %1262 = vmatprep.subr.bf16.mxu0 0
        %1263 = vmatpush1.bf16.msra.mxu0 %v1192
        %1264 = vmatprep.subr.bf16.mxu0 0
        %1265 = vmatpush1.bf16.msra.mxu0 %v1193
        %1266 = vmatprep.subr.bf16.mxu0 0
        %1267 = vmatpush1.bf16.msra.mxu0 %v1194
        %1268 = vmatprep.subr.bf16.mxu0 0
        %1269 = vmatpush1.bf16.msra.mxu0 %v1195
        %1270 = vmatprep.subr.bf16.mxu0 0
        %1271 = vmatpush1.bf16.msra.mxu0 %v1196
        %1272 = vmatprep.subr.bf16.mxu0 0
        %1273 = vmatpush1.bf16.msra.mxu0 %v1197
        %1274 = vmatprep.subr.bf16.mxu0 0
        %1275 = vmatpush1.bf16.msra.mxu0 %v1198
        %1276 = vmatprep.subr.bf16.mxu0 0
        %1277 = vmatpush1.bf16.msra.mxu0 %v1199
        %1278 = vmatprep.subr.bf16.mxu0 0
        %1279 = vmatpush1.bf16.msra.mxu0 %v1200
        %1280 = vmatprep.subr.bf16.mxu0 0
        %1281 = vmatpush1.bf16.msra.mxu0 %v1201
        %1282 = vmatprep.mubr.bf16.mxu0 %v799
        %1283 = vmatmul.mubr.bf16.gmra.mrb[0].mxu0 %v798
        %v1284 = vpop.f32.mrb[0].mxu0
        %v1285 = vadd.f32 0.0, %v1284
        %v1286 = vpop.f32.mrb[0].mxu0
        %v1287 = vpop.f32.mrb[0].mxu0
        %v1288 = vadd.f32 0.0, %v1287
        %v1289 = vpop.f32.mrb[0].mxu0
        %1290 = vmatprep.mubr.bf16.mxu0 %v803
        %1291 = vmatmul.mubr.bf16.gmra.mrb[0].mxu0 %v802
        %v1292 = vpop.f32.mrb[0].mxu0
        %v1293 = vadd.f32 0.0, %v1292
        %v1294 = vpop.f32.mrb[0].mxu0
        %v1295 = vpop.f32.mrb[0].mxu0
        %v1296 = vadd.f32 0.0, %v1295
        %v1297 = vpop.f32.mrb[0].mxu0
        %1298 = vmatprep.mubr.bf16.mxu0 %v807
        %1299 = vmatmul.mubr.bf16.gmra.mrb[0].mxu0 %v806
        %v1300 = vpop.f32.mrb[0].mxu0
        %v1301 = vadd.f32 0.0, %v1300
        %v1302 = vpop.f32.mrb[0].mxu0
        %v1303 = vpop.f32.mrb[0].mxu0
        %v1304 = vadd.f32 0.0, %v1303
        %v1305 = vpop.f32.mrb[0].mxu0
        %1306 = vmatprep.mubr.bf16.mxu0 %v811
        %1307 = vmatmul.mubr.bf16.gmra.mrb[0].mxu0 %v810
        %v1308 = vpop.f32.mrb[0].mxu0
        %v1309 = vadd.f32 0.0, %v1308
        %v1310 = vpop.f32.mrb[0].mxu0
        %v1311 = vpop.f32.mrb[0].mxu0
        %v1312 = vadd.f32 0.0, %v1311
        %v1313 = vpop.f32.mrb[0].mxu0
        %1314 = vmatprep.mubr.bf16.mxu0 %v815
        %1315 = vmatmul.mubr.bf16.gmra.mrb[0].mxu0 %v814
        %v1316 = vpop.f32.mrb[0].mxu0
        %v1317 = vadd.f32 0.0, %v1316
        %v1318 = vpop.f32.mrb[0].mxu0
        %v1319 = vpop.f32.mrb[0].mxu0
        %v1320 = vadd.f32 0.0, %v1319
        %v1321 = vpop.f32.mrb[0].mxu0
        %1322 = vmatprep.mubr.bf16.mxu0 %v819
        %1323 = vmatmul.mubr.bf16.gmra.mrb[0].mxu0 %v818
        %v1324 = vpop.f32.mrb[0].mxu0
        %v1325 = vadd.f32 0.0, %v1324
        %v1326 = vpop.f32.mrb[0].mxu0
        %v1327 = vpop.f32.mrb[0].mxu0
        %v1328 = vadd.f32 0.0, %v1327
        %v1329 = vpop.f32.mrb[0].mxu0
        %1330 = vmatprep.mubr.bf16.mxu0 %v823
        %1331 = vmatmul.mubr.bf16.gmra.mrb[0].mxu0 %v822
        %v1332 = vpop.f32.mrb[0].mxu0
        %v1333 = vadd.f32 0.0, %v1332
        %v1334 = vpop.f32.mrb[0].mxu0
        %v1335 = vpop.f32.mrb[0].mxu0
        %v1336 = vadd.f32 0.0, %v1335
        %v1337 = vpop.f32.mrb[0].mxu0
        %1338 = vmatprep.mubr.bf16.mxu0 %v827
        %1339 = vmatmul.mubr.bf16.gmra.mrb[0].mxu0 %v826
        %v1340 = vpop.f32.mrb[0].mxu0
        %v1341 = vadd.f32 0.0, %v1340
        %v1342 = vpop.f32.mrb[0].mxu0
        %v1343 = vpop.f32.mrb[0].mxu0
        %v1344 = vadd.f32 0.0, %v1343
        %v1345 = vpop.f32.mrb[0].mxu0
        %1346 = vmatprep.mubr.bf16.mxu0 %v831
        %1347 = vmatmul.mubr.bf16.gmra.mrb[0].mxu0 %v830
        %v1348 = vpop.f32.mrb[0].mxu0
        %v1349 = vadd.f32 0.0, %v1348
        %v1350 = vpop.f32.mrb[0].mxu0
        %v1351 = vpop.f32.mrb[0].mxu0
        %v1352 = vadd.f32 0.0, %v1351
        %v1353 = vpop.f32.mrb[0].mxu0
        %1354 = vmatprep.mubr.bf16.mxu0 %v835
        %1355 = vmatmul.mubr.bf16.gmra.mrb[0].mxu0 %v834
        %v1356 = vpop.f32.mrb[0].mxu0
        %v1357 = vadd.f32 0.0, %v1356
        %v1358 = vpop.f32.mrb[0].mxu0
        %v1359 = vpop.f32.mrb[0].mxu0
        %v1360 = vadd.f32 0.0, %v1359
        %v1361 = vpop.f32.mrb[0].mxu0
        %1362 = vmatprep.mubr.bf16.mxu0 %v839
        %1363 = vmatmul.mubr.bf16.gmra.mrb[0].mxu0 %v838
        %v1364 = vpop.f32.mrb[0].mxu0
        %v1365 = vadd.f32 0.0, %v1364
        %v1366 = vpop.f32.mrb[0].mxu0
        %v1367 = vpop.f32.mrb[0].mxu0
        %v1368 = vadd.f32 0.0, %v1367
        %v1369 = vpop.f32.mrb[0].mxu0
        %1370 = vmatprep.mubr.bf16.mxu0 %v843
        %1371 = vmatmul.mubr.bf16.gmra.mrb[0].mxu0 %v842
        %v1372 = vpop.f32.mrb[0].mxu0
        %v1373 = vadd.f32 0.0, %v1372
        %v1374 = vpop.f32.mrb[0].mxu0
        %v1375 = vpop.f32.mrb[0].mxu0
        %v1376 = vadd.f32 0.0, %v1375
        %v1377 = vpop.f32.mrb[0].mxu0
        %1378 = vmatprep.mubr.bf16.mxu0 %v847
        %1379 = vmatmul.mubr.bf16.gmra.mrb[0].mxu0 %v846
        %v1380 = vpop.f32.mrb[0].mxu0
        %v1381 = vadd.f32 0.0, %v1380
        %v1382 = vpop.f32.mrb[0].mxu0
        %v1383 = vpop.f32.mrb[0].mxu0
        %v1384 = vadd.f32 0.0, %v1383
        %v1385 = vpop.f32.mrb[0].mxu0
        %1386 = vmatprep.mubr.bf16.mxu0 %v851
        %1387 = vmatmul.mubr.bf16.gmra.mrb[0].mxu0 %v850
        %v1388 = vpop.f32.mrb[0].mxu0
        %v1389 = vadd.f32 0.0, %v1388
        %v1390 = vpop.f32.mrb[0].mxu0
        %v1391 = vpop.f32.mrb[0].mxu0
        %v1392 = vadd.f32 0.0, %v1391
        %v1393 = vpop.f32.mrb[0].mxu0
        %1394 = vmatprep.mubr.bf16.mxu0 %v855
        %1395 = vmatmul.mubr.bf16.gmra.mrb[0].mxu0 %v854
        %v1396 = vpop.f32.mrb[0].mxu0
        %v1397 = vadd.f32 0.0, %v1396
        %v1398 = vpop.f32.mrb[0].mxu0
        %v1399 = vpop.f32.mrb[0].mxu0
        %v1400 = vadd.f32 0.0, %v1399
        %v1401 = vpop.f32.mrb[0].mxu0
        %1402 = vmatprep.mubr.bf16.mxu0 %v859
        %1403 = vmatmul.mubr.bf16.gmra.mrb[0].mxu0 %v858
        %v1404 = vpop.f32.mrb[0].mxu0
        %v1405 = vadd.f32 0.0, %v1404
        %v1406 = vpop.f32.mrb[0].mxu0
        %v1407 = vpop.f32.mrb[0].mxu0
        %v1408 = vadd.f32 0.0, %v1407
        %v1409 = vpop.f32.mrb[0].mxu0
        %1410 = vmatprep.mubr.bf16.mxu0 %v863
        %1411 = vmatmul.mubr.bf16.gmra.mrb[0].mxu0 %v862
        %v1412 = vpop.f32.mrb[0].mxu0
        %v1413 = vadd.f32 0.0, %v1412
        %v1414 = vpop.f32.mrb[0].mxu0
        %v1415 = vpop.f32.mrb[0].mxu0
        %v1416 = vadd.f32 0.0, %v1415
        %v1417 = vpop.f32.mrb[0].mxu0
        %1418 = vmatprep.mubr.bf16.mxu0 %v867
        %1419 = vmatmul.mubr.bf16.gmra.mrb[0].mxu0 %v866
        %v1420 = vpop.f32.mrb[0].mxu0
        %v1421 = vadd.f32 0.0, %v1420
        %v1422 = vpop.f32.mrb[0].mxu0
        %v1423 = vpop.f32.mrb[0].mxu0
        %v1424 = vadd.f32 0.0, %v1423
        %v1425 = vpop.f32.mrb[0].mxu0
        %1426 = vmatprep.mubr.bf16.mxu0 %v871
        %1427 = vmatmul.mubr.bf16.gmra.mrb[0].mxu0 %v870
        %v1428 = vpop.f32.mrb[0].mxu0
        %v1429 = vadd.f32 0.0, %v1428
        %v1430 = vpop.f32.mrb[0].mxu0
        %v1431 = vpop.f32.mrb[0].mxu0
        %v1432 = vadd.f32 0.0, %v1431
        %v1433 = vpop.f32.mrb[0].mxu0
        %1434 = vmatprep.mubr.bf16.mxu0 %v875
        %1435 = vmatmul.mubr.bf16.gmra.mrb[0].mxu0 %v874
        %v1436 = vpop.f32.mrb[0].mxu0
        %v1437 = vadd.f32 0.0, %v1436
        %v1438 = vpop.f32.mrb[0].mxu0
        %v1439 = vpop.f32.mrb[0].mxu0
        %v1440 = vadd.f32 0.0, %v1439
        %v1441 = vpop.f32.mrb[0].mxu0
        %1442 = vmatprep.mubr.bf16.mxu0 %v879
        %1443 = vmatmul.mubr.bf16.gmra.mrb[0].mxu0 %v878
        %v1444 = vpop.f32.mrb[0].mxu0
        %v1445 = vadd.f32 0.0, %v1444
        %v1446 = vpop.f32.mrb[0].mxu0
        %v1447 = vpop.f32.mrb[0].mxu0
        %v1448 = vadd.f32 0.0, %v1447
        %v1449 = vpop.f32.mrb[0].mxu0
        %1450 = vmatprep.mubr.bf16.mxu0 %v883
        %1451 = vmatmul.mubr.bf16.gmra.mrb[0].mxu0 %v882
        %v1452 = vpop.f32.mrb[0].mxu0
        %v1453 = vadd.f32 0.0, %v1452
        %v1454 = vpop.f32.mrb[0].mxu0
        %v1455 = vpop.f32.mrb[0].mxu0
        %v1456 = vadd.f32 0.0, %v1455
        %v1457 = vpop.f32.mrb[0].mxu0
        %1458 = vmatprep.mubr.bf16.mxu0 %v887
        %1459 = vmatmul.mubr.bf16.gmra.mrb[0].mxu0 %v886
        %v1460 = vpop.f32.mrb[0].mxu0
        %v1461 = vadd.f32 0.0, %v1460
        %v1462 = vpop.f32.mrb[0].mxu0
        %v1463 = vpop.f32.mrb[0].mxu0
        %v1464 = vadd.f32 0.0, %v1463
        %v1465 = vpop.f32.mrb[0].mxu0
        %1466 = vmatprep.mubr.bf16.mxu0 %v891
        %1467 = vmatmul.mubr.bf16.gmra.mrb[0].mxu0 %v890
        %v1468 = vpop.f32.mrb[0].mxu0
        %v1469 = vadd.f32 0.0, %v1468
        %v1470 = vpop.f32.mrb[0].mxu0
        %v1471 = vpop.f32.mrb[0].mxu0
        %v1472 = vadd.f32 0.0, %v1471
        %v1473 = vpop.f32.mrb[0].mxu0
        %1474 = vmatprep.mubr.bf16.mxu0 %v895
        %1475 = vmatmul.mubr.bf16.gmra.mrb[0].mxu0 %v894
        %v1476 = vpop.f32.mrb[0].mxu0
        %v1477 = vadd.f32 0.0, %v1476
        %v1478 = vpop.f32.mrb[0].mxu0
        %v1479 = vpop.f32.mrb[0].mxu0
        %v1480 = vadd.f32 0.0, %v1479
        %v1481 = vpop.f32.mrb[0].mxu0
        %1482 = vmatprep.mubr.bf16.mxu0 %v899
        %1483 = vmatmul.mubr.bf16.gmra.mrb[0].mxu0 %v898
        %v1484 = vpop.f32.mrb[0].mxu0
        %v1485 = vadd.f32 0.0, %v1484
        %v1486 = vpop.f32.mrb[0].mxu0
        %v1487 = vpop.f32.mrb[0].mxu0
        %v1488 = vadd.f32 0.0, %v1487
        %v1489 = vpop.f32.mrb[0].mxu0
        %1490 = vmatprep.mubr.bf16.mxu0 %v903
        %1491 = vmatmul.mubr.bf16.gmra.mrb[0].mxu0 %v902
        %v1492 = vpop.f32.mrb[0].mxu0
        %v1493 = vadd.f32 0.0, %v1492
        %v1494 = vpop.f32.mrb[0].mxu0
        %v1495 = vpop.f32.mrb[0].mxu0
        %v1496 = vadd.f32 0.0, %v1495
        %v1497 = vpop.f32.mrb[0].mxu0
        %1498 = vmatprep.mubr.bf16.mxu0 %v907
        %1499 = vmatmul.mubr.bf16.gmra.mrb[0].mxu0 %v906
        %v1500 = vpop.f32.mrb[0].mxu0
        %v1501 = vadd.f32 0.0, %v1500
        %v1502 = vpop.f32.mrb[0].mxu0
        %v1503 = vpop.f32.mrb[0].mxu0
        %v1504 = vadd.f32 0.0, %v1503
        %v1505 = vpop.f32.mrb[0].mxu0
        %1506 = vmatprep.mubr.bf16.mxu0 %v911
        %1507 = vmatmul.mubr.bf16.gmra.mrb[0].mxu0 %v910
        %v1508 = vpop.f32.mrb[0].mxu0
        %v1509 = vadd.f32 0.0, %v1508
        %v1510 = vpop.f32.mrb[0].mxu0
        %v1511 = vpop.f32.mrb[0].mxu0
        %v1512 = vadd.f32 0.0, %v1511
        %v1513 = vpop.f32.mrb[0].mxu0
        %1514 = vmatprep.mubr.bf16.mxu0 %v915
        %1515 = vmatmul.mubr.bf16.gmra.mrb[0].mxu0 %v914
        %v1516 = vpop.f32.mrb[0].mxu0
        %v1517 = vadd.f32 0.0, %v1516
        %v1518 = vpop.f32.mrb[0].mxu0
        %v1519 = vpop.f32.mrb[0].mxu0
        %v1520 = vadd.f32 0.0, %v1519
        %v1521 = vpop.f32.mrb[0].mxu0
        %1522 = vmatprep.mubr.bf16.mxu0 %v919
        %1523 = vmatmul.mubr.bf16.gmra.mrb[0].mxu0 %v918
        %v1524 = vpop.f32.mrb[0].mxu0
        %v1525 = vadd.f32 0.0, %v1524
        %v1526 = vpop.f32.mrb[0].mxu0
        %v1527 = vpop.f32.mrb[0].mxu0
        %v1528 = vadd.f32 0.0, %v1527
        %v1529 = vpop.f32.mrb[0].mxu0
        %1530 = vmatprep.mubr.bf16.mxu0 %v923
        %1531 = vmatmul.mubr.bf16.gmra.mrb[0].mxu0 %v922
        %v1532 = vpop.f32.mrb[0].mxu0
        %v1533 = vadd.f32 0.0, %v1532
        %v1534 = vpop.f32.mrb[0].mxu0
        %v1535 = vpop.f32.mrb[0].mxu0
        %v1536 = vadd.f32 0.0, %v1535
        %v1537 = vpop.f32.mrb[0].mxu0
        %1538 = vdwg.mxu0
        %1539 = vmatprep.subr.bf16.mxu0 0
        %1540 = vmatpush1.bf16.msra.mxu0 %v1202
        %1541 = vmatprep.subr.bf16.mxu0 0
        %1542 = vmatpush1.bf16.msra.mxu0 %v1203
        %1543 = vmatprep.subr.bf16.mxu0 0
        %1544 = vmatpush1.bf16.msra.mxu0 %v1204
        %1545 = vmatprep.subr.bf16.mxu0 0
        %1546 = vmatpush1.bf16.msra.mxu0 %v1205
        %1547 = vmatprep.subr.bf16.mxu0 0
        %1548 = vmatpush1.bf16.msra.mxu0 %v1206
        %1549 = vmatprep.subr.bf16.mxu0 0
        %1550 = vmatpush1.bf16.msra.mxu0 %v1207
        %1551 = vmatprep.subr.bf16.mxu0 0
        %1552 = vmatpush1.bf16.msra.mxu0 %v1208
        %1553 = vmatprep.subr.bf16.mxu0 0
        %1554 = vmatpush1.bf16.msra.mxu0 %v1209
        %1555 = vmatprep.subr.bf16.mxu0 0
        %1556 = vmatpush1.bf16.msra.mxu0 %v1210
        %1557 = vmatprep.subr.bf16.mxu0 0
        %1558 = vmatpush1.bf16.msra.mxu0 %v1211
        %1559 = vmatprep.subr.bf16.mxu0 0
        %1560 = vmatpush1.bf16.msra.mxu0 %v1212
        %1561 = vmatprep.subr.bf16.mxu0 0
        %1562 = vmatpush1.bf16.msra.mxu0 %v1213
        %1563 = vmatprep.subr.bf16.mxu0 0
        %1564 = vmatpush1.bf16.msra.mxu0 %v1214
        %1565 = vmatprep.subr.bf16.mxu0 0
        %1566 = vmatpush1.bf16.msra.mxu0 %v1215
        %1567 = vmatprep.subr.bf16.mxu0 0
        %1568 = vmatpush1.bf16.msra.mxu0 %v1216
        %1569 = vmatprep.subr.bf16.mxu0 0
        %1570 = vmatpush1.bf16.msra.mxu0 %v1217
        %1571 = vmatprep.mubr.bf16.mxu0 %v801
        %1572 = vmatmul.mubr.bf16.gmra.mrb[0].mxu0 %v800
        %v1573 = vpop.f32.mrb[0].mxu0
        %v1574 = vadd.f32 %v1285, %v1573
        %v1575 = vpop.f32.mrb[0].mxu0
        %v1576 = vpop.f32.mrb[0].mxu0
        %v1577 = vadd.f32 %v1288, %v1576
        %v1578 = vpop.f32.mrb[0].mxu0
        %1579 = vmatprep.mubr.bf16.mxu0 %v805
        %1580 = vmatmul.mubr.bf16.gmra.mrb[0].mxu0 %v804
        %v1581 = vpop.f32.mrb[0].mxu0
        %v1582 = vadd.f32 %v1293, %v1581
        %v1583 = vpop.f32.mrb[0].mxu0
        %v1584 = vpop.f32.mrb[0].mxu0
        %v1585 = vadd.f32 %v1296, %v1584
        %v1586 = vpop.f32.mrb[0].mxu0
        %1587 = vmatprep.mubr.bf16.mxu0 %v809
        %1588 = vmatmul.mubr.bf16.gmra.mrb[0].mxu0 %v808
        %v1589 = vpop.f32.mrb[0].mxu0
        %v1590 = vadd.f32 %v1301, %v1589
        %v1591 = vpop.f32.mrb[0].mxu0
        %v1592 = vpop.f32.mrb[0].mxu0
        %v1593 = vadd.f32 %v1304, %v1592
        %v1594 = vpop.f32.mrb[0].mxu0
        %1595 = vmatprep.mubr.bf16.mxu0 %v813
        %1596 = vmatmul.mubr.bf16.gmra.mrb[0].mxu0 %v812
        %v1597 = vpop.f32.mrb[0].mxu0
        %v1598 = vadd.f32 %v1309, %v1597
        %v1599 = vpop.f32.mrb[0].mxu0
        %v1600 = vpop.f32.mrb[0].mxu0
        %v1601 = vadd.f32 %v1312, %v1600
        %v1602 = vpop.f32.mrb[0].mxu0
        %1603 = vmatprep.mubr.bf16.mxu0 %v817
        %1604 = vmatmul.mubr.bf16.gmra.mrb[0].mxu0 %v816
        %v1605 = vpop.f32.mrb[0].mxu0
        %v1606 = vadd.f32 %v1317, %v1605
        %v1607 = vpop.f32.mrb[0].mxu0
        %v1608 = vpop.f32.mrb[0].mxu0
        %v1609 = vadd.f32 %v1320, %v1608
        %v1610 = vpop.f32.mrb[0].mxu0
        %1611 = vmatprep.mubr.bf16.mxu0 %v821
        %1612 = vmatmul.mubr.bf16.gmra.mrb[0].mxu0 %v820
        %v1613 = vpop.f32.mrb[0].mxu0
        %v1614 = vadd.f32 %v1325, %v1613
        %v1615 = vpop.f32.mrb[0].mxu0
        %v1616 = vpop.f32.mrb[0].mxu0
        %v1617 = vadd.f32 %v1328, %v1616
        %v1618 = vpop.f32.mrb[0].mxu0
        %1619 = vmatprep.mubr.bf16.mxu0 %v825
        %1620 = vmatmul.mubr.bf16.gmra.mrb[0].mxu0 %v824
        %v1621 = vpop.f32.mrb[0].mxu0
        %v1622 = vadd.f32 %v1333, %v1621
        %v1623 = vpop.f32.mrb[0].mxu0
        %v1624 = vpop.f32.mrb[0].mxu0
        %v1625 = vadd.f32 %v1336, %v1624
        %v1626 = vpop.f32.mrb[0].mxu0
        %1627 = vmatprep.mubr.bf16.mxu0 %v829
        %1628 = vmatmul.mubr.bf16.gmra.mrb[0].mxu0 %v828
        %v1629 = vpop.f32.mrb[0].mxu0
        %v1630 = vadd.f32 %v1341, %v1629
        %v1631 = vpop.f32.mrb[0].mxu0
        %v1632 = vpop.f32.mrb[0].mxu0
        %v1633 = vadd.f32 %v1344, %v1632
        %v1634 = vpop.f32.mrb[0].mxu0
        %1635 = vmatprep.mubr.bf16.mxu0 %v833
        %1636 = vmatmul.mubr.bf16.gmra.mrb[0].mxu0 %v832
        %v1637 = vpop.f32.mrb[0].mxu0
        %v1638 = vadd.f32 %v1349, %v1637
        %v1639 = vpop.f32.mrb[0].mxu0
        %v1640 = vpop.f32.mrb[0].mxu0
        %v1641 = vadd.f32 %v1352, %v1640
        %v1642 = vpop.f32.mrb[0].mxu0
        %1643 = vmatprep.mubr.bf16.mxu0 %v837
        %1644 = vmatmul.mubr.bf16.gmra.mrb[0].mxu0 %v836
        %v1645 = vpop.f32.mrb[0].mxu0
        %v1646 = vadd.f32 %v1357, %v1645
        %v1647 = vpop.f32.mrb[0].mxu0
        %v1648 = vpop.f32.mrb[0].mxu0
        %v1649 = vadd.f32 %v1360, %v1648
        %v1650 = vpop.f32.mrb[0].mxu0
        %1651 = vmatprep.mubr.bf16.mxu0 %v841
        %1652 = vmatmul.mubr.bf16.gmra.mrb[0].mxu0 %v840
        %v1653 = vpop.f32.mrb[0].mxu0
        %v1654 = vadd.f32 %v1365, %v1653
        %v1655 = vpop.f32.mrb[0].mxu0
        %v1656 = vpop.f32.mrb[0].mxu0
        %v1657 = vadd.f32 %v1368, %v1656
        %v1658 = vpop.f32.mrb[0].mxu0
        %1659 = vmatprep.mubr.bf16.mxu0 %v845
        %1660 = vmatmul.mubr.bf16.gmra.mrb[0].mxu0 %v844
        %v1661 = vpop.f32.mrb[0].mxu0
        %v1662 = vadd.f32 %v1373, %v1661
        %v1663 = vpop.f32.mrb[0].mxu0
        %v1664 = vpop.f32.mrb[0].mxu0
        %v1665 = vadd.f32 %v1376, %v1664
        %v1666 = vpop.f32.mrb[0].mxu0
        %1667 = vmatprep.mubr.bf16.mxu0 %v849
        %1668 = vmatmul.mubr.bf16.gmra.mrb[0].mxu0 %v848
        %v1669 = vpop.f32.mrb[0].mxu0
        %v1670 = vadd.f32 %v1381, %v1669
        %v1671 = vpop.f32.mrb[0].mxu0
        %v1672 = vpop.f32.mrb[0].mxu0
        %v1673 = vadd.f32 %v1384, %v1672
        %v1674 = vpop.f32.mrb[0].mxu0
        %1675 = vmatprep.mubr.bf16.mxu0 %v853
        %1676 = vmatmul.mubr.bf16.gmra.mrb[0].mxu0 %v852
        %v1677 = vpop.f32.mrb[0].mxu0
        %v1678 = vadd.f32 %v1389, %v1677
        %v1679 = vpop.f32.mrb[0].mxu0
        %v1680 = vpop.f32.mrb[0].mxu0
        %v1681 = vadd.f32 %v1392, %v1680
        %v1682 = vpop.f32.mrb[0].mxu0
        %1683 = vmatprep.mubr.bf16.mxu0 %v857
        %1684 = vmatmul.mubr.bf16.gmra.mrb[0].mxu0 %v856
        %v1685 = vpop.f32.mrb[0].mxu0
        %v1686 = vadd.f32 %v1397, %v1685
        %v1687 = vpop.f32.mrb[0].mxu0
        %v1688 = vpop.f32.mrb[0].mxu0
        %v1689 = vadd.f32 %v1400, %v1688
        %v1690 = vpop.f32.mrb[0].mxu0
        %1691 = vmatprep.mubr.bf16.mxu0 %v861
        %1692 = vmatmul.mubr.bf16.gmra.mrb[0].mxu0 %v860
        %v1693 = vpop.f32.mrb[0].mxu0
        %v1694 = vadd.f32 %v1405, %v1693
        %v1695 = vpop.f32.mrb[0].mxu0
        %v1696 = vpop.f32.mrb[0].mxu0
        %v1697 = vadd.f32 %v1408, %v1696
        %v1698 = vpop.f32.mrb[0].mxu0
        %1699 = vmatprep.mubr.bf16.mxu0 %v865
        %1700 = vmatmul.mubr.bf16.gmra.mrb[0].mxu0 %v864
        %v1701 = vpop.f32.mrb[0].mxu0
        %v1702 = vadd.f32 %v1413, %v1701
        %v1703 = vpop.f32.mrb[0].mxu0
        %v1704 = vpop.f32.mrb[0].mxu0
        %v1705 = vadd.f32 %v1416, %v1704
        %v1706 = vpop.f32.mrb[0].mxu0
        %1707 = vmatprep.mubr.bf16.mxu0 %v869
        %1708 = vmatmul.mubr.bf16.gmra.mrb[0].mxu0 %v868
        %v1709 = vpop.f32.mrb[0].mxu0
        %v1710 = vadd.f32 %v1421, %v1709
        %v1711 = vpop.f32.mrb[0].mxu0
        %v1712 = vpop.f32.mrb[0].mxu0
        %v1713 = vadd.f32 %v1424, %v1712
        %v1714 = vpop.f32.mrb[0].mxu0
        %1715 = vmatprep.mubr.bf16.mxu0 %v873
        %1716 = vmatmul.mubr.bf16.gmra.mrb[0].mxu0 %v872
        %v1717 = vpop.f32.mrb[0].mxu0
        %v1718 = vadd.f32 %v1429, %v1717
        %v1719 = vpop.f32.mrb[0].mxu0
        %v1720 = vpop.f32.mrb[0].mxu0
        %v1721 = vadd.f32 %v1432, %v1720
        %v1722 = vpop.f32.mrb[0].mxu0
        %1723 = vmatprep.mubr.bf16.mxu0 %v877
        %1724 = vmatmul.mubr.bf16.gmra.mrb[0].mxu0 %v876
        %v1725 = vpop.f32.mrb[0].mxu0
        %v1726 = vadd.f32 %v1437, %v1725
        %v1727 = vpop.f32.mrb[0].mxu0
        %v1728 = vpop.f32.mrb[0].mxu0
        %v1729 = vadd.f32 %v1440, %v1728
        %v1730 = vpop.f32.mrb[0].mxu0
        %1731 = vmatprep.mubr.bf16.mxu0 %v881
        %1732 = vmatmul.mubr.bf16.gmra.mrb[0].mxu0 %v880
        %v1733 = vpop.f32.mrb[0].mxu0
        %v1734 = vadd.f32 %v1445, %v1733
        %v1735 = vpop.f32.mrb[0].mxu0
        %v1736 = vpop.f32.mrb[0].mxu0
        %v1737 = vadd.f32 %v1448, %v1736
        %v1738 = vpop.f32.mrb[0].mxu0
        %1739 = vmatprep.mubr.bf16.mxu0 %v885
        %1740 = vmatmul.mubr.bf16.gmra.mrb[0].mxu0 %v884
        %v1741 = vpop.f32.mrb[0].mxu0
        %v1742 = vadd.f32 %v1453, %v1741
        %v1743 = vpop.f32.mrb[0].mxu0
        %v1744 = vpop.f32.mrb[0].mxu0
        %v1745 = vadd.f32 %v1456, %v1744
        %v1746 = vpop.f32.mrb[0].mxu0
        %1747 = vmatprep.mubr.bf16.mxu0 %v889
        %1748 = vmatmul.mubr.bf16.gmra.mrb[0].mxu0 %v888
        %v1749 = vpop.f32.mrb[0].mxu0
        %v1750 = vadd.f32 %v1461, %v1749
        %v1751 = vpop.f32.mrb[0].mxu0
        %v1752 = vpop.f32.mrb[0].mxu0
        %v1753 = vadd.f32 %v1464, %v1752
        %v1754 = vpop.f32.mrb[0].mxu0
        %1755 = vmatprep.mubr.bf16.mxu0 %v893
        %1756 = vmatmul.mubr.bf16.gmra.mrb[0].mxu0 %v892
        %v1757 = vpop.f32.mrb[0].mxu0
        %v1758 = vadd.f32 %v1469, %v1757
        %v1759 = vpop.f32.mrb[0].mxu0
        %v1760 = vpop.f32.mrb[0].mxu0
        %v1761 = vadd.f32 %v1472, %v1760
        %v1762 = vpop.f32.mrb[0].mxu0
        %1763 = vmatprep.mubr.bf16.mxu0 %v897
        %1764 = vmatmul.mubr.bf16.gmra.mrb[0].mxu0 %v896
        %v1765 = vpop.f32.mrb[0].mxu0
        %v1766 = vadd.f32 %v1477, %v1765
        %v1767 = vpop.f32.mrb[0].mxu0
        %v1768 = vpop.f32.mrb[0].mxu0
        %v1769 = vadd.f32 %v1480, %v1768
        %v1770 = vpop.f32.mrb[0].mxu0
        %1771 = vmatprep.mubr.bf16.mxu0 %v901
        %1772 = vmatmul.mubr.bf16.gmra.mrb[0].mxu0 %v900
        %v1773 = vpop.f32.mrb[0].mxu0
        %v1774 = vadd.f32 %v1485, %v1773
        %v1775 = vpop.f32.mrb[0].mxu0
        %v1776 = vpop.f32.mrb[0].mxu0
        %v1777 = vadd.f32 %v1488, %v1776
        %v1778 = vpop.f32.mrb[0].mxu0
        %1779 = vmatprep.mubr.bf16.mxu0 %v905
        %1780 = vmatmul.mubr.bf16.gmra.mrb[0].mxu0 %v904
        %v1781 = vpop.f32.mrb[0].mxu0
        %v1782 = vadd.f32 %v1493, %v1781
        %v1783 = vpop.f32.mrb[0].mxu0
        %v1784 = vpop.f32.mrb[0].mxu0
        %v1785 = vadd.f32 %v1496, %v1784
        %v1786 = vpop.f32.mrb[0].mxu0
        %1787 = vmatprep.mubr.bf16.mxu0 %v909
        %1788 = vmatmul.mubr.bf16.gmra.mrb[0].mxu0 %v908
        %v1789 = vpop.f32.mrb[0].mxu0
        %v1790 = vadd.f32 %v1501, %v1789
        %v1791 = vpop.f32.mrb[0].mxu0
        %v1792 = vpop.f32.mrb[0].mxu0
        %v1793 = vadd.f32 %v1504, %v1792
        %v1794 = vpop.f32.mrb[0].mxu0
        %1795 = vmatprep.mubr.bf16.mxu0 %v913
        %1796 = vmatmul.mubr.bf16.gmra.mrb[0].mxu0 %v912
        %v1797 = vpop.f32.mrb[0].mxu0
        %v1798 = vadd.f32 %v1509, %v1797
        %v1799 = vpop.f32.mrb[0].mxu0
        %v1800 = vpop.f32.mrb[0].mxu0
        %v1801 = vadd.f32 %v1512, %v1800
        %v1802 = vpop.f32.mrb[0].mxu0
        %1803 = vmatprep.mubr.bf16.mxu0 %v917
        %1804 = vmatmul.mubr.bf16.gmra.mrb[0].mxu0 %v916
        %v1805 = vpop.f32.mrb[0].mxu0
        %v1806 = vadd.f32 %v1517, %v1805
        %v1807 = vpop.f32.mrb[0].mxu0
        %v1808 = vpop.f32.mrb[0].mxu0
        %v1809 = vadd.f32 %v1520, %v1808
        %v1810 = vpop.f32.mrb[0].mxu0
        %1811 = vmatprep.mubr.bf16.mxu0 %v921
        %1812 = vmatmul.mubr.bf16.gmra.mrb[0].mxu0 %v920
        %v1813 = vpop.f32.mrb[0].mxu0
        %v1814 = vadd.f32 %v1525, %v1813
        %v1815 = vpop.f32.mrb[0].mxu0
        %v1816 = vpop.f32.mrb[0].mxu0
        %v1817 = vadd.f32 %v1528, %v1816
        %v1818 = vpop.f32.mrb[0].mxu0
        %1819 = vmatprep.mubr.bf16.mxu0 %v925
        %1820 = vmatmul.mubr.bf16.gmra.mrb[0].mxu0 %v924
        %v1821 = vpop.f32.mrb[0].mxu0
        %v1822 = vadd.f32 %v1533, %v1821
        %v1823 = vpop.f32.mrb[0].mxu0
        %v1824 = vpop.f32.mrb[0].mxu0
        %v1825 = vadd.f32 %v1536, %v1824
        %v1826 = vpop.f32.mrb[0].mxu0
        %1827 = vdwg.mxu0
        %v1828 = vadd.f32 %v926, %v1574
        %v1829 = vadd.f32 %v927, %v1577
        %v1830 = vadd.f32 %v928, %v1582
        %v1831 = vadd.f32 %v929, %v1585
        %v1832 = vadd.f32 %v930, %v1590
        %v1833 = vadd.f32 %v931, %v1593
        %v1834 = vadd.f32 %v932, %v1598
        %v1835 = vadd.f32 %v933, %v1601
        %v1836 = vadd.f32 %v934, %v1606
        %v1837 = vadd.f32 %v935, %v1609
        %v1838 = vadd.f32 %v936, %v1614
        %v1839 = vadd.f32 %v937, %v1617
        %v1840 = vadd.f32 %v938, %v1622
        %v1841 = vadd.f32 %v939, %v1625
        %v1842 = vadd.f32 %v940, %v1630
        %v1843 = vadd.f32 %v941, %v1633
        %v1844 = vadd.f32 %v942, %v1638
        %v1845 = vadd.f32 %v943, %v1641
        %v1846 = vadd.f32 %v944, %v1646
        %v1847 = vadd.f32 %v945, %v1649
        %v1848 = vadd.f32 %v946, %v1654
        %v1849 = vadd.f32 %v947, %v1657
        %v1850 = vadd.f32 %v948, %v1662
        %v1851 = vadd.f32 %v949, %v1665
        %v1852 = vadd.f32 %v950, %v1670
        %v1853 = vadd.f32 %v951, %v1673
        %v1854 = vadd.f32 %v952, %v1678
        %v1855 = vadd.f32 %v953, %v1681
        %v1856 = vadd.f32 %v954, %v1686
        %v1857 = vadd.f32 %v955, %v1689
        %v1858 = vadd.f32 %v956, %v1694
        %v1859 = vadd.f32 %v957, %v1697
        %v1860 = vadd.f32 %v958, %v1702
        %v1861 = vadd.f32 %v959, %v1705
        %v1862 = vadd.f32 %v960, %v1710
        %v1863 = vadd.f32 %v961, %v1713
        %v1864 = vadd.f32 %v962, %v1718
        %v1865 = vadd.f32 %v963, %v1721
        %v1866 = vadd.f32 %v964, %v1726
        %v1867 = vadd.f32 %v965, %v1729
        %v1868 = vadd.f32 %v966, %v1734
        %v1869 = vadd.f32 %v967, %v1737
        %v1870 = vadd.f32 %v968, %v1742
        %v1871 = vadd.f32 %v969, %v1745
        %v1872 = vadd.f32 %v970, %v1750
        %v1873 = vadd.f32 %v971, %v1753
        %v1874 = vadd.f32 %v972, %v1758
        %v1875 = vadd.f32 %v973, %v1761
        %v1876 = vadd.f32 %v974, %v1766
        %v1877 = vadd.f32 %v975, %v1769
        %v1878 = vadd.f32 %v976, %v1774
        %v1879 = vadd.f32 %v977, %v1777
        %v1880 = vadd.f32 %v978, %v1782
        %v1881 = vadd.f32 %v979, %v1785
        %v1882 = vadd.f32 %v980, %v1790
        %v1883 = vadd.f32 %v981, %v1793
        %v1884 = vadd.f32 %v982, %v1798
        %v1885 = vadd.f32 %v983, %v1801
        %v1886 = vadd.f32 %v984, %v1806
        %v1887 = vadd.f32 %v985, %v1809
        %v1888 = vadd.f32 %v986, %v1814
        %v1889 = vadd.f32 %v987, %v1817
        %v1890 = vadd.f32 %v988, %v1822
        %v1891 = vadd.f32 %v989, %v1825
        %1892 = vst [vmem:[#allocation2] sm:$0xff] %v1828
        %1893 = vst [vmem:[#allocation2 + $0x10] sm:$0xff] %v1829
        %1894 = vst [vmem:[#allocation2 + $0x20] sm:$0xff] %v1830
        %1895 = vst [vmem:[#allocation2 + $0x30] sm:$0xff] %v1831
        %1896 = vst [vmem:[#allocation2 + $0x40] sm:$0xff] %v1832
        %1897 = vst [vmem:[#allocation2 + $0x50] sm:$0xff] %v1833
        %1898 = vst [vmem:[#allocation2 + $0x60] sm:$0xff] %v1834
        %1899 = vst [vmem:[#allocation2 + $0x70] sm:$0xff] %v1835
        %1900 = vst [vmem:[#allocation2 + $0x80] sm:$0xff] %v1836
        %1901 = vst [vmem:[#allocation2 + $0x90] sm:$0xff] %v1837
        %1902 = vst [vmem:[#allocation2 + $0xa0] sm:$0xff] %v1838
        %1903 = vst [vmem:[#allocation2 + $0xb0] sm:$0xff] %v1839
        %1904 = vst [vmem:[#allocation2 + $0xc0] sm:$0xff] %v1840
        %1905 = vst [vmem:[#allocation2 + $0xd0] sm:$0xff] %v1841
        %1906 = vst [vmem:[#allocation2 + $0xe0] sm:$0xff] %v1842
        %1907 = vst [vmem:[#allocation2 + $0xf0] sm:$0xff] %v1843
        %1908 = vst [vmem:[#allocation2 + $0x100] sm:$0xff] %v1844
        %1909 = vst [vmem:[#allocation2 + $0x110] sm:$0xff] %v1845
        %1910 = vst [vmem:[#allocation2 + $0x120] sm:$0xff] %v1846
        %1911 = vst [vmem:[#allocation2 + $0x130] sm:$0xff] %v1847
        %1912 = vst [vmem:[#allocation2 + $0x140] sm:$0xff] %v1848
        %1913 = vst [vmem:[#allocation2 + $0x150] sm:$0xff] %v1849
        %1914 = vst [vmem:[#allocation2 + $0x160] sm:$0xff] %v1850
        %1915 = vst [vmem:[#allocation2 + $0x170] sm:$0xff] %v1851
        %1916 = vst [vmem:[#allocation2 + $0x180] sm:$0xff] %v1852
        %1917 = vst [vmem:[#allocation2 + $0x190] sm:$0xff] %v1853
        %1918 = vst [vmem:[#allocation2 + $0x1a0] sm:$0xff] %v1854
        %1919 = vst [vmem:[#allocation2 + $0x1b0] sm:$0xff] %v1855
        %1920 = vst [vmem:[#allocation2 + $0x1c0] sm:$0xff] %v1856
        %1921 = vst [vmem:[#allocation2 + $0x1d0] sm:$0xff] %v1857
        %1922 = vst [vmem:[#allocation2 + $0x1e0] sm:$0xff] %v1858
        %1923 = vst [vmem:[#allocation2 + $0x1f0] sm:$0xff] %v1859
        %1924 = vst [vmem:[#allocation2 + $0x200] sm:$0xff] %v1860
        %1925 = vst [vmem:[#allocation2 + $0x210] sm:$0xff] %v1861
        %1926 = vst [vmem:[#allocation2 + $0x220] sm:$0xff] %v1862
        %1927 = vst [vmem:[#allocation2 + $0x230] sm:$0xff] %v1863
        %1928 = vst [vmem:[#allocation2 + $0x240] sm:$0xff] %v1864
        %1929 = vst [vmem:[#allocation2 + $0x250] sm:$0xff] %v1865
        %1930 = vst [vmem:[#allocation2 + $0x260] sm:$0xff] %v1866
        %1931 = vst [vmem:[#allocation2 + $0x270] sm:$0xff] %v1867
        %1932 = vst [vmem:[#allocation2 + $0x280] sm:$0xff] %v1868
        %1933 = vst [vmem:[#allocation2 + $0x290] sm:$0xff] %v1869
        %1934 = vst [vmem:[#allocation2 + $0x2a0] sm:$0xff] %v1870
        %1935 = vst [vmem:[#allocation2 + $0x2b0] sm:$0xff] %v1871
        %1936 = vst [vmem:[#allocation2 + $0x2c0] sm:$0xff] %v1872
        %1937 = vst [vmem:[#allocation2 + $0x2d0] sm:$0xff] %v1873
        %1938 = vst [vmem:[#allocation2 + $0x2e0] sm:$0xff] %v1874
        %1939 = vst [vmem:[#allocation2 + $0x2f0] sm:$0xff] %v1875
        %1940 = vst [vmem:[#allocation2 + $0x300] sm:$0xff] %v1876
        %1941 = vst [vmem:[#allocation2 + $0x310] sm:$0xff] %v1877
        %1942 = vst [vmem:[#allocation2 + $0x320] sm:$0xff] %v1878
        %1943 = vst [vmem:[#allocation2 + $0x330] sm:$0xff] %v1879
        %1944 = vst [vmem:[#allocation2 + $0x340] sm:$0xff] %v1880
        %1945 = vst [vmem:[#allocation2 + $0x350] sm:$0xff] %v1881
        %1946 = vst [vmem:[#allocation2 + $0x360] sm:$0xff] %v1882
        %1947 = vst [vmem:[#allocation2 + $0x370] sm:$0xff] %v1883
        %1948 = vst [vmem:[#allocation2 + $0x380] sm:$0xff] %v1884
        %1949 = vst [vmem:[#allocation2 + $0x390] sm:$0xff] %v1885
        %1950 = vst [vmem:[#allocation2 + $0x3a0] sm:$0xff] %v1886
        %1951 = vst [vmem:[#allocation2 + $0x3b0] sm:$0xff] %v1887
        %1952 = vst [vmem:[#allocation2 + $0x3c0] sm:$0xff] %v1888
        %1953 = vst [vmem:[#allocation2 + $0x3d0] sm:$0xff] %v1889
        %1954 = vst [vmem:[#allocation2 + $0x3e0] sm:$0xff] %v1890
        %1955 = vst [vmem:[#allocation2 + $0x3f0] sm:$0xff] %v1891
        %p1956 = scmp.eq.s32.totalorder %s23, 2
        // Predicated region
        $region76: #{gnn_boundary_classifier_forward.3} parent=66 // pred_check
          %p1957 = pneg %p1956
        $region77: #{gnn_boundary_classifier_forward.3} parent=66 // pred_check_branch
          %1959 = sbr.rel (%p1957) target = $region79
        $region78: #{gnn_boundary_classifier_forward.3} parent=66 // pred_region
          %v1960 = vld [vmem:[#allocation2] sm:$0xff]
          %v1961 = vld [vmem:[#allocation2 + $0x10] sm:$0xff]
          %v1962 = vld [vmem:[#allocation2 + $0x20] sm:$0xff]
          %v1963 = vld [vmem:[#allocation2 + $0x30] sm:$0xff]
          %v1964 = vld [vmem:[#allocation2 + $0x40] sm:$0xff]
          %v1965 = vld [vmem:[#allocation2 + $0x50] sm:$0xff]
          %v1966 = vld [vmem:[#allocation2 + $0x60] sm:$0xff]
          %v1967 = vld [vmem:[#allocation2 + $0x70] sm:$0xff]
          %v1968 = vld [vmem:[#allocation2 + $0x80] sm:$0xff]
          %v1969 = vld [vmem:[#allocation2 + $0x90] sm:$0xff]
          %v1970 = vld [vmem:[#allocation2 + $0xa0] sm:$0xff]
          %v1971 = vld [vmem:[#allocation2 + $0xb0] sm:$0xff]
          %v1972 = vld [vmem:[#allocation2 + $0xc0] sm:$0xff]
          %v1973 = vld [vmem:[#allocation2 + $0xd0] sm:$0xff]
          %v1974 = vld [vmem:[#allocation2 + $0xe0] sm:$0xff]
          %v1975 = vld [vmem:[#allocation2 + $0xf0] sm:$0xff]
          %v1976 = vld [vmem:[#allocation2 + $0x100] sm:$0xff]
          %v1977 = vld [vmem:[#allocation2 + $0x110] sm:$0xff]
          %v1978 = vld [vmem:[#allocation2 + $0x120] sm:$0xff]
          %v1979 = vld [vmem:[#allocation2 + $0x130] sm:$0xff]
          %v1980 = vld [vmem:[#allocation2 + $0x140] sm:$0xff]
          %v1981 = vld [vmem:[#allocation2 + $0x150] sm:$0xff]
          %v1982 = vld [vmem:[#allocation2 + $0x160] sm:$0xff]
          %v1983 = vld [vmem:[#allocation2 + $0x170] sm:$0xff]
          %v1984 = vld [vmem:[#allocation2 + $0x180] sm:$0xff]
          %v1985 = vld [vmem:[#allocation2 + $0x190] sm:$0xff]
          %v1986 = vld [vmem:[#allocation2 + $0x1a0] sm:$0xff]
          %v1987 = vld [vmem:[#allocation2 + $0x1b0] sm:$0xff]
          %v1988 = vld [vmem:[#allocation2 + $0x1c0] sm:$0xff]
          %v1989 = vld [vmem:[#allocation2 + $0x1d0] sm:$0xff]
          %v1990 = vld [vmem:[#allocation2 + $0x1e0] sm:$0xff]
          %v1991 = vld [vmem:[#allocation2 + $0x1f0] sm:$0xff]
          %v1992 = vld [vmem:[#allocation2 + $0x200] sm:$0xff]
          %v1993 = vld [vmem:[#allocation2 + $0x210] sm:$0xff]
          %v1994 = vld [vmem:[#allocation2 + $0x220] sm:$0xff]
          %v1995 = vld [vmem:[#allocation2 + $0x230] sm:$0xff]
          %v1996 = vld [vmem:[#allocation2 + $0x240] sm:$0xff]
          %v1997 = vld [vmem:[#allocation2 + $0x250] sm:$0xff]
          %v1998 = vld [vmem:[#allocation2 + $0x260] sm:$0xff]
          %v1999 = vld [vmem:[#allocation2 + $0x270] sm:$0xff]
          %v2000 = vld [vmem:[#allocation2 + $0x280] sm:$0xff]
          %v2001 = vld [vmem:[#allocation2 + $0x290] sm:$0xff]
          %v2002 = vld [vmem:[#allocation2 + $0x2a0] sm:$0xff]
          %v2003 = vld [vmem:[#allocation2 + $0x2b0] sm:$0xff]
          %v2004 = vld [vmem:[#allocation2 + $0x2c0] sm:$0xff]
          %v2005 = vld [vmem:[#allocation2 + $0x2d0] sm:$0xff]
          %v2006 = vld [vmem:[#allocation2 + $0x2e0] sm:$0xff]
          %v2007 = vld [vmem:[#allocation2 + $0x2f0] sm:$0xff]
          %v2008 = vld [vmem:[#allocation2 + $0x300] sm:$0xff]
          %v2009 = vld [vmem:[#allocation2 + $0x310] sm:$0xff]
          %v2010 = vld [vmem:[#allocation2 + $0x320] sm:$0xff]
          %v2011 = vld [vmem:[#allocation2 + $0x330] sm:$0xff]
          %v2012 = vld [vmem:[#allocation2 + $0x340] sm:$0xff]
          %v2013 = vld [vmem:[#allocation2 + $0x350] sm:$0xff]
          %v2014 = vld [vmem:[#allocation2 + $0x360] sm:$0xff]
          %v2015 = vld [vmem:[#allocation2 + $0x370] sm:$0xff]
          %v2016 = vld [vmem:[#allocation2 + $0x380] sm:$0xff]
          %v2017 = vld [vmem:[#allocation2 + $0x390] sm:$0xff]
          %v2018 = vld [vmem:[#allocation2 + $0x3a0] sm:$0xff]
          %v2019 = vld [vmem:[#allocation2 + $0x3b0] sm:$0xff]
          %v2020 = vld [vmem:[#allocation2 + $0x3c0] sm:$0xff]
          %v2021 = vld [vmem:[#allocation2 + $0x3d0] sm:$0xff]
          %v2022 = vld [vmem:[#allocation2 + $0x3e0] sm:$0xff]
          %v2023 = vld [vmem:[#allocation2 + $0x3f0] sm:$0xff]
          %v2024 = vld [vmem:[%s459] sm:$0xff]
          %v2025 = vld [vmem:[%s459 + $0x8] sm:$0xff]
          %v2026 = vld [vmem:[%s459 + $0x10] sm:$0xff]
          %v2027 = vld [vmem:[%s459 + $0x18] sm:$0xff]
          %v2028 = vld [vmem:[%s459 + $0x20] sm:$0xff]
          %v2029 = vld [vmem:[%s459 + $0x28] sm:$0xff]
          %v2030 = vld [vmem:[%s459 + $0x30] sm:$0xff]
          %v2031 = vld [vmem:[%s459 + $0x38] sm:$0xff]
          %v2032 = vld [vmem:[%s459 + $0x40] sm:$0xff]
          %v2033 = vld [vmem:[%s459 + $0x48] sm:$0xff]
          %v2034 = vld [vmem:[%s459 + $0x50] sm:$0xff]
          %v2035 = vld [vmem:[%s459 + $0x58] sm:$0xff]
          %v2036 = vld [vmem:[%s459 + $0x60] sm:$0xff]
          %v2037 = vld [vmem:[%s459 + $0x68] sm:$0xff]
          %v2038 = vld [vmem:[%s459 + $0x70] sm:$0xff]
          %v2039 = vld [vmem:[%s459 + $0x78] sm:$0xff]
          %v2040 = vld [vmem:[%s459 + $0x80] sm:$0xff]
          %v2041 = vld [vmem:[%s459 + $0x88] sm:$0xff]
          %v2042 = vld [vmem:[%s459 + $0x90] sm:$0xff]
          %v2043 = vld [vmem:[%s459 + $0x98] sm:$0xff]
          %v2044 = vld [vmem:[%s459 + $0xa0] sm:$0xff]
          %v2045 = vld [vmem:[%s459 + $0xa8] sm:$0xff]
          %v2046 = vld [vmem:[%s459 + $0xb0] sm:$0xff]
          %v2047 = vld [vmem:[%s459 + $0xb8] sm:$0xff]
          %v2048 = vld [vmem:[%s459 + $0xc0] sm:$0xff]
          %v2049 = vld [vmem:[%s459 + $0xc8] sm:$0xff]
          %v2050 = vld [vmem:[%s459 + $0xd0] sm:$0xff]
          %v2051 = vld [vmem:[%s459 + $0xd8] sm:$0xff]
          %v2052 = vld [vmem:[%s459 + $0xe0] sm:$0xff]
          %v2053 = vld [vmem:[%s459 + $0xe8] sm:$0xff]
          %v2054 = vld [vmem:[%s459 + $0xf0] sm:$0xff]
          %v2055 = vld [vmem:[%s459 + $0xf8] sm:$0xff]
          %v2056 = vld [vmem:[%s459 + $0x100] sm:$0xff]
          %v2057 = vld [vmem:[%s459 + $0x108] sm:$0xff]
          %v2058 = vld [vmem:[%s459 + $0x110] sm:$0xff]
          %v2059 = vld [vmem:[%s459 + $0x118] sm:$0xff]
          %v2060 = vld [vmem:[%s459 + $0x120] sm:$0xff]
          %v2061 = vld [vmem:[%s459 + $0x128] sm:$0xff]
          %v2062 = vld [vmem:[%s459 + $0x130] sm:$0xff]
          %v2063 = vld [vmem:[%s459 + $0x138] sm:$0xff]
          %v2064 = vld [vmem:[%s459 + $0x140] sm:$0xff]
          %v2065 = vld [vmem:[%s459 + $0x148] sm:$0xff]
          %v2066 = vld [vmem:[%s459 + $0x150] sm:$0xff]
          %v2067 = vld [vmem:[%s459 + $0x158] sm:$0xff]
          %v2068 = vld [vmem:[%s459 + $0x160] sm:$0xff]
          %v2069 = vld [vmem:[%s459 + $0x168] sm:$0xff]
          %v2070 = vld [vmem:[%s459 + $0x170] sm:$0xff]
          %v2071 = vld [vmem:[%s459 + $0x178] sm:$0xff]
          %v2072 = vld [vmem:[%s459 + $0x180] sm:$0xff]
          %v2073 = vld [vmem:[%s459 + $0x188] sm:$0xff]
          %v2074 = vld [vmem:[%s459 + $0x190] sm:$0xff]
          %v2075 = vld [vmem:[%s459 + $0x198] sm:$0xff]
          %v2076 = vld [vmem:[%s459 + $0x1a0] sm:$0xff]
          %v2077 = vld [vmem:[%s459 + $0x1a8] sm:$0xff]
          %v2078 = vld [vmem:[%s459 + $0x1b0] sm:$0xff]
          %v2079 = vld [vmem:[%s459 + $0x1b8] sm:$0xff]
          %v2080 = vld [vmem:[%s459 + $0x1c0] sm:$0xff]
          %v2081 = vld [vmem:[%s459 + $0x1c8] sm:$0xff]
          %v2082 = vld [vmem:[%s459 + $0x1d0] sm:$0xff]
          %v2083 = vld [vmem:[%s459 + $0x1d8] sm:$0xff]
          %v2084 = vld [vmem:[%s459 + $0x1e0] sm:$0xff]
          %v2085 = vld [vmem:[%s459 + $0x1e8] sm:$0xff]
          %v2086 = vld [vmem:[%s459 + $0x1f0] sm:$0xff]
          %v2087 = vld [vmem:[%s459 + $0x1f8] sm:$0xff]
          %2089 = vset.pattern.permute.xlu0 0
          %2090 = vperm.xlu0 %2089, %v2024
          %v2091 = vpop.permute.xlu0 %2090
          %2094 = vset.pattern.permute.xlu0 0
          %2095 = vperm.xlu0 %2094, %v2025
          %v2096 = vpop.permute.xlu0 %2095
          %2099 = vset.pattern.permute.xlu0 0
          %2100 = vperm.xlu0 %2099, %v2026
          %v2101 = vpop.permute.xlu0 %2100
          %2104 = vset.pattern.permute.xlu0 0
          %2105 = vperm.xlu0 %2104, %v2027
          %v2106 = vpop.permute.xlu0 %2105
          %2109 = vset.pattern.permute.xlu0 0
          %2110 = vperm.xlu0 %2109, %v2028
          %v2111 = vpop.permute.xlu0 %2110
          %2114 = vset.pattern.permute.xlu0 0
          %2115 = vperm.xlu0 %2114, %v2029
          %v2116 = vpop.permute.xlu0 %2115
          %2119 = vset.pattern.permute.xlu0 0
          %2120 = vperm.xlu0 %2119, %v2030
          %v2121 = vpop.permute.xlu0 %2120
          %2124 = vset.pattern.permute.xlu0 0
          %2125 = vperm.xlu0 %2124, %v2031
          %v2126 = vpop.permute.xlu0 %2125
          %2129 = vset.pattern.permute.xlu0 0
          %2130 = vperm.xlu0 %2129, %v2032
          %v2131 = vpop.permute.xlu0 %2130
          %2134 = vset.pattern.permute.xlu0 0
          %2135 = vperm.xlu0 %2134, %v2033
          %v2136 = vpop.permute.xlu0 %2135
          %2139 = vset.pattern.permute.xlu0 0
          %2140 = vperm.xlu0 %2139, %v2034
          %v2141 = vpop.permute.xlu0 %2140
          %2144 = vset.pattern.permute.xlu0 0
          %2145 = vperm.xlu0 %2144, %v2035
          %v2146 = vpop.permute.xlu0 %2145
          %2149 = vset.pattern.permute.xlu0 0
          %2150 = vperm.xlu0 %2149, %v2036
          %v2151 = vpop.permute.xlu0 %2150
          %2154 = vset.pattern.permute.xlu0 0
          %2155 = vperm.xlu0 %2154, %v2037
          %v2156 = vpop.permute.xlu0 %2155
          %2159 = vset.pattern.permute.xlu0 0
          %2160 = vperm.xlu0 %2159, %v2038
          %v2161 = vpop.permute.xlu0 %2160
          %2164 = vset.pattern.permute.xlu0 0
          %2165 = vperm.xlu0 %2164, %v2039
          %v2166 = vpop.permute.xlu0 %2165
          %2169 = vset.pattern.permute.xlu0 0
          %2170 = vperm.xlu0 %2169, %v2040
          %v2171 = vpop.permute.xlu0 %2170
          %2174 = vset.pattern.permute.xlu0 0
          %2175 = vperm.xlu0 %2174, %v2041
          %v2176 = vpop.permute.xlu0 %2175
          %2179 = vset.pattern.permute.xlu0 0
          %2180 = vperm.xlu0 %2179, %v2042
          %v2181 = vpop.permute.xlu0 %2180
          %2184 = vset.pattern.permute.xlu0 0
          %2185 = vperm.xlu0 %2184, %v2043
          %v2186 = vpop.permute.xlu0 %2185
          %2189 = vset.pattern.permute.xlu0 0
          %2190 = vperm.xlu0 %2189, %v2044
          %v2191 = vpop.permute.xlu0 %2190
          %2194 = vset.pattern.permute.xlu0 0
          %2195 = vperm.xlu0 %2194, %v2045
          %v2196 = vpop.permute.xlu0 %2195
          %2199 = vset.pattern.permute.xlu0 0
          %2200 = vperm.xlu0 %2199, %v2046
          %v2201 = vpop.permute.xlu0 %2200
          %2204 = vset.pattern.permute.xlu0 0
          %2205 = vperm.xlu0 %2204, %v2047
          %v2206 = vpop.permute.xlu0 %2205
          %2209 = vset.pattern.permute.xlu0 0
          %2210 = vperm.xlu0 %2209, %v2048
          %v2211 = vpop.permute.xlu0 %2210
          %2214 = vset.pattern.permute.xlu0 0
          %2215 = vperm.xlu0 %2214, %v2049
          %v2216 = vpop.permute.xlu0 %2215
          %2219 = vset.pattern.permute.xlu0 0
          %2220 = vperm.xlu0 %2219, %v2050
          %v2221 = vpop.permute.xlu0 %2220
          %2224 = vset.pattern.permute.xlu0 0
          %2225 = vperm.xlu0 %2224, %v2051
          %v2226 = vpop.permute.xlu0 %2225
          %2229 = vset.pattern.permute.xlu0 0
          %2230 = vperm.xlu0 %2229, %v2052
          %v2231 = vpop.permute.xlu0 %2230
          %2234 = vset.pattern.permute.xlu0 0
          %2235 = vperm.xlu0 %2234, %v2053
          %v2236 = vpop.permute.xlu0 %2235
          %2239 = vset.pattern.permute.xlu0 0
          %2240 = vperm.xlu0 %2239, %v2054
          %v2241 = vpop.permute.xlu0 %2240
          %2244 = vset.pattern.permute.xlu0 0
          %2245 = vperm.xlu0 %2244, %v2055
          %v2246 = vpop.permute.xlu0 %2245
          %2249 = vset.pattern.permute.xlu0 0
          %2250 = vperm.xlu0 %2249, %v2056
          %v2251 = vpop.permute.xlu0 %2250
          %2254 = vset.pattern.permute.xlu0 0
          %2255 = vperm.xlu0 %2254, %v2057
          %v2256 = vpop.permute.xlu0 %2255
          %2259 = vset.pattern.permute.xlu0 0
          %2260 = vperm.xlu0 %2259, %v2058
          %v2261 = vpop.permute.xlu0 %2260
          %2264 = vset.pattern.permute.xlu0 0
          %2265 = vperm.xlu0 %2264, %v2059
          %v2266 = vpop.permute.xlu0 %2265
          %2269 = vset.pattern.permute.xlu0 0
          %2270 = vperm.xlu0 %2269, %v2060
          %v2271 = vpop.permute.xlu0 %2270
          %2274 = vset.pattern.permute.xlu0 0
          %2275 = vperm.xlu0 %2274, %v2061
          %v2276 = vpop.permute.xlu0 %2275
          %2279 = vset.pattern.permute.xlu0 0
          %2280 = vperm.xlu0 %2279, %v2062
          %v2281 = vpop.permute.xlu0 %2280
          %2284 = vset.pattern.permute.xlu0 0
          %2285 = vperm.xlu0 %2284, %v2063
          %v2286 = vpop.permute.xlu0 %2285
          %2289 = vset.pattern.permute.xlu0 0
          %2290 = vperm.xlu0 %2289, %v2064
          %v2291 = vpop.permute.xlu0 %2290
          %2294 = vset.pattern.permute.xlu0 0
          %2295 = vperm.xlu0 %2294, %v2065
          %v2296 = vpop.permute.xlu0 %2295
          %2299 = vset.pattern.permute.xlu0 0
          %2300 = vperm.xlu0 %2299, %v2066
          %v2301 = vpop.permute.xlu0 %2300
          %2304 = vset.pattern.permute.xlu0 0
          %2305 = vperm.xlu0 %2304, %v2067
          %v2306 = vpop.permute.xlu0 %2305
          %2309 = vset.pattern.permute.xlu0 0
          %2310 = vperm.xlu0 %2309, %v2068
          %v2311 = vpop.permute.xlu0 %2310
          %2314 = vset.pattern.permute.xlu0 0
          %2315 = vperm.xlu0 %2314, %v2069
          %v2316 = vpop.permute.xlu0 %2315
          %2319 = vset.pattern.permute.xlu0 0
          %2320 = vperm.xlu0 %2319, %v2070
          %v2321 = vpop.permute.xlu0 %2320
          %2324 = vset.pattern.permute.xlu0 0
          %2325 = vperm.xlu0 %2324, %v2071
          %v2326 = vpop.permute.xlu0 %2325
          %2329 = vset.pattern.permute.xlu0 0
          %2330 = vperm.xlu0 %2329, %v2072
          %v2331 = vpop.permute.xlu0 %2330
          %2334 = vset.pattern.permute.xlu0 0
          %2335 = vperm.xlu0 %2334, %v2073
          %v2336 = vpop.permute.xlu0 %2335
          %2339 = vset.pattern.permute.xlu0 0
          %2340 = vperm.xlu0 %2339, %v2074
          %v2341 = vpop.permute.xlu0 %2340
          %2344 = vset.pattern.permute.xlu0 0
          %2345 = vperm.xlu0 %2344, %v2075
          %v2346 = vpop.permute.xlu0 %2345
          %2349 = vset.pattern.permute.xlu0 0
          %2350 = vperm.xlu0 %2349, %v2076
          %v2351 = vpop.permute.xlu0 %2350
          %2354 = vset.pattern.permute.xlu0 0
          %2355 = vperm.xlu0 %2354, %v2077
          %v2356 = vpop.permute.xlu0 %2355
          %2359 = vset.pattern.permute.xlu0 0
          %2360 = vperm.xlu0 %2359, %v2078
          %v2361 = vpop.permute.xlu0 %2360
          %2364 = vset.pattern.permute.xlu0 0
          %2365 = vperm.xlu0 %2364, %v2079
          %v2366 = vpop.permute.xlu0 %2365
          %2369 = vset.pattern.permute.xlu0 0
          %2370 = vperm.xlu0 %2369, %v2080
          %v2371 = vpop.permute.xlu0 %2370
          %2374 = vset.pattern.permute.xlu0 0
          %2375 = vperm.xlu0 %2374, %v2081
          %v2376 = vpop.permute.xlu0 %2375
          %2379 = vset.pattern.permute.xlu0 0
          %2380 = vperm.xlu0 %2379, %v2082
          %v2381 = vpop.permute.xlu0 %2380
          %2384 = vset.pattern.permute.xlu0 0
          %2385 = vperm.xlu0 %2384, %v2083
          %v2386 = vpop.permute.xlu0 %2385
          %2389 = vset.pattern.permute.xlu0 0
          %2390 = vperm.xlu0 %2389, %v2084
          %v2391 = vpop.permute.xlu0 %2390
          %2394 = vset.pattern.permute.xlu0 0
          %2395 = vperm.xlu0 %2394, %v2085
          %v2396 = vpop.permute.xlu0 %2395
          %2399 = vset.pattern.permute.xlu0 0
          %2400 = vperm.xlu0 %2399, %v2086
          %v2401 = vpop.permute.xlu0 %2400
          %2404 = vset.pattern.permute.xlu0 0
          %2405 = vperm.xlu0 %2404, %v2087
          %v2406 = vpop.permute.xlu0 %2405
          %v2408 = vmul.f32 %v1960, %v2091
          %v2409 = vmul.f32 %v1961, %v2096
          %v2410 = vmul.f32 %v1962, %v2101
          %v2411 = vmul.f32 %v1963, %v2106
          %v2412 = vmul.f32 %v1964, %v2111
          %v2413 = vmul.f32 %v1965, %v2116
          %v2414 = vmul.f32 %v1966, %v2121
          %v2415 = vmul.f32 %v1967, %v2126
          %v2416 = vmul.f32 %v1968, %v2131
          %v2417 = vmul.f32 %v1969, %v2136
          %v2418 = vmul.f32 %v1970, %v2141
          %v2419 = vmul.f32 %v1971, %v2146
          %v2420 = vmul.f32 %v1972, %v2151
          %v2421 = vmul.f32 %v1973, %v2156
          %v2422 = vmul.f32 %v1974, %v2161
          %v2423 = vmul.f32 %v1975, %v2166
          %v2424 = vmul.f32 %v1976, %v2171
          %v2425 = vmul.f32 %v1977, %v2176
          %v2426 = vmul.f32 %v1978, %v2181
          %v2427 = vmul.f32 %v1979, %v2186
          %v2428 = vmul.f32 %v1980, %v2191
          %v2429 = vmul.f32 %v1981, %v2196
          %v2430 = vmul.f32 %v1982, %v2201
          %v2431 = vmul.f32 %v1983, %v2206
          %v2432 = vmul.f32 %v1984, %v2211
          %v2433 = vmul.f32 %v1985, %v2216
          %v2434 = vmul.f32 %v1986, %v2221
          %v2435 = vmul.f32 %v1987, %v2226
          %v2436 = vmul.f32 %v1988, %v2231
          %v2437 = vmul.f32 %v1989, %v2236
          %v2438 = vmul.f32 %v1990, %v2241
          %v2439 = vmul.f32 %v1991, %v2246
          %v2440 = vmul.f32 %v1992, %v2251
          %v2441 = vmul.f32 %v1993, %v2256
          %v2442 = vmul.f32 %v1994, %v2261
          %v2443 = vmul.f32 %v1995, %v2266
          %v2444 = vmul.f32 %v1996, %v2271
          %v2445 = vmul.f32 %v1997, %v2276
          %v2446 = vmul.f32 %v1998, %v2281
          %v2447 = vmul.f32 %v1999, %v2286
          %v2448 = vmul.f32 %v2000, %v2291
          %v2449 = vmul.f32 %v2001, %v2296
          %v2450 = vmul.f32 %v2002, %v2301
          %v2451 = vmul.f32 %v2003, %v2306
          %v2452 = vmul.f32 %v2004, %v2311
          %v2453 = vmul.f32 %v2005, %v2316
          %v2454 = vmul.f32 %v2006, %v2321
          %v2455 = vmul.f32 %v2007, %v2326
          %v2456 = vmul.f32 %v2008, %v2331
          %v2457 = vmul.f32 %v2009, %v2336
          %v2458 = vmul.f32 %v2010, %v2341
          %v2459 = vmul.f32 %v2011, %v2346
          %v2460 = vmul.f32 %v2012, %v2351
          %v2461 = vmul.f32 %v2013, %v2356
          %v2462 = vmul.f32 %v2014, %v2361
          %v2463 = vmul.f32 %v2015, %v2366
          %v2464 = vmul.f32 %v2016, %v2371
          %v2465 = vmul.f32 %v2017, %v2376
          %v2466 = vmul.f32 %v2018, %v2381
          %v2467 = vmul.f32 %v2019, %v2386
          %v2468 = vmul.f32 %v2020, %v2391
          %v2469 = vmul.f32 %v2021, %v2396
          %v2470 = vmul.f32 %v2022, %v2401
          %v2471 = vmul.f32 %v2023, %v2406
          %2472 = vst [vmem:[#allocation2] sm:$0xff] %v2408
          %2473 = vst [vmem:[#allocation2 + $0x10] sm:$0xff] %v2409
          %2474 = vst [vmem:[#allocation2 + $0x20] sm:$0xff] %v2410
          %2475 = vst [vmem:[#allocation2 + $0x30] sm:$0xff] %v2411
          %2476 = vst [vmem:[#allocation2 + $0x40] sm:$0xff] %v2412
          %2477 = vst [vmem:[#allocation2 + $0x50] sm:$0xff] %v2413
          %2478 = vst [vmem:[#allocation2 + $0x60] sm:$0xff] %v2414
          %2479 = vst [vmem:[#allocation2 + $0x70] sm:$0xff] %v2415
          %2480 = vst [vmem:[#allocation2 + $0x80] sm:$0xff] %v2416
          %2481 = vst [vmem:[#allocation2 + $0x90] sm:$0xff] %v2417
          %2482 = vst [vmem:[#allocation2 + $0xa0] sm:$0xff] %v2418
          %2483 = vst [vmem:[#allocation2 + $0xb0] sm:$0xff] %v2419
          %2484 = vst [vmem:[#allocation2 + $0xc0] sm:$0xff] %v2420
          %2485 = vst [vmem:[#allocation2 + $0xd0] sm:$0xff] %v2421
          %2486 = vst [vmem:[#allocation2 + $0xe0] sm:$0xff] %v2422
          %2487 = vst [vmem:[#allocation2 + $0xf0] sm:$0xff] %v2423
          %2488 = vst [vmem:[#allocation2 + $0x100] sm:$0xff] %v2424
          %2489 = vst [vmem:[#allocation2 + $0x110] sm:$0xff] %v2425
          %2490 = vst [vmem:[#allocation2 + $0x120] sm:$0xff] %v2426
          %2491 = vst [vmem:[#allocation2 + $0x130] sm:$0xff] %v2427
          %2492 = vst [vmem:[#allocation2 + $0x140] sm:$0xff] %v2428
          %2493 = vst [vmem:[#allocation2 + $0x150] sm:$0xff] %v2429
          %2494 = vst [vmem:[#allocation2 + $0x160] sm:$0xff] %v2430
          %2495 = vst [vmem:[#allocation2 + $0x170] sm:$0xff] %v2431
          %2496 = vst [vmem:[#allocation2 + $0x180] sm:$0xff] %v2432
          %2497 = vst [vmem:[#allocation2 + $0x190] sm:$0xff] %v2433
          %2498 = vst [vmem:[#allocation2 + $0x1a0] sm:$0xff] %v2434
          %2499 = vst [vmem:[#allocation2 + $0x1b0] sm:$0xff] %v2435
          %2500 = vst [vmem:[#allocation2 + $0x1c0] sm:$0xff] %v2436
          %2501 = vst [vmem:[#allocation2 + $0x1d0] sm:$0xff] %v2437
          %2502 = vst [vmem:[#allocation2 + $0x1e0] sm:$0xff] %v2438
          %2503 = vst [vmem:[#allocation2 + $0x1f0] sm:$0xff] %v2439
          %2504 = vst [vmem:[#allocation2 + $0x200] sm:$0xff] %v2440
          %2505 = vst [vmem:[#allocation2 + $0x210] sm:$0xff] %v2441
          %2506 = vst [vmem:[#allocation2 + $0x220] sm:$0xff] %v2442
          %2507 = vst [vmem:[#allocation2 + $0x230] sm:$0xff] %v2443
          %2508 = vst [vmem:[#allocation2 + $0x240] sm:$0xff] %v2444
          %2509 = vst [vmem:[#allocation2 + $0x250] sm:$0xff] %v2445
          %2510 = vst [vmem:[#allocation2 + $0x260] sm:$0xff] %v2446
          %2511 = vst [vmem:[#allocation2 + $0x270] sm:$0xff] %v2447
          %2512 = vst [vmem:[#allocation2 + $0x280] sm:$0xff] %v2448
          %2513 = vst [vmem:[#allocation2 + $0x290] sm:$0xff] %v2449
          %2514 = vst [vmem:[#allocation2 + $0x2a0] sm:$0xff] %v2450
          %2515 = vst [vmem:[#allocation2 + $0x2b0] sm:$0xff] %v2451
          %2516 = vst [vmem:[#allocation2 + $0x2c0] sm:$0xff] %v2452
          %2517 = vst [vmem:[#allocation2 + $0x2d0] sm:$0xff] %v2453
          %2518 = vst [vmem:[#allocation2 + $0x2e0] sm:$0xff] %v2454
          %2519 = vst [vmem:[#allocation2 + $0x2f0] sm:$0xff] %v2455
          %2520 = vst [vmem:[#allocation2 + $0x300] sm:$0xff] %v2456
          %2521 = vst [vmem:[#allocation2 + $0x310] sm:$0xff] %v2457
          %2522 = vst [vmem:[#allocation2 + $0x320] sm:$0xff] %v2458
          %2523 = vst [vmem:[#allocation2 + $0x330] sm:$0xff] %v2459
          %2524 = vst [vmem:[#allocation2 + $0x340] sm:$0xff] %v2460
          %2525 = vst [vmem:[#allocation2 + $0x350] sm:$0xff] %v2461
          %2526 = vst [vmem:[#allocation2 + $0x360] sm:$0xff] %v2462
          %2527 = vst [vmem:[#allocation2 + $0x370] sm:$0xff] %v2463
          %2528 = vst [vmem:[#allocation2 + $0x380] sm:$0xff] %v2464
          %2529 = vst [vmem:[#allocation2 + $0x390] sm:$0xff] %v2465
          %2530 = vst [vmem:[#allocation2 + $0x3a0] sm:$0xff] %v2466
          %2531 = vst [vmem:[#allocation2 + $0x3b0] sm:$0xff] %v2467
          %2532 = vst [vmem:[#allocation2 + $0x3c0] sm:$0xff] %v2468
          %2533 = vst [vmem:[#allocation2 + $0x3d0] sm:$0xff] %v2469
          %2534 = vst [vmem:[#allocation2 + $0x3e0] sm:$0xff] %v2470
          %2535 = vst [vmem:[#allocation2 + $0x3f0] sm:$0xff] %v2471
          %v2536 = vld [vmem:[#allocation2] sm:$0xff]
          %v2537 = vld [vmem:[#allocation2 + $0x8] sm:$0xff]
          %v2538 = vld [vmem:[#allocation2 + $0x10] sm:$0xff]
          %v2539 = vld [vmem:[#allocation2 + $0x18] sm:$0xff]
          %v2540 = vld [vmem:[#allocation2 + $0x20] sm:$0xff]
          %v2541 = vld [vmem:[#allocation2 + $0x28] sm:$0xff]
          %v2542 = vld [vmem:[#allocation2 + $0x30] sm:$0xff]
          %v2543 = vld [vmem:[#allocation2 + $0x38] sm:$0xff]
          %v2544 = vld [vmem:[#allocation2 + $0x40] sm:$0xff]
          %v2545 = vld [vmem:[#allocation2 + $0x48] sm:$0xff]
          %v2546 = vld [vmem:[#allocation2 + $0x50] sm:$0xff]
          %v2547 = vld [vmem:[#allocation2 + $0x58] sm:$0xff]
          %v2548 = vld [vmem:[#allocation2 + $0x60] sm:$0xff]
          %v2549 = vld [vmem:[#allocation2 + $0x68] sm:$0xff]
          %v2550 = vld [vmem:[#allocation2 + $0x70] sm:$0xff]
          %v2551 = vld [vmem:[#allocation2 + $0x78] sm:$0xff]
          %v2552 = vld [vmem:[#allocation2 + $0x80] sm:$0xff]
          %v2553 = vld [vmem:[#allocation2 + $0x88] sm:$0xff]
          %v2554 = vld [vmem:[#allocation2 + $0x90] sm:$0xff]
          %v2555 = vld [vmem:[#allocation2 + $0x98] sm:$0xff]
          %v2556 = vld [vmem:[#allocation2 + $0xa0] sm:$0xff]
          %v2557 = vld [vmem:[#allocation2 + $0xa8] sm:$0xff]
          %v2558 = vld [vmem:[#allocation2 + $0xb0] sm:$0xff]
          %v2559 = vld [vmem:[#allocation2 + $0xb8] sm:$0xff]
          %v2560 = vld [vmem:[#allocation2 + $0xc0] sm:$0xff]
          %v2561 = vld [vmem:[#allocation2 + $0xc8] sm:$0xff]
          %v2562 = vld [vmem:[#allocation2 + $0xd0] sm:$0xff]
          %v2563 = vld [vmem:[#allocation2 + $0xd8] sm:$0xff]
          %v2564 = vld [vmem:[#allocation2 + $0xe0] sm:$0xff]
          %v2565 = vld [vmem:[#allocation2 + $0xe8] sm:$0xff]
          %v2566 = vld [vmem:[#allocation2 + $0xf0] sm:$0xff]
          %v2567 = vld [vmem:[#allocation2 + $0xf8] sm:$0xff]
          %v2568 = vld [vmem:[#allocation2 + $0x100] sm:$0xff]
          %v2569 = vld [vmem:[#allocation2 + $0x108] sm:$0xff]
          %v2570 = vld [vmem:[#allocation2 + $0x110] sm:$0xff]
          %v2571 = vld [vmem:[#allocation2 + $0x118] sm:$0xff]
          %v2572 = vld [vmem:[#allocation2 + $0x120] sm:$0xff]
          %v2573 = vld [vmem:[#allocation2 + $0x128] sm:$0xff]
          %v2574 = vld [vmem:[#allocation2 + $0x130] sm:$0xff]
          %v2575 = vld [vmem:[#allocation2 + $0x138] sm:$0xff]
          %v2576 = vld [vmem:[#allocation2 + $0x140] sm:$0xff]
          %v2577 = vld [vmem:[#allocation2 + $0x148] sm:$0xff]
          %v2578 = vld [vmem:[#allocation2 + $0x150] sm:$0xff]
          %v2579 = vld [vmem:[#allocation2 + $0x158] sm:$0xff]
          %v2580 = vld [vmem:[#allocation2 + $0x160] sm:$0xff]
          %v2581 = vld [vmem:[#allocation2 + $0x168] sm:$0xff]
          %v2582 = vld [vmem:[#allocation2 + $0x170] sm:$0xff]
          %v2583 = vld [vmem:[#allocation2 + $0x178] sm:$0xff]
          %v2584 = vld [vmem:[#allocation2 + $0x180] sm:$0xff]
          %v2585 = vld [vmem:[#allocation2 + $0x188] sm:$0xff]
          %v2586 = vld [vmem:[#allocation2 + $0x190] sm:$0xff]
          %v2587 = vld [vmem:[#allocation2 + $0x198] sm:$0xff]
          %v2588 = vld [vmem:[#allocation2 + $0x1a0] sm:$0xff]
          %v2589 = vld [vmem:[#allocation2 + $0x1a8] sm:$0xff]
          %v2590 = vld [vmem:[#allocation2 + $0x1b0] sm:$0xff]
          %v2591 = vld [vmem:[#allocation2 + $0x1b8] sm:$0xff]
          %v2592 = vld [vmem:[#allocation2 + $0x1c0] sm:$0xff]
          %v2593 = vld [vmem:[#allocation2 + $0x1c8] sm:$0xff]
          %v2594 = vld [vmem:[#allocation2 + $0x1d0] sm:$0xff]
          %v2595 = vld [vmem:[#allocation2 + $0x1d8] sm:$0xff]
          %v2596 = vld [vmem:[#allocation2 + $0x1e0] sm:$0xff]
          %v2597 = vld [vmem:[#allocation2 + $0x1e8] sm:$0xff]
          %v2598 = vld [vmem:[#allocation2 + $0x1f0] sm:$0xff]
          %v2599 = vld [vmem:[#allocation2 + $0x1f8] sm:$0xff]
          %v2600 = vld [vmem:[#allocation2 + $0x200] sm:$0xff]
          %v2601 = vld [vmem:[#allocation2 + $0x208] sm:$0xff]
          %v2602 = vld [vmem:[#allocation2 + $0x210] sm:$0xff]
          %v2603 = vld [vmem:[#allocation2 + $0x218] sm:$0xff]
          %v2604 = vld [vmem:[#allocation2 + $0x220] sm:$0xff]
          %v2605 = vld [vmem:[#allocation2 + $0x228] sm:$0xff]
          %v2606 = vld [vmem:[#allocation2 + $0x230] sm:$0xff]
          %v2607 = vld [vmem:[#allocation2 + $0x238] sm:$0xff]
          %v2608 = vld [vmem:[#allocation2 + $0x240] sm:$0xff]
          %v2609 = vld [vmem:[#allocation2 + $0x248] sm:$0xff]
          %v2610 = vld [vmem:[#allocation2 + $0x250] sm:$0xff]
          %v2611 = vld [vmem:[#allocation2 + $0x258] sm:$0xff]
          %v2612 = vld [vmem:[#allocation2 + $0x260] sm:$0xff]
          %v2613 = vld [vmem:[#allocation2 + $0x268] sm:$0xff]
          %v2614 = vld [vmem:[#allocation2 + $0x270] sm:$0xff]
          %v2615 = vld [vmem:[#allocation2 + $0x278] sm:$0xff]
          %v2616 = vld [vmem:[#allocation2 + $0x280] sm:$0xff]
          %v2617 = vld [vmem:[#allocation2 + $0x288] sm:$0xff]
          %v2618 = vld [vmem:[#allocation2 + $0x290] sm:$0xff]
          %v2619 = vld [vmem:[#allocation2 + $0x298] sm:$0xff]
          %v2620 = vld [vmem:[#allocation2 + $0x2a0] sm:$0xff]
          %v2621 = vld [vmem:[#allocation2 + $0x2a8] sm:$0xff]
          %v2622 = vld [vmem:[#allocation2 + $0x2b0] sm:$0xff]
          %v2623 = vld [vmem:[#allocation2 + $0x2b8] sm:$0xff]
          %v2624 = vld [vmem:[#allocation2 + $0x2c0] sm:$0xff]
          %v2625 = vld [vmem:[#allocation2 + $0x2c8] sm:$0xff]
          %v2626 = vld [vmem:[#allocation2 + $0x2d0] sm:$0xff]
          %v2627 = vld [vmem:[#allocation2 + $0x2d8] sm:$0xff]
          %v2628 = vld [vmem:[#allocation2 + $0x2e0] sm:$0xff]
          %v2629 = vld [vmem:[#allocation2 + $0x2e8] sm:$0xff]
          %v2630 = vld [vmem:[#allocation2 + $0x2f0] sm:$0xff]
          %v2631 = vld [vmem:[#allocation2 + $0x2f8] sm:$0xff]
          %v2632 = vld [vmem:[#allocation2 + $0x300] sm:$0xff]
          %v2633 = vld [vmem:[#allocation2 + $0x308] sm:$0xff]
          %v2634 = vld [vmem:[#allocation2 + $0x310] sm:$0xff]
          %v2635 = vld [vmem:[#allocation2 + $0x318] sm:$0xff]
          %v2636 = vld [vmem:[#allocation2 + $0x320] sm:$0xff]
          %v2637 = vld [vmem:[#allocation2 + $0x328] sm:$0xff]
          %v2638 = vld [vmem:[#allocation2 + $0x330] sm:$0xff]
          %v2639 = vld [vmem:[#allocation2 + $0x338] sm:$0xff]
          %v2640 = vld [vmem:[#allocation2 + $0x340] sm:$0xff]
          %v2641 = vld [vmem:[#allocation2 + $0x348] sm:$0xff]
          %v2642 = vld [vmem:[#allocation2 + $0x350] sm:$0xff]
          %v2643 = vld [vmem:[#allocation2 + $0x358] sm:$0xff]
          %v2644 = vld [vmem:[#allocation2 + $0x360] sm:$0xff]
          %v2645 = vld [vmem:[#allocation2 + $0x368] sm:$0xff]
          %v2646 = vld [vmem:[#allocation2 + $0x370] sm:$0xff]
          %v2647 = vld [vmem:[#allocation2 + $0x378] sm:$0xff]
          %v2648 = vld [vmem:[#allocation2 + $0x380] sm:$0xff]
          %v2649 = vld [vmem:[#allocation2 + $0x388] sm:$0xff]
          %v2650 = vld [vmem:[#allocation2 + $0x390] sm:$0xff]
          %v2651 = vld [vmem:[#allocation2 + $0x398] sm:$0xff]
          %v2652 = vld [vmem:[#allocation2 + $0x3a0] sm:$0xff]
          %v2653 = vld [vmem:[#allocation2 + $0x3a8] sm:$0xff]
          %v2654 = vld [vmem:[#allocation2 + $0x3b0] sm:$0xff]
          %v2655 = vld [vmem:[#allocation2 + $0x3b8] sm:$0xff]
          %v2656 = vld [vmem:[#allocation2 + $0x3c0] sm:$0xff]
          %v2657 = vld [vmem:[#allocation2 + $0x3c8] sm:$0xff]
          %v2658 = vld [vmem:[#allocation2 + $0x3d0] sm:$0xff]
          %v2659 = vld [vmem:[#allocation2 + $0x3d8] sm:$0xff]
          %v2660 = vld [vmem:[#allocation2 + $0x3e0] sm:$0xff]
          %v2661 = vld [vmem:[#allocation2 + $0x3e8] sm:$0xff]
          %v2662 = vld [vmem:[#allocation2 + $0x3f0] sm:$0xff]
          %v2663 = vld [vmem:[#allocation2 + $0x3f8] sm:$0xff]
          %v2664 = vpack.c.bf16 %v2538, %v2536
          %v2665 = vpack.c.bf16 %v2539, %v2537
          %v2666 = vpack.c.bf16 %v2542, %v2540
          %v2667 = vpack.c.bf16 %v2543, %v2541
          %v2668 = vpack.c.bf16 %v2546, %v2544
          %v2669 = vpack.c.bf16 %v2547, %v2545
          %v2670 = vpack.c.bf16 %v2550, %v2548
          %v2671 = vpack.c.bf16 %v2551, %v2549
          %v2672 = vpack.c.bf16 %v2554, %v2552
          %v2673 = vpack.c.bf16 %v2555, %v2553
          %v2674 = vpack.c.bf16 %v2558, %v2556
          %v2675 = vpack.c.bf16 %v2559, %v2557
          %v2676 = vpack.c.bf16 %v2562, %v2560
          %v2677 = vpack.c.bf16 %v2563, %v2561
          %v2678 = vpack.c.bf16 %v2566, %v2564
          %v2679 = vpack.c.bf16 %v2567, %v2565
          %v2680 = vpack.c.bf16 %v2570, %v2568
          %v2681 = vpack.c.bf16 %v2571, %v2569
          %v2682 = vpack.c.bf16 %v2574, %v2572
          %v2683 = vpack.c.bf16 %v2575, %v2573
          %v2684 = vpack.c.bf16 %v2578, %v2576
          %v2685 = vpack.c.bf16 %v2579, %v2577
          %v2686 = vpack.c.bf16 %v2582, %v2580
          %v2687 = vpack.c.bf16 %v2583, %v2581
          %v2688 = vpack.c.bf16 %v2586, %v2584
          %v2689 = vpack.c.bf16 %v2587, %v2585
          %v2690 = vpack.c.bf16 %v2590, %v2588
          %v2691 = vpack.c.bf16 %v2591, %v2589
          %v2692 = vpack.c.bf16 %v2594, %v2592
          %v2693 = vpack.c.bf16 %v2595, %v2593
          %v2694 = vpack.c.bf16 %v2598, %v2596
          %v2695 = vpack.c.bf16 %v2599, %v2597
          %v2696 = vpack.c.bf16 %v2602, %v2600
          %v2697 = vpack.c.bf16 %v2603, %v2601
          %v2698 = vpack.c.bf16 %v2606, %v2604
          %v2699 = vpack.c.bf16 %v2607, %v2605
          %v2700 = vpack.c.bf16 %v2610, %v2608
          %v2701 = vpack.c.bf16 %v2611, %v2609
          %v2702 = vpack.c.bf16 %v2614, %v2612
          %v2703 = vpack.c.bf16 %v2615, %v2613
          %v2704 = vpack.c.bf16 %v2618, %v2616
          %v2705 = vpack.c.bf16 %v2619, %v2617
          %v2706 = vpack.c.bf16 %v2622, %v2620
          %v2707 = vpack.c.bf16 %v2623, %v2621
          %v2708 = vpack.c.bf16 %v2626, %v2624
          %v2709 = vpack.c.bf16 %v2627, %v2625
          %v2710 = vpack.c.bf16 %v2630, %v2628
          %v2711 = vpack.c.bf16 %v2631, %v2629
          %v2712 = vpack.c.bf16 %v2634, %v2632
          %v2713 = vpack.c.bf16 %v2635, %v2633
          %v2714 = vpack.c.bf16 %v2638, %v2636
          %v2715 = vpack.c.bf16 %v2639, %v2637
          %v2716 = vpack.c.bf16 %v2642, %v2640
          %v2717 = vpack.c.bf16 %v2643, %v2641
          %v2718 = vpack.c.bf16 %v2646, %v2644
          %v2719 = vpack.c.bf16 %v2647, %v2645
          %v2720 = vpack.c.bf16 %v2650, %v2648
          %v2721 = vpack.c.bf16 %v2651, %v2649
          %v2722 = vpack.c.bf16 %v2654, %v2652
          %v2723 = vpack.c.bf16 %v2655, %v2653
          %v2724 = vpack.c.bf16 %v2658, %v2656
          %v2725 = vpack.c.bf16 %v2659, %v2657
          %v2726 = vpack.c.bf16 %v2662, %v2660
          %v2727 = vpack.c.bf16 %v2663, %v2661
          %v2728 = vld [vmem:[%s3] sm:$0xf]
          %v2729 = vld [vmem:[%s3 + $0x4] sm:$0xf]
          %v2730 = vld [vmem:[%s3 + $0x8] sm:$0xf]
          %v2731 = vld [vmem:[%s3 + $0xc] sm:$0xf]
          %v2732 = vld [vmem:[%s3 + $0x10] sm:$0xf]
          %v2733 = vld [vmem:[%s3 + $0x14] sm:$0xf]
          %v2734 = vld [vmem:[%s3 + $0x18] sm:$0xf]
          %v2735 = vld [vmem:[%s3 + $0x1c] sm:$0xf]
          %v2736 = vld [vmem:[%s3 + $0x20] sm:$0xf]
          %v2737 = vld [vmem:[%s3 + $0x24] sm:$0xf]
          %v2738 = vld [vmem:[%s3 + $0x28] sm:$0xf]
          %v2739 = vld [vmem:[%s3 + $0x2c] sm:$0xf]
          %v2740 = vld [vmem:[%s3 + $0x30] sm:$0xf]
          %v2741 = vld [vmem:[%s3 + $0x34] sm:$0xf]
          %v2742 = vld [vmem:[%s3 + $0x38] sm:$0xf]
          %v2743 = vld [vmem:[%s3 + $0x3c] sm:$0xf]
          %v2744 = vld [vmem:[%s3 + $0x40] sm:$0xf]
          %v2745 = vld [vmem:[%s3 + $0x44] sm:$0xf]
          %v2746 = vld [vmem:[%s3 + $0x48] sm:$0xf]
          %v2747 = vld [vmem:[%s3 + $0x4c] sm:$0xf]
          %v2748 = vld [vmem:[%s3 + $0x50] sm:$0xf]
          %v2749 = vld [vmem:[%s3 + $0x54] sm:$0xf]
          %v2750 = vld [vmem:[%s3 + $0x58] sm:$0xf]
          %v2751 = vld [vmem:[%s3 + $0x5c] sm:$0xf]
          %v2752 = vld [vmem:[%s3 + $0x60] sm:$0xf]
          %v2753 = vld [vmem:[%s3 + $0x64] sm:$0xf]
          %v2754 = vld [vmem:[%s3 + $0x68] sm:$0xf]
          %v2755 = vld [vmem:[%s3 + $0x6c] sm:$0xf]
          %v2756 = vld [vmem:[%s3 + $0x70] sm:$0xf]
          %v2757 = vld [vmem:[%s3 + $0x74] sm:$0xf]
          %v2758 = vld [vmem:[%s3 + $0x78] sm:$0xf]
          %v2759 = vld [vmem:[%s3 + $0x7c] sm:$0xf]
          %v2760 = vld [vmem:[%s4] sm:$0x1]
          %v2762 = vlaneseq
          %v2763 = vshrl.u32 %v2762, 7
          %v2764 = vsub.s32 0, %v2763
          %v2765 = vrot.slane %v2760, %v2764
          %v2799 = vunpack.c.l.b16 %v2728
          %v2800 = vunpack.c.l.b16 %v2729
          %v2801 = vunpack.c.l.b16 %v2730
          %v2802 = vunpack.c.l.b16 %v2731
          %v2803 = vunpack.c.l.b16 %v2732
          %v2804 = vunpack.c.l.b16 %v2733
          %v2805 = vunpack.c.l.b16 %v2734
          %v2806 = vunpack.c.l.b16 %v2735
          %v2807 = vunpack.c.l.b16 %v2736
          %v2808 = vunpack.c.l.b16 %v2737
          %v2809 = vunpack.c.l.b16 %v2738
          %v2810 = vunpack.c.l.b16 %v2739
          %v2811 = vunpack.c.l.b16 %v2740
          %v2812 = vunpack.c.l.b16 %v2741
          %v2813 = vunpack.c.l.b16 %v2742
          %v2814 = vunpack.c.l.b16 %v2743
          %v2815 = vunpack.c.l.b16 %v2744
          %v2816 = vunpack.c.l.b16 %v2745
          %v2817 = vunpack.c.l.b16 %v2746
          %v2818 = vunpack.c.l.b16 %v2747
          %v2819 = vunpack.c.l.b16 %v2748
          %v2820 = vunpack.c.l.b16 %v2749
          %v2821 = vunpack.c.l.b16 %v2750
          %v2822 = vunpack.c.l.b16 %v2751
          %v2823 = vunpack.c.l.b16 %v2752
          %v2824 = vunpack.c.l.b16 %v2753
          %v2825 = vunpack.c.l.b16 %v2754
          %v2826 = vunpack.c.l.b16 %v2755
          %v2827 = vunpack.c.l.b16 %v2756
          %v2828 = vunpack.c.l.b16 %v2757
          %v2829 = vunpack.c.l.b16 %v2758
          %v2830 = vunpack.c.l.b16 %v2759
          %v2831 = vpack.c.b16 %v2800, %v2799
          %v2832 = vpack.c.b16 %v2802, %v2801
          %v2833 = vpack.c.b16 %v2804, %v2803
          %v2834 = vpack.c.b16 %v2806, %v2805
          %v2835 = vpack.c.b16 %v2808, %v2807
          %v2836 = vpack.c.b16 %v2810, %v2809
          %v2837 = vpack.c.b16 %v2812, %v2811
          %v2838 = vpack.c.b16 %v2814, %v2813
          %v2839 = vpack.c.b16 %v2816, %v2815
          %v2840 = vpack.c.b16 %v2818, %v2817
          %v2841 = vpack.c.b16 %v2820, %v2819
          %v2842 = vpack.c.b16 %v2822, %v2821
          %v2843 = vpack.c.b16 %v2824, %v2823
          %v2844 = vpack.c.b16 %v2826, %v2825
          %v2845 = vpack.c.b16 %v2828, %v2827
          %v2846 = vpack.c.b16 %v2830, %v2829
          %2863 = vmatprep.subr.bf16.mxu0 0
          %2864 = vmatpush1.bf16.msra.mxu0 %v2831
          %2865 = vmatprep.subr.bf16.mxu0 0
          %2866 = vmatpush1.bf16.msra.mxu0 %v2832
          %2867 = vmatprep.subr.bf16.mxu0 0
          %2868 = vmatpush1.bf16.msra.mxu0 %v2833
          %2869 = vmatprep.subr.bf16.mxu0 0
          %2870 = vmatpush1.bf16.msra.mxu0 %v2834
          %2871 = vmatprep.subr.bf16.mxu0 0
          %2872 = vmatpush1.bf16.msra.mxu0 %v2835
          %2873 = vmatprep.subr.bf16.mxu0 0
          %2874 = vmatpush1.bf16.msra.mxu0 %v2836
          %2875 = vmatprep.subr.bf16.mxu0 0
          %2876 = vmatpush1.bf16.msra.mxu0 %v2837
          %2877 = vmatprep.subr.bf16.mxu0 0
          %2878 = vmatpush1.bf16.msra.mxu0 %v2838
          %2879 = vmatprep.subr.bf16.mxu0 0
          %2880 = vmatpush1.bf16.msra.mxu0 %v2839
          %2881 = vmatprep.subr.bf16.mxu0 0
          %2882 = vmatpush1.bf16.msra.mxu0 %v2840
          %2883 = vmatprep.subr.bf16.mxu0 0
          %2884 = vmatpush1.bf16.msra.mxu0 %v2841
          %2885 = vmatprep.subr.bf16.mxu0 0
          %2886 = vmatpush1.bf16.msra.mxu0 %v2842
          %2887 = vmatprep.subr.bf16.mxu0 0
          %2888 = vmatpush1.bf16.msra.mxu0 %v2843
          %2889 = vmatprep.subr.bf16.mxu0 0
          %2890 = vmatpush1.bf16.msra.mxu0 %v2844
          %2891 = vmatprep.subr.bf16.mxu0 0
          %2892 = vmatpush1.bf16.msra.mxu0 %v2845
          %2893 = vmatprep.subr.bf16.mxu0 0
          %2894 = vmatpush1.bf16.msra.mxu0 %v2846
          %2895 = vmatprep.mubr.bf16.mxu0 %v2665
          %2896 = vmatmul.mubr.bf16.gmra.mrb[0].mxu0 %v2664
          %v2897 = vpop.f32.mrb[0].mxu0
          %v2898 = vadd.f32 %v2765, %v2897
          %v2899 = vpop.f32.mrb[0].mxu0
          %v2900 = vpop.f32.mrb[0].mxu0
          %v2901 = vadd.f32 %v2765, %v2900
          %v2902 = vpop.f32.mrb[0].mxu0
          %2903 = vmatprep.mubr.bf16.mxu0 %v2667
          %2904 = vmatmul.mubr.bf16.gmra.mrb[0].mxu0 %v2666
          %v2905 = vpop.f32.mrb[0].mxu0
          %v2906 = vadd.f32 %v2765, %v2905
          %v2907 = vpop.f32.mrb[0].mxu0
          %v2908 = vpop.f32.mrb[0].mxu0
          %v2909 = vadd.f32 %v2765, %v2908
          %v2910 = vpop.f32.mrb[0].mxu0
          %2911 = vmatprep.mubr.bf16.mxu0 %v2669
          %2912 = vmatmul.mubr.bf16.gmra.mrb[0].mxu0 %v2668
          %v2913 = vpop.f32.mrb[0].mxu0
          %v2914 = vadd.f32 %v2765, %v2913
          %v2915 = vpop.f32.mrb[0].mxu0
          %v2916 = vpop.f32.mrb[0].mxu0
          %v2917 = vadd.f32 %v2765, %v2916
          %v2918 = vpop.f32.mrb[0].mxu0
          %2919 = vmatprep.mubr.bf16.mxu0 %v2671
          %2920 = vmatmul.mubr.bf16.gmra.mrb[0].mxu0 %v2670
          %v2921 = vpop.f32.mrb[0].mxu0
          %v2922 = vadd.f32 %v2765, %v2921
          %v2923 = vpop.f32.mrb[0].mxu0
          %v2924 = vpop.f32.mrb[0].mxu0
          %v2925 = vadd.f32 %v2765, %v2924
          %v2926 = vpop.f32.mrb[0].mxu0
          %2927 = vmatprep.mubr.bf16.mxu0 %v2673
          %2928 = vmatmul.mubr.bf16.gmra.mrb[0].mxu0 %v2672
          %v2929 = vpop.f32.mrb[0].mxu0
          %v2930 = vadd.f32 %v2765, %v2929
          %v2931 = vpop.f32.mrb[0].mxu0
          %v2932 = vpop.f32.mrb[0].mxu0
          %v2933 = vadd.f32 %v2765, %v2932
          %v2934 = vpop.f32.mrb[0].mxu0
          %2935 = vmatprep.mubr.bf16.mxu0 %v2675
          %2936 = vmatmul.mubr.bf16.gmra.mrb[0].mxu0 %v2674
          %v2937 = vpop.f32.mrb[0].mxu0
          %v2938 = vadd.f32 %v2765, %v2937
          %v2939 = vpop.f32.mrb[0].mxu0
          %v2940 = vpop.f32.mrb[0].mxu0
          %v2941 = vadd.f32 %v2765, %v2940
          %v2942 = vpop.f32.mrb[0].mxu0
          %2943 = vmatprep.mubr.bf16.mxu0 %v2677
          %2944 = vmatmul.mubr.bf16.gmra.mrb[0].mxu0 %v2676
          %v2945 = vpop.f32.mrb[0].mxu0
          %v2946 = vadd.f32 %v2765, %v2945
          %v2947 = vpop.f32.mrb[0].mxu0
          %v2948 = vpop.f32.mrb[0].mxu0
          %v2949 = vadd.f32 %v2765, %v2948
          %v2950 = vpop.f32.mrb[0].mxu0
          %2951 = vmatprep.mubr.bf16.mxu0 %v2679
          %2952 = vmatmul.mubr.bf16.gmra.mrb[0].mxu0 %v2678
          %v2953 = vpop.f32.mrb[0].mxu0
          %v2954 = vadd.f32 %v2765, %v2953
          %v2955 = vpop.f32.mrb[0].mxu0
          %v2956 = vpop.f32.mrb[0].mxu0
          %v2957 = vadd.f32 %v2765, %v2956
          %v2958 = vpop.f32.mrb[0].mxu0
          %2959 = vmatprep.mubr.bf16.mxu0 %v2681
          %2960 = vmatmul.mubr.bf16.gmra.mrb[0].mxu0 %v2680
          %v2961 = vpop.f32.mrb[0].mxu0
          %v2962 = vadd.f32 %v2765, %v2961
          %v2963 = vpop.f32.mrb[0].mxu0
          %v2964 = vpop.f32.mrb[0].mxu0
          %v2965 = vadd.f32 %v2765, %v2964
          %v2966 = vpop.f32.mrb[0].mxu0
          %2967 = vmatprep.mubr.bf16.mxu0 %v2683
          %2968 = vmatmul.mubr.bf16.gmra.mrb[0].mxu0 %v2682
          %v2969 = vpop.f32.mrb[0].mxu0
          %v2970 = vadd.f32 %v2765, %v2969
          %v2971 = vpop.f32.mrb[0].mxu0
          %v2972 = vpop.f32.mrb[0].mxu0
          %v2973 = vadd.f32 %v2765, %v2972
          %v2974 = vpop.f32.mrb[0].mxu0
          %2975 = vmatprep.mubr.bf16.mxu0 %v2685
          %2976 = vmatmul.mubr.bf16.gmra.mrb[0].mxu0 %v2684
          %v2977 = vpop.f32.mrb[0].mxu0
          %v2978 = vadd.f32 %v2765, %v2977
          %v2979 = vpop.f32.mrb[0].mxu0
          %v2980 = vpop.f32.mrb[0].mxu0
          %v2981 = vadd.f32 %v2765, %v2980
          %v2982 = vpop.f32.mrb[0].mxu0
          %2983 = vmatprep.mubr.bf16.mxu0 %v2687
          %2984 = vmatmul.mubr.bf16.gmra.mrb[0].mxu0 %v2686
          %v2985 = vpop.f32.mrb[0].mxu0
          %v2986 = vadd.f32 %v2765, %v2985
          %v2987 = vpop.f32.mrb[0].mxu0
          %v2988 = vpop.f32.mrb[0].mxu0
          %v2989 = vadd.f32 %v2765, %v2988
          %v2990 = vpop.f32.mrb[0].mxu0
          %2991 = vmatprep.mubr.bf16.mxu0 %v2689
          %2992 = vmatmul.mubr.bf16.gmra.mrb[0].mxu0 %v2688
          %v2993 = vpop.f32.mrb[0].mxu0
          %v2994 = vadd.f32 %v2765, %v2993
          %v2995 = vpop.f32.mrb[0].mxu0
          %v2996 = vpop.f32.mrb[0].mxu0
          %v2997 = vadd.f32 %v2765, %v2996
          %v2998 = vpop.f32.mrb[0].mxu0
          %2999 = vmatprep.mubr.bf16.mxu0 %v2691
          %3000 = vmatmul.mubr.bf16.gmra.mrb[0].mxu0 %v2690
          %v3001 = vpop.f32.mrb[0].mxu0
          %v3002 = vadd.f32 %v2765, %v3001
          %v3003 = vpop.f32.mrb[0].mxu0
          %v3004 = vpop.f32.mrb[0].mxu0
          %v3005 = vadd.f32 %v2765, %v3004
          %v3006 = vpop.f32.mrb[0].mxu0
          %3007 = vmatprep.mubr.bf16.mxu0 %v2693
          %3008 = vmatmul.mubr.bf16.gmra.mrb[0].mxu0 %v2692
          %v3009 = vpop.f32.mrb[0].mxu0
          %v3010 = vadd.f32 %v2765, %v3009
          %v3011 = vpop.f32.mrb[0].mxu0
          %v3012 = vpop.f32.mrb[0].mxu0
          %v3013 = vadd.f32 %v2765, %v3012
          %v3014 = vpop.f32.mrb[0].mxu0
          %3015 = vmatprep.mubr.bf16.mxu0 %v2695
          %3016 = vmatmul.mubr.bf16.gmra.mrb[0].mxu0 %v2694
          %v3017 = vpop.f32.mrb[0].mxu0
          %v3018 = vadd.f32 %v2765, %v3017
          %v3019 = vpop.f32.mrb[0].mxu0
          %v3020 = vpop.f32.mrb[0].mxu0
          %v3021 = vadd.f32 %v2765, %v3020
          %v3022 = vpop.f32.mrb[0].mxu0
          %3023 = vmatprep.mubr.bf16.mxu0 %v2697
          %3024 = vmatmul.mubr.bf16.gmra.mrb[0].mxu0 %v2696
          %v3025 = vpop.f32.mrb[0].mxu0
          %v3026 = vadd.f32 %v2765, %v3025
          %v3027 = vpop.f32.mrb[0].mxu0
          %v3028 = vpop.f32.mrb[0].mxu0
          %v3029 = vadd.f32 %v2765, %v3028
          %v3030 = vpop.f32.mrb[0].mxu0
          %3031 = vmatprep.mubr.bf16.mxu0 %v2699
          %3032 = vmatmul.mubr.bf16.gmra.mrb[0].mxu0 %v2698
          %v3033 = vpop.f32.mrb[0].mxu0
          %v3034 = vadd.f32 %v2765, %v3033
          %v3035 = vpop.f32.mrb[0].mxu0
          %v3036 = vpop.f32.mrb[0].mxu0
          %v3037 = vadd.f32 %v2765, %v3036
          %v3038 = vpop.f32.mrb[0].mxu0
          %3039 = vmatprep.mubr.bf16.mxu0 %v2701
          %3040 = vmatmul.mubr.bf16.gmra.mrb[0].mxu0 %v2700
          %v3041 = vpop.f32.mrb[0].mxu0
          %v3042 = vadd.f32 %v2765, %v3041
          %v3043 = vpop.f32.mrb[0].mxu0
          %v3044 = vpop.f32.mrb[0].mxu0
          %v3045 = vadd.f32 %v2765, %v3044
          %v3046 = vpop.f32.mrb[0].mxu0
          %3047 = vmatprep.mubr.bf16.mxu0 %v2703
          %3048 = vmatmul.mubr.bf16.gmra.mrb[0].mxu0 %v2702
          %v3049 = vpop.f32.mrb[0].mxu0
          %v3050 = vadd.f32 %v2765, %v3049
          %v3051 = vpop.f32.mrb[0].mxu0
          %v3052 = vpop.f32.mrb[0].mxu0
          %v3053 = vadd.f32 %v2765, %v3052
          %v3054 = vpop.f32.mrb[0].mxu0
          %3055 = vmatprep.mubr.bf16.mxu0 %v2705
          %3056 = vmatmul.mubr.bf16.gmra.mrb[0].mxu0 %v2704
          %v3057 = vpop.f32.mrb[0].mxu0
          %v3058 = vadd.f32 %v2765, %v3057
          %v3059 = vpop.f32.mrb[0].mxu0
          %v3060 = vpop.f32.mrb[0].mxu0
          %v3061 = vadd.f32 %v2765, %v3060
          %v3062 = vpop.f32.mrb[0].mxu0
          %3063 = vmatprep.mubr.bf16.mxu0 %v2707
          %3064 = vmatmul.mubr.bf16.gmra.mrb[0].mxu0 %v2706
          %v3065 = vpop.f32.mrb[0].mxu0
          %v3066 = vadd.f32 %v2765, %v3065
          %v3067 = vpop.f32.mrb[0].mxu0
          %v3068 = vpop.f32.mrb[0].mxu0
          %v3069 = vadd.f32 %v2765, %v3068
          %v3070 = vpop.f32.mrb[0].mxu0
          %3071 = vmatprep.mubr.bf16.mxu0 %v2709
          %3072 = vmatmul.mubr.bf16.gmra.mrb[0].mxu0 %v2708
          %v3073 = vpop.f32.mrb[0].mxu0
          %v3074 = vadd.f32 %v2765, %v3073
          %v3075 = vpop.f32.mrb[0].mxu0
          %v3076 = vpop.f32.mrb[0].mxu0
          %v3077 = vadd.f32 %v2765, %v3076
          %v3078 = vpop.f32.mrb[0].mxu0
          %3079 = vmatprep.mubr.bf16.mxu0 %v2711
          %3080 = vmatmul.mubr.bf16.gmra.mrb[0].mxu0 %v2710
          %v3081 = vpop.f32.mrb[0].mxu0
          %v3082 = vadd.f32 %v2765, %v3081
          %v3083 = vpop.f32.mrb[0].mxu0
          %v3084 = vpop.f32.mrb[0].mxu0
          %v3085 = vadd.f32 %v2765, %v3084
          %v3086 = vpop.f32.mrb[0].mxu0
          %3087 = vmatprep.mubr.bf16.mxu0 %v2713
          %3088 = vmatmul.mubr.bf16.gmra.mrb[0].mxu0 %v2712
          %v3089 = vpop.f32.mrb[0].mxu0
          %v3090 = vadd.f32 %v2765, %v3089
          %v3091 = vpop.f32.mrb[0].mxu0
          %v3092 = vpop.f32.mrb[0].mxu0
          %v3093 = vadd.f32 %v2765, %v3092
          %v3094 = vpop.f32.mrb[0].mxu0
          %3095 = vmatprep.mubr.bf16.mxu0 %v2715
          %3096 = vmatmul.mubr.bf16.gmra.mrb[0].mxu0 %v2714
          %v3097 = vpop.f32.mrb[0].mxu0
          %v3098 = vadd.f32 %v2765, %v3097
          %v3099 = vpop.f32.mrb[0].mxu0
          %v3100 = vpop.f32.mrb[0].mxu0
          %v3101 = vadd.f32 %v2765, %v3100
          %v3102 = vpop.f32.mrb[0].mxu0
          %3103 = vmatprep.mubr.bf16.mxu0 %v2717
          %3104 = vmatmul.mubr.bf16.gmra.mrb[0].mxu0 %v2716
          %v3105 = vpop.f32.mrb[0].mxu0
          %v3106 = vadd.f32 %v2765, %v3105
          %v3107 = vpop.f32.mrb[0].mxu0
          %v3108 = vpop.f32.mrb[0].mxu0
          %v3109 = vadd.f32 %v2765, %v3108
          %v3110 = vpop.f32.mrb[0].mxu0
          %3111 = vmatprep.mubr.bf16.mxu0 %v2719
          %3112 = vmatmul.mubr.bf16.gmra.mrb[0].mxu0 %v2718
          %v3113 = vpop.f32.mrb[0].mxu0
          %v3114 = vadd.f32 %v2765, %v3113
          %v3115 = vpop.f32.mrb[0].mxu0
          %v3116 = vpop.f32.mrb[0].mxu0
          %v3117 = vadd.f32 %v2765, %v3116
          %v3118 = vpop.f32.mrb[0].mxu0
          %3119 = vmatprep.mubr.bf16.mxu0 %v2721
          %3120 = vmatmul.mubr.bf16.gmra.mrb[0].mxu0 %v2720
          %v3121 = vpop.f32.mrb[0].mxu0
          %v3122 = vadd.f32 %v2765, %v3121
          %v3123 = vpop.f32.mrb[0].mxu0
          %v3124 = vpop.f32.mrb[0].mxu0
          %v3125 = vadd.f32 %v2765, %v3124
          %v3126 = vpop.f32.mrb[0].mxu0
          %3127 = vmatprep.mubr.bf16.mxu0 %v2723
          %3128 = vmatmul.mubr.bf16.gmra.mrb[0].mxu0 %v2722
          %v3129 = vpop.f32.mrb[0].mxu0
          %v3130 = vadd.f32 %v2765, %v3129
          %v3131 = vpop.f32.mrb[0].mxu0
          %v3132 = vpop.f32.mrb[0].mxu0
          %v3133 = vadd.f32 %v2765, %v3132
          %v3134 = vpop.f32.mrb[0].mxu0
          %3135 = vmatprep.mubr.bf16.mxu0 %v2725
          %3136 = vmatmul.mubr.bf16.gmra.mrb[0].mxu0 %v2724
          %v3137 = vpop.f32.mrb[0].mxu0
          %v3138 = vadd.f32 %v2765, %v3137
          %v3139 = vpop.f32.mrb[0].mxu0
          %v3140 = vpop.f32.mrb[0].mxu0
          %v3141 = vadd.f32 %v2765, %v3140
          %v3142 = vpop.f32.mrb[0].mxu0
          %3143 = vmatprep.mubr.bf16.mxu0 %v2727
          %3144 = vmatmul.mubr.bf16.gmra.mrb[0].mxu0 %v2726
          %v3145 = vpop.f32.mrb[0].mxu0
          %v3146 = vadd.f32 %v2765, %v3145
          %v3147 = vpop.f32.mrb[0].mxu0
          %v3148 = vpop.f32.mrb[0].mxu0
          %v3149 = vadd.f32 %v2765, %v3148
          %v3150 = vpop.f32.mrb[0].mxu0
          %3151 = vdwg.mxu0
          %v3152 = vmax.f32 %v2898, 0.0
          %v3153 = vmax.f32 %v2901, 0.0
          %v3154 = vmax.f32 %v2906, 0.0
          %v3155 = vmax.f32 %v2909, 0.0
          %v3156 = vmax.f32 %v2914, 0.0
          %v3157 = vmax.f32 %v2917, 0.0
          %v3158 = vmax.f32 %v2922, 0.0
          %v3159 = vmax.f32 %v2925, 0.0
          %v3160 = vmax.f32 %v2930, 0.0
          %v3161 = vmax.f32 %v2933, 0.0
          %v3162 = vmax.f32 %v2938, 0.0
          %v3163 = vmax.f32 %v2941, 0.0
          %v3164 = vmax.f32 %v2946, 0.0
          %v3165 = vmax.f32 %v2949, 0.0
          %v3166 = vmax.f32 %v2954, 0.0
          %v3167 = vmax.f32 %v2957, 0.0
          %v3168 = vmax.f32 %v2962, 0.0
          %v3169 = vmax.f32 %v2965, 0.0
          %v3170 = vmax.f32 %v2970, 0.0
          %v3171 = vmax.f32 %v2973, 0.0
          %v3172 = vmax.f32 %v2978, 0.0
          %v3173 = vmax.f32 %v2981, 0.0
          %v3174 = vmax.f32 %v2986, 0.0
          %v3175 = vmax.f32 %v2989, 0.0
          %v3176 = vmax.f32 %v2994, 0.0
          %v3177 = vmax.f32 %v2997, 0.0
          %v3178 = vmax.f32 %v3002, 0.0
          %v3179 = vmax.f32 %v3005, 0.0
          %v3180 = vmax.f32 %v3010, 0.0
          %v3181 = vmax.f32 %v3013, 0.0
          %v3182 = vmax.f32 %v3018, 0.0
          %v3183 = vmax.f32 %v3021, 0.0
          %v3184 = vmax.f32 %v3026, 0.0
          %v3185 = vmax.f32 %v3029, 0.0
          %v3186 = vmax.f32 %v3034, 0.0
          %v3187 = vmax.f32 %v3037, 0.0
          %v3188 = vmax.f32 %v3042, 0.0
          %v3189 = vmax.f32 %v3045, 0.0
          %v3190 = vmax.f32 %v3050, 0.0
          %v3191 = vmax.f32 %v3053, 0.0
          %v3192 = vmax.f32 %v3058, 0.0
          %v3193 = vmax.f32 %v3061, 0.0
          %v3194 = vmax.f32 %v3066, 0.0
          %v3195 = vmax.f32 %v3069, 0.0
          %v3196 = vmax.f32 %v3074, 0.0
          %v3197 = vmax.f32 %v3077, 0.0
          %v3198 = vmax.f32 %v3082, 0.0
          %v3199 = vmax.f32 %v3085, 0.0
          %v3200 = vmax.f32 %v3090, 0.0
          %v3201 = vmax.f32 %v3093, 0.0
          %v3202 = vmax.f32 %v3098, 0.0
          %v3203 = vmax.f32 %v3101, 0.0
          %v3204 = vmax.f32 %v3106, 0.0
          %v3205 = vmax.f32 %v3109, 0.0
          %v3206 = vmax.f32 %v3114, 0.0
          %v3207 = vmax.f32 %v3117, 0.0
          %v3208 = vmax.f32 %v3122, 0.0
          %v3209 = vmax.f32 %v3125, 0.0
          %v3210 = vmax.f32 %v3130, 0.0
          %v3211 = vmax.f32 %v3133, 0.0
          %v3212 = vmax.f32 %v3138, 0.0
          %v3213 = vmax.f32 %v3141, 0.0
          %v3214 = vmax.f32 %v3146, 0.0
          %v3215 = vmax.f32 %v3149, 0.0
          %v3216 = vpack.c.bf16 %v3153, %v3152
          %v3217 = vpack.c.bf16 %v3155, %v3154
          %v3218 = vpack.c.bf16 %v3157, %v3156
          %v3219 = vpack.c.bf16 %v3159, %v3158
          %v3220 = vpack.c.bf16 %v3161, %v3160
          %v3221 = vpack.c.bf16 %v3163, %v3162
          %v3222 = vpack.c.bf16 %v3165, %v3164
          %v3223 = vpack.c.bf16 %v3167, %v3166
          %v3224 = vpack.c.bf16 %v3169, %v3168
          %v3225 = vpack.c.bf16 %v3171, %v3170
          %v3226 = vpack.c.bf16 %v3173, %v3172
          %v3227 = vpack.c.bf16 %v3175, %v3174
          %v3228 = vpack.c.bf16 %v3177, %v3176
          %v3229 = vpack.c.bf16 %v3179, %v3178
          %v3230 = vpack.c.bf16 %v3181, %v3180
          %v3231 = vpack.c.bf16 %v3183, %v3182
          %v3232 = vpack.c.bf16 %v3185, %v3184
          %v3233 = vpack.c.bf16 %v3187, %v3186
          %v3234 = vpack.c.bf16 %v3189, %v3188
          %v3235 = vpack.c.bf16 %v3191, %v3190
          %v3236 = vpack.c.bf16 %v3193, %v3192
          %v3237 = vpack.c.bf16 %v3195, %v3194
          %v3238 = vpack.c.bf16 %v3197, %v3196
          %v3239 = vpack.c.bf16 %v3199, %v3198
          %v3240 = vpack.c.bf16 %v3201, %v3200
          %v3241 = vpack.c.bf16 %v3203, %v3202
          %v3242 = vpack.c.bf16 %v3205, %v3204
          %v3243 = vpack.c.bf16 %v3207, %v3206
          %v3244 = vpack.c.bf16 %v3209, %v3208
          %v3245 = vpack.c.bf16 %v3211, %v3210
          %v3246 = vpack.c.bf16 %v3213, %v3212
          %v3247 = vpack.c.bf16 %v3215, %v3214
          %v3248 = vld [vmem:[%s5] sm:$0xf]
          %v3249 = vld [vmem:[%s5 + $0x4] sm:$0xf]
          %v3250 = vld [vmem:[%s5 + $0x8] sm:$0xf]
          %v3251 = vld [vmem:[%s5 + $0xc] sm:$0xf]
          %v3252 = vld [vmem:[%s5 + $0x10] sm:$0xf]
          %v3253 = vld [vmem:[%s5 + $0x14] sm:$0xf]
          %v3254 = vld [vmem:[%s5 + $0x18] sm:$0xf]
          %v3255 = vld [vmem:[%s5 + $0x1c] sm:$0xf]
          %v3256 = vld [vmem:[%s5 + $0x20] sm:$0xf]
          %v3257 = vld [vmem:[%s5 + $0x24] sm:$0xf]
          %v3258 = vld [vmem:[%s5 + $0x28] sm:$0xf]
          %v3259 = vld [vmem:[%s5 + $0x2c] sm:$0xf]
          %v3260 = vld [vmem:[%s5 + $0x30] sm:$0xf]
          %v3261 = vld [vmem:[%s5 + $0x34] sm:$0xf]
          %v3262 = vld [vmem:[%s5 + $0x38] sm:$0xf]
          %v3263 = vld [vmem:[%s5 + $0x3c] sm:$0xf]
          %v3264 = vld [vmem:[%s6] sm:$0x1]
          %v3266 = vlaneseq
          %v3267 = vshrl.u32 %v3266, 7
          %v3268 = vsub.s32 0, %v3267
          %v3269 = vrot.slane %v3264, %v3268
          %v3287 = vunpack.c.l.b16 %v3248
          %v3288 = vunpack.c.l.b16 %v3249
          %v3289 = vunpack.c.l.b16 %v3250
          %v3290 = vunpack.c.l.b16 %v3251
          %v3291 = vunpack.c.l.b16 %v3252
          %v3292 = vunpack.c.l.b16 %v3253
          %v3293 = vunpack.c.l.b16 %v3254
          %v3294 = vunpack.c.l.b16 %v3255
          %v3295 = vunpack.c.l.b16 %v3256
          %v3296 = vunpack.c.l.b16 %v3257
          %v3297 = vunpack.c.l.b16 %v3258
          %v3298 = vunpack.c.l.b16 %v3259
          %v3299 = vunpack.c.l.b16 %v3260
          %v3300 = vunpack.c.l.b16 %v3261
          %v3301 = vunpack.c.l.b16 %v3262
          %v3302 = vunpack.c.l.b16 %v3263
          %v3303 = vpack.c.b16 %v3288, %v3287
          %v3304 = vpack.c.b16 %v3290, %v3289
          %v3305 = vpack.c.b16 %v3292, %v3291
          %v3306 = vpack.c.b16 %v3294, %v3293
          %v3307 = vpack.c.b16 %v3296, %v3295
          %v3308 = vpack.c.b16 %v3298, %v3297
          %v3309 = vpack.c.b16 %v3300, %v3299
          %v3310 = vpack.c.b16 %v3302, %v3301
          %3319 = vmatprep.subr.bf16.mxu0 0
          %3320 = vmatpush1.bf16.msra.mxu0 %v3303
          %3321 = vmatprep.subr.bf16.mxu0 0
          %3322 = vmatpush1.bf16.msra.mxu0 %v3304
          %3323 = vmatprep.subr.bf16.mxu0 0
          %3324 = vmatpush1.bf16.msra.mxu0 %v3305
          %3325 = vmatprep.subr.bf16.mxu0 0
          %3326 = vmatpush1.bf16.msra.mxu0 %v3306
          %3327 = vmatprep.subr.bf16.mxu0 0
          %3328 = vmatpush1.bf16.msra.mxu0 %v3307
          %3329 = vmatprep.subr.bf16.mxu0 0
          %3330 = vmatpush1.bf16.msra.mxu0 %v3308
          %3331 = vmatprep.subr.bf16.mxu0 0
          %3332 = vmatpush1.bf16.msra.mxu0 %v3309
          %3333 = vmatprep.subr.bf16.mxu0 0
          %3334 = vmatpush1.bf16.msra.mxu0 %v3310
          %3335 = vmatprep.subr.bf16.mxu0 0
          %3336 = vmatpush1.bf16.msra.mxu0 0
          %3337 = vmatprep.subr.bf16.mxu0 0
          %3338 = vmatpush1.bf16.msra.mxu0 0
          %3339 = vmatprep.subr.bf16.mxu0 0
          %3340 = vmatpush1.bf16.msra.mxu0 0
          %3341 = vmatprep.subr.bf16.mxu0 0
          %3342 = vmatpush1.bf16.msra.mxu0 0
          %3343 = vmatprep.subr.bf16.mxu0 0
          %3344 = vmatpush1.bf16.msra.mxu0 0
          %3345 = vmatprep.subr.bf16.mxu0 0
          %3346 = vmatpush1.bf16.msra.mxu0 0
          %3347 = vmatprep.subr.bf16.mxu0 0
          %3348 = vmatpush1.bf16.msra.mxu0 0
          %3349 = vmatprep.subr.bf16.mxu0 0
          %3350 = vmatpush1.bf16.msra.mxu0 0
          %3351 = vmatprep.mubr.bf16.mxu0 0
          %3352 = vmatmul.mubr.bf16.gmra.mrb[0].mxu0 %v3216
          %v3353 = vpop.f32.mrb[0].mxu0
          %v3354 = vadd.f32 %v3269, %v3353
          %v3355 = vpop.f32.mrb[0].mxu0
          %v3356 = vpop.f32.mrb[0].mxu0
          %v3357 = vadd.f32 %v3269, %v3356
          %v3358 = vpop.f32.mrb[0].mxu0
          %3359 = vmatprep.mubr.bf16.mxu0 0
          %3360 = vmatmul.mubr.bf16.gmra.mrb[0].mxu0 %v3217
          %v3361 = vpop.f32.mrb[0].mxu0
          %v3362 = vadd.f32 %v3269, %v3361
          %v3363 = vpop.f32.mrb[0].mxu0
          %v3364 = vpop.f32.mrb[0].mxu0
          %v3365 = vadd.f32 %v3269, %v3364
          %v3366 = vpop.f32.mrb[0].mxu0
          %3367 = vmatprep.mubr.bf16.mxu0 0
          %3368 = vmatmul.mubr.bf16.gmra.mrb[0].mxu0 %v3218
          %v3369 = vpop.f32.mrb[0].mxu0
          %v3370 = vadd.f32 %v3269, %v3369
          %v3371 = vpop.f32.mrb[0].mxu0
          %v3372 = vpop.f32.mrb[0].mxu0
          %v3373 = vadd.f32 %v3269, %v3372
          %v3374 = vpop.f32.mrb[0].mxu0
          %3375 = vmatprep.mubr.bf16.mxu0 0
          %3376 = vmatmul.mubr.bf16.gmra.mrb[0].mxu0 %v3219
          %v3377 = vpop.f32.mrb[0].mxu0
          %v3378 = vadd.f32 %v3269, %v3377
          %v3379 = vpop.f32.mrb[0].mxu0
          %v3380 = vpop.f32.mrb[0].mxu0
          %v3381 = vadd.f32 %v3269, %v3380
          %v3382 = vpop.f32.mrb[0].mxu0
          %3383 = vmatprep.mubr.bf16.mxu0 0
          %3384 = vmatmul.mubr.bf16.gmra.mrb[0].mxu0 %v3220
          %v3385 = vpop.f32.mrb[0].mxu0
          %v3386 = vadd.f32 %v3269, %v3385
          %v3387 = vpop.f32.mrb[0].mxu0
          %v3388 = vpop.f32.mrb[0].mxu0
          %v3389 = vadd.f32 %v3269, %v3388
          %v3390 = vpop.f32.mrb[0].mxu0
          %3391 = vmatprep.mubr.bf16.mxu0 0
          %3392 = vmatmul.mubr.bf16.gmra.mrb[0].mxu0 %v3221
          %v3393 = vpop.f32.mrb[0].mxu0
          %v3394 = vadd.f32 %v3269, %v3393
          %v3395 = vpop.f32.mrb[0].mxu0
          %v3396 = vpop.f32.mrb[0].mxu0
          %v3397 = vadd.f32 %v3269, %v3396
          %v3398 = vpop.f32.mrb[0].mxu0
          %3399 = vmatprep.mubr.bf16.mxu0 0
          %3400 = vmatmul.mubr.bf16.gmra.mrb[0].mxu0 %v3222
          %v3401 = vpop.f32.mrb[0].mxu0
          %v3402 = vadd.f32 %v3269, %v3401
          %v3403 = vpop.f32.mrb[0].mxu0
          %v3404 = vpop.f32.mrb[0].mxu0
          %v3405 = vadd.f32 %v3269, %v3404
          %v3406 = vpop.f32.mrb[0].mxu0
          %3407 = vmatprep.mubr.bf16.mxu0 0
          %3408 = vmatmul.mubr.bf16.gmra.mrb[0].mxu0 %v3223
          %v3409 = vpop.f32.mrb[0].mxu0
          %v3410 = vadd.f32 %v3269, %v3409
          %v3411 = vpop.f32.mrb[0].mxu0
          %v3412 = vpop.f32.mrb[0].mxu0
          %v3413 = vadd.f32 %v3269, %v3412
          %v3414 = vpop.f32.mrb[0].mxu0
          %3415 = vmatprep.mubr.bf16.mxu0 0
          %3416 = vmatmul.mubr.bf16.gmra.mrb[0].mxu0 %v3224
          %v3417 = vpop.f32.mrb[0].mxu0
          %v3418 = vadd.f32 %v3269, %v3417
          %v3419 = vpop.f32.mrb[0].mxu0
          %v3420 = vpop.f32.mrb[0].mxu0
          %v3421 = vadd.f32 %v3269, %v3420
          %v3422 = vpop.f32.mrb[0].mxu0
          %3423 = vmatprep.mubr.bf16.mxu0 0
          %3424 = vmatmul.mubr.bf16.gmra.mrb[0].mxu0 %v3225
          %v3425 = vpop.f32.mrb[0].mxu0
          %v3426 = vadd.f32 %v3269, %v3425
          %v3427 = vpop.f32.mrb[0].mxu0
          %v3428 = vpop.f32.mrb[0].mxu0
          %v3429 = vadd.f32 %v3269, %v3428
          %v3430 = vpop.f32.mrb[0].mxu0
          %3431 = vmatprep.mubr.bf16.mxu0 0
          %3432 = vmatmul.mubr.bf16.gmra.mrb[0].mxu0 %v3226
          %v3433 = vpop.f32.mrb[0].mxu0
          %v3434 = vadd.f32 %v3269, %v3433
          %v3435 = vpop.f32.mrb[0].mxu0
          %v3436 = vpop.f32.mrb[0].mxu0
          %v3437 = vadd.f32 %v3269, %v3436
          %v3438 = vpop.f32.mrb[0].mxu0
          %3439 = vmatprep.mubr.bf16.mxu0 0
          %3440 = vmatmul.mubr.bf16.gmra.mrb[0].mxu0 %v3227
          %v3441 = vpop.f32.mrb[0].mxu0
          %v3442 = vadd.f32 %v3269, %v3441
          %v3443 = vpop.f32.mrb[0].mxu0
          %v3444 = vpop.f32.mrb[0].mxu0
          %v3445 = vadd.f32 %v3269, %v3444
          %v3446 = vpop.f32.mrb[0].mxu0
          %3447 = vmatprep.mubr.bf16.mxu0 0
          %3448 = vmatmul.mubr.bf16.gmra.mrb[0].mxu0 %v3228
          %v3449 = vpop.f32.mrb[0].mxu0
          %v3450 = vadd.f32 %v3269, %v3449
          %v3451 = vpop.f32.mrb[0].mxu0
          %v3452 = vpop.f32.mrb[0].mxu0
          %v3453 = vadd.f32 %v3269, %v3452
          %v3454 = vpop.f32.mrb[0].mxu0
          %3455 = vmatprep.mubr.bf16.mxu0 0
          %3456 = vmatmul.mubr.bf16.gmra.mrb[0].mxu0 %v3229
          %v3457 = vpop.f32.mrb[0].mxu0
          %v3458 = vadd.f32 %v3269, %v3457
          %v3459 = vpop.f32.mrb[0].mxu0
          %v3460 = vpop.f32.mrb[0].mxu0
          %v3461 = vadd.f32 %v3269, %v3460
          %v3462 = vpop.f32.mrb[0].mxu0
          %3463 = vmatprep.mubr.bf16.mxu0 0
          %3464 = vmatmul.mubr.bf16.gmra.mrb[0].mxu0 %v3230
          %v3465 = vpop.f32.mrb[0].mxu0
          %v3466 = vadd.f32 %v3269, %v3465
          %v3467 = vpop.f32.mrb[0].mxu0
          %v3468 = vpop.f32.mrb[0].mxu0
          %v3469 = vadd.f32 %v3269, %v3468
          %v3470 = vpop.f32.mrb[0].mxu0
          %3471 = vmatprep.mubr.bf16.mxu0 0
          %3472 = vmatmul.mubr.bf16.gmra.mrb[0].mxu0 %v3231
          %v3473 = vpop.f32.mrb[0].mxu0
          %v3474 = vadd.f32 %v3269, %v3473
          %v3475 = vpop.f32.mrb[0].mxu0
          %v3476 = vpop.f32.mrb[0].mxu0
          %v3477 = vadd.f32 %v3269, %v3476
          %v3478 = vpop.f32.mrb[0].mxu0
          %3479 = vmatprep.mubr.bf16.mxu0 0
          %3480 = vmatmul.mubr.bf16.gmra.mrb[0].mxu0 %v3232
          %v3481 = vpop.f32.mrb[0].mxu0
          %v3482 = vadd.f32 %v3269, %v3481
          %v3483 = vpop.f32.mrb[0].mxu0
          %v3484 = vpop.f32.mrb[0].mxu0
          %v3485 = vadd.f32 %v3269, %v3484
          %v3486 = vpop.f32.mrb[0].mxu0
          %3487 = vmatprep.mubr.bf16.mxu0 0
          %3488 = vmatmul.mubr.bf16.gmra.mrb[0].mxu0 %v3233
          %v3489 = vpop.f32.mrb[0].mxu0
          %v3490 = vadd.f32 %v3269, %v3489
          %v3491 = vpop.f32.mrb[0].mxu0
          %v3492 = vpop.f32.mrb[0].mxu0
          %v3493 = vadd.f32 %v3269, %v3492
          %v3494 = vpop.f32.mrb[0].mxu0
          %3495 = vmatprep.mubr.bf16.mxu0 0
          %3496 = vmatmul.mubr.bf16.gmra.mrb[0].mxu0 %v3234
          %v3497 = vpop.f32.mrb[0].mxu0
          %v3498 = vadd.f32 %v3269, %v3497
          %v3499 = vpop.f32.mrb[0].mxu0
          %v3500 = vpop.f32.mrb[0].mxu0
          %v3501 = vadd.f32 %v3269, %v3500
          %v3502 = vpop.f32.mrb[0].mxu0
          %3503 = vmatprep.mubr.bf16.mxu0 0
          %3504 = vmatmul.mubr.bf16.gmra.mrb[0].mxu0 %v3235
          %v3505 = vpop.f32.mrb[0].mxu0
          %v3506 = vadd.f32 %v3269, %v3505
          %v3507 = vpop.f32.mrb[0].mxu0
          %v3508 = vpop.f32.mrb[0].mxu0
          %v3509 = vadd.f32 %v3269, %v3508
          %v3510 = vpop.f32.mrb[0].mxu0
          %3511 = vmatprep.mubr.bf16.mxu0 0
          %3512 = vmatmul.mubr.bf16.gmra.mrb[0].mxu0 %v3236
          %v3513 = vpop.f32.mrb[0].mxu0
          %v3514 = vadd.f32 %v3269, %v3513
          %v3515 = vpop.f32.mrb[0].mxu0
          %v3516 = vpop.f32.mrb[0].mxu0
          %v3517 = vadd.f32 %v3269, %v3516
          %v3518 = vpop.f32.mrb[0].mxu0
          %3519 = vmatprep.mubr.bf16.mxu0 0
          %3520 = vmatmul.mubr.bf16.gmra.mrb[0].mxu0 %v3237
          %v3521 = vpop.f32.mrb[0].mxu0
          %v3522 = vadd.f32 %v3269, %v3521
          %v3523 = vpop.f32.mrb[0].mxu0
          %v3524 = vpop.f32.mrb[0].mxu0
          %v3525 = vadd.f32 %v3269, %v3524
          %v3526 = vpop.f32.mrb[0].mxu0
          %3527 = vmatprep.mubr.bf16.mxu0 0
          %3528 = vmatmul.mubr.bf16.gmra.mrb[0].mxu0 %v3238
          %v3529 = vpop.f32.mrb[0].mxu0
          %v3530 = vadd.f32 %v3269, %v3529
          %v3531 = vpop.f32.mrb[0].mxu0
          %v3532 = vpop.f32.mrb[0].mxu0
          %v3533 = vadd.f32 %v3269, %v3532
          %v3534 = vpop.f32.mrb[0].mxu0
          %3535 = vmatprep.mubr.bf16.mxu0 0
          %3536 = vmatmul.mubr.bf16.gmra.mrb[0].mxu0 %v3239
          %v3537 = vpop.f32.mrb[0].mxu0
          %v3538 = vadd.f32 %v3269, %v3537
          %v3539 = vpop.f32.mrb[0].mxu0
          %v3540 = vpop.f32.mrb[0].mxu0
          %v3541 = vadd.f32 %v3269, %v3540
          %v3542 = vpop.f32.mrb[0].mxu0
          %3543 = vmatprep.mubr.bf16.mxu0 0
          %3544 = vmatmul.mubr.bf16.gmra.mrb[0].mxu0 %v3240
          %v3545 = vpop.f32.mrb[0].mxu0
          %v3546 = vadd.f32 %v3269, %v3545
          %v3547 = vpop.f32.mrb[0].mxu0
          %v3548 = vpop.f32.mrb[0].mxu0
          %v3549 = vadd.f32 %v3269, %v3548
          %v3550 = vpop.f32.mrb[0].mxu0
          %3551 = vmatprep.mubr.bf16.mxu0 0
          %3552 = vmatmul.mubr.bf16.gmra.mrb[0].mxu0 %v3241
          %v3553 = vpop.f32.mrb[0].mxu0
          %v3554 = vadd.f32 %v3269, %v3553
          %v3555 = vpop.f32.mrb[0].mxu0
          %v3556 = vpop.f32.mrb[0].mxu0
          %v3557 = vadd.f32 %v3269, %v3556
          %v3558 = vpop.f32.mrb[0].mxu0
          %3559 = vmatprep.mubr.bf16.mxu0 0
          %3560 = vmatmul.mubr.bf16.gmra.mrb[0].mxu0 %v3242
          %v3561 = vpop.f32.mrb[0].mxu0
          %v3562 = vadd.f32 %v3269, %v3561
          %v3563 = vpop.f32.mrb[0].mxu0
          %v3564 = vpop.f32.mrb[0].mxu0
          %v3565 = vadd.f32 %v3269, %v3564
          %v3566 = vpop.f32.mrb[0].mxu0
          %3567 = vmatprep.mubr.bf16.mxu0 0
          %3568 = vmatmul.mubr.bf16.gmra.mrb[0].mxu0 %v3243
          %v3569 = vpop.f32.mrb[0].mxu0
          %v3570 = vadd.f32 %v3269, %v3569
          %v3571 = vpop.f32.mrb[0].mxu0
          %v3572 = vpop.f32.mrb[0].mxu0
          %v3573 = vadd.f32 %v3269, %v3572
          %v3574 = vpop.f32.mrb[0].mxu0
          %3575 = vmatprep.mubr.bf16.mxu0 0
          %3576 = vmatmul.mubr.bf16.gmra.mrb[0].mxu0 %v3244
          %v3577 = vpop.f32.mrb[0].mxu0
          %v3578 = vadd.f32 %v3269, %v3577
          %v3579 = vpop.f32.mrb[0].mxu0
          %v3580 = vpop.f32.mrb[0].mxu0
          %v3581 = vadd.f32 %v3269, %v3580
          %v3582 = vpop.f32.mrb[0].mxu0
          %3583 = vmatprep.mubr.bf16.mxu0 0
          %3584 = vmatmul.mubr.bf16.gmra.mrb[0].mxu0 %v3245
          %v3585 = vpop.f32.mrb[0].mxu0
          %v3586 = vadd.f32 %v3269, %v3585
          %v3587 = vpop.f32.mrb[0].mxu0
          %v3588 = vpop.f32.mrb[0].mxu0
          %v3589 = vadd.f32 %v3269, %v3588
          %v3590 = vpop.f32.mrb[0].mxu0
          %3591 = vmatprep.mubr.bf16.mxu0 0
          %3592 = vmatmul.mubr.bf16.gmra.mrb[0].mxu0 %v3246
          %v3593 = vpop.f32.mrb[0].mxu0
          %v3594 = vadd.f32 %v3269, %v3593
          %v3595 = vpop.f32.mrb[0].mxu0
          %v3596 = vpop.f32.mrb[0].mxu0
          %v3597 = vadd.f32 %v3269, %v3596
          %v3598 = vpop.f32.mrb[0].mxu0
          %3599 = vmatprep.mubr.bf16.mxu0 0
          %3600 = vmatmul.mubr.bf16.gmra.mrb[0].mxu0 %v3247
          %v3601 = vpop.f32.mrb[0].mxu0
          %v3602 = vadd.f32 %v3269, %v3601
          %v3603 = vpop.f32.mrb[0].mxu0
          %v3604 = vpop.f32.mrb[0].mxu0
          %v3605 = vadd.f32 %v3269, %v3604
          %v3606 = vpop.f32.mrb[0].mxu0
          %3607 = vdwg.mxu0
          %3608 = vst [vmem:[%s465] sm:$0xff] %v3354
          %3609 = vst [vmem:[%s465 + $0x8] sm:$0xff] %v3357
          %3610 = vst [vmem:[%s465 + $0x10] sm:$0xff] %v3362
          %3611 = vst [vmem:[%s465 + $0x18] sm:$0xff] %v3365
          %3612 = vst [vmem:[%s465 + $0x20] sm:$0xff] %v3370
          %3613 = vst [vmem:[%s465 + $0x28] sm:$0xff] %v3373
          %3614 = vst [vmem:[%s465 + $0x30] sm:$0xff] %v3378
          %3615 = vst [vmem:[%s465 + $0x38] sm:$0xff] %v3381
          %3616 = vst [vmem:[%s465 + $0x40] sm:$0xff] %v3386
          %3617 = vst [vmem:[%s465 + $0x48] sm:$0xff] %v3389
          %3618 = vst [vmem:[%s465 + $0x50] sm:$0xff] %v3394
          %3619 = vst [vmem:[%s465 + $0x58] sm:$0xff] %v3397
          %3620 = vst [vmem:[%s465 + $0x60] sm:$0xff] %v3402
          %3621 = vst [vmem:[%s465 + $0x68] sm:$0xff] %v3405
          %3622 = vst [vmem:[%s465 + $0x70] sm:$0xff] %v3410
          %3623 = vst [vmem:[%s465 + $0x78] sm:$0xff] %v3413
          %3624 = vst [vmem:[%s465 + $0x80] sm:$0xff] %v3418
          %3625 = vst [vmem:[%s465 + $0x88] sm:$0xff] %v3421
          %3626 = vst [vmem:[%s465 + $0x90] sm:$0xff] %v3426
          %3627 = vst [vmem:[%s465 + $0x98] sm:$0xff] %v3429
          %3628 = vst [vmem:[%s465 + $0xa0] sm:$0xff] %v3434
          %3629 = vst [vmem:[%s465 + $0xa8] sm:$0xff] %v3437
          %3630 = vst [vmem:[%s465 + $0xb0] sm:$0xff] %v3442
          %3631 = vst [vmem:[%s465 + $0xb8] sm:$0xff] %v3445
          %3632 = vst [vmem:[%s465 + $0xc0] sm:$0xff] %v3450
          %3633 = vst [vmem:[%s465 + $0xc8] sm:$0xff] %v3453
          %3634 = vst [vmem:[%s465 + $0xd0] sm:$0xff] %v3458
          %3635 = vst [vmem:[%s465 + $0xd8] sm:$0xff] %v3461
          %3636 = vst [vmem:[%s465 + $0xe0] sm:$0xff] %v3466
          %3637 = vst [vmem:[%s465 + $0xe8] sm:$0xff] %v3469
          %3638 = vst [vmem:[%s465 + $0xf0] sm:$0xff] %v3474
          %3639 = vst [vmem:[%s465 + $0xf8] sm:$0xff] %v3477
          %3640 = vst [vmem:[%s465 + $0x100] sm:$0xff] %v3482
          %3641 = vst [vmem:[%s465 + $0x108] sm:$0xff] %v3485
          %3642 = vst [vmem:[%s465 + $0x110] sm:$0xff] %v3490
          %3643 = vst [vmem:[%s465 + $0x118] sm:$0xff] %v3493
          %3644 = vst [vmem:[%s465 + $0x120] sm:$0xff] %v3498
          %3645 = vst [vmem:[%s465 + $0x128] sm:$0xff] %v3501
          %3646 = vst [vmem:[%s465 + $0x130] sm:$0xff] %v3506
          %3647 = vst [vmem:[%s465 + $0x138] sm:$0xff] %v3509
          %3648 = vst [vmem:[%s465 + $0x140] sm:$0xff] %v3514
          %3649 = vst [vmem:[%s465 + $0x148] sm:$0xff] %v3517
          %3650 = vst [vmem:[%s465 + $0x150] sm:$0xff] %v3522
          %3651 = vst [vmem:[%s465 + $0x158] sm:$0xff] %v3525
          %3652 = vst [vmem:[%s465 + $0x160] sm:$0xff] %v3530
          %3653 = vst [vmem:[%s465 + $0x168] sm:$0xff] %v3533
          %3654 = vst [vmem:[%s465 + $0x170] sm:$0xff] %v3538
          %3655 = vst [vmem:[%s465 + $0x178] sm:$0xff] %v3541
          %3656 = vst [vmem:[%s465 + $0x180] sm:$0xff] %v3546
          %3657 = vst [vmem:[%s465 + $0x188] sm:$0xff] %v3549
          %3658 = vst [vmem:[%s465 + $0x190] sm:$0xff] %v3554
          %3659 = vst [vmem:[%s465 + $0x198] sm:$0xff] %v3557
          %3660 = vst [vmem:[%s465 + $0x1a0] sm:$0xff] %v3562
          %3661 = vst [vmem:[%s465 + $0x1a8] sm:$0xff] %v3565
          %3662 = vst [vmem:[%s465 + $0x1b0] sm:$0xff] %v3570
          %3663 = vst [vmem:[%s465 + $0x1b8] sm:$0xff] %v3573
          %3664 = vst [vmem:[%s465 + $0x1c0] sm:$0xff] %v3578
          %3665 = vst [vmem:[%s465 + $0x1c8] sm:$0xff] %v3581
          %3666 = vst [vmem:[%s465 + $0x1d0] sm:$0xff] %v3586
          %3667 = vst [vmem:[%s465 + $0x1d8] sm:$0xff] %v3589
          %3668 = vst [vmem:[%s465 + $0x1e0] sm:$0xff] %v3594
          %3669 = vst [vmem:[%s465 + $0x1e8] sm:$0xff] %v3597
          %3670 = vst [vmem:[%s465 + $0x1f0] sm:$0xff] %v3602
          %3671 = vst [vmem:[%s465 + $0x1f8] sm:$0xff] %v3605
        $region79: #{gnn_boundary_classifier_forward.3} parent=66 // pred_fallthru
          _
        %s3672 = smul.u32 64, %s22
        %p3673 = scmp.lt.s32.totalorder %s3672, 191
        %s3674 = scalar_select %p3673, %s3672, 191
        %s3675 = smul.addr %s3674, 8
        %s3676 = scalar_lea.vmem %s7, %s3675
        // Predicated region
        $region80: #{gnn_boundary_classifier_forward.3} parent=66 // pred_check
          %p3677 = pneg %p207
        $region81: #{gnn_boundary_classifier_forward.3} parent=66 // pred_check_branch
          %3679 = sbr.rel (%p3677) target = $region83
        $region82: #{gnn_boundary_classifier_forward.3} parent=66 // pred_region
          %s3680 = smul.u32 64, %s22
        $region83: #{gnn_boundary_classifier_forward.3} parent=66 // pred_fallthru
          _
      $region67: #{gnn_boundary_classifier_forward.3} parent=5 // pred_fallthru
        _
      %p3681 = scmp.le.s32.totalorder 2, %s13
      // Predicated region
      $region84: #{gnn_boundary_classifier_forward.3} parent=5 // pred_check
        %p3682 = pneg %p3681
      $region85: #{gnn_boundary_classifier_forward.3} parent=5 // pred_check_branch
        %3684 = sbr.rel (%p3682) target = $region87
      $region86: #{gnn_boundary_classifier_forward.3} parent=5 // pred_region
        %s3685 = ssub.s32 %s13, 2
        // Predicated region
        $region88: #{gnn_boundary_classifier_forward.3} parent=86 // pred_check
          %p3686 = pneg %p213
        $region89: #{gnn_boundary_classifier_forward.3} parent=86 // pred_check_branch
          %3688 = sbr.rel (%p3686) target = $region91
        $region90: #{gnn_boundary_classifier_forward.3} parent=86 // pred_region
          %s3689 = smul.u32 64, %s24
          %p3690 = scmp.lt.s32.totalorder %s3689, 191
          %s3691 = scalar_select %p3690, %s3689, 191
          %s3692 = smul.addr %s3691, 8
          %s3693 = scalar_lea.vmem %s7, %s3692
        $region91: #{gnn_boundary_classifier_forward.3} parent=86 // pred_fallthru
          _
      $region87: #{gnn_boundary_classifier_forward.3} parent=5 // pred_fallthru
        _
    $region6: #{gnn_boundary_classifier_forward.3} parent=1 // loop_footer
      %s17 = sadd.s32 1, %s13
    $region7: #{gnn_boundary_classifier_forward.3} parent=1 // loop_footer_branch
      %12 = sbr.rel target = $region3
    $region8: #{gnn_boundary_classifier_forward.3} parent=1 // loop_exit
      _

// kernel: gnn_boundary_classifier_forward.2
$region0: #{gnn_boundary_classifier_forward.2}
  #allocation0 [shape = 'u32[]', space=smem, size = 0x4, offset = 0x4, fixed_abs, tag = 'smem constant byte address 0x4 - core index']
  #allocation1 [shape = 'u32[144,128]{1,0:T(1,128)}', space=vmem, size = 0x12000, scoped, tag = 'internal scratch']
  #allocation2 [shape = 'f32[512,256]{1,0:T(8,128)}', space=vmem, size = 0x80000, scoped, tag = 'scratch operand']
  %s0 = inlined_call_operand.vmem [shape: s8[1536,1536], index: 0, kind: input, shape index: {}]
  %s1 = inlined_call_operand.vmem [shape: bf16[1536,128], index: 1, kind: input, shape index: {}]
  %s2 = inlined_call_operand.vmem [shape: f32[1536,1], index: 2, kind: input, shape index: {}]
  %s3 = inlined_call_operand.vmem [shape: bf16[256,128], index: 3, kind: input, shape index: {}]
  %s4 = inlined_call_operand.vmem [shape: f32[1,128], index: 4, kind: input, shape index: {}]
  %s5 = inlined_call_operand.vmem [shape: bf16[1536,128], index: 5, kind: output, shape index: {}]
  %s6 = sld [smem:[#allocation0]]
  $region84: #{gnn_boundary_classifier_forward.2} parent=0
    _
  %s8 = ssub.s32 1, %s6
  %s9 = scalar_select 0, %s8, %s6
  $region1: #{gnn_boundary_classifier_forward.2} parent=0
    #allocation3 [shape = 'u8[524288]{0}', space=vmem, size = 0x80000, scoped, tag = 'input window, operand 0']
    loop: start=0, step=1, limit=11
    $region2: #{gnn_boundary_classifier_forward.2} parent=1 // loop_pre_header
      _
    $region3: #{gnn_boundary_classifier_forward.2} parent=1 // loop_header
      %s11 = sphi 0, %s15
      %p12 = scmp.ge.s32.totalorder %s11, 11
      %s18 = sphi 0, %s30
      %s19 = sphi 0, %s26
      %s20 = sphi 0, %s18
      %s21 = sphi 0, %s19
      %s22 = sphi 0, %s20
      %s23 = sphi 0, %s21
      %s35 = sphi 0, %s37
      %s38 = sphi 0, %s35
      %s39 = sphi 0, %s38
      %s55 = sphi 0, %s39
      %s59 = sphi 0, %s59
      %s61 = sphi 0, %s59
      %s62 = sphi 0, %s61
      %s76 = sphi 0, %s62
      %s82 = sphi 0, %s84
      %s85 = sphi 0, %s82
      %s86 = sphi 0, %s85
      %s102 = sphi 0, %s86
      %s106 = sphi 0, %s106
      %s108 = sphi 0, %s106
      %s109 = sphi 0, %s108
      %s123 = sphi 0, %s109
      %s127 = sphi 0, %s127
      %s129 = sphi 0, %s127
      %s130 = sphi 0, %s129
      %s144 = sphi 0, %s130
      %s150 = sphi 0, %s152
      %s153 = sphi 0, %s150
      %s154 = sphi 0, %s153
      %s170 = sphi 0, %s154
    $region4: #{gnn_boundary_classifier_forward.2} parent=1 // loop_header_branch
      %14 = sbr.rel (%p12) target = $region8
    $region5: #{gnn_boundary_classifier_forward.2} parent=1 // loop_body
      %s16 = ssub.s32 %s11, 1
      %s17 = ssub.s32 %s11, 2
      %s24 = sadd.s32 1, %s19
      %p25 = scmp.ge.s32.totalorder %s24, 3
      %s26 = scalar_select %p25, 0, %s24
      %s27 = sadd.s32 1, %s18
      %s28 = scalar_select %p25, %s27, %s18
      %p29 = scmp.ge.s32.totalorder %s28, 3
      %s30 = scalar_select %p29, 0, %s28
      %s31 = ssub.s32 %s18, %s30
      %s32 = ssub.s32 %s19, %s26
      %s33 = sor.u32 %s31, %s32
      %p34 = scmp.eq.s32.totalorder %s33, 0
      %s36 = sadd.s32 %s35, 1
      %s37 = scalar_select %p34, %s35, %s36
      %p40 = pneg %p34
      %p41 = scmp.eq.s32.totalorder %s11, 8
      %p42 = por %p40, %p41
      %p43 = scmp.ne.s32.totalorder %s35, %s38
      %p44 = scmp.eq.s32.totalorder %s11, 0
      %p45 = por %p43, %p44
      %p46 = scmp.ne.s32.totalorder %s35, %s38
      %p47 = scmp.eq.s32.totalorder %s16, 8
      %p48 = por %p46, %p47
      %p49 = scmp.ne.s32.totalorder %s38, %s39
      %p50 = scmp.eq.s32.totalorder %s16, 0
      %p51 = por %p49, %p50
      %p52 = scmp.ne.s32.totalorder %s38, %s39
      %p53 = scmp.eq.s32.totalorder %s17, 8
      %p54 = por %p52, %p53
      %p56 = scmp.ne.s32.totalorder %s39, %s55
      %p57 = scmp.eq.s32.totalorder %s17, 0
      %p58 = por %p56, %p57
      %s60 = sadd.s32 %s59, 1
      %p63 = scmp.eq.s32.totalorder %s11, 8
      %p64 = scmp.ne.s32.totalorder %s59, %s61
      %p65 = scmp.eq.s32.totalorder %s11, 0
      %p66 = por %p64, %p65
      %p67 = scmp.ne.s32.totalorder %s59, %s61
      %p68 = scmp.eq.s32.totalorder %s16, 8
      %p69 = por %p67, %p68
      %p70 = scmp.ne.s32.totalorder %s61, %s62
      %p71 = scmp.eq.s32.totalorder %s16, 0
      %p72 = por %p70, %p71
      %p73 = scmp.ne.s32.totalorder %s61, %s62
      %p74 = scmp.eq.s32.totalorder %s17, 8
      %p75 = por %p73, %p74
      %p77 = scmp.ne.s32.totalorder %s62, %s76
      %p78 = scmp.eq.s32.totalorder %s17, 0
      %p79 = por %p77, %p78
      %s80 = ssub.s32 %s18, %s30
      %p81 = scmp.eq.s32.totalorder %s80, 0
      %s83 = sadd.s32 %s82, 1
      %s84 = scalar_select %p81, %s82, %s83
      %p87 = pneg %p81
      %p88 = scmp.eq.s32.totalorder %s11, 8
      %p89 = por %p87, %p88
      %p90 = scmp.ne.s32.totalorder %s82, %s85
      %p91 = scmp.eq.s32.totalorder %s11, 0
      %p92 = por %p90, %p91
      %p93 = scmp.ne.s32.totalorder %s82, %s85
      %p94 = scmp.eq.s32.totalorder %s16, 8
      %p95 = por %p93, %p94
      %p96 = scmp.ne.s32.totalorder %s85, %s86
      %p97 = scmp.eq.s32.totalorder %s16, 0
      %p98 = por %p96, %p97
      %p99 = scmp.ne.s32.totalorder %s85, %s86
      %p100 = scmp.eq.s32.totalorder %s17, 8
      %p101 = por %p99, %p100
      %p103 = scmp.ne.s32.totalorder %s86, %s102
      %p104 = scmp.eq.s32.totalorder %s17, 0
      %p105 = por %p103, %p104
      %s107 = sadd.s32 %s106, 1
      %p110 = scmp.eq.s32.totalorder %s11, 8
      %p111 = scmp.ne.s32.totalorder %s106, %s108
      %p112 = scmp.eq.s32.totalorder %s11, 0
      %p113 = por %p111, %p112
      %p114 = scmp.ne.s32.totalorder %s106, %s108
      %p115 = scmp.eq.s32.totalorder %s16, 8
      %p116 = por %p114, %p115
      %p117 = scmp.ne.s32.totalorder %s108, %s109
      %p118 = scmp.eq.s32.totalorder %s16, 0
      %p119 = por %p117, %p118
      %p120 = scmp.ne.s32.totalorder %s108, %s109
      %p121 = scmp.eq.s32.totalorder %s17, 8
      %p122 = por %p120, %p121
      %p124 = scmp.ne.s32.totalorder %s109, %s123
      %p125 = scmp.eq.s32.totalorder %s17, 0
      %p126 = por %p124, %p125
      %s128 = sadd.s32 %s127, 1
      %p131 = scmp.eq.s32.totalorder %s11, 8
      %p132 = scmp.ne.s32.totalorder %s127, %s129
      %p133 = scmp.eq.s32.totalorder %s11, 0
      %p134 = por %p132, %p133
      %p135 = scmp.ne.s32.totalorder %s127, %s129
      %p136 = scmp.eq.s32.totalorder %s16, 8
      %p137 = por %p135, %p136
      %p138 = scmp.ne.s32.totalorder %s129, %s130
      %p139 = scmp.eq.s32.totalorder %s16, 0
      %p140 = por %p138, %p139
      %p141 = scmp.ne.s32.totalorder %s129, %s130
      %p142 = scmp.eq.s32.totalorder %s17, 8
      %p143 = por %p141, %p142
      %p145 = scmp.ne.s32.totalorder %s130, %s144
      %p146 = scmp.eq.s32.totalorder %s17, 0
      %p147 = por %p145, %p146
      %s148 = ssub.s32 %s18, %s30
      %p149 = scmp.eq.s32.totalorder %s148, 0
      %s151 = sadd.s32 %s150, 1
      %s152 = scalar_select %p149, %s150, %s151
      %p155 = pneg %p149
      %p156 = scmp.eq.s32.totalorder %s11, 8
      %p157 = por %p155, %p156
      %p158 = scmp.ne.s32.totalorder %s150, %s153
      %p159 = scmp.eq.s32.totalorder %s11, 0
      %p160 = por %p158, %p159
      %p161 = scmp.ne.s32.totalorder %s150, %s153
      %p162 = scmp.eq.s32.totalorder %s16, 8
      %p163 = por %p161, %p162
      %p164 = scmp.ne.s32.totalorder %s153, %s154
      %p165 = scmp.eq.s32.totalorder %s16, 0
      %p166 = por %p164, %p165
      %p167 = scmp.ne.s32.totalorder %s153, %s154
      %p168 = scmp.eq.s32.totalorder %s17, 8
      %p169 = por %p167, %p168
      %p171 = scmp.ne.s32.totalorder %s154, %s170
      %p172 = scmp.eq.s32.totalorder %s17, 0
      %p173 = por %p171, %p172
      %p174 = scmp.le.s32.totalorder 1, %s11
      %p175 = scmp.lt.s32.totalorder %s11, 10
      %p176 = pnand %p174, %p175
      %p177 = pneg %p176
      // Predicated region
      $region9: #{gnn_boundary_classifier_forward.2} parent=5 // pred_check
        _
      $region10: #{gnn_boundary_classifier_forward.2} parent=5 // pred_check_branch
        %179 = sbr.rel (%p176) target = $region12
      $region11: #{gnn_boundary_classifier_forward.2} parent=5 // pred_region
        %s180 = ssub.s32 %s11, 1
        // Predicated region
        $region13: #{gnn_boundary_classifier_forward.2} parent=11 // pred_check
          %p181 = pneg %p72
        $region14: #{gnn_boundary_classifier_forward.2} parent=11 // pred_check_branch
          %183 = sbr.rel (%p181) target = $region16
        $region15: #{gnn_boundary_classifier_forward.2} parent=11 // pred_region
          _
        $region16: #{gnn_boundary_classifier_forward.2} parent=11 // pred_fallthru
          _
        // Predicated region
        $region17: #{gnn_boundary_classifier_forward.2} parent=11 // pred_check
          %p184 = pneg %p119
        $region18: #{gnn_boundary_classifier_forward.2} parent=11 // pred_check_branch
          %186 = sbr.rel (%p184) target = $region20
        $region19: #{gnn_boundary_classifier_forward.2} parent=11 // pred_region
          _
        $region20: #{gnn_boundary_classifier_forward.2} parent=11 // pred_fallthru
          _
        // Predicated region
        $region21: #{gnn_boundary_classifier_forward.2} parent=11 // pred_check
          %p187 = pneg %p140
        $region22: #{gnn_boundary_classifier_forward.2} parent=11 // pred_check_branch
          %189 = sbr.rel (%p187) target = $region24
        $region23: #{gnn_boundary_classifier_forward.2} parent=11 // pred_region
          _
        $region24: #{gnn_boundary_classifier_forward.2} parent=11 // pred_fallthru
          _
      $region12: #{gnn_boundary_classifier_forward.2} parent=5 // pred_fallthru
        _
      %p190 = scmp.lt.s32.totalorder %s11, 9
      // Predicated region
      $region25: #{gnn_boundary_classifier_forward.2} parent=5 // pred_check
        %p191 = pneg %p190
      $region26: #{gnn_boundary_classifier_forward.2} parent=5 // pred_check_branch
        %193 = sbr.rel (%p191) target = $region28
      $region27: #{gnn_boundary_classifier_forward.2} parent=5 // pred_region
        // Predicated region
        $region29: #{gnn_boundary_classifier_forward.2} parent=27 // pred_check
          %p194 = pneg %p45
        $region30: #{gnn_boundary_classifier_forward.2} parent=27 // pred_check_branch
          %196 = sbr.rel (%p194) target = $region32
        $region31: #{gnn_boundary_classifier_forward.2} parent=27 // pred_region
          %s197 = sand.u32 %s35, 1
          %s198 = sand.u32 %s35, 1
          %s199 = smul.addr %s198, 512
          %s200 = scalar_lea.vmem [#allocation3], %s199
          %s201 = smul.u32 16, %s18
          %s202 = smul.u32 4, %s19
          %s203 = smul.addr %s201, 12
          %s204 = sadd.s32 %s202, %s203
          %s205 = smul.addr %s204, 8
          %s206 = scalar_lea.vmem %s0, %s205
          // Predicated region
          $region33: #{gnn_boundary_classifier_forward.2} parent=31 // pred_check
            _
          $region34: #{gnn_boundary_classifier_forward.2} parent=31 // pred_check_branch
            %208 = sbr.rel (0) target = $region36
          $region35: #{gnn_boundary_classifier_forward.2} parent=31 // pred_region
            // Predicated region
            $region37: #{gnn_boundary_classifier_forward.2} parent=35 // pred_check
              _
            $region38: #{gnn_boundary_classifier_forward.2} parent=35 // pred_check_branch
              %210 = sbr.rel (0) target = $region40
            $region39: #{gnn_boundary_classifier_forward.2} parent=35 // pred_region
              loop: start=0, step=1, limit=1
              $region41: #{gnn_boundary_classifier_forward.2} parent=39 // loop_pre_header
                _
              $region42: #{gnn_boundary_classifier_forward.2} parent=39 // loop_header
                %s212 = sphi 0, %s216
                %p213 = scmp.ge.s32.totalorder %s212, 1
                %s217 = sphi %s206, %s206
                %s218 = sphi %s200, %s200
              $region43: #{gnn_boundary_classifier_forward.2} parent=39 // loop_header_branch
                %215 = sbr.rel (%p213) target = $region47
              $region44: #{gnn_boundary_classifier_forward.2} parent=39 // loop_body
                %v219 = vld [vmem:[%s217] sm:$0xff]
                %220 = vst [vmem:[%s218] sm:$0xff] %v219
                %v221 = vld [vmem:[%s217 + $0x8] sm:$0xff]
                %222 = vst [vmem:[%s218 + $0x8] sm:$0xff] %v221
                %v223 = vld [vmem:[%s217 + $0x10] sm:$0xff]
                %224 = vst [vmem:[%s218 + $0x10] sm:$0xff] %v223
                %v225 = vld [vmem:[%s217 + $0x18] sm:$0xff]
                %226 = vst [vmem:[%s218 + $0x18] sm:$0xff] %v225
                %v227 = vld [vmem:[%s217 + $0x60] sm:$0xff]
                %228 = vst [vmem:[%s218 + $0x20] sm:$0xff] %v227
                %v229 = vld [vmem:[%s217 + $0x68] sm:$0xff]
                %230 = vst [vmem:[%s218 + $0x28] sm:$0xff] %v229
                %v231 = vld [vmem:[%s217 + $0x70] sm:$0xff]
                %232 = vst [vmem:[%s218 + $0x30] sm:$0xff] %v231
                %v233 = vld [vmem:[%s217 + $0x78] sm:$0xff]
                %234 = vst [vmem:[%s218 + $0x38] sm:$0xff] %v233
                %v235 = vld [vmem:[%s217 + $0xc0] sm:$0xff]
                %236 = vst [vmem:[%s218 + $0x40] sm:$0xff] %v235
                %v237 = vld [vmem:[%s217 + $0xc8] sm:$0xff]
                %238 = vst [vmem:[%s218 + $0x48] sm:$0xff] %v237
                %v239 = vld [vmem:[%s217 + $0xd0] sm:$0xff]
                %240 = vst [vmem:[%s218 + $0x50] sm:$0xff] %v239
                %v241 = vld [vmem:[%s217 + $0xd8] sm:$0xff]
                %242 = vst [vmem:[%s218 + $0x58] sm:$0xff] %v241
                %v243 = vld [vmem:[%s217 + $0x120] sm:$0xff]
                %244 = vst [vmem:[%s218 + $0x60] sm:$0xff] %v243
                %v245 = vld [vmem:[%s217 + $0x128] sm:$0xff]
                %246 = vst [vmem:[%s218 + $0x68] sm:$0xff] %v245
                %v247 = vld [vmem:[%s217 + $0x130] sm:$0xff]
                %248 = vst [vmem:[%s218 + $0x70] sm:$0xff] %v247
                %v249 = vld [vmem:[%s217 + $0x138] sm:$0xff]
                %250 = vst [vmem:[%s218 + $0x78] sm:$0xff] %v249
                %v251 = vld [vmem:[%s217 + $0x180] sm:$0xff]
                %252 = vst [vmem:[%s218 + $0x80] sm:$0xff] %v251
                %v253 = vld [vmem:[%s217 + $0x188] sm:$0xff]
                %254 = vst [vmem:[%s218 + $0x88] sm:$0xff] %v253
                %v255 = vld [vmem:[%s217 + $0x190] sm:$0xff]
                %256 = vst [vmem:[%s218 + $0x90] sm:$0xff] %v255
                %v257 = vld [vmem:[%s217 + $0x198] sm:$0xff]
                %258 = vst [vmem:[%s218 + $0x98] sm:$0xff] %v257
                %v259 = vld [vmem:[%s217 + $0x1e0] sm:$0xff]
                %260 = vst [vmem:[%s218 + $0xa0] sm:$0xff] %v259
                %v261 = vld [vmem:[%s217 + $0x1e8] sm:$0xff]
                %262 = vst [vmem:[%s218 + $0xa8] sm:$0xff] %v261
                %v263 = vld [vmem:[%s217 + $0x1f0] sm:$0xff]
                %264 = vst [vmem:[%s218 + $0xb0] sm:$0xff] %v263
                %v265 = vld [vmem:[%s217 + $0x1f8] sm:$0xff]
                %266 = vst [vmem:[%s218 + $0xb8] sm:$0xff] %v265
                %v267 = vld [vmem:[%s217 + $0x240] sm:$0xff]
                %268 = vst [vmem:[%s218 + $0xc0] sm:$0xff] %v267
                %v269 = vld [vmem:[%s217 + $0x248] sm:$0xff]
                %270 = vst [vmem:[%s218 + $0xc8] sm:$0xff] %v269
                %v271 = vld [vmem:[%s217 + $0x250] sm:$0xff]
                %272 = vst [vmem:[%s218 + $0xd0] sm:$0xff] %v271
                %v273 = vld [vmem:[%s217 + $0x258] sm:$0xff]
                %274 = vst [vmem:[%s218 + $0xd8] sm:$0xff] %v273
                %v275 = vld [vmem:[%s217 + $0x2a0] sm:$0xff]
                %276 = vst [vmem:[%s218 + $0xe0] sm:$0xff] %v275
                %v277 = vld [vmem:[%s217 + $0x2a8] sm:$0xff]
                %278 = vst [vmem:[%s218 + $0xe8] sm:$0xff] %v277
                %v279 = vld [vmem:[%s217 + $0x2b0] sm:$0xff]
                %280 = vst [vmem:[%s218 + $0xf0] sm:$0xff] %v279
                %v281 = vld [vmem:[%s217 + $0x2b8] sm:$0xff]
                %282 = vst [vmem:[%s218 + $0xf8] sm:$0xff] %v281
                %v283 = vld [vmem:[%s217 + $0x300] sm:$0xff]
                %284 = vst [vmem:[%s218 + $0x100] sm:$0xff] %v283
                %v285 = vld [vmem:[%s217 + $0x308] sm:$0xff]
                %286 = vst [vmem:[%s218 + $0x108] sm:$0xff] %v285
                %v287 = vld [vmem:[%s217 + $0x310] sm:$0xff]
                %288 = vst [vmem:[%s218 + $0x110] sm:$0xff] %v287
                %v289 = vld [vmem:[%s217 + $0x318] sm:$0xff]
                %290 = vst [vmem:[%s218 + $0x118] sm:$0xff] %v289
                %v291 = vld [vmem:[%s217 + $0x360] sm:$0xff]
                %292 = vst [vmem:[%s218 + $0x120] sm:$0xff] %v291
                %v293 = vld [vmem:[%s217 + $0x368] sm:$0xff]
                %294 = vst [vmem:[%s218 + $0x128] sm:$0xff] %v293
                %v295 = vld [vmem:[%s217 + $0x370] sm:$0xff]
                %296 = vst [vmem:[%s218 + $0x130] sm:$0xff] %v295
                %v297 = vld [vmem:[%s217 + $0x378] sm:$0xff]
                %298 = vst [vmem:[%s218 + $0x138] sm:$0xff] %v297
                %v299 = vld [vmem:[%s217 + $0x3c0] sm:$0xff]
                %300 = vst [vmem:[%s218 + $0x140] sm:$0xff] %v299
                %v301 = vld [vmem:[%s217 + $0x3c8] sm:$0xff]
                %302 = vst [vmem:[%s218 + $0x148] sm:$0xff] %v301
                %v303 = vld [vmem:[%s217 + $0x3d0] sm:$0xff]
                %304 = vst [vmem:[%s218 + $0x150] sm:$0xff] %v303
                %v305 = vld [vmem:[%s217 + $0x3d8] sm:$0xff]
                %306 = vst [vmem:[%s218 + $0x158] sm:$0xff] %v305
                %v307 = vld [vmem:[%s217 + $0x420] sm:$0xff]
                %308 = vst [vmem:[%s218 + $0x160] sm:$0xff] %v307
                %v309 = vld [vmem:[%s217 + $0x428] sm:$0xff]
                %310 = vst [vmem:[%s218 + $0x168] sm:$0xff] %v309
                %v311 = vld [vmem:[%s217 + $0x430] sm:$0xff]
                %312 = vst [vmem:[%s218 + $0x170] sm:$0xff] %v311
                %v313 = vld [vmem:[%s217 + $0x438] sm:$0xff]
                %314 = vst [vmem:[%s218 + $0x178] sm:$0xff] %v313
                %v315 = vld [vmem:[%s217 + $0x480] sm:$0xff]
                %316 = vst [vmem:[%s218 + $0x180] sm:$0xff] %v315
                %v317 = vld [vmem:[%s217 + $0x488] sm:$0xff]
                %318 = vst [vmem:[%s218 + $0x188] sm:$0xff] %v317
                %v319 = vld [vmem:[%s217 + $0x490] sm:$0xff]
                %320 = vst [vmem:[%s218 + $0x190] sm:$0xff] %v319
                %v321 = vld [vmem:[%s217 + $0x498] sm:$0xff]
                %322 = vst [vmem:[%s218 + $0x198] sm:$0xff] %v321
                %v323 = vld [vmem:[%s217 + $0x4e0] sm:$0xff]
                %324 = vst [vmem:[%s218 + $0x1a0] sm:$0xff] %v323
                %v325 = vld [vmem:[%s217 + $0x4e8] sm:$0xff]
                %326 = vst [vmem:[%s218 + $0x1a8] sm:$0xff] %v325
                %v327 = vld [vmem:[%s217 + $0x4f0] sm:$0xff]
                %328 = vst [vmem:[%s218 + $0x1b0] sm:$0xff] %v327
                %v329 = vld [vmem:[%s217 + $0x4f8] sm:$0xff]
                %330 = vst [vmem:[%s218 + $0x1b8] sm:$0xff] %v329
                %v331 = vld [vmem:[%s217 + $0x540] sm:$0xff]
                %332 = vst [vmem:[%s218 + $0x1c0] sm:$0xff] %v331
                %v333 = vld [vmem:[%s217 + $0x548] sm:$0xff]
                %334 = vst [vmem:[%s218 + $0x1c8] sm:$0xff] %v333
                %v335 = vld [vmem:[%s217 + $0x550] sm:$0xff]
                %336 = vst [vmem:[%s218 + $0x1d0] sm:$0xff] %v335
                %v337 = vld [vmem:[%s217 + $0x558] sm:$0xff]
                %338 = vst [vmem:[%s218 + $0x1d8] sm:$0xff] %v337
                %v339 = vld [vmem:[%s217 + $0x5a0] sm:$0xff]
                %340 = vst [vmem:[%s218 + $0x1e0] sm:$0xff] %v339
                %v341 = vld [vmem:[%s217 + $0x5a8] sm:$0xff]
                %342 = vst [vmem:[%s218 + $0x1e8] sm:$0xff] %v341
                %v343 = vld [vmem:[%s217 + $0x5b0] sm:$0xff]
                %344 = vst [vmem:[%s218 + $0x1f0] sm:$0xff] %v343
                %v345 = vld [vmem:[%s217 + $0x5b8] sm:$0xff]
                %346 = vst [vmem:[%s218 + $0x1f8] sm:$0xff] %v345
              $region45: #{gnn_boundary_classifier_forward.2} parent=39 // loop_footer
                %s216 = sadd.s32 1, %s212
              $region46: #{gnn_boundary_classifier_forward.2} parent=39 // loop_footer_branch
                %211 = sbr.rel target = $region42
              $region47: #{gnn_boundary_classifier_forward.2} parent=39 // loop_exit
                _
            $region40: #{gnn_boundary_classifier_forward.2} parent=35 // pred_fallthru
              _
            // Predicated region
            $region48: #{gnn_boundary_classifier_forward.2} parent=35 // pred_check
              _
            $region49: #{gnn_boundary_classifier_forward.2} parent=35 // pred_check_branch
              %348 = sbr.rel target = $region51
            $region50: #{gnn_boundary_classifier_forward.2} parent=35 // pred_region
              _
            $region51: #{gnn_boundary_classifier_forward.2} parent=35 // pred_fallthru
              _
          $region36: #{gnn_boundary_classifier_forward.2} parent=31 // pred_fallthru
            _
          %349 = vnop
        $region32: #{gnn_boundary_classifier_forward.2} parent=27 // pred_fallthru
          _
        // Predicated region
        $region52: #{gnn_boundary_classifier_forward.2} parent=27 // pred_check
          %p350 = pneg %p92
        $region53: #{gnn_boundary_classifier_forward.2} parent=27 // pred_check_branch
          %352 = sbr.rel (%p350) target = $region55
        $region54: #{gnn_boundary_classifier_forward.2} parent=27 // pred_region
          %s353 = smul.u32 64, %s18
          %p354 = scmp.lt.s32.totalorder %s353, 191
          %s355 = scalar_select %p354, %s353, 191
          %s356 = smul.addr %s355, 8
          %s357 = scalar_lea.vmem %s2, %s356
          %s358 = smul.u32 64, %s18
        $region55: #{gnn_boundary_classifier_forward.2} parent=27 // pred_fallthru
          _
      $region28: #{gnn_boundary_classifier_forward.2} parent=5 // pred_fallthru
        _
      %p359 = scmp.le.s32.totalorder 1, %s11
      %p360 = scmp.lt.s32.totalorder %s11, 10
      %p361 = pnand %p359, %p360
      %p362 = pneg %p361
      // Predicated region
      $region56: #{gnn_boundary_classifier_forward.2} parent=5 // pred_check
        _
      $region57: #{gnn_boundary_classifier_forward.2} parent=5 // pred_check_branch
        %364 = sbr.rel (%p361) target = $region59
      $region58: #{gnn_boundary_classifier_forward.2} parent=5 // pred_region
        %s365 = ssub.s32 %s11, 1
        %s366 = sand.u32 %s38, 1
        %s367 = sand.u32 %s38, 1
        %s368 = smul.addr %s367, 512
        %s369 = scalar_lea.vmem [#allocation3], %s368
        // Predicated region
        $region60: #{gnn_boundary_classifier_forward.2} parent=58 // pred_check
          %p370 = pneg %p51
        $region61: #{gnn_boundary_classifier_forward.2} parent=58 // pred_check_branch
          %372 = sbr.rel (%p370) target = $region63
        $region62: #{gnn_boundary_classifier_forward.2} parent=58 // pred_region
          _
        $region63: #{gnn_boundary_classifier_forward.2} parent=58 // pred_fallthru
          _
        %s373 = sand.u32 %s38, 1
        %s374 = sand.u32 %s38, 1
        %s375 = smul.addr %s374, 512
        %s376 = scalar_lea.vmem [#allocation3], %s375
        %p377 = pneg %p51
        %p378 = pneg %p48
        %p379 = pneg %p72
        %p380 = pneg %p69
        %s381 = smul.u32 64, %s20
        %p382 = scmp.lt.s32.totalorder %s381, 191
        %s383 = scalar_select %p382, %s381, 191
        %s384 = smul.addr %s383, 8
        %s385 = scalar_lea.vmem %s2, %s384
        %p386 = pneg %p98
        %p387 = pneg %p95
        %p388 = pneg %p119
        %p389 = pneg %p116
        %p390 = pneg %p140
        %p391 = pneg %p137
        %p392 = pneg %p166
        %p393 = pneg %p163
        %s394 = smul.u32 64, %s20
        %p395 = scmp.lt.s32.totalorder %s394, 191
        %s396 = scalar_select %p395, %s394, 191
        %s397 = smul.addr %s396, 4
        %s398 = scalar_lea.vmem %s5, %s397
        %s399 = smul.u32 16, %s20
        %s400 = smul.u32 4, %s21
        %s401 = smul.u32 64, %s20
        %p402 = scmp.lt.s32.totalorder %s401, 191
        %s403 = scalar_select %p402, %s401, 191
        %s404 = smul.addr %s403, 8
        %s405 = scalar_lea.vmem %s2, %s404
        %s406 = smul.u32 64, %s20
        %s407 = smul.u32 64, %s20
        %p408 = scmp.lt.s32.totalorder %s407, 191
        %s409 = scalar_select %p408, %s407, 191
        %s410 = smul.addr %s409, 4
        %s411 = scalar_lea.vmem %s5, %s410
        %s412 = smul.u32 64, %s20
        %p414 = scmp.eq.s32.totalorder %s21, 0
        // Predicated region
        $region64: #{gnn_boundary_classifier_forward.2} parent=58 // pred_check
          %p415 = pneg %p414
        $region65: #{gnn_boundary_classifier_forward.2} parent=58 // pred_check_branch
          %417 = sbr.rel (%p415) target = $region67
        $region66: #{gnn_boundary_classifier_forward.2} parent=58 // pred_region
          %418 = vst [vmem:[#allocation2] sm:$0xff] 0.0
          %419 = vst [vmem:[#allocation2 + $0x10] sm:$0xff] 0.0
          %420 = vst [vmem:[#allocation2 + $0x20] sm:$0xff] 0.0
          %421 = vst [vmem:[#allocation2 + $0x30] sm:$0xff] 0.0
          %422 = vst [vmem:[#allocation2 + $0x40] sm:$0xff] 0.0
          %423 = vst [vmem:[#allocation2 + $0x50] sm:$0xff] 0.0
          %424 = vst [vmem:[#allocation2 + $0x60] sm:$0xff] 0.0
          %425 = vst [vmem:[#allocation2 + $0x70] sm:$0xff] 0.0
          %426 = vst [vmem:[#allocation2 + $0x80] sm:$0xff] 0.0
          %427 = vst [vmem:[#allocation2 + $0x90] sm:$0xff] 0.0
          %428 = vst [vmem:[#allocation2 + $0xa0] sm:$0xff] 0.0
          %429 = vst [vmem:[#allocation2 + $0xb0] sm:$0xff] 0.0
          %430 = vst [vmem:[#allocation2 + $0xc0] sm:$0xff] 0.0
          %431 = vst [vmem:[#allocation2 + $0xd0] sm:$0xff] 0.0
          %432 = vst [vmem:[#allocation2 + $0xe0] sm:$0xff] 0.0
          %433 = vst [vmem:[#allocation2 + $0xf0] sm:$0xff] 0.0
          %434 = vst [vmem:[#allocation2 + $0x100] sm:$0xff] 0.0
          %435 = vst [vmem:[#allocation2 + $0x110] sm:$0xff] 0.0
          %436 = vst [vmem:[#allocation2 + $0x120] sm:$0xff] 0.0
          %437 = vst [vmem:[#allocation2 + $0x130] sm:$0xff] 0.0
          %438 = vst [vmem:[#allocation2 + $0x140] sm:$0xff] 0.0
          %439 = vst [vmem:[#allocation2 + $0x150] sm:$0xff] 0.0
          %440 = vst [vmem:[#allocation2 + $0x160] sm:$0xff] 0.0
          %441 = vst [vmem:[#allocation2 + $0x170] sm:$0xff] 0.0
          %442 = vst [vmem:[#allocation2 + $0x180] sm:$0xff] 0.0
          %443 = vst [vmem:[#allocation2 + $0x190] sm:$0xff] 0.0
          %444 = vst [vmem:[#allocation2 + $0x1a0] sm:$0xff] 0.0
          %445 = vst [vmem:[#allocation2 + $0x1b0] sm:$0xff] 0.0
          %446 = vst [vmem:[#allocation2 + $0x1c0] sm:$0xff] 0.0
          %447 = vst [vmem:[#allocation2 + $0x1d0] sm:$0xff] 0.0
          %448 = vst [vmem:[#allocation2 + $0x1e0] sm:$0xff] 0.0
          %449 = vst [vmem:[#allocation2 + $0x1f0] sm:$0xff] 0.0
          %450 = vst [vmem:[#allocation2 + $0x200] sm:$0xff] 0.0
          %451 = vst [vmem:[#allocation2 + $0x210] sm:$0xff] 0.0
          %452 = vst [vmem:[#allocation2 + $0x220] sm:$0xff] 0.0
          %453 = vst [vmem:[#allocation2 + $0x230] sm:$0xff] 0.0
          %454 = vst [vmem:[#allocation2 + $0x240] sm:$0xff] 0.0
          %455 = vst [vmem:[#allocation2 + $0x250] sm:$0xff] 0.0
          %456 = vst [vmem:[#allocation2 + $0x260] sm:$0xff] 0.0
          %457 = vst [vmem:[#allocation2 + $0x270] sm:$0xff] 0.0
          %458 = vst [vmem:[#allocation2 + $0x280] sm:$0xff] 0.0
          %459 = vst [vmem:[#allocation2 + $0x290] sm:$0xff] 0.0
          %460 = vst [vmem:[#allocation2 + $0x2a0] sm:$0xff] 0.0
          %461 = vst [vmem:[#allocation2 + $0x2b0] sm:$0xff] 0.0
          %462 = vst [vmem:[#allocation2 + $0x2c0] sm:$0xff] 0.0
          %463 = vst [vmem:[#allocation2 + $0x2d0] sm:$0xff] 0.0
          %464 = vst [vmem:[#allocation2 + $0x2e0] sm:$0xff] 0.0
          %465 = vst [vmem:[#allocation2 + $0x2f0] sm:$0xff] 0.0
          %466 = vst [vmem:[#allocation2 + $0x300] sm:$0xff] 0.0
          %467 = vst [vmem:[#allocation2 + $0x310] sm:$0xff] 0.0
          %468 = vst [vmem:[#allocation2 + $0x320] sm:$0xff] 0.0
          %469 = vst [vmem:[#allocation2 + $0x330] sm:$0xff] 0.0
          %470 = vst [vmem:[#allocation2 + $0x340] sm:$0xff] 0.0
          %471 = vst [vmem:[#allocation2 + $0x350] sm:$0xff] 0.0
          %472 = vst [vmem:[#allocation2 + $0x360] sm:$0xff] 0.0
          %473 = vst [vmem:[#allocation2 + $0x370] sm:$0xff] 0.0
          %474 = vst [vmem:[#allocation2 + $0x380] sm:$0xff] 0.0
          %475 = vst [vmem:[#allocation2 + $0x390] sm:$0xff] 0.0
          %476 = vst [vmem:[#allocation2 + $0x3a0] sm:$0xff] 0.0
          %477 = vst [vmem:[#allocation2 + $0x3b0] sm:$0xff] 0.0
          %478 = vst [vmem:[#allocation2 + $0x3c0] sm:$0xff] 0.0
          %479 = vst [vmem:[#allocation2 + $0x3d0] sm:$0xff] 0.0
          %480 = vst [vmem:[#allocation2 + $0x3e0] sm:$0xff] 0.0
          %481 = vst [vmem:[#allocation2 + $0x3f0] sm:$0xff] 0.0
          %s482 = smul.u32 %s20, 512
          %s483 = sshra.s32 %s482, 3
          %s484 = sand.u32 %s482, 7
          %s485 = smul.addr %s483, 4
          %s486 = scalar_lea.vmem %s1, %s485
          %v487 = vld [vmem:[%s486] sm:$0xf]
          %v488 = vld [vmem:[%s486 + $0x4] sm:$0xf]
          %v489 = vld [vmem:[%s486 + $0x8] sm:$0xf]
          %v490 = vld [vmem:[%s486 + $0xc] sm:$0xf]
          %v491 = vld [vmem:[%s486 + $0x10] sm:$0xf]
          %v492 = vld [vmem:[%s486 + $0x14] sm:$0xf]
          %v493 = vld [vmem:[%s486 + $0x18] sm:$0xf]
          %v494 = vld [vmem:[%s486 + $0x1c] sm:$0xf]
          %v495 = vld [vmem:[%s486 + $0x20] sm:$0xf]
          %v496 = vld [vmem:[%s486 + $0x24] sm:$0xf]
          %v497 = vld [vmem:[%s486 + $0x28] sm:$0xf]
          %v498 = vld [vmem:[%s486 + $0x2c] sm:$0xf]
          %v499 = vld [vmem:[%s486 + $0x30] sm:$0xf]
          %v500 = vld [vmem:[%s486 + $0x34] sm:$0xf]
          %v501 = vld [vmem:[%s486 + $0x38] sm:$0xf]
          %v502 = vld [vmem:[%s486 + $0x3c] sm:$0xf]
          %v503 = vld [vmem:[%s486 + $0x40] sm:$0xf]
          %v504 = vld [vmem:[%s486 + $0x44] sm:$0xf]
          %v505 = vld [vmem:[%s486 + $0x48] sm:$0xf]
          %v506 = vld [vmem:[%s486 + $0x4c] sm:$0xf]
          %v507 = vld [vmem:[%s486 + $0x50] sm:$0xf]
          %v508 = vld [vmem:[%s486 + $0x54] sm:$0xf]
          %v509 = vld [vmem:[%s486 + $0x58] sm:$0xf]
          %v510 = vld [vmem:[%s486 + $0x5c] sm:$0xf]
          %v511 = vld [vmem:[%s486 + $0x60] sm:$0xf]
          %v512 = vld [vmem:[%s486 + $0x64] sm:$0xf]
          %v513 = vld [vmem:[%s486 + $0x68] sm:$0xf]
          %v514 = vld [vmem:[%s486 + $0x6c] sm:$0xf]
          %v515 = vld [vmem:[%s486 + $0x70] sm:$0xf]
          %v516 = vld [vmem:[%s486 + $0x74] sm:$0xf]
          %v517 = vld [vmem:[%s486 + $0x78] sm:$0xf]
          %v518 = vld [vmem:[%s486 + $0x7c] sm:$0xf]
          %v519 = vld [vmem:[%s486 + $0x80] sm:$0xf]
          %v520 = vld [vmem:[%s486 + $0x84] sm:$0xf]
          %v521 = vld [vmem:[%s486 + $0x88] sm:$0xf]
          %v522 = vld [vmem:[%s486 + $0x8c] sm:$0xf]
          %v523 = vld [vmem:[%s486 + $0x90] sm:$0xf]
          %v524 = vld [vmem:[%s486 + $0x94] sm:$0xf]
          %v525 = vld [vmem:[%s486 + $0x98] sm:$0xf]
          %v526 = vld [vmem:[%s486 + $0x9c] sm:$0xf]
          %v527 = vld [vmem:[%s486 + $0xa0] sm:$0xf]
          %v528 = vld [vmem:[%s486 + $0xa4] sm:$0xf]
          %v529 = vld [vmem:[%s486 + $0xa8] sm:$0xf]
          %v530 = vld [vmem:[%s486 + $0xac] sm:$0xf]
          %v531 = vld [vmem:[%s486 + $0xb0] sm:$0xf]
          %v532 = vld [vmem:[%s486 + $0xb4] sm:$0xf]
          %v533 = vld [vmem:[%s486 + $0xb8] sm:$0xf]
          %v534 = vld [vmem:[%s486 + $0xbc] sm:$0xf]
          %v535 = vld [vmem:[%s486 + $0xc0] sm:$0xf]
          %v536 = vld [vmem:[%s486 + $0xc4] sm:$0xf]
          %v537 = vld [vmem:[%s486 + $0xc8] sm:$0xf]
          %v538 = vld [vmem:[%s486 + $0xcc] sm:$0xf]
          %v539 = vld [vmem:[%s486 + $0xd0] sm:$0xf]
          %v540 = vld [vmem:[%s486 + $0xd4] sm:$0xf]
          %v541 = vld [vmem:[%s486 + $0xd8] sm:$0xf]
          %v542 = vld [vmem:[%s486 + $0xdc] sm:$0xf]
          %v543 = vld [vmem:[%s486 + $0xe0] sm:$0xf]
          %v544 = vld [vmem:[%s486 + $0xe4] sm:$0xf]
          %v545 = vld [vmem:[%s486 + $0xe8] sm:$0xf]
          %v546 = vld [vmem:[%s486 + $0xec] sm:$0xf]
          %v547 = vld [vmem:[%s486 + $0xf0] sm:$0xf]
          %v548 = vld [vmem:[%s486 + $0xf4] sm:$0xf]
          %v549 = vld [vmem:[%s486 + $0xf8] sm:$0xf]
          %v550 = vld [vmem:[%s486 + $0xfc] sm:$0xf]
          %v551 = vunpack.c.l.bf16 %v487
          %v552 = vunpack.c.l.bf16 %v488
          %v553 = vunpack.c.l.bf16 %v489
          %v554 = vunpack.c.l.bf16 %v490
          %v555 = vunpack.c.l.bf16 %v491
          %v556 = vunpack.c.l.bf16 %v492
          %v557 = vunpack.c.l.bf16 %v493
          %v558 = vunpack.c.l.bf16 %v494
          %v559 = vunpack.c.l.bf16 %v495
          %v560 = vunpack.c.l.bf16 %v496
          %v561 = vunpack.c.l.bf16 %v497
          %v562 = vunpack.c.l.bf16 %v498
          %v563 = vunpack.c.l.bf16 %v499
          %v564 = vunpack.c.l.bf16 %v500
          %v565 = vunpack.c.l.bf16 %v501
          %v566 = vunpack.c.l.bf16 %v502
          %v567 = vunpack.c.l.bf16 %v503
          %v568 = vunpack.c.l.bf16 %v504
          %v569 = vunpack.c.l.bf16 %v505
          %v570 = vunpack.c.l.bf16 %v506
          %v571 = vunpack.c.l.bf16 %v507
          %v572 = vunpack.c.l.bf16 %v508
          %v573 = vunpack.c.l.bf16 %v509
          %v574 = vunpack.c.l.bf16 %v510
          %v575 = vunpack.c.l.bf16 %v511
          %v576 = vunpack.c.l.bf16 %v512
          %v577 = vunpack.c.l.bf16 %v513
          %v578 = vunpack.c.l.bf16 %v514
          %v579 = vunpack.c.l.bf16 %v515
          %v580 = vunpack.c.l.bf16 %v516
          %v581 = vunpack.c.l.bf16 %v517
          %v582 = vunpack.c.l.bf16 %v518
          %v583 = vunpack.c.l.bf16 %v519
          %v584 = vunpack.c.l.bf16 %v520
          %v585 = vunpack.c.l.bf16 %v521
          %v586 = vunpack.c.l.bf16 %v522
          %v587 = vunpack.c.l.bf16 %v523
          %v588 = vunpack.c.l.bf16 %v524
          %v589 = vunpack.c.l.bf16 %v525
          %v590 = vunpack.c.l.bf16 %v526
          %v591 = vunpack.c.l.bf16 %v527
          %v592 = vunpack.c.l.bf16 %v528
          %v593 = vunpack.c.l.bf16 %v529
          %v594 = vunpack.c.l.bf16 %v530
          %v595 = vunpack.c.l.bf16 %v531
          %v596 = vunpack.c.l.bf16 %v532
          %v597 = vunpack.c.l.bf16 %v533
          %v598 = vunpack.c.l.bf16 %v534
          %v599 = vunpack.c.l.bf16 %v535
          %v600 = vunpack.c.l.bf16 %v536
          %v601 = vunpack.c.l.bf16 %v537
          %v602 = vunpack.c.l.bf16 %v538
          %v603 = vunpack.c.l.bf16 %v539
          %v604 = vunpack.c.l.bf16 %v540
          %v605 = vunpack.c.l.bf16 %v541
          %v606 = vunpack.c.l.bf16 %v542
          %v607 = vunpack.c.l.bf16 %v543
          %v608 = vunpack.c.l.bf16 %v544
          %v609 = vunpack.c.l.bf16 %v545
          %v610 = vunpack.c.l.bf16 %v546
          %v611 = vunpack.c.l.bf16 %v547
          %v612 = vunpack.c.l.bf16 %v548
          %v613 = vunpack.c.l.bf16 %v549
          %v614 = vunpack.c.l.bf16 %v550
          %615 = vst [vmem:[#allocation2 + $0x8] sm:$0xff] %v551
          %616 = vst [vmem:[#allocation2 + $0x18] sm:$0xff] %v552
          %617 = vst [vmem:[#allocation2 + $0x28] sm:$0xff] %v553
          %618 = vst [vmem:[#allocation2 + $0x38] sm:$0xff] %v554
          %619 = vst [vmem:[#allocation2 + $0x48] sm:$0xff] %v555
          %620 = vst [vmem:[#allocation2 + $0x58] sm:$0xff] %v556
          %621 = vst [vmem:[#allocation2 + $0x68] sm:$0xff] %v557
          %622 = vst [vmem:[#allocation2 + $0x78] sm:$0xff] %v558
          %623 = vst [vmem:[#allocation2 + $0x88] sm:$0xff] %v559
          %624 = vst [vmem:[#allocation2 + $0x98] sm:$0xff] %v560
          %625 = vst [vmem:[#allocation2 + $0xa8] sm:$0xff] %v561
          %626 = vst [vmem:[#allocation2 + $0xb8] sm:$0xff] %v562
          %627 = vst [vmem:[#allocation2 + $0xc8] sm:$0xff] %v563
          %628 = vst [vmem:[#allocation2 + $0xd8] sm:$0xff] %v564
          %629 = vst [vmem:[#allocation2 + $0xe8] sm:$0xff] %v565
          %630 = vst [vmem:[#allocation2 + $0xf8] sm:$0xff] %v566
          %631 = vst [vmem:[#allocation2 + $0x108] sm:$0xff] %v567
          %632 = vst [vmem:[#allocation2 + $0x118] sm:$0xff] %v568
          %633 = vst [vmem:[#allocation2 + $0x128] sm:$0xff] %v569
          %634 = vst [vmem:[#allocation2 + $0x138] sm:$0xff] %v570
          %635 = vst [vmem:[#allocation2 + $0x148] sm:$0xff] %v571
          %636 = vst [vmem:[#allocation2 + $0x158] sm:$0xff] %v572
          %637 = vst [vmem:[#allocation2 + $0x168] sm:$0xff] %v573
          %638 = vst [vmem:[#allocation2 + $0x178] sm:$0xff] %v574
          %639 = vst [vmem:[#allocation2 + $0x188] sm:$0xff] %v575
          %640 = vst [vmem:[#allocation2 + $0x198] sm:$0xff] %v576
          %641 = vst [vmem:[#allocation2 + $0x1a8] sm:$0xff] %v577
          %642 = vst [vmem:[#allocation2 + $0x1b8] sm:$0xff] %v578
          %643 = vst [vmem:[#allocation2 + $0x1c8] sm:$0xff] %v579
          %644 = vst [vmem:[#allocation2 + $0x1d8] sm:$0xff] %v580
          %645 = vst [vmem:[#allocation2 + $0x1e8] sm:$0xff] %v581
          %646 = vst [vmem:[#allocation2 + $0x1f8] sm:$0xff] %v582
          %647 = vst [vmem:[#allocation2 + $0x208] sm:$0xff] %v583
          %648 = vst [vmem:[#allocation2 + $0x218] sm:$0xff] %v584
          %649 = vst [vmem:[#allocation2 + $0x228] sm:$0xff] %v585
          %650 = vst [vmem:[#allocation2 + $0x238] sm:$0xff] %v586
          %651 = vst [vmem:[#allocation2 + $0x248] sm:$0xff] %v587
          %652 = vst [vmem:[#allocation2 + $0x258] sm:$0xff] %v588
          %653 = vst [vmem:[#allocation2 + $0x268] sm:$0xff] %v589
          %654 = vst [vmem:[#allocation2 + $0x278] sm:$0xff] %v590
          %655 = vst [vmem:[#allocation2 + $0x288] sm:$0xff] %v591
          %656 = vst [vmem:[#allocation2 + $0x298] sm:$0xff] %v592
          %657 = vst [vmem:[#allocation2 + $0x2a8] sm:$0xff] %v593
          %658 = vst [vmem:[#allocation2 + $0x2b8] sm:$0xff] %v594
          %659 = vst [vmem:[#allocation2 + $0x2c8] sm:$0xff] %v595
          %660 = vst [vmem:[#allocation2 + $0x2d8] sm:$0xff] %v596
          %661 = vst [vmem:[#allocation2 + $0x2e8] sm:$0xff] %v597
          %662 = vst [vmem:[#allocation2 + $0x2f8] sm:$0xff] %v598
          %663 = vst [vmem:[#allocation2 + $0x308] sm:$0xff] %v599
          %664 = vst [vmem:[#allocation2 + $0x318] sm:$0xff] %v600
          %665 = vst [vmem:[#allocation2 + $0x328] sm:$0xff] %v601
          %666 = vst [vmem:[#allocation2 + $0x338] sm:$0xff] %v602
          %667 = vst [vmem:[#allocation2 + $0x348] sm:$0xff] %v603
          %668 = vst [vmem:[#allocation2 + $0x358] sm:$0xff] %v604
          %669 = vst [vmem:[#allocation2 + $0x368] sm:$0xff] %v605
          %670 = vst [vmem:[#allocation2 + $0x378] sm:$0xff] %v606
          %671 = vst [vmem:[#allocation2 + $0x388] sm:$0xff] %v607
          %672 = vst [vmem:[#allocation2 + $0x398] sm:$0xff] %v608
          %673 = vst [vmem:[#allocation2 + $0x3a8] sm:$0xff] %v609
          %674 = vst [vmem:[#allocation2 + $0x3b8] sm:$0xff] %v610
          %675 = vst [vmem:[#allocation2 + $0x3c8] sm:$0xff] %v611
          %676 = vst [vmem:[#allocation2 + $0x3d8] sm:$0xff] %v612
          %677 = vst [vmem:[#allocation2 + $0x3e8] sm:$0xff] %v613
          %678 = vst [vmem:[#allocation2 + $0x3f8] sm:$0xff] %v614
        $region67: #{gnn_boundary_classifier_forward.2} parent=58 // pred_fallthru
          _
        %s679 = smul.u32 %s21, 512
        %v680 = vld [vmem:[%s369] sm:$0xff]
        %v681 = vld [vmem:[%s369 + $0x8] sm:$0xff]
        %v682 = vld [vmem:[%s369 + $0x10] sm:$0xff]
        %v683 = vld [vmem:[%s369 + $0x18] sm:$0xff]
        %v684 = vld [vmem:[%s369 + $0x20] sm:$0xff]
        %v685 = vld [vmem:[%s369 + $0x28] sm:$0xff]
        %v686 = vld [vmem:[%s369 + $0x30] sm:$0xff]
        %v687 = vld [vmem:[%s369 + $0x38] sm:$0xff]
        %v688 = vld [vmem:[%s369 + $0x40] sm:$0xff]
        %v689 = vld [vmem:[%s369 + $0x48] sm:$0xff]
        %v690 = vld [vmem:[%s369 + $0x50] sm:$0xff]
        %v691 = vld [vmem:[%s369 + $0x58] sm:$0xff]
        %v692 = vld [vmem:[%s369 + $0x60] sm:$0xff]
        %v693 = vld [vmem:[%s369 + $0x68] sm:$0xff]
        %v694 = vld [vmem:[%s369 + $0x70] sm:$0xff]
        %v695 = vld [vmem:[%s369 + $0x78] sm:$0xff]
        %v696 = vld [vmem:[%s369 + $0x80] sm:$0xff]
        %v697 = vld [vmem:[%s369 + $0x88] sm:$0xff]
        %v698 = vld [vmem:[%s369 + $0x90] sm:$0xff]
        %v699 = vld [vmem:[%s369 + $0x98] sm:$0xff]
        %v700 = vld [vmem:[%s369 + $0xa0] sm:$0xff]
        %v701 = vld [vmem:[%s369 + $0xa8] sm:$0xff]
        %v702 = vld [vmem:[%s369 + $0xb0] sm:$0xff]
        %v703 = vld [vmem:[%s369 + $0xb8] sm:$0xff]
        %v704 = vld [vmem:[%s369 + $0xc0] sm:$0xff]
        %v705 = vld [vmem:[%s369 + $0xc8] sm:$0xff]
        %v706 = vld [vmem:[%s369 + $0xd0] sm:$0xff]
        %v707 = vld [vmem:[%s369 + $0xd8] sm:$0xff]
        %v708 = vld [vmem:[%s369 + $0xe0] sm:$0xff]
        %v709 = vld [vmem:[%s369 + $0xe8] sm:$0xff]
        %v710 = vld [vmem:[%s369 + $0xf0] sm:$0xff]
        %v711 = vld [vmem:[%s369 + $0xf8] sm:$0xff]
        %v712 = vld [vmem:[%s369 + $0x100] sm:$0xff]
        %v713 = vld [vmem:[%s369 + $0x108] sm:$0xff]
        %v714 = vld [vmem:[%s369 + $0x110] sm:$0xff]
        %v715 = vld [vmem:[%s369 + $0x118] sm:$0xff]
        %v716 = vld [vmem:[%s369 + $0x120] sm:$0xff]
        %v717 = vld [vmem:[%s369 + $0x128] sm:$0xff]
        %v718 = vld [vmem:[%s369 + $0x130] sm:$0xff]
        %v719 = vld [vmem:[%s369 + $0x138] sm:$0xff]
        %v720 = vld [vmem:[%s369 + $0x140] sm:$0xff]
        %v721 = vld [vmem:[%s369 + $0x148] sm:$0xff]
        %v722 = vld [vmem:[%s369 + $0x150] sm:$0xff]
        %v723 = vld [vmem:[%s369 + $0x158] sm:$0xff]
        %v724 = vld [vmem:[%s369 + $0x160] sm:$0xff]
        %v725 = vld [vmem:[%s369 + $0x168] sm:$0xff]
        %v726 = vld [vmem:[%s369 + $0x170] sm:$0xff]
        %v727 = vld [vmem:[%s369 + $0x178] sm:$0xff]
        %v728 = vld [vmem:[%s369 + $0x180] sm:$0xff]
        %v729 = vld [vmem:[%s369 + $0x188] sm:$0xff]
        %v730 = vld [vmem:[%s369 + $0x190] sm:$0xff]
        %v731 = vld [vmem:[%s369 + $0x198] sm:$0xff]
        %v732 = vld [vmem:[%s369 + $0x1a0] sm:$0xff]
        %v733 = vld [vmem:[%s369 + $0x1a8] sm:$0xff]
        %v734 = vld [vmem:[%s369 + $0x1b0] sm:$0xff]
        %v735 = vld [vmem:[%s369 + $0x1b8] sm:$0xff]
        %v736 = vld [vmem:[%s369 + $0x1c0] sm:$0xff]
        %v737 = vld [vmem:[%s369 + $0x1c8] sm:$0xff]
        %v738 = vld [vmem:[%s369 + $0x1d0] sm:$0xff]
        %v739 = vld [vmem:[%s369 + $0x1d8] sm:$0xff]
        %v740 = vld [vmem:[%s369 + $0x1e0] sm:$0xff]
        %v741 = vld [vmem:[%s369 + $0x1e8] sm:$0xff]
        %v742 = vld [vmem:[%s369 + $0x1f0] sm:$0xff]
        %v743 = vld [vmem:[%s369 + $0x1f8] sm:$0xff]
        %v744 = vunpack.c.l.s8.bf16 %v680
        %v745 = vunpack.c.l.s8.bf16 %v681
        %v746 = vunpack.c.l.s8.bf16 %v682
        %v747 = vunpack.c.l.s8.bf16 %v683
        %v748 = vunpack.c.h.s8.bf16 %v680
        %v749 = vunpack.c.h.s8.bf16 %v681
        %v750 = vunpack.c.h.s8.bf16 %v682
        %v751 = vunpack.c.h.s8.bf16 %v683
        %v752 = vunpack.c.l.s8.bf16 %v684
        %v753 = vunpack.c.l.s8.bf16 %v685
        %v754 = vunpack.c.l.s8.bf16 %v686
        %v755 = vunpack.c.l.s8.bf16 %v687
        %v756 = vunpack.c.h.s8.bf16 %v684
        %v757 = vunpack.c.h.s8.bf16 %v685
        %v758 = vunpack.c.h.s8.bf16 %v686
        %v759 = vunpack.c.h.s8.bf16 %v687
        %v760 = vunpack.c.l.s8.bf16 %v688
        %v761 = vunpack.c.l.s8.bf16 %v689
        %v762 = vunpack.c.l.s8.bf16 %v690
        %v763 = vunpack.c.l.s8.bf16 %v691
        %v764 = vunpack.c.h.s8.bf16 %v688
        %v765 = vunpack.c.h.s8.bf16 %v689
        %v766 = vunpack.c.h.s8.bf16 %v690
        %v767 = vunpack.c.h.s8.bf16 %v691
        %v768 = vunpack.c.l.s8.bf16 %v692
        %v769 = vunpack.c.l.s8.bf16 %v693
        %v770 = vunpack.c.l.s8.bf16 %v694
        %v771 = vunpack.c.l.s8.bf16 %v695
        %v772 = vunpack.c.h.s8.bf16 %v692
        %v773 = vunpack.c.h.s8.bf16 %v693
        %v774 = vunpack.c.h.s8.bf16 %v694
        %v775 = vunpack.c.h.s8.bf16 %v695
        %v776 = vunpack.c.l.s8.bf16 %v696
        %v777 = vunpack.c.l.s8.bf16 %v697
        %v778 = vunpack.c.l.s8.bf16 %v698
        %v779 = vunpack.c.l.s8.bf16 %v699
        %v780 = vunpack.c.h.s8.bf16 %v696
        %v781 = vunpack.c.h.s8.bf16 %v697
        %v782 = vunpack.c.h.s8.bf16 %v698
        %v783 = vunpack.c.h.s8.bf16 %v699
        %v784 = vunpack.c.l.s8.bf16 %v700
        %v785 = vunpack.c.l.s8.bf16 %v701
        %v786 = vunpack.c.l.s8.bf16 %v702
        %v787 = vunpack.c.l.s8.bf16 %v703
        %v788 = vunpack.c.h.s8.bf16 %v700
        %v789 = vunpack.c.h.s8.bf16 %v701
        %v790 = vunpack.c.h.s8.bf16 %v702
        %v791 = vunpack.c.h.s8.bf16 %v703
        %v792 = vunpack.c.l.s8.bf16 %v704
        %v793 = vunpack.c.l.s8.bf16 %v705
        %v794 = vunpack.c.l.s8.bf16 %v706
        %v795 = vunpack.c.l.s8.bf16 %v707
        %v796 = vunpack.c.h.s8.bf16 %v704
        %v797 = vunpack.c.h.s8.bf16 %v705
        %v798 = vunpack.c.h.s8.bf16 %v706
        %v799 = vunpack.c.h.s8.bf16 %v707
        %v800 = vunpack.c.l.s8.bf16 %v708
        %v801 = vunpack.c.l.s8.bf16 %v709
        %v802 = vunpack.c.l.s8.bf16 %v710
        %v803 = vunpack.c.l.s8.bf16 %v711
        %v804 = vunpack.c.h.s8.bf16 %v708
        %v805 = vunpack.c.h.s8.bf16 %v709
        %v806 = vunpack.c.h.s8.bf16 %v710
        %v807 = vunpack.c.h.s8.bf16 %v711
        %v808 = vunpack.c.l.s8.bf16 %v712
        %v809 = vunpack.c.l.s8.bf16 %v713
        %v810 = vunpack.c.l.s8.bf16 %v714
        %v811 = vunpack.c.l.s8.bf16 %v715
        %v812 = vunpack.c.h.s8.bf16 %v712
        %v813 = vunpack.c.h.s8.bf16 %v713
        %v814 = vunpack.c.h.s8.bf16 %v714
        %v815 = vunpack.c.h.s8.bf16 %v715
        %v816 = vunpack.c.l.s8.bf16 %v716
        %v817 = vunpack.c.l.s8.bf16 %v717
        %v818 = vunpack.c.l.s8.bf16 %v718
        %v819 = vunpack.c.l.s8.bf16 %v719
        %v820 = vunpack.c.h.s8.bf16 %v716
        %v821 = vunpack.c.h.s8.bf16 %v717
        %v822 = vunpack.c.h.s8.bf16 %v718
        %v823 = vunpack.c.h.s8.bf16 %v719
        %v824 = vunpack.c.l.s8.bf16 %v720
        %v825 = vunpack.c.l.s8.bf16 %v721
        %v826 = vunpack.c.l.s8.bf16 %v722
        %v827 = vunpack.c.l.s8.bf16 %v723
        %v828 = vunpack.c.h.s8.bf16 %v720
        %v829 = vunpack.c.h.s8.bf16 %v721
        %v830 = vunpack.c.h.s8.bf16 %v722
        %v831 = vunpack.c.h.s8.bf16 %v723
        %v832 = vunpack.c.l.s8.bf16 %v724
        %v833 = vunpack.c.l.s8.bf16 %v725
        %v834 = vunpack.c.l.s8.bf16 %v726
        %v835 = vunpack.c.l.s8.bf16 %v727
        %v836 = vunpack.c.h.s8.bf16 %v724
        %v837 = vunpack.c.h.s8.bf16 %v725
        %v838 = vunpack.c.h.s8.bf16 %v726
        %v839 = vunpack.c.h.s8.bf16 %v727
        %v840 = vunpack.c.l.s8.bf16 %v728
        %v841 = vunpack.c.l.s8.bf16 %v729
        %v842 = vunpack.c.l.s8.bf16 %v730
        %v843 = vunpack.c.l.s8.bf16 %v731
        %v844 = vunpack.c.h.s8.bf16 %v728
        %v845 = vunpack.c.h.s8.bf16 %v729
        %v846 = vunpack.c.h.s8.bf16 %v730
        %v847 = vunpack.c.h.s8.bf16 %v731
        %v848 = vunpack.c.l.s8.bf16 %v732
        %v849 = vunpack.c.l.s8.bf16 %v733
        %v850 = vunpack.c.l.s8.bf16 %v734
        %v851 = vunpack.c.l.s8.bf16 %v735
        %v852 = vunpack.c.h.s8.bf16 %v732
        %v853 = vunpack.c.h.s8.bf16 %v733
        %v854 = vunpack.c.h.s8.bf16 %v734
        %v855 = vunpack.c.h.s8.bf16 %v735
        %v856 = vunpack.c.l.s8.bf16 %v736
        %v857 = vunpack.c.l.s8.bf16 %v737
        %v858 = vunpack.c.l.s8.bf16 %v738
        %v859 = vunpack.c.l.s8.bf16 %v739
        %v860 = vunpack.c.h.s8.bf16 %v736
        %v861 = vunpack.c.h.s8.bf16 %v737
        %v862 = vunpack.c.h.s8.bf16 %v738
        %v863 = vunpack.c.h.s8.bf16 %v739
        %v864 = vunpack.c.l.s8.bf16 %v740
        %v865 = vunpack.c.l.s8.bf16 %v741
        %v866 = vunpack.c.l.s8.bf16 %v742
        %v867 = vunpack.c.l.s8.bf16 %v743
        %v868 = vunpack.c.h.s8.bf16 %v740
        %v869 = vunpack.c.h.s8.bf16 %v741
        %v870 = vunpack.c.h.s8.bf16 %v742
        %v871 = vunpack.c.h.s8.bf16 %v743
        %v872 = vld [vmem:[#allocation2] sm:$0xff]
        %v873 = vld [vmem:[#allocation2 + $0x10] sm:$0xff]
        %v874 = vld [vmem:[#allocation2 + $0x20] sm:$0xff]
        %v875 = vld [vmem:[#allocation2 + $0x30] sm:$0xff]
        %v876 = vld [vmem:[#allocation2 + $0x40] sm:$0xff]
        %v877 = vld [vmem:[#allocation2 + $0x50] sm:$0xff]
        %v878 = vld [vmem:[#allocation2 + $0x60] sm:$0xff]
        %v879 = vld [vmem:[#allocation2 + $0x70] sm:$0xff]
        %v880 = vld [vmem:[#allocation2 + $0x80] sm:$0xff]
        %v881 = vld [vmem:[#allocation2 + $0x90] sm:$0xff]
        %v882 = vld [vmem:[#allocation2 + $0xa0] sm:$0xff]
        %v883 = vld [vmem:[#allocation2 + $0xb0] sm:$0xff]
        %v884 = vld [vmem:[#allocation2 + $0xc0] sm:$0xff]
        %v885 = vld [vmem:[#allocation2 + $0xd0] sm:$0xff]
        %v886 = vld [vmem:[#allocation2 + $0xe0] sm:$0xff]
        %v887 = vld [vmem:[#allocation2 + $0xf0] sm:$0xff]
        %v888 = vld [vmem:[#allocation2 + $0x100] sm:$0xff]
        %v889 = vld [vmem:[#allocation2 + $0x110] sm:$0xff]
        %v890 = vld [vmem:[#allocation2 + $0x120] sm:$0xff]
        %v891 = vld [vmem:[#allocation2 + $0x130] sm:$0xff]
        %v892 = vld [vmem:[#allocation2 + $0x140] sm:$0xff]
        %v893 = vld [vmem:[#allocation2 + $0x150] sm:$0xff]
        %v894 = vld [vmem:[#allocation2 + $0x160] sm:$0xff]
        %v895 = vld [vmem:[#allocation2 + $0x170] sm:$0xff]
        %v896 = vld [vmem:[#allocation2 + $0x180] sm:$0xff]
        %v897 = vld [vmem:[#allocation2 + $0x190] sm:$0xff]
        %v898 = vld [vmem:[#allocation2 + $0x1a0] sm:$0xff]
        %v899 = vld [vmem:[#allocation2 + $0x1b0] sm:$0xff]
        %v900 = vld [vmem:[#allocation2 + $0x1c0] sm:$0xff]
        %v901 = vld [vmem:[#allocation2 + $0x1d0] sm:$0xff]
        %v902 = vld [vmem:[#allocation2 + $0x1e0] sm:$0xff]
        %v903 = vld [vmem:[#allocation2 + $0x1f0] sm:$0xff]
        %v904 = vld [vmem:[#allocation2 + $0x200] sm:$0xff]
        %v905 = vld [vmem:[#allocation2 + $0x210] sm:$0xff]
        %v906 = vld [vmem:[#allocation2 + $0x220] sm:$0xff]
        %v907 = vld [vmem:[#allocation2 + $0x230] sm:$0xff]
        %v908 = vld [vmem:[#allocation2 + $0x240] sm:$0xff]
        %v909 = vld [vmem:[#allocation2 + $0x250] sm:$0xff]
        %v910 = vld [vmem:[#allocation2 + $0x260] sm:$0xff]
        %v911 = vld [vmem:[#allocation2 + $0x270] sm:$0xff]
        %v912 = vld [vmem:[#allocation2 + $0x280] sm:$0xff]
        %v913 = vld [vmem:[#allocation2 + $0x290] sm:$0xff]
        %v914 = vld [vmem:[#allocation2 + $0x2a0] sm:$0xff]
        %v915 = vld [vmem:[#allocation2 + $0x2b0] sm:$0xff]
        %v916 = vld [vmem:[#allocation2 + $0x2c0] sm:$0xff]
        %v917 = vld [vmem:[#allocation2 + $0x2d0] sm:$0xff]
        %v918 = vld [vmem:[#allocation2 + $0x2e0] sm:$0xff]
        %v919 = vld [vmem:[#allocation2 + $0x2f0] sm:$0xff]
        %v920 = vld [vmem:[#allocation2 + $0x300] sm:$0xff]
        %v921 = vld [vmem:[#allocation2 + $0x310] sm:$0xff]
        %v922 = vld [vmem:[#allocation2 + $0x320] sm:$0xff]
        %v923 = vld [vmem:[#allocation2 + $0x330] sm:$0xff]
        %v924 = vld [vmem:[#allocation2 + $0x340] sm:$0xff]
        %v925 = vld [vmem:[#allocation2 + $0x350] sm:$0xff]
        %v926 = vld [vmem:[#allocation2 + $0x360] sm:$0xff]
        %v927 = vld [vmem:[#allocation2 + $0x370] sm:$0xff]
        %v928 = vld [vmem:[#allocation2 + $0x380] sm:$0xff]
        %v929 = vld [vmem:[#allocation2 + $0x390] sm:$0xff]
        %v930 = vld [vmem:[#allocation2 + $0x3a0] sm:$0xff]
        %v931 = vld [vmem:[#allocation2 + $0x3b0] sm:$0xff]
        %v932 = vld [vmem:[#allocation2 + $0x3c0] sm:$0xff]
        %v933 = vld [vmem:[#allocation2 + $0x3d0] sm:$0xff]
        %v934 = vld [vmem:[#allocation2 + $0x3e0] sm:$0xff]
        %v935 = vld [vmem:[#allocation2 + $0x3f0] sm:$0xff]
        %s936 = sshra.s32 %s679, 3
        %s937 = sand.u32 %s679, 7
        %s938 = smul.addr %s936, 4
        %s939 = scalar_lea.vmem %s1, %s938
        %v940 = vld [vmem:[%s939] sm:$0xf]
        %v941 = vld [vmem:[%s939 + $0x4] sm:$0xf]
        %v942 = vld [vmem:[%s939 + $0x8] sm:$0xf]
        %v943 = vld [vmem:[%s939 + $0xc] sm:$0xf]
        %v944 = vld [vmem:[%s939 + $0x10] sm:$0xf]
        %v945 = vld [vmem:[%s939 + $0x14] sm:$0xf]
        %v946 = vld [vmem:[%s939 + $0x18] sm:$0xf]
        %v947 = vld [vmem:[%s939 + $0x1c] sm:$0xf]
        %v948 = vld [vmem:[%s939 + $0x20] sm:$0xf]
        %v949 = vld [vmem:[%s939 + $0x24] sm:$0xf]
        %v950 = vld [vmem:[%s939 + $0x28] sm:$0xf]
        %v951 = vld [vmem:[%s939 + $0x2c] sm:$0xf]
        %v952 = vld [vmem:[%s939 + $0x30] sm:$0xf]
        %v953 = vld [vmem:[%s939 + $0x34] sm:$0xf]
        %v954 = vld [vmem:[%s939 + $0x38] sm:$0xf]
        %v955 = vld [vmem:[%s939 + $0x3c] sm:$0xf]
        %v956 = vld [vmem:[%s939 + $0x40] sm:$0xf]
        %v957 = vld [vmem:[%s939 + $0x44] sm:$0xf]
        %v958 = vld [vmem:[%s939 + $0x48] sm:$0xf]
        %v959 = vld [vmem:[%s939 + $0x4c] sm:$0xf]
        %v960 = vld [vmem:[%s939 + $0x50] sm:$0xf]
        %v961 = vld [vmem:[%s939 + $0x54] sm:$0xf]
        %v962 = vld [vmem:[%s939 + $0x58] sm:$0xf]
        %v963 = vld [vmem:[%s939 + $0x5c] sm:$0xf]
        %v964 = vld [vmem:[%s939 + $0x60] sm:$0xf]
        %v965 = vld [vmem:[%s939 + $0x64] sm:$0xf]
        %v966 = vld [vmem:[%s939 + $0x68] sm:$0xf]
        %v967 = vld [vmem:[%s939 + $0x6c] sm:$0xf]
        %v968 = vld [vmem:[%s939 + $0x70] sm:$0xf]
        %v969 = vld [vmem:[%s939 + $0x74] sm:$0xf]
        %v970 = vld [vmem:[%s939 + $0x78] sm:$0xf]
        %v971 = vld [vmem:[%s939 + $0x7c] sm:$0xf]
        %v972 = vld [vmem:[%s939 + $0x80] sm:$0xf]
        %v973 = vld [vmem:[%s939 + $0x84] sm:$0xf]
        %v974 = vld [vmem:[%s939 + $0x88] sm:$0xf]
        %v975 = vld [vmem:[%s939 + $0x8c] sm:$0xf]
        %v976 = vld [vmem:[%s939 + $0x90] sm:$0xf]
        %v977 = vld [vmem:[%s939 + $0x94] sm:$0xf]
        %v978 = vld [vmem:[%s939 + $0x98] sm:$0xf]
        %v979 = vld [vmem:[%s939 + $0x9c] sm:$0xf]
        %v980 = vld [vmem:[%s939 + $0xa0] sm:$0xf]
        %v981 = vld [vmem:[%s939 + $0xa4] sm:$0xf]
        %v982 = vld [vmem:[%s939 + $0xa8] sm:$0xf]
        %v983 = vld [vmem:[%s939 + $0xac] sm:$0xf]
        %v984 = vld [vmem:[%s939 + $0xb0] sm:$0xf]
        %v985 = vld [vmem:[%s939 + $0xb4] sm:$0xf]
        %v986 = vld [vmem:[%s939 + $0xb8] sm:$0xf]
        %v987 = vld [vmem:[%s939 + $0xbc] sm:$0xf]
        %v988 = vld [vmem:[%s939 + $0xc0] sm:$0xf]
        %v989 = vld [vmem:[%s939 + $0xc4] sm:$0xf]
        %v990 = vld [vmem:[%s939 + $0xc8] sm:$0xf]
        %v991 = vld [vmem:[%s939 + $0xcc] sm:$0xf]
        %v992 = vld [vmem:[%s939 + $0xd0] sm:$0xf]
        %v993 = vld [vmem:[%s939 + $0xd4] sm:$0xf]
        %v994 = vld [vmem:[%s939 + $0xd8] sm:$0xf]
        %v995 = vld [vmem:[%s939 + $0xdc] sm:$0xf]
        %v996 = vld [vmem:[%s939 + $0xe0] sm:$0xf]
        %v997 = vld [vmem:[%s939 + $0xe4] sm:$0xf]
        %v998 = vld [vmem:[%s939 + $0xe8] sm:$0xf]
        %v999 = vld [vmem:[%s939 + $0xec] sm:$0xf]
        %v1000 = vld [vmem:[%s939 + $0xf0] sm:$0xf]
        %v1001 = vld [vmem:[%s939 + $0xf4] sm:$0xf]
        %v1002 = vld [vmem:[%s939 + $0xf8] sm:$0xf]
        %v1003 = vld [vmem:[%s939 + $0xfc] sm:$0xf]
        %v1068 = vunpack.c.l.b16 %v940
        %v1069 = vunpack.c.l.b16 %v941
        %v1070 = vunpack.c.l.b16 %v942
        %v1071 = vunpack.c.l.b16 %v943
        %v1072 = vunpack.c.l.b16 %v944
        %v1073 = vunpack.c.l.b16 %v945
        %v1074 = vunpack.c.l.b16 %v946
        %v1075 = vunpack.c.l.b16 %v947
        %v1076 = vunpack.c.l.b16 %v948
        %v1077 = vunpack.c.l.b16 %v949
        %v1078 = vunpack.c.l.b16 %v950
        %v1079 = vunpack.c.l.b16 %v951
        %v1080 = vunpack.c.l.b16 %v952
        %v1081 = vunpack.c.l.b16 %v953
        %v1082 = vunpack.c.l.b16 %v954
        %v1083 = vunpack.c.l.b16 %v955
        %v1084 = vunpack.c.l.b16 %v956
        %v1085 = vunpack.c.l.b16 %v957
        %v1086 = vunpack.c.l.b16 %v958
        %v1087 = vunpack.c.l.b16 %v959
        %v1088 = vunpack.c.l.b16 %v960
        %v1089 = vunpack.c.l.b16 %v961
        %v1090 = vunpack.c.l.b16 %v962
        %v1091 = vunpack.c.l.b16 %v963
        %v1092 = vunpack.c.l.b16 %v964
        %v1093 = vunpack.c.l.b16 %v965
        %v1094 = vunpack.c.l.b16 %v966
        %v1095 = vunpack.c.l.b16 %v967
        %v1096 = vunpack.c.l.b16 %v968
        %v1097 = vunpack.c.l.b16 %v969
        %v1098 = vunpack.c.l.b16 %v970
        %v1099 = vunpack.c.l.b16 %v971
        %v1100 = vunpack.c.l.b16 %v972
        %v1101 = vunpack.c.l.b16 %v973
        %v1102 = vunpack.c.l.b16 %v974
        %v1103 = vunpack.c.l.b16 %v975
        %v1104 = vunpack.c.l.b16 %v976
        %v1105 = vunpack.c.l.b16 %v977
        %v1106 = vunpack.c.l.b16 %v978
        %v1107 = vunpack.c.l.b16 %v979
        %v1108 = vunpack.c.l.b16 %v980
        %v1109 = vunpack.c.l.b16 %v981
        %v1110 = vunpack.c.l.b16 %v982
        %v1111 = vunpack.c.l.b16 %v983
        %v1112 = vunpack.c.l.b16 %v984
        %v1113 = vunpack.c.l.b16 %v985
        %v1114 = vunpack.c.l.b16 %v986
        %v1115 = vunpack.c.l.b16 %v987
        %v1116 = vunpack.c.l.b16 %v988
        %v1117 = vunpack.c.l.b16 %v989
        %v1118 = vunpack.c.l.b16 %v990
        %v1119 = vunpack.c.l.b16 %v991
        %v1120 = vunpack.c.l.b16 %v992
        %v1121 = vunpack.c.l.b16 %v993
        %v1122 = vunpack.c.l.b16 %v994
        %v1123 = vunpack.c.l.b16 %v995
        %v1124 = vunpack.c.l.b16 %v996
        %v1125 = vunpack.c.l.b16 %v997
        %v1126 = vunpack.c.l.b16 %v998
        %v1127 = vunpack.c.l.b16 %v999
        %v1128 = vunpack.c.l.b16 %v1000
        %v1129 = vunpack.c.l.b16 %v1001
        %v1130 = vunpack.c.l.b16 %v1002
        %v1131 = vunpack.c.l.b16 %v1003
        %v1132 = vpack.c.b16 %v1069, %v1068
        %v1133 = vpack.c.b16 %v1071, %v1070
        %v1134 = vpack.c.b16 %v1073, %v1072
        %v1135 = vpack.c.b16 %v1075, %v1074
        %v1136 = vpack.c.b16 %v1077, %v1076
        %v1137 = vpack.c.b16 %v1079, %v1078
        %v1138 = vpack.c.b16 %v1081, %v1080
        %v1139 = vpack.c.b16 %v1083, %v1082
        %v1140 = vpack.c.b16 %v1085, %v1084
        %v1141 = vpack.c.b16 %v1087, %v1086
        %v1142 = vpack.c.b16 %v1089, %v1088
        %v1143 = vpack.c.b16 %v1091, %v1090
        %v1144 = vpack.c.b16 %v1093, %v1092
        %v1145 = vpack.c.b16 %v1095, %v1094
        %v1146 = vpack.c.b16 %v1097, %v1096
        %v1147 = vpack.c.b16 %v1099, %v1098
        %v1148 = vpack.c.b16 %v1101, %v1100
        %v1149 = vpack.c.b16 %v1103, %v1102
        %v1150 = vpack.c.b16 %v1105, %v1104
        %v1151 = vpack.c.b16 %v1107, %v1106
        %v1152 = vpack.c.b16 %v1109, %v1108
        %v1153 = vpack.c.b16 %v1111, %v1110
        %v1154 = vpack.c.b16 %v1113, %v1112
        %v1155 = vpack.c.b16 %v1115, %v1114
        %v1156 = vpack.c.b16 %v1117, %v1116
        %v1157 = vpack.c.b16 %v1119, %v1118
        %v1158 = vpack.c.b16 %v1121, %v1120
        %v1159 = vpack.c.b16 %v1123, %v1122
        %v1160 = vpack.c.b16 %v1125, %v1124
        %v1161 = vpack.c.b16 %v1127, %v1126
        %v1162 = vpack.c.b16 %v1129, %v1128
        %v1163 = vpack.c.b16 %v1131, %v1130
        %1196 = vmatprep.subr.bf16.mxu0 0
        %1197 = vmatpush1.bf16.msra.mxu0 %v1132
        %1198 = vmatprep.subr.bf16.mxu0 0
        %1199 = vmatpush1.bf16.msra.mxu0 %v1133
        %1200 = vmatprep.subr.bf16.mxu0 0
        %1201 = vmatpush1.bf16.msra.mxu0 %v1134
        %1202 = vmatprep.subr.bf16.mxu0 0
        %1203 = vmatpush1.bf16.msra.mxu0 %v1135
        %1204 = vmatprep.subr.bf16.mxu0 0
        %1205 = vmatpush1.bf16.msra.mxu0 %v1136
        %1206 = vmatprep.subr.bf16.mxu0 0
        %1207 = vmatpush1.bf16.msra.mxu0 %v1137
        %1208 = vmatprep.subr.bf16.mxu0 0
        %1209 = vmatpush1.bf16.msra.mxu0 %v1138
        %1210 = vmatprep.subr.bf16.mxu0 0
        %1211 = vmatpush1.bf16.msra.mxu0 %v1139
        %1212 = vmatprep.subr.bf16.mxu0 0
        %1213 = vmatpush1.bf16.msra.mxu0 %v1140
        %1214 = vmatprep.subr.bf16.mxu0 0
        %1215 = vmatpush1.bf16.msra.mxu0 %v1141
        %1216 = vmatprep.subr.bf16.mxu0 0
        %1217 = vmatpush1.bf16.msra.mxu0 %v1142
        %1218 = vmatprep.subr.bf16.mxu0 0
        %1219 = vmatpush1.bf16.msra.mxu0 %v1143
        %1220 = vmatprep.subr.bf16.mxu0 0
        %1221 = vmatpush1.bf16.msra.mxu0 %v1144
        %1222 = vmatprep.subr.bf16.mxu0 0
        %1223 = vmatpush1.bf16.msra.mxu0 %v1145
        %1224 = vmatprep.subr.bf16.mxu0 0
        %1225 = vmatpush1.bf16.msra.mxu0 %v1146
        %1226 = vmatprep.subr.bf16.mxu0 0
        %1227 = vmatpush1.bf16.msra.mxu0 %v1147
        %1228 = vmatprep.mubr.bf16.mxu0 %v745
        %1229 = vmatmul.mubr.bf16.gmra.mrb[0].mxu0 %v744
        %v1230 = vpop.f32.mrb[0].mxu0
        %v1231 = vadd.f32 0.0, %v1230
        %v1232 = vpop.f32.mrb[0].mxu0
        %v1233 = vpop.f32.mrb[0].mxu0
        %v1234 = vadd.f32 0.0, %v1233
        %v1235 = vpop.f32.mrb[0].mxu0
        %1236 = vmatprep.mubr.bf16.mxu0 %v749
        %1237 = vmatmul.mubr.bf16.gmra.mrb[0].mxu0 %v748
        %v1238 = vpop.f32.mrb[0].mxu0
        %v1239 = vadd.f32 0.0, %v1238
        %v1240 = vpop.f32.mrb[0].mxu0
        %v1241 = vpop.f32.mrb[0].mxu0
        %v1242 = vadd.f32 0.0, %v1241
        %v1243 = vpop.f32.mrb[0].mxu0
        %1244 = vmatprep.mubr.bf16.mxu0 %v753
        %1245 = vmatmul.mubr.bf16.gmra.mrb[0].mxu0 %v752
        %v1246 = vpop.f32.mrb[0].mxu0
        %v1247 = vadd.f32 0.0, %v1246
        %v1248 = vpop.f32.mrb[0].mxu0
        %v1249 = vpop.f32.mrb[0].mxu0
        %v1250 = vadd.f32 0.0, %v1249
        %v1251 = vpop.f32.mrb[0].mxu0
        %1252 = vmatprep.mubr.bf16.mxu0 %v757
        %1253 = vmatmul.mubr.bf16.gmra.mrb[0].mxu0 %v756
        %v1254 = vpop.f32.mrb[0].mxu0
        %v1255 = vadd.f32 0.0, %v1254
        %v1256 = vpop.f32.mrb[0].mxu0
        %v1257 = vpop.f32.mrb[0].mxu0
        %v1258 = vadd.f32 0.0, %v1257
        %v1259 = vpop.f32.mrb[0].mxu0
        %1260 = vmatprep.mubr.bf16.mxu0 %v761
        %1261 = vmatmul.mubr.bf16.gmra.mrb[0].mxu0 %v760
        %v1262 = vpop.f32.mrb[0].mxu0
        %v1263 = vadd.f32 0.0, %v1262
        %v1264 = vpop.f32.mrb[0].mxu0
        %v1265 = vpop.f32.mrb[0].mxu0
        %v1266 = vadd.f32 0.0, %v1265
        %v1267 = vpop.f32.mrb[0].mxu0
        %1268 = vmatprep.mubr.bf16.mxu0 %v765
        %1269 = vmatmul.mubr.bf16.gmra.mrb[0].mxu0 %v764
        %v1270 = vpop.f32.mrb[0].mxu0
        %v1271 = vadd.f32 0.0, %v1270
        %v1272 = vpop.f32.mrb[0].mxu0
        %v1273 = vpop.f32.mrb[0].mxu0
        %v1274 = vadd.f32 0.0, %v1273
        %v1275 = vpop.f32.mrb[0].mxu0
        %1276 = vmatprep.mubr.bf16.mxu0 %v769
        %1277 = vmatmul.mubr.bf16.gmra.mrb[0].mxu0 %v768
        %v1278 = vpop.f32.mrb[0].mxu0
        %v1279 = vadd.f32 0.0, %v1278
        %v1280 = vpop.f32.mrb[0].mxu0
        %v1281 = vpop.f32.mrb[0].mxu0
        %v1282 = vadd.f32 0.0, %v1281
        %v1283 = vpop.f32.mrb[0].mxu0
        %1284 = vmatprep.mubr.bf16.mxu0 %v773
        %1285 = vmatmul.mubr.bf16.gmra.mrb[0].mxu0 %v772
        %v1286 = vpop.f32.mrb[0].mxu0
        %v1287 = vadd.f32 0.0, %v1286
        %v1288 = vpop.f32.mrb[0].mxu0
        %v1289 = vpop.f32.mrb[0].mxu0
        %v1290 = vadd.f32 0.0, %v1289
        %v1291 = vpop.f32.mrb[0].mxu0
        %1292 = vmatprep.mubr.bf16.mxu0 %v777
        %1293 = vmatmul.mubr.bf16.gmra.mrb[0].mxu0 %v776
        %v1294 = vpop.f32.mrb[0].mxu0
        %v1295 = vadd.f32 0.0, %v1294
        %v1296 = vpop.f32.mrb[0].mxu0
        %v1297 = vpop.f32.mrb[0].mxu0
        %v1298 = vadd.f32 0.0, %v1297
        %v1299 = vpop.f32.mrb[0].mxu0
        %1300 = vmatprep.mubr.bf16.mxu0 %v781
        %1301 = vmatmul.mubr.bf16.gmra.mrb[0].mxu0 %v780
        %v1302 = vpop.f32.mrb[0].mxu0
        %v1303 = vadd.f32 0.0, %v1302
        %v1304 = vpop.f32.mrb[0].mxu0
        %v1305 = vpop.f32.mrb[0].mxu0
        %v1306 = vadd.f32 0.0, %v1305
        %v1307 = vpop.f32.mrb[0].mxu0
        %1308 = vmatprep.mubr.bf16.mxu0 %v785
        %1309 = vmatmul.mubr.bf16.gmra.mrb[0].mxu0 %v784
        %v1310 = vpop.f32.mrb[0].mxu0
        %v1311 = vadd.f32 0.0, %v1310
        %v1312 = vpop.f32.mrb[0].mxu0
        %v1313 = vpop.f32.mrb[0].mxu0
        %v1314 = vadd.f32 0.0, %v1313
        %v1315 = vpop.f32.mrb[0].mxu0
        %1316 = vmatprep.mubr.bf16.mxu0 %v789
        %1317 = vmatmul.mubr.bf16.gmra.mrb[0].mxu0 %v788
        %v1318 = vpop.f32.mrb[0].mxu0
        %v1319 = vadd.f32 0.0, %v1318
        %v1320 = vpop.f32.mrb[0].mxu0
        %v1321 = vpop.f32.mrb[0].mxu0
        %v1322 = vadd.f32 0.0, %v1321
        %v1323 = vpop.f32.mrb[0].mxu0
        %1324 = vmatprep.mubr.bf16.mxu0 %v793
        %1325 = vmatmul.mubr.bf16.gmra.mrb[0].mxu0 %v792
        %v1326 = vpop.f32.mrb[0].mxu0
        %v1327 = vadd.f32 0.0, %v1326
        %v1328 = vpop.f32.mrb[0].mxu0
        %v1329 = vpop.f32.mrb[0].mxu0
        %v1330 = vadd.f32 0.0, %v1329
        %v1331 = vpop.f32.mrb[0].mxu0
        %1332 = vmatprep.mubr.bf16.mxu0 %v797
        %1333 = vmatmul.mubr.bf16.gmra.mrb[0].mxu0 %v796
        %v1334 = vpop.f32.mrb[0].mxu0
        %v1335 = vadd.f32 0.0, %v1334
        %v1336 = vpop.f32.mrb[0].mxu0
        %v1337 = vpop.f32.mrb[0].mxu0
        %v1338 = vadd.f32 0.0, %v1337
        %v1339 = vpop.f32.mrb[0].mxu0
        %1340 = vmatprep.mubr.bf16.mxu0 %v801
        %1341 = vmatmul.mubr.bf16.gmra.mrb[0].mxu0 %v800
        %v1342 = vpop.f32.mrb[0].mxu0
        %v1343 = vadd.f32 0.0, %v1342
        %v1344 = vpop.f32.mrb[0].mxu0
        %v1345 = vpop.f32.mrb[0].mxu0
        %v1346 = vadd.f32 0.0, %v1345
        %v1347 = vpop.f32.mrb[0].mxu0
        %1348 = vmatprep.mubr.bf16.mxu0 %v805
        %1349 = vmatmul.mubr.bf16.gmra.mrb[0].mxu0 %v804
        %v1350 = vpop.f32.mrb[0].mxu0
        %v1351 = vadd.f32 0.0, %v1350
        %v1352 = vpop.f32.mrb[0].mxu0
        %v1353 = vpop.f32.mrb[0].mxu0
        %v1354 = vadd.f32 0.0, %v1353
        %v1355 = vpop.f32.mrb[0].mxu0
        %1356 = vmatprep.mubr.bf16.mxu0 %v809
        %1357 = vmatmul.mubr.bf16.gmra.mrb[0].mxu0 %v808
        %v1358 = vpop.f32.mrb[0].mxu0
        %v1359 = vadd.f32 0.0, %v1358
        %v1360 = vpop.f32.mrb[0].mxu0
        %v1361 = vpop.f32.mrb[0].mxu0
        %v1362 = vadd.f32 0.0, %v1361
        %v1363 = vpop.f32.mrb[0].mxu0
        %1364 = vmatprep.mubr.bf16.mxu0 %v813
        %1365 = vmatmul.mubr.bf16.gmra.mrb[0].mxu0 %v812
        %v1366 = vpop.f32.mrb[0].mxu0
        %v1367 = vadd.f32 0.0, %v1366
        %v1368 = vpop.f32.mrb[0].mxu0
        %v1369 = vpop.f32.mrb[0].mxu0
        %v1370 = vadd.f32 0.0, %v1369
        %v1371 = vpop.f32.mrb[0].mxu0
        %1372 = vmatprep.mubr.bf16.mxu0 %v817
        %1373 = vmatmul.mubr.bf16.gmra.mrb[0].mxu0 %v816
        %v1374 = vpop.f32.mrb[0].mxu0
        %v1375 = vadd.f32 0.0, %v1374
        %v1376 = vpop.f32.mrb[0].mxu0
        %v1377 = vpop.f32.mrb[0].mxu0
        %v1378 = vadd.f32 0.0, %v1377
        %v1379 = vpop.f32.mrb[0].mxu0
        %1380 = vmatprep.mubr.bf16.mxu0 %v821
        %1381 = vmatmul.mubr.bf16.gmra.mrb[0].mxu0 %v820
        %v1382 = vpop.f32.mrb[0].mxu0
        %v1383 = vadd.f32 0.0, %v1382
        %v1384 = vpop.f32.mrb[0].mxu0
        %v1385 = vpop.f32.mrb[0].mxu0
        %v1386 = vadd.f32 0.0, %v1385
        %v1387 = vpop.f32.mrb[0].mxu0
        %1388 = vmatprep.mubr.bf16.mxu0 %v825
        %1389 = vmatmul.mubr.bf16.gmra.mrb[0].mxu0 %v824
        %v1390 = vpop.f32.mrb[0].mxu0
        %v1391 = vadd.f32 0.0, %v1390
        %v1392 = vpop.f32.mrb[0].mxu0
        %v1393 = vpop.f32.mrb[0].mxu0
        %v1394 = vadd.f32 0.0, %v1393
        %v1395 = vpop.f32.mrb[0].mxu0
        %1396 = vmatprep.mubr.bf16.mxu0 %v829
        %1397 = vmatmul.mubr.bf16.gmra.mrb[0].mxu0 %v828
        %v1398 = vpop.f32.mrb[0].mxu0
        %v1399 = vadd.f32 0.0, %v1398
        %v1400 = vpop.f32.mrb[0].mxu0
        %v1401 = vpop.f32.mrb[0].mxu0
        %v1402 = vadd.f32 0.0, %v1401
        %v1403 = vpop.f32.mrb[0].mxu0
        %1404 = vmatprep.mubr.bf16.mxu0 %v833
        %1405 = vmatmul.mubr.bf16.gmra.mrb[0].mxu0 %v832
        %v1406 = vpop.f32.mrb[0].mxu0
        %v1407 = vadd.f32 0.0, %v1406
        %v1408 = vpop.f32.mrb[0].mxu0
        %v1409 = vpop.f32.mrb[0].mxu0
        %v1410 = vadd.f32 0.0, %v1409
        %v1411 = vpop.f32.mrb[0].mxu0
        %1412 = vmatprep.mubr.bf16.mxu0 %v837
        %1413 = vmatmul.mubr.bf16.gmra.mrb[0].mxu0 %v836
        %v1414 = vpop.f32.mrb[0].mxu0
        %v1415 = vadd.f32 0.0, %v1414
        %v1416 = vpop.f32.mrb[0].mxu0
        %v1417 = vpop.f32.mrb[0].mxu0
        %v1418 = vadd.f32 0.0, %v1417
        %v1419 = vpop.f32.mrb[0].mxu0
        %1420 = vmatprep.mubr.bf16.mxu0 %v841
        %1421 = vmatmul.mubr.bf16.gmra.mrb[0].mxu0 %v840
        %v1422 = vpop.f32.mrb[0].mxu0
        %v1423 = vadd.f32 0.0, %v1422
        %v1424 = vpop.f32.mrb[0].mxu0
        %v1425 = vpop.f32.mrb[0].mxu0
        %v1426 = vadd.f32 0.0, %v1425
        %v1427 = vpop.f32.mrb[0].mxu0
        %1428 = vmatprep.mubr.bf16.mxu0 %v845
        %1429 = vmatmul.mubr.bf16.gmra.mrb[0].mxu0 %v844
        %v1430 = vpop.f32.mrb[0].mxu0
        %v1431 = vadd.f32 0.0, %v1430
        %v1432 = vpop.f32.mrb[0].mxu0
        %v1433 = vpop.f32.mrb[0].mxu0
        %v1434 = vadd.f32 0.0, %v1433
        %v1435 = vpop.f32.mrb[0].mxu0
        %1436 = vmatprep.mubr.bf16.mxu0 %v849
        %1437 = vmatmul.mubr.bf16.gmra.mrb[0].mxu0 %v848
        %v1438 = vpop.f32.mrb[0].mxu0
        %v1439 = vadd.f32 0.0, %v1438
        %v1440 = vpop.f32.mrb[0].mxu0
        %v1441 = vpop.f32.mrb[0].mxu0
        %v1442 = vadd.f32 0.0, %v1441
        %v1443 = vpop.f32.mrb[0].mxu0
        %1444 = vmatprep.mubr.bf16.mxu0 %v853
        %1445 = vmatmul.mubr.bf16.gmra.mrb[0].mxu0 %v852
        %v1446 = vpop.f32.mrb[0].mxu0
        %v1447 = vadd.f32 0.0, %v1446
        %v1448 = vpop.f32.mrb[0].mxu0
        %v1449 = vpop.f32.mrb[0].mxu0
        %v1450 = vadd.f32 0.0, %v1449
        %v1451 = vpop.f32.mrb[0].mxu0
        %1452 = vmatprep.mubr.bf16.mxu0 %v857
        %1453 = vmatmul.mubr.bf16.gmra.mrb[0].mxu0 %v856
        %v1454 = vpop.f32.mrb[0].mxu0
        %v1455 = vadd.f32 0.0, %v1454
        %v1456 = vpop.f32.mrb[0].mxu0
        %v1457 = vpop.f32.mrb[0].mxu0
        %v1458 = vadd.f32 0.0, %v1457
        %v1459 = vpop.f32.mrb[0].mxu0
        %1460 = vmatprep.mubr.bf16.mxu0 %v861
        %1461 = vmatmul.mubr.bf16.gmra.mrb[0].mxu0 %v860
        %v1462 = vpop.f32.mrb[0].mxu0
        %v1463 = vadd.f32 0.0, %v1462
        %v1464 = vpop.f32.mrb[0].mxu0
        %v1465 = vpop.f32.mrb[0].mxu0
        %v1466 = vadd.f32 0.0, %v1465
        %v1467 = vpop.f32.mrb[0].mxu0
        %1468 = vmatprep.mubr.bf16.mxu0 %v865
        %1469 = vmatmul.mubr.bf16.gmra.mrb[0].mxu0 %v864
        %v1470 = vpop.f32.mrb[0].mxu0
        %v1471 = vadd.f32 0.0, %v1470
        %v1472 = vpop.f32.mrb[0].mxu0
        %v1473 = vpop.f32.mrb[0].mxu0
        %v1474 = vadd.f32 0.0, %v1473
        %v1475 = vpop.f32.mrb[0].mxu0
        %1476 = vmatprep.mubr.bf16.mxu0 %v869
        %1477 = vmatmul.mubr.bf16.gmra.mrb[0].mxu0 %v868
        %v1478 = vpop.f32.mrb[0].mxu0
        %v1479 = vadd.f32 0.0, %v1478
        %v1480 = vpop.f32.mrb[0].mxu0
        %v1481 = vpop.f32.mrb[0].mxu0
        %v1482 = vadd.f32 0.0, %v1481
        %v1483 = vpop.f32.mrb[0].mxu0
        %1484 = vdwg.mxu0
        %1485 = vmatprep.subr.bf16.mxu0 0
        %1486 = vmatpush1.bf16.msra.mxu0 %v1148
        %1487 = vmatprep.subr.bf16.mxu0 0
        %1488 = vmatpush1.bf16.msra.mxu0 %v1149
        %1489 = vmatprep.subr.bf16.mxu0 0
        %1490 = vmatpush1.bf16.msra.mxu0 %v1150
        %1491 = vmatprep.subr.bf16.mxu0 0
        %1492 = vmatpush1.bf16.msra.mxu0 %v1151
        %1493 = vmatprep.subr.bf16.mxu0 0
        %1494 = vmatpush1.bf16.msra.mxu0 %v1152
        %1495 = vmatprep.subr.bf16.mxu0 0
        %1496 = vmatpush1.bf16.msra.mxu0 %v1153
        %1497 = vmatprep.subr.bf16.mxu0 0
        %1498 = vmatpush1.bf16.msra.mxu0 %v1154
        %1499 = vmatprep.subr.bf16.mxu0 0
        %1500 = vmatpush1.bf16.msra.mxu0 %v1155
        %1501 = vmatprep.subr.bf16.mxu0 0
        %1502 = vmatpush1.bf16.msra.mxu0 %v1156
        %1503 = vmatprep.subr.bf16.mxu0 0
        %1504 = vmatpush1.bf16.msra.mxu0 %v1157
        %1505 = vmatprep.subr.bf16.mxu0 0
        %1506 = vmatpush1.bf16.msra.mxu0 %v1158
        %1507 = vmatprep.subr.bf16.mxu0 0
        %1508 = vmatpush1.bf16.msra.mxu0 %v1159
        %1509 = vmatprep.subr.bf16.mxu0 0
        %1510 = vmatpush1.bf16.msra.mxu0 %v1160
        %1511 = vmatprep.subr.bf16.mxu0 0
        %1512 = vmatpush1.bf16.msra.mxu0 %v1161
        %1513 = vmatprep.subr.bf16.mxu0 0
        %1514 = vmatpush1.bf16.msra.mxu0 %v1162
        %1515 = vmatprep.subr.bf16.mxu0 0
        %1516 = vmatpush1.bf16.msra.mxu0 %v1163
        %1517 = vmatprep.mubr.bf16.mxu0 %v747
        %1518 = vmatmul.mubr.bf16.gmra.mrb[0].mxu0 %v746
        %v1519 = vpop.f32.mrb[0].mxu0
        %v1520 = vadd.f32 %v1231, %v1519
        %v1521 = vpop.f32.mrb[0].mxu0
        %v1522 = vpop.f32.mrb[0].mxu0
        %v1523 = vadd.f32 %v1234, %v1522
        %v1524 = vpop.f32.mrb[0].mxu0
        %1525 = vmatprep.mubr.bf16.mxu0 %v751
        %1526 = vmatmul.mubr.bf16.gmra.mrb[0].mxu0 %v750
        %v1527 = vpop.f32.mrb[0].mxu0
        %v1528 = vadd.f32 %v1239, %v1527
        %v1529 = vpop.f32.mrb[0].mxu0
        %v1530 = vpop.f32.mrb[0].mxu0
        %v1531 = vadd.f32 %v1242, %v1530
        %v1532 = vpop.f32.mrb[0].mxu0
        %1533 = vmatprep.mubr.bf16.mxu0 %v755
        %1534 = vmatmul.mubr.bf16.gmra.mrb[0].mxu0 %v754
        %v1535 = vpop.f32.mrb[0].mxu0
        %v1536 = vadd.f32 %v1247, %v1535
        %v1537 = vpop.f32.mrb[0].mxu0
        %v1538 = vpop.f32.mrb[0].mxu0
        %v1539 = vadd.f32 %v1250, %v1538
        %v1540 = vpop.f32.mrb[0].mxu0
        %1541 = vmatprep.mubr.bf16.mxu0 %v759
        %1542 = vmatmul.mubr.bf16.gmra.mrb[0].mxu0 %v758
        %v1543 = vpop.f32.mrb[0].mxu0
        %v1544 = vadd.f32 %v1255, %v1543
        %v1545 = vpop.f32.mrb[0].mxu0
        %v1546 = vpop.f32.mrb[0].mxu0
        %v1547 = vadd.f32 %v1258, %v1546
        %v1548 = vpop.f32.mrb[0].mxu0
        %1549 = vmatprep.mubr.bf16.mxu0 %v763
        %1550 = vmatmul.mubr.bf16.gmra.mrb[0].mxu0 %v762
        %v1551 = vpop.f32.mrb[0].mxu0
        %v1552 = vadd.f32 %v1263, %v1551
        %v1553 = vpop.f32.mrb[0].mxu0
        %v1554 = vpop.f32.mrb[0].mxu0
        %v1555 = vadd.f32 %v1266, %v1554
        %v1556 = vpop.f32.mrb[0].mxu0
        %1557 = vmatprep.mubr.bf16.mxu0 %v767
        %1558 = vmatmul.mubr.bf16.gmra.mrb[0].mxu0 %v766
        %v1559 = vpop.f32.mrb[0].mxu0
        %v1560 = vadd.f32 %v1271, %v1559
        %v1561 = vpop.f32.mrb[0].mxu0
        %v1562 = vpop.f32.mrb[0].mxu0
        %v1563 = vadd.f32 %v1274, %v1562
        %v1564 = vpop.f32.mrb[0].mxu0
        %1565 = vmatprep.mubr.bf16.mxu0 %v771
        %1566 = vmatmul.mubr.bf16.gmra.mrb[0].mxu0 %v770
        %v1567 = vpop.f32.mrb[0].mxu0
        %v1568 = vadd.f32 %v1279, %v1567
        %v1569 = vpop.f32.mrb[0].mxu0
        %v1570 = vpop.f32.mrb[0].mxu0
        %v1571 = vadd.f32 %v1282, %v1570
        %v1572 = vpop.f32.mrb[0].mxu0
        %1573 = vmatprep.mubr.bf16.mxu0 %v775
        %1574 = vmatmul.mubr.bf16.gmra.mrb[0].mxu0 %v774
        %v1575 = vpop.f32.mrb[0].mxu0
        %v1576 = vadd.f32 %v1287, %v1575
        %v1577 = vpop.f32.mrb[0].mxu0
        %v1578 = vpop.f32.mrb[0].mxu0
        %v1579 = vadd.f32 %v1290, %v1578
        %v1580 = vpop.f32.mrb[0].mxu0
        %1581 = vmatprep.mubr.bf16.mxu0 %v779
        %1582 = vmatmul.mubr.bf16.gmra.mrb[0].mxu0 %v778
        %v1583 = vpop.f32.mrb[0].mxu0
        %v1584 = vadd.f32 %v1295, %v1583
        %v1585 = vpop.f32.mrb[0].mxu0
        %v1586 = vpop.f32.mrb[0].mxu0
        %v1587 = vadd.f32 %v1298, %v1586
        %v1588 = vpop.f32.mrb[0].mxu0
        %1589 = vmatprep.mubr.bf16.mxu0 %v783
        %1590 = vmatmul.mubr.bf16.gmra.mrb[0].mxu0 %v782
        %v1591 = vpop.f32.mrb[0].mxu0
        %v1592 = vadd.f32 %v1303, %v1591
        %v1593 = vpop.f32.mrb[0].mxu0
        %v1594 = vpop.f32.mrb[0].mxu0
        %v1595 = vadd.f32 %v1306, %v1594
        %v1596 = vpop.f32.mrb[0].mxu0
        %1597 = vmatprep.mubr.bf16.mxu0 %v787
        %1598 = vmatmul.mubr.bf16.gmra.mrb[0].mxu0 %v786
        %v1599 = vpop.f32.mrb[0].mxu0
        %v1600 = vadd.f32 %v1311, %v1599
        %v1601 = vpop.f32.mrb[0].mxu0
        %v1602 = vpop.f32.mrb[0].mxu0
        %v1603 = vadd.f32 %v1314, %v1602
        %v1604 = vpop.f32.mrb[0].mxu0
        %1605 = vmatprep.mubr.bf16.mxu0 %v791
        %1606 = vmatmul.mubr.bf16.gmra.mrb[0].mxu0 %v790
        %v1607 = vpop.f32.mrb[0].mxu0
        %v1608 = vadd.f32 %v1319, %v1607
        %v1609 = vpop.f32.mrb[0].mxu0
        %v1610 = vpop.f32.mrb[0].mxu0
        %v1611 = vadd.f32 %v1322, %v1610
        %v1612 = vpop.f32.mrb[0].mxu0
        %1613 = vmatprep.mubr.bf16.mxu0 %v795
        %1614 = vmatmul.mubr.bf16.gmra.mrb[0].mxu0 %v794
        %v1615 = vpop.f32.mrb[0].mxu0
        %v1616 = vadd.f32 %v1327, %v1615
        %v1617 = vpop.f32.mrb[0].mxu0
        %v1618 = vpop.f32.mrb[0].mxu0
        %v1619 = vadd.f32 %v1330, %v1618
        %v1620 = vpop.f32.mrb[0].mxu0
        %1621 = vmatprep.mubr.bf16.mxu0 %v799
        %1622 = vmatmul.mubr.bf16.gmra.mrb[0].mxu0 %v798
        %v1623 = vpop.f32.mrb[0].mxu0
        %v1624 = vadd.f32 %v1335, %v1623
        %v1625 = vpop.f32.mrb[0].mxu0
        %v1626 = vpop.f32.mrb[0].mxu0
        %v1627 = vadd.f32 %v1338, %v1626
        %v1628 = vpop.f32.mrb[0].mxu0
        %1629 = vmatprep.mubr.bf16.mxu0 %v803
        %1630 = vmatmul.mubr.bf16.gmra.mrb[0].mxu0 %v802
        %v1631 = vpop.f32.mrb[0].mxu0
        %v1632 = vadd.f32 %v1343, %v1631
        %v1633 = vpop.f32.mrb[0].mxu0
        %v1634 = vpop.f32.mrb[0].mxu0
        %v1635 = vadd.f32 %v1346, %v1634
        %v1636 = vpop.f32.mrb[0].mxu0
        %1637 = vmatprep.mubr.bf16.mxu0 %v807
        %1638 = vmatmul.mubr.bf16.gmra.mrb[0].mxu0 %v806
        %v1639 = vpop.f32.mrb[0].mxu0
        %v1640 = vadd.f32 %v1351, %v1639
        %v1641 = vpop.f32.mrb[0].mxu0
        %v1642 = vpop.f32.mrb[0].mxu0
        %v1643 = vadd.f32 %v1354, %v1642
        %v1644 = vpop.f32.mrb[0].mxu0
        %1645 = vmatprep.mubr.bf16.mxu0 %v811
        %1646 = vmatmul.mubr.bf16.gmra.mrb[0].mxu0 %v810
        %v1647 = vpop.f32.mrb[0].mxu0
        %v1648 = vadd.f32 %v1359, %v1647
        %v1649 = vpop.f32.mrb[0].mxu0
        %v1650 = vpop.f32.mrb[0].mxu0
        %v1651 = vadd.f32 %v1362, %v1650
        %v1652 = vpop.f32.mrb[0].mxu0
        %1653 = vmatprep.mubr.bf16.mxu0 %v815
        %1654 = vmatmul.mubr.bf16.gmra.mrb[0].mxu0 %v814
        %v1655 = vpop.f32.mrb[0].mxu0
        %v1656 = vadd.f32 %v1367, %v1655
        %v1657 = vpop.f32.mrb[0].mxu0
        %v1658 = vpop.f32.mrb[0].mxu0
        %v1659 = vadd.f32 %v1370, %v1658
        %v1660 = vpop.f32.mrb[0].mxu0
        %1661 = vmatprep.mubr.bf16.mxu0 %v819
        %1662 = vmatmul.mubr.bf16.gmra.mrb[0].mxu0 %v818
        %v1663 = vpop.f32.mrb[0].mxu0
        %v1664 = vadd.f32 %v1375, %v1663
        %v1665 = vpop.f32.mrb[0].mxu0
        %v1666 = vpop.f32.mrb[0].mxu0
        %v1667 = vadd.f32 %v1378, %v1666
        %v1668 = vpop.f32.mrb[0].mxu0
        %1669 = vmatprep.mubr.bf16.mxu0 %v823
        %1670 = vmatmul.mubr.bf16.gmra.mrb[0].mxu0 %v822
        %v1671 = vpop.f32.mrb[0].mxu0
        %v1672 = vadd.f32 %v1383, %v1671
        %v1673 = vpop.f32.mrb[0].mxu0
        %v1674 = vpop.f32.mrb[0].mxu0
        %v1675 = vadd.f32 %v1386, %v1674
        %v1676 = vpop.f32.mrb[0].mxu0
        %1677 = vmatprep.mubr.bf16.mxu0 %v827
        %1678 = vmatmul.mubr.bf16.gmra.mrb[0].mxu0 %v826
        %v1679 = vpop.f32.mrb[0].mxu0
        %v1680 = vadd.f32 %v1391, %v1679
        %v1681 = vpop.f32.mrb[0].mxu0
        %v1682 = vpop.f32.mrb[0].mxu0
        %v1683 = vadd.f32 %v1394, %v1682
        %v1684 = vpop.f32.mrb[0].mxu0
        %1685 = vmatprep.mubr.bf16.mxu0 %v831
        %1686 = vmatmul.mubr.bf16.gmra.mrb[0].mxu0 %v830
        %v1687 = vpop.f32.mrb[0].mxu0
        %v1688 = vadd.f32 %v1399, %v1687
        %v1689 = vpop.f32.mrb[0].mxu0
        %v1690 = vpop.f32.mrb[0].mxu0
        %v1691 = vadd.f32 %v1402, %v1690
        %v1692 = vpop.f32.mrb[0].mxu0
        %1693 = vmatprep.mubr.bf16.mxu0 %v835
        %1694 = vmatmul.mubr.bf16.gmra.mrb[0].mxu0 %v834
        %v1695 = vpop.f32.mrb[0].mxu0
        %v1696 = vadd.f32 %v1407, %v1695
        %v1697 = vpop.f32.mrb[0].mxu0
        %v1698 = vpop.f32.mrb[0].mxu0
        %v1699 = vadd.f32 %v1410, %v1698
        %v1700 = vpop.f32.mrb[0].mxu0
        %1701 = vmatprep.mubr.bf16.mxu0 %v839
        %1702 = vmatmul.mubr.bf16.gmra.mrb[0].mxu0 %v838
        %v1703 = vpop.f32.mrb[0].mxu0
        %v1704 = vadd.f32 %v1415, %v1703
        %v1705 = vpop.f32.mrb[0].mxu0
        %v1706 = vpop.f32.mrb[0].mxu0
        %v1707 = vadd.f32 %v1418, %v1706
        %v1708 = vpop.f32.mrb[0].mxu0
        %1709 = vmatprep.mubr.bf16.mxu0 %v843
        %1710 = vmatmul.mubr.bf16.gmra.mrb[0].mxu0 %v842
        %v1711 = vpop.f32.mrb[0].mxu0
        %v1712 = vadd.f32 %v1423, %v1711
        %v1713 = vpop.f32.mrb[0].mxu0
        %v1714 = vpop.f32.mrb[0].mxu0
        %v1715 = vadd.f32 %v1426, %v1714
        %v1716 = vpop.f32.mrb[0].mxu0
        %1717 = vmatprep.mubr.bf16.mxu0 %v847
        %1718 = vmatmul.mubr.bf16.gmra.mrb[0].mxu0 %v846
        %v1719 = vpop.f32.mrb[0].mxu0
        %v1720 = vadd.f32 %v1431, %v1719
        %v1721 = vpop.f32.mrb[0].mxu0
        %v1722 = vpop.f32.mrb[0].mxu0
        %v1723 = vadd.f32 %v1434, %v1722
        %v1724 = vpop.f32.mrb[0].mxu0
        %1725 = vmatprep.mubr.bf16.mxu0 %v851
        %1726 = vmatmul.mubr.bf16.gmra.mrb[0].mxu0 %v850
        %v1727 = vpop.f32.mrb[0].mxu0
        %v1728 = vadd.f32 %v1439, %v1727
        %v1729 = vpop.f32.mrb[0].mxu0
        %v1730 = vpop.f32.mrb[0].mxu0
        %v1731 = vadd.f32 %v1442, %v1730
        %v1732 = vpop.f32.mrb[0].mxu0
        %1733 = vmatprep.mubr.bf16.mxu0 %v855
        %1734 = vmatmul.mubr.bf16.gmra.mrb[0].mxu0 %v854
        %v1735 = vpop.f32.mrb[0].mxu0
        %v1736 = vadd.f32 %v1447, %v1735
        %v1737 = vpop.f32.mrb[0].mxu0
        %v1738 = vpop.f32.mrb[0].mxu0
        %v1739 = vadd.f32 %v1450, %v1738
        %v1740 = vpop.f32.mrb[0].mxu0
        %1741 = vmatprep.mubr.bf16.mxu0 %v859
        %1742 = vmatmul.mubr.bf16.gmra.mrb[0].mxu0 %v858
        %v1743 = vpop.f32.mrb[0].mxu0
        %v1744 = vadd.f32 %v1455, %v1743
        %v1745 = vpop.f32.mrb[0].mxu0
        %v1746 = vpop.f32.mrb[0].mxu0
        %v1747 = vadd.f32 %v1458, %v1746
        %v1748 = vpop.f32.mrb[0].mxu0
        %1749 = vmatprep.mubr.bf16.mxu0 %v863
        %1750 = vmatmul.mubr.bf16.gmra.mrb[0].mxu0 %v862
        %v1751 = vpop.f32.mrb[0].mxu0
        %v1752 = vadd.f32 %v1463, %v1751
        %v1753 = vpop.f32.mrb[0].mxu0
        %v1754 = vpop.f32.mrb[0].mxu0
        %v1755 = vadd.f32 %v1466, %v1754
        %v1756 = vpop.f32.mrb[0].mxu0
        %1757 = vmatprep.mubr.bf16.mxu0 %v867
        %1758 = vmatmul.mubr.bf16.gmra.mrb[0].mxu0 %v866
        %v1759 = vpop.f32.mrb[0].mxu0
        %v1760 = vadd.f32 %v1471, %v1759
        %v1761 = vpop.f32.mrb[0].mxu0
        %v1762 = vpop.f32.mrb[0].mxu0
        %v1763 = vadd.f32 %v1474, %v1762
        %v1764 = vpop.f32.mrb[0].mxu0
        %1765 = vmatprep.mubr.bf16.mxu0 %v871
        %1766 = vmatmul.mubr.bf16.gmra.mrb[0].mxu0 %v870
        %v1767 = vpop.f32.mrb[0].mxu0
        %v1768 = vadd.f32 %v1479, %v1767
        %v1769 = vpop.f32.mrb[0].mxu0
        %v1770 = vpop.f32.mrb[0].mxu0
        %v1771 = vadd.f32 %v1482, %v1770
        %v1772 = vpop.f32.mrb[0].mxu0
        %1773 = vdwg.mxu0
        %v1774 = vadd.f32 %v872, %v1520
        %v1775 = vadd.f32 %v873, %v1523
        %v1776 = vadd.f32 %v874, %v1528
        %v1777 = vadd.f32 %v875, %v1531
        %v1778 = vadd.f32 %v876, %v1536
        %v1779 = vadd.f32 %v877, %v1539
        %v1780 = vadd.f32 %v878, %v1544
        %v1781 = vadd.f32 %v879, %v1547
        %v1782 = vadd.f32 %v880, %v1552
        %v1783 = vadd.f32 %v881, %v1555
        %v1784 = vadd.f32 %v882, %v1560
        %v1785 = vadd.f32 %v883, %v1563
        %v1786 = vadd.f32 %v884, %v1568
        %v1787 = vadd.f32 %v885, %v1571
        %v1788 = vadd.f32 %v886, %v1576
        %v1789 = vadd.f32 %v887, %v1579
        %v1790 = vadd.f32 %v888, %v1584
        %v1791 = vadd.f32 %v889, %v1587
        %v1792 = vadd.f32 %v890, %v1592
        %v1793 = vadd.f32 %v891, %v1595
        %v1794 = vadd.f32 %v892, %v1600
        %v1795 = vadd.f32 %v893, %v1603
        %v1796 = vadd.f32 %v894, %v1608
        %v1797 = vadd.f32 %v895, %v1611
        %v1798 = vadd.f32 %v896, %v1616
        %v1799 = vadd.f32 %v897, %v1619
        %v1800 = vadd.f32 %v898, %v1624
        %v1801 = vadd.f32 %v899, %v1627
        %v1802 = vadd.f32 %v900, %v1632
        %v1803 = vadd.f32 %v901, %v1635
        %v1804 = vadd.f32 %v902, %v1640
        %v1805 = vadd.f32 %v903, %v1643
        %v1806 = vadd.f32 %v904, %v1648
        %v1807 = vadd.f32 %v905, %v1651
        %v1808 = vadd.f32 %v906, %v1656
        %v1809 = vadd.f32 %v907, %v1659
        %v1810 = vadd.f32 %v908, %v1664
        %v1811 = vadd.f32 %v909, %v1667
        %v1812 = vadd.f32 %v910, %v1672
        %v1813 = vadd.f32 %v911, %v1675
        %v1814 = vadd.f32 %v912, %v1680
        %v1815 = vadd.f32 %v913, %v1683
        %v1816 = vadd.f32 %v914, %v1688
        %v1817 = vadd.f32 %v915, %v1691
        %v1818 = vadd.f32 %v916, %v1696
        %v1819 = vadd.f32 %v917, %v1699
        %v1820 = vadd.f32 %v918, %v1704
        %v1821 = vadd.f32 %v919, %v1707
        %v1822 = vadd.f32 %v920, %v1712
        %v1823 = vadd.f32 %v921, %v1715
        %v1824 = vadd.f32 %v922, %v1720
        %v1825 = vadd.f32 %v923, %v1723
        %v1826 = vadd.f32 %v924, %v1728
        %v1827 = vadd.f32 %v925, %v1731
        %v1828 = vadd.f32 %v926, %v1736
        %v1829 = vadd.f32 %v927, %v1739
        %v1830 = vadd.f32 %v928, %v1744
        %v1831 = vadd.f32 %v929, %v1747
        %v1832 = vadd.f32 %v930, %v1752
        %v1833 = vadd.f32 %v931, %v1755
        %v1834 = vadd.f32 %v932, %v1760
        %v1835 = vadd.f32 %v933, %v1763
        %v1836 = vadd.f32 %v934, %v1768
        %v1837 = vadd.f32 %v935, %v1771
        %1838 = vst [vmem:[#allocation2] sm:$0xff] %v1774
        %1839 = vst [vmem:[#allocation2 + $0x10] sm:$0xff] %v1775
        %1840 = vst [vmem:[#allocation2 + $0x20] sm:$0xff] %v1776
        %1841 = vst [vmem:[#allocation2 + $0x30] sm:$0xff] %v1777
        %1842 = vst [vmem:[#allocation2 + $0x40] sm:$0xff] %v1778
        %1843 = vst [vmem:[#allocation2 + $0x50] sm:$0xff] %v1779
        %1844 = vst [vmem:[#allocation2 + $0x60] sm:$0xff] %v1780
        %1845 = vst [vmem:[#allocation2 + $0x70] sm:$0xff] %v1781
        %1846 = vst [vmem:[#allocation2 + $0x80] sm:$0xff] %v1782
        %1847 = vst [vmem:[#allocation2 + $0x90] sm:$0xff] %v1783
        %1848 = vst [vmem:[#allocation2 + $0xa0] sm:$0xff] %v1784
        %1849 = vst [vmem:[#allocation2 + $0xb0] sm:$0xff] %v1785
        %1850 = vst [vmem:[#allocation2 + $0xc0] sm:$0xff] %v1786
        %1851 = vst [vmem:[#allocation2 + $0xd0] sm:$0xff] %v1787
        %1852 = vst [vmem:[#allocation2 + $0xe0] sm:$0xff] %v1788
        %1853 = vst [vmem:[#allocation2 + $0xf0] sm:$0xff] %v1789
        %1854 = vst [vmem:[#allocation2 + $0x100] sm:$0xff] %v1790
        %1855 = vst [vmem:[#allocation2 + $0x110] sm:$0xff] %v1791
        %1856 = vst [vmem:[#allocation2 + $0x120] sm:$0xff] %v1792
        %1857 = vst [vmem:[#allocation2 + $0x130] sm:$0xff] %v1793
        %1858 = vst [vmem:[#allocation2 + $0x140] sm:$0xff] %v1794
        %1859 = vst [vmem:[#allocation2 + $0x150] sm:$0xff] %v1795
        %1860 = vst [vmem:[#allocation2 + $0x160] sm:$0xff] %v1796
        %1861 = vst [vmem:[#allocation2 + $0x170] sm:$0xff] %v1797
        %1862 = vst [vmem:[#allocation2 + $0x180] sm:$0xff] %v1798
        %1863 = vst [vmem:[#allocation2 + $0x190] sm:$0xff] %v1799
        %1864 = vst [vmem:[#allocation2 + $0x1a0] sm:$0xff] %v1800
        %1865 = vst [vmem:[#allocation2 + $0x1b0] sm:$0xff] %v1801
        %1866 = vst [vmem:[#allocation2 + $0x1c0] sm:$0xff] %v1802
        %1867 = vst [vmem:[#allocation2 + $0x1d0] sm:$0xff] %v1803
        %1868 = vst [vmem:[#allocation2 + $0x1e0] sm:$0xff] %v1804
        %1869 = vst [vmem:[#allocation2 + $0x1f0] sm:$0xff] %v1805
        %1870 = vst [vmem:[#allocation2 + $0x200] sm:$0xff] %v1806
        %1871 = vst [vmem:[#allocation2 + $0x210] sm:$0xff] %v1807
        %1872 = vst [vmem:[#allocation2 + $0x220] sm:$0xff] %v1808
        %1873 = vst [vmem:[#allocation2 + $0x230] sm:$0xff] %v1809
        %1874 = vst [vmem:[#allocation2 + $0x240] sm:$0xff] %v1810
        %1875 = vst [vmem:[#allocation2 + $0x250] sm:$0xff] %v1811
        %1876 = vst [vmem:[#allocation2 + $0x260] sm:$0xff] %v1812
        %1877 = vst [vmem:[#allocation2 + $0x270] sm:$0xff] %v1813
        %1878 = vst [vmem:[#allocation2 + $0x280] sm:$0xff] %v1814
        %1879 = vst [vmem:[#allocation2 + $0x290] sm:$0xff] %v1815
        %1880 = vst [vmem:[#allocation2 + $0x2a0] sm:$0xff] %v1816
        %1881 = vst [vmem:[#allocation2 + $0x2b0] sm:$0xff] %v1817
        %1882 = vst [vmem:[#allocation2 + $0x2c0] sm:$0xff] %v1818
        %1883 = vst [vmem:[#allocation2 + $0x2d0] sm:$0xff] %v1819
        %1884 = vst [vmem:[#allocation2 + $0x2e0] sm:$0xff] %v1820
        %1885 = vst [vmem:[#allocation2 + $0x2f0] sm:$0xff] %v1821
        %1886 = vst [vmem:[#allocation2 + $0x300] sm:$0xff] %v1822
        %1887 = vst [vmem:[#allocation2 + $0x310] sm:$0xff] %v1823
        %1888 = vst [vmem:[#allocation2 + $0x320] sm:$0xff] %v1824
        %1889 = vst [vmem:[#allocation2 + $0x330] sm:$0xff] %v1825
        %1890 = vst [vmem:[#allocation2 + $0x340] sm:$0xff] %v1826
        %1891 = vst [vmem:[#allocation2 + $0x350] sm:$0xff] %v1827
        %1892 = vst [vmem:[#allocation2 + $0x360] sm:$0xff] %v1828
        %1893 = vst [vmem:[#allocation2 + $0x370] sm:$0xff] %v1829
        %1894 = vst [vmem:[#allocation2 + $0x380] sm:$0xff] %v1830
        %1895 = vst [vmem:[#allocation2 + $0x390] sm:$0xff] %v1831
        %1896 = vst [vmem:[#allocation2 + $0x3a0] sm:$0xff] %v1832
        %1897 = vst [vmem:[#allocation2 + $0x3b0] sm:$0xff] %v1833
        %1898 = vst [vmem:[#allocation2 + $0x3c0] sm:$0xff] %v1834
        %1899 = vst [vmem:[#allocation2 + $0x3d0] sm:$0xff] %v1835
        %1900 = vst [vmem:[#allocation2 + $0x3e0] sm:$0xff] %v1836
        %1901 = vst [vmem:[#allocation2 + $0x3f0] sm:$0xff] %v1837
        %p1902 = scmp.eq.s32.totalorder %s21, 2
        // Predicated region
        $region68: #{gnn_boundary_classifier_forward.2} parent=58 // pred_check
          %p1903 = pneg %p1902
        $region69: #{gnn_boundary_classifier_forward.2} parent=58 // pred_check_branch
          %1905 = sbr.rel (%p1903) target = $region71
        $region70: #{gnn_boundary_classifier_forward.2} parent=58 // pred_region
          %v1906 = vld [vmem:[#allocation2] sm:$0xff]
          %v1907 = vld [vmem:[#allocation2 + $0x10] sm:$0xff]
          %v1908 = vld [vmem:[#allocation2 + $0x20] sm:$0xff]
          %v1909 = vld [vmem:[#allocation2 + $0x30] sm:$0xff]
          %v1910 = vld [vmem:[#allocation2 + $0x40] sm:$0xff]
          %v1911 = vld [vmem:[#allocation2 + $0x50] sm:$0xff]
          %v1912 = vld [vmem:[#allocation2 + $0x60] sm:$0xff]
          %v1913 = vld [vmem:[#allocation2 + $0x70] sm:$0xff]
          %v1914 = vld [vmem:[#allocation2 + $0x80] sm:$0xff]
          %v1915 = vld [vmem:[#allocation2 + $0x90] sm:$0xff]
          %v1916 = vld [vmem:[#allocation2 + $0xa0] sm:$0xff]
          %v1917 = vld [vmem:[#allocation2 + $0xb0] sm:$0xff]
          %v1918 = vld [vmem:[#allocation2 + $0xc0] sm:$0xff]
          %v1919 = vld [vmem:[#allocation2 + $0xd0] sm:$0xff]
          %v1920 = vld [vmem:[#allocation2 + $0xe0] sm:$0xff]
          %v1921 = vld [vmem:[#allocation2 + $0xf0] sm:$0xff]
          %v1922 = vld [vmem:[#allocation2 + $0x100] sm:$0xff]
          %v1923 = vld [vmem:[#allocation2 + $0x110] sm:$0xff]
          %v1924 = vld [vmem:[#allocation2 + $0x120] sm:$0xff]
          %v1925 = vld [vmem:[#allocation2 + $0x130] sm:$0xff]
          %v1926 = vld [vmem:[#allocation2 + $0x140] sm:$0xff]
          %v1927 = vld [vmem:[#allocation2 + $0x150] sm:$0xff]
          %v1928 = vld [vmem:[#allocation2 + $0x160] sm:$0xff]
          %v1929 = vld [vmem:[#allocation2 + $0x170] sm:$0xff]
          %v1930 = vld [vmem:[#allocation2 + $0x180] sm:$0xff]
          %v1931 = vld [vmem:[#allocation2 + $0x190] sm:$0xff]
          %v1932 = vld [vmem:[#allocation2 + $0x1a0] sm:$0xff]
          %v1933 = vld [vmem:[#allocation2 + $0x1b0] sm:$0xff]
          %v1934 = vld [vmem:[#allocation2 + $0x1c0] sm:$0xff]
          %v1935 = vld [vmem:[#allocation2 + $0x1d0] sm:$0xff]
          %v1936 = vld [vmem:[#allocation2 + $0x1e0] sm:$0xff]
          %v1937 = vld [vmem:[#allocation2 + $0x1f0] sm:$0xff]
          %v1938 = vld [vmem:[#allocation2 + $0x200] sm:$0xff]
          %v1939 = vld [vmem:[#allocation2 + $0x210] sm:$0xff]
          %v1940 = vld [vmem:[#allocation2 + $0x220] sm:$0xff]
          %v1941 = vld [vmem:[#allocation2 + $0x230] sm:$0xff]
          %v1942 = vld [vmem:[#allocation2 + $0x240] sm:$0xff]
          %v1943 = vld [vmem:[#allocation2 + $0x250] sm:$0xff]
          %v1944 = vld [vmem:[#allocation2 + $0x260] sm:$0xff]
          %v1945 = vld [vmem:[#allocation2 + $0x270] sm:$0xff]
          %v1946 = vld [vmem:[#allocation2 + $0x280] sm:$0xff]
          %v1947 = vld [vmem:[#allocation2 + $0x290] sm:$0xff]
          %v1948 = vld [vmem:[#allocation2 + $0x2a0] sm:$0xff]
          %v1949 = vld [vmem:[#allocation2 + $0x2b0] sm:$0xff]
          %v1950 = vld [vmem:[#allocation2 + $0x2c0] sm:$0xff]
          %v1951 = vld [vmem:[#allocation2 + $0x2d0] sm:$0xff]
          %v1952 = vld [vmem:[#allocation2 + $0x2e0] sm:$0xff]
          %v1953 = vld [vmem:[#allocation2 + $0x2f0] sm:$0xff]
          %v1954 = vld [vmem:[#allocation2 + $0x300] sm:$0xff]
          %v1955 = vld [vmem:[#allocation2 + $0x310] sm:$0xff]
          %v1956 = vld [vmem:[#allocation2 + $0x320] sm:$0xff]
          %v1957 = vld [vmem:[#allocation2 + $0x330] sm:$0xff]
          %v1958 = vld [vmem:[#allocation2 + $0x340] sm:$0xff]
          %v1959 = vld [vmem:[#allocation2 + $0x350] sm:$0xff]
          %v1960 = vld [vmem:[#allocation2 + $0x360] sm:$0xff]
          %v1961 = vld [vmem:[#allocation2 + $0x370] sm:$0xff]
          %v1962 = vld [vmem:[#allocation2 + $0x380] sm:$0xff]
          %v1963 = vld [vmem:[#allocation2 + $0x390] sm:$0xff]
          %v1964 = vld [vmem:[#allocation2 + $0x3a0] sm:$0xff]
          %v1965 = vld [vmem:[#allocation2 + $0x3b0] sm:$0xff]
          %v1966 = vld [vmem:[#allocation2 + $0x3c0] sm:$0xff]
          %v1967 = vld [vmem:[#allocation2 + $0x3d0] sm:$0xff]
          %v1968 = vld [vmem:[#allocation2 + $0x3e0] sm:$0xff]
          %v1969 = vld [vmem:[#allocation2 + $0x3f0] sm:$0xff]
          %v1970 = vld [vmem:[%s405] sm:$0xff]
          %v1971 = vld [vmem:[%s405 + $0x8] sm:$0xff]
          %v1972 = vld [vmem:[%s405 + $0x10] sm:$0xff]
          %v1973 = vld [vmem:[%s405 + $0x18] sm:$0xff]
          %v1974 = vld [vmem:[%s405 + $0x20] sm:$0xff]
          %v1975 = vld [vmem:[%s405 + $0x28] sm:$0xff]
          %v1976 = vld [vmem:[%s405 + $0x30] sm:$0xff]
          %v1977 = vld [vmem:[%s405 + $0x38] sm:$0xff]
          %v1978 = vld [vmem:[%s405 + $0x40] sm:$0xff]
          %v1979 = vld [vmem:[%s405 + $0x48] sm:$0xff]
          %v1980 = vld [vmem:[%s405 + $0x50] sm:$0xff]
          %v1981 = vld [vmem:[%s405 + $0x58] sm:$0xff]
          %v1982 = vld [vmem:[%s405 + $0x60] sm:$0xff]
          %v1983 = vld [vmem:[%s405 + $0x68] sm:$0xff]
          %v1984 = vld [vmem:[%s405 + $0x70] sm:$0xff]
          %v1985 = vld [vmem:[%s405 + $0x78] sm:$0xff]
          %v1986 = vld [vmem:[%s405 + $0x80] sm:$0xff]
          %v1987 = vld [vmem:[%s405 + $0x88] sm:$0xff]
          %v1988 = vld [vmem:[%s405 + $0x90] sm:$0xff]
          %v1989 = vld [vmem:[%s405 + $0x98] sm:$0xff]
          %v1990 = vld [vmem:[%s405 + $0xa0] sm:$0xff]
          %v1991 = vld [vmem:[%s405 + $0xa8] sm:$0xff]
          %v1992 = vld [vmem:[%s405 + $0xb0] sm:$0xff]
          %v1993 = vld [vmem:[%s405 + $0xb8] sm:$0xff]
          %v1994 = vld [vmem:[%s405 + $0xc0] sm:$0xff]
          %v1995 = vld [vmem:[%s405 + $0xc8] sm:$0xff]
          %v1996 = vld [vmem:[%s405 + $0xd0] sm:$0xff]
          %v1997 = vld [vmem:[%s405 + $0xd8] sm:$0xff]
          %v1998 = vld [vmem:[%s405 + $0xe0] sm:$0xff]
          %v1999 = vld [vmem:[%s405 + $0xe8] sm:$0xff]
          %v2000 = vld [vmem:[%s405 + $0xf0] sm:$0xff]
          %v2001 = vld [vmem:[%s405 + $0xf8] sm:$0xff]
          %v2002 = vld [vmem:[%s405 + $0x100] sm:$0xff]
          %v2003 = vld [vmem:[%s405 + $0x108] sm:$0xff]
          %v2004 = vld [vmem:[%s405 + $0x110] sm:$0xff]
          %v2005 = vld [vmem:[%s405 + $0x118] sm:$0xff]
          %v2006 = vld [vmem:[%s405 + $0x120] sm:$0xff]
          %v2007 = vld [vmem:[%s405 + $0x128] sm:$0xff]
          %v2008 = vld [vmem:[%s405 + $0x130] sm:$0xff]
          %v2009 = vld [vmem:[%s405 + $0x138] sm:$0xff]
          %v2010 = vld [vmem:[%s405 + $0x140] sm:$0xff]
          %v2011 = vld [vmem:[%s405 + $0x148] sm:$0xff]
          %v2012 = vld [vmem:[%s405 + $0x150] sm:$0xff]
          %v2013 = vld [vmem:[%s405 + $0x158] sm:$0xff]
          %v2014 = vld [vmem:[%s405 + $0x160] sm:$0xff]
          %v2015 = vld [vmem:[%s405 + $0x168] sm:$0xff]
          %v2016 = vld [vmem:[%s405 + $0x170] sm:$0xff]
          %v2017 = vld [vmem:[%s405 + $0x178] sm:$0xff]
          %v2018 = vld [vmem:[%s405 + $0x180] sm:$0xff]
          %v2019 = vld [vmem:[%s405 + $0x188] sm:$0xff]
          %v2020 = vld [vmem:[%s405 + $0x190] sm:$0xff]
          %v2021 = vld [vmem:[%s405 + $0x198] sm:$0xff]
          %v2022 = vld [vmem:[%s405 + $0x1a0] sm:$0xff]
          %v2023 = vld [vmem:[%s405 + $0x1a8] sm:$0xff]
          %v2024 = vld [vmem:[%s405 + $0x1b0] sm:$0xff]
          %v2025 = vld [vmem:[%s405 + $0x1b8] sm:$0xff]
          %v2026 = vld [vmem:[%s405 + $0x1c0] sm:$0xff]
          %v2027 = vld [vmem:[%s405 + $0x1c8] sm:$0xff]
          %v2028 = vld [vmem:[%s405 + $0x1d0] sm:$0xff]
          %v2029 = vld [vmem:[%s405 + $0x1d8] sm:$0xff]
          %v2030 = vld [vmem:[%s405 + $0x1e0] sm:$0xff]
          %v2031 = vld [vmem:[%s405 + $0x1e8] sm:$0xff]
          %v2032 = vld [vmem:[%s405 + $0x1f0] sm:$0xff]
          %v2033 = vld [vmem:[%s405 + $0x1f8] sm:$0xff]
          %2035 = vset.pattern.permute.xlu0 0
          %2036 = vperm.xlu0 %2035, %v1970
          %v2037 = vpop.permute.xlu0 %2036
          %2040 = vset.pattern.permute.xlu0 0
          %2041 = vperm.xlu0 %2040, %v1971
          %v2042 = vpop.permute.xlu0 %2041
          %2045 = vset.pattern.permute.xlu0 0
          %2046 = vperm.xlu0 %2045, %v1972
          %v2047 = vpop.permute.xlu0 %2046
          %2050 = vset.pattern.permute.xlu0 0
          %2051 = vperm.xlu0 %2050, %v1973
          %v2052 = vpop.permute.xlu0 %2051
          %2055 = vset.pattern.permute.xlu0 0
          %2056 = vperm.xlu0 %2055, %v1974
          %v2057 = vpop.permute.xlu0 %2056
          %2060 = vset.pattern.permute.xlu0 0
          %2061 = vperm.xlu0 %2060, %v1975
          %v2062 = vpop.permute.xlu0 %2061
          %2065 = vset.pattern.permute.xlu0 0
          %2066 = vperm.xlu0 %2065, %v1976
          %v2067 = vpop.permute.xlu0 %2066
          %2070 = vset.pattern.permute.xlu0 0
          %2071 = vperm.xlu0 %2070, %v1977
          %v2072 = vpop.permute.xlu0 %2071
          %2075 = vset.pattern.permute.xlu0 0
          %2076 = vperm.xlu0 %2075, %v1978
          %v2077 = vpop.permute.xlu0 %2076
          %2080 = vset.pattern.permute.xlu0 0
          %2081 = vperm.xlu0 %2080, %v1979
          %v2082 = vpop.permute.xlu0 %2081
          %2085 = vset.pattern.permute.xlu0 0
          %2086 = vperm.xlu0 %2085, %v1980
          %v2087 = vpop.permute.xlu0 %2086
          %2090 = vset.pattern.permute.xlu0 0
          %2091 = vperm.xlu0 %2090, %v1981
          %v2092 = vpop.permute.xlu0 %2091
          %2095 = vset.pattern.permute.xlu0 0
          %2096 = vperm.xlu0 %2095, %v1982
          %v2097 = vpop.permute.xlu0 %2096
          %2100 = vset.pattern.permute.xlu0 0
          %2101 = vperm.xlu0 %2100, %v1983
          %v2102 = vpop.permute.xlu0 %2101
          %2105 = vset.pattern.permute.xlu0 0
          %2106 = vperm.xlu0 %2105, %v1984
          %v2107 = vpop.permute.xlu0 %2106
          %2110 = vset.pattern.permute.xlu0 0
          %2111 = vperm.xlu0 %2110, %v1985
          %v2112 = vpop.permute.xlu0 %2111
          %2115 = vset.pattern.permute.xlu0 0
          %2116 = vperm.xlu0 %2115, %v1986
          %v2117 = vpop.permute.xlu0 %2116
          %2120 = vset.pattern.permute.xlu0 0
          %2121 = vperm.xlu0 %2120, %v1987
          %v2122 = vpop.permute.xlu0 %2121
          %2125 = vset.pattern.permute.xlu0 0
          %2126 = vperm.xlu0 %2125, %v1988
          %v2127 = vpop.permute.xlu0 %2126
          %2130 = vset.pattern.permute.xlu0 0
          %2131 = vperm.xlu0 %2130, %v1989
          %v2132 = vpop.permute.xlu0 %2131
          %2135 = vset.pattern.permute.xlu0 0
          %2136 = vperm.xlu0 %2135, %v1990
          %v2137 = vpop.permute.xlu0 %2136
          %2140 = vset.pattern.permute.xlu0 0
          %2141 = vperm.xlu0 %2140, %v1991
          %v2142 = vpop.permute.xlu0 %2141
          %2145 = vset.pattern.permute.xlu0 0
          %2146 = vperm.xlu0 %2145, %v1992
          %v2147 = vpop.permute.xlu0 %2146
          %2150 = vset.pattern.permute.xlu0 0
          %2151 = vperm.xlu0 %2150, %v1993
          %v2152 = vpop.permute.xlu0 %2151
          %2155 = vset.pattern.permute.xlu0 0
          %2156 = vperm.xlu0 %2155, %v1994
          %v2157 = vpop.permute.xlu0 %2156
          %2160 = vset.pattern.permute.xlu0 0
          %2161 = vperm.xlu0 %2160, %v1995
          %v2162 = vpop.permute.xlu0 %2161
          %2165 = vset.pattern.permute.xlu0 0
          %2166 = vperm.xlu0 %2165, %v1996
          %v2167 = vpop.permute.xlu0 %2166
          %2170 = vset.pattern.permute.xlu0 0
          %2171 = vperm.xlu0 %2170, %v1997
          %v2172 = vpop.permute.xlu0 %2171
          %2175 = vset.pattern.permute.xlu0 0
          %2176 = vperm.xlu0 %2175, %v1998
          %v2177 = vpop.permute.xlu0 %2176
          %2180 = vset.pattern.permute.xlu0 0
          %2181 = vperm.xlu0 %2180, %v1999
          %v2182 = vpop.permute.xlu0 %2181
          %2185 = vset.pattern.permute.xlu0 0
          %2186 = vperm.xlu0 %2185, %v2000
          %v2187 = vpop.permute.xlu0 %2186
          %2190 = vset.pattern.permute.xlu0 0
          %2191 = vperm.xlu0 %2190, %v2001
          %v2192 = vpop.permute.xlu0 %2191
          %2195 = vset.pattern.permute.xlu0 0
          %2196 = vperm.xlu0 %2195, %v2002
          %v2197 = vpop.permute.xlu0 %2196
          %2200 = vset.pattern.permute.xlu0 0
          %2201 = vperm.xlu0 %2200, %v2003
          %v2202 = vpop.permute.xlu0 %2201
          %2205 = vset.pattern.permute.xlu0 0
          %2206 = vperm.xlu0 %2205, %v2004
          %v2207 = vpop.permute.xlu0 %2206
          %2210 = vset.pattern.permute.xlu0 0
          %2211 = vperm.xlu0 %2210, %v2005
          %v2212 = vpop.permute.xlu0 %2211
          %2215 = vset.pattern.permute.xlu0 0
          %2216 = vperm.xlu0 %2215, %v2006
          %v2217 = vpop.permute.xlu0 %2216
          %2220 = vset.pattern.permute.xlu0 0
          %2221 = vperm.xlu0 %2220, %v2007
          %v2222 = vpop.permute.xlu0 %2221
          %2225 = vset.pattern.permute.xlu0 0
          %2226 = vperm.xlu0 %2225, %v2008
          %v2227 = vpop.permute.xlu0 %2226
          %2230 = vset.pattern.permute.xlu0 0
          %2231 = vperm.xlu0 %2230, %v2009
          %v2232 = vpop.permute.xlu0 %2231
          %2235 = vset.pattern.permute.xlu0 0
          %2236 = vperm.xlu0 %2235, %v2010
          %v2237 = vpop.permute.xlu0 %2236
          %2240 = vset.pattern.permute.xlu0 0
          %2241 = vperm.xlu0 %2240, %v2011
          %v2242 = vpop.permute.xlu0 %2241
          %2245 = vset.pattern.permute.xlu0 0
          %2246 = vperm.xlu0 %2245, %v2012
          %v2247 = vpop.permute.xlu0 %2246
          %2250 = vset.pattern.permute.xlu0 0
          %2251 = vperm.xlu0 %2250, %v2013
          %v2252 = vpop.permute.xlu0 %2251
          %2255 = vset.pattern.permute.xlu0 0
          %2256 = vperm.xlu0 %2255, %v2014
          %v2257 = vpop.permute.xlu0 %2256
          %2260 = vset.pattern.permute.xlu0 0
          %2261 = vperm.xlu0 %2260, %v2015
          %v2262 = vpop.permute.xlu0 %2261
          %2265 = vset.pattern.permute.xlu0 0
          %2266 = vperm.xlu0 %2265, %v2016
          %v2267 = vpop.permute.xlu0 %2266
          %2270 = vset.pattern.permute.xlu0 0
          %2271 = vperm.xlu0 %2270, %v2017
          %v2272 = vpop.permute.xlu0 %2271
          %2275 = vset.pattern.permute.xlu0 0
          %2276 = vperm.xlu0 %2275, %v2018
          %v2277 = vpop.permute.xlu0 %2276
          %2280 = vset.pattern.permute.xlu0 0
          %2281 = vperm.xlu0 %2280, %v2019
          %v2282 = vpop.permute.xlu0 %2281
          %2285 = vset.pattern.permute.xlu0 0
          %2286 = vperm.xlu0 %2285, %v2020
          %v2287 = vpop.permute.xlu0 %2286
          %2290 = vset.pattern.permute.xlu0 0
          %2291 = vperm.xlu0 %2290, %v2021
          %v2292 = vpop.permute.xlu0 %2291
          %2295 = vset.pattern.permute.xlu0 0
          %2296 = vperm.xlu0 %2295, %v2022
          %v2297 = vpop.permute.xlu0 %2296
          %2300 = vset.pattern.permute.xlu0 0
          %2301 = vperm.xlu0 %2300, %v2023
          %v2302 = vpop.permute.xlu0 %2301
          %2305 = vset.pattern.permute.xlu0 0
          %2306 = vperm.xlu0 %2305, %v2024
          %v2307 = vpop.permute.xlu0 %2306
          %2310 = vset.pattern.permute.xlu0 0
          %2311 = vperm.xlu0 %2310, %v2025
          %v2312 = vpop.permute.xlu0 %2311
          %2315 = vset.pattern.permute.xlu0 0
          %2316 = vperm.xlu0 %2315, %v2026
          %v2317 = vpop.permute.xlu0 %2316
          %2320 = vset.pattern.permute.xlu0 0
          %2321 = vperm.xlu0 %2320, %v2027
          %v2322 = vpop.permute.xlu0 %2321
          %2325 = vset.pattern.permute.xlu0 0
          %2326 = vperm.xlu0 %2325, %v2028
          %v2327 = vpop.permute.xlu0 %2326
          %2330 = vset.pattern.permute.xlu0 0
          %2331 = vperm.xlu0 %2330, %v2029
          %v2332 = vpop.permute.xlu0 %2331
          %2335 = vset.pattern.permute.xlu0 0
          %2336 = vperm.xlu0 %2335, %v2030
          %v2337 = vpop.permute.xlu0 %2336
          %2340 = vset.pattern.permute.xlu0 0
          %2341 = vperm.xlu0 %2340, %v2031
          %v2342 = vpop.permute.xlu0 %2341
          %2345 = vset.pattern.permute.xlu0 0
          %2346 = vperm.xlu0 %2345, %v2032
          %v2347 = vpop.permute.xlu0 %2346
          %2350 = vset.pattern.permute.xlu0 0
          %2351 = vperm.xlu0 %2350, %v2033
          %v2352 = vpop.permute.xlu0 %2351
          %v2354 = vmul.f32 %v1906, %v2037
          %v2355 = vmul.f32 %v1907, %v2042
          %v2356 = vmul.f32 %v1908, %v2047
          %v2357 = vmul.f32 %v1909, %v2052
          %v2358 = vmul.f32 %v1910, %v2057
          %v2359 = vmul.f32 %v1911, %v2062
          %v2360 = vmul.f32 %v1912, %v2067
          %v2361 = vmul.f32 %v1913, %v2072
          %v2362 = vmul.f32 %v1914, %v2077
          %v2363 = vmul.f32 %v1915, %v2082
          %v2364 = vmul.f32 %v1916, %v2087
          %v2365 = vmul.f32 %v1917, %v2092
          %v2366 = vmul.f32 %v1918, %v2097
          %v2367 = vmul.f32 %v1919, %v2102
          %v2368 = vmul.f32 %v1920, %v2107
          %v2369 = vmul.f32 %v1921, %v2112
          %v2370 = vmul.f32 %v1922, %v2117
          %v2371 = vmul.f32 %v1923, %v2122
          %v2372 = vmul.f32 %v1924, %v2127
          %v2373 = vmul.f32 %v1925, %v2132
          %v2374 = vmul.f32 %v1926, %v2137
          %v2375 = vmul.f32 %v1927, %v2142
          %v2376 = vmul.f32 %v1928, %v2147
          %v2377 = vmul.f32 %v1929, %v2152
          %v2378 = vmul.f32 %v1930, %v2157
          %v2379 = vmul.f32 %v1931, %v2162
          %v2380 = vmul.f32 %v1932, %v2167
          %v2381 = vmul.f32 %v1933, %v2172
          %v2382 = vmul.f32 %v1934, %v2177
          %v2383 = vmul.f32 %v1935, %v2182
          %v2384 = vmul.f32 %v1936, %v2187
          %v2385 = vmul.f32 %v1937, %v2192
          %v2386 = vmul.f32 %v1938, %v2197
          %v2387 = vmul.f32 %v1939, %v2202
          %v2388 = vmul.f32 %v1940, %v2207
          %v2389 = vmul.f32 %v1941, %v2212
          %v2390 = vmul.f32 %v1942, %v2217
          %v2391 = vmul.f32 %v1943, %v2222
          %v2392 = vmul.f32 %v1944, %v2227
          %v2393 = vmul.f32 %v1945, %v2232
          %v2394 = vmul.f32 %v1946, %v2237
          %v2395 = vmul.f32 %v1947, %v2242
          %v2396 = vmul.f32 %v1948, %v2247
          %v2397 = vmul.f32 %v1949, %v2252
          %v2398 = vmul.f32 %v1950, %v2257
          %v2399 = vmul.f32 %v1951, %v2262
          %v2400 = vmul.f32 %v1952, %v2267
          %v2401 = vmul.f32 %v1953, %v2272
          %v2402 = vmul.f32 %v1954, %v2277
          %v2403 = vmul.f32 %v1955, %v2282
          %v2404 = vmul.f32 %v1956, %v2287
          %v2405 = vmul.f32 %v1957, %v2292
          %v2406 = vmul.f32 %v1958, %v2297
          %v2407 = vmul.f32 %v1959, %v2302
          %v2408 = vmul.f32 %v1960, %v2307
          %v2409 = vmul.f32 %v1961, %v2312
          %v2410 = vmul.f32 %v1962, %v2317
          %v2411 = vmul.f32 %v1963, %v2322
          %v2412 = vmul.f32 %v1964, %v2327
          %v2413 = vmul.f32 %v1965, %v2332
          %v2414 = vmul.f32 %v1966, %v2337
          %v2415 = vmul.f32 %v1967, %v2342
          %v2416 = vmul.f32 %v1968, %v2347
          %v2417 = vmul.f32 %v1969, %v2352
          %2418 = vst [vmem:[#allocation2] sm:$0xff] %v2354
          %2419 = vst [vmem:[#allocation2 + $0x10] sm:$0xff] %v2355
          %2420 = vst [vmem:[#allocation2 + $0x20] sm:$0xff] %v2356
          %2421 = vst [vmem:[#allocation2 + $0x30] sm:$0xff] %v2357
          %2422 = vst [vmem:[#allocation2 + $0x40] sm:$0xff] %v2358
          %2423 = vst [vmem:[#allocation2 + $0x50] sm:$0xff] %v2359
          %2424 = vst [vmem:[#allocation2 + $0x60] sm:$0xff] %v2360
          %2425 = vst [vmem:[#allocation2 + $0x70] sm:$0xff] %v2361
          %2426 = vst [vmem:[#allocation2 + $0x80] sm:$0xff] %v2362
          %2427 = vst [vmem:[#allocation2 + $0x90] sm:$0xff] %v2363
          %2428 = vst [vmem:[#allocation2 + $0xa0] sm:$0xff] %v2364
          %2429 = vst [vmem:[#allocation2 + $0xb0] sm:$0xff] %v2365
          %2430 = vst [vmem:[#allocation2 + $0xc0] sm:$0xff] %v2366
          %2431 = vst [vmem:[#allocation2 + $0xd0] sm:$0xff] %v2367
          %2432 = vst [vmem:[#allocation2 + $0xe0] sm:$0xff] %v2368
          %2433 = vst [vmem:[#allocation2 + $0xf0] sm:$0xff] %v2369
          %2434 = vst [vmem:[#allocation2 + $0x100] sm:$0xff] %v2370
          %2435 = vst [vmem:[#allocation2 + $0x110] sm:$0xff] %v2371
          %2436 = vst [vmem:[#allocation2 + $0x120] sm:$0xff] %v2372
          %2437 = vst [vmem:[#allocation2 + $0x130] sm:$0xff] %v2373
          %2438 = vst [vmem:[#allocation2 + $0x140] sm:$0xff] %v2374
          %2439 = vst [vmem:[#allocation2 + $0x150] sm:$0xff] %v2375
          %2440 = vst [vmem:[#allocation2 + $0x160] sm:$0xff] %v2376
          %2441 = vst [vmem:[#allocation2 + $0x170] sm:$0xff] %v2377
          %2442 = vst [vmem:[#allocation2 + $0x180] sm:$0xff] %v2378
          %2443 = vst [vmem:[#allocation2 + $0x190] sm:$0xff] %v2379
          %2444 = vst [vmem:[#allocation2 + $0x1a0] sm:$0xff] %v2380
          %2445 = vst [vmem:[#allocation2 + $0x1b0] sm:$0xff] %v2381
          %2446 = vst [vmem:[#allocation2 + $0x1c0] sm:$0xff] %v2382
          %2447 = vst [vmem:[#allocation2 + $0x1d0] sm:$0xff] %v2383
          %2448 = vst [vmem:[#allocation2 + $0x1e0] sm:$0xff] %v2384
          %2449 = vst [vmem:[#allocation2 + $0x1f0] sm:$0xff] %v2385
          %2450 = vst [vmem:[#allocation2 + $0x200] sm:$0xff] %v2386
          %2451 = vst [vmem:[#allocation2 + $0x210] sm:$0xff] %v2387
          %2452 = vst [vmem:[#allocation2 + $0x220] sm:$0xff] %v2388
          %2453 = vst [vmem:[#allocation2 + $0x230] sm:$0xff] %v2389
          %2454 = vst [vmem:[#allocation2 + $0x240] sm:$0xff] %v2390
          %2455 = vst [vmem:[#allocation2 + $0x250] sm:$0xff] %v2391
          %2456 = vst [vmem:[#allocation2 + $0x260] sm:$0xff] %v2392
          %2457 = vst [vmem:[#allocation2 + $0x270] sm:$0xff] %v2393
          %2458 = vst [vmem:[#allocation2 + $0x280] sm:$0xff] %v2394
          %2459 = vst [vmem:[#allocation2 + $0x290] sm:$0xff] %v2395
          %2460 = vst [vmem:[#allocation2 + $0x2a0] sm:$0xff] %v2396
          %2461 = vst [vmem:[#allocation2 + $0x2b0] sm:$0xff] %v2397
          %2462 = vst [vmem:[#allocation2 + $0x2c0] sm:$0xff] %v2398
          %2463 = vst [vmem:[#allocation2 + $0x2d0] sm:$0xff] %v2399
          %2464 = vst [vmem:[#allocation2 + $0x2e0] sm:$0xff] %v2400
          %2465 = vst [vmem:[#allocation2 + $0x2f0] sm:$0xff] %v2401
          %2466 = vst [vmem:[#allocation2 + $0x300] sm:$0xff] %v2402
          %2467 = vst [vmem:[#allocation2 + $0x310] sm:$0xff] %v2403
          %2468 = vst [vmem:[#allocation2 + $0x320] sm:$0xff] %v2404
          %2469 = vst [vmem:[#allocation2 + $0x330] sm:$0xff] %v2405
          %2470 = vst [vmem:[#allocation2 + $0x340] sm:$0xff] %v2406
          %2471 = vst [vmem:[#allocation2 + $0x350] sm:$0xff] %v2407
          %2472 = vst [vmem:[#allocation2 + $0x360] sm:$0xff] %v2408
          %2473 = vst [vmem:[#allocation2 + $0x370] sm:$0xff] %v2409
          %2474 = vst [vmem:[#allocation2 + $0x380] sm:$0xff] %v2410
          %2475 = vst [vmem:[#allocation2 + $0x390] sm:$0xff] %v2411
          %2476 = vst [vmem:[#allocation2 + $0x3a0] sm:$0xff] %v2412
          %2477 = vst [vmem:[#allocation2 + $0x3b0] sm:$0xff] %v2413
          %2478 = vst [vmem:[#allocation2 + $0x3c0] sm:$0xff] %v2414
          %2479 = vst [vmem:[#allocation2 + $0x3d0] sm:$0xff] %v2415
          %2480 = vst [vmem:[#allocation2 + $0x3e0] sm:$0xff] %v2416
          %2481 = vst [vmem:[#allocation2 + $0x3f0] sm:$0xff] %v2417
          %v2482 = vld [vmem:[#allocation2] sm:$0xff]
          %v2483 = vld [vmem:[#allocation2 + $0x8] sm:$0xff]
          %v2484 = vld [vmem:[#allocation2 + $0x10] sm:$0xff]
          %v2485 = vld [vmem:[#allocation2 + $0x18] sm:$0xff]
          %v2486 = vld [vmem:[#allocation2 + $0x20] sm:$0xff]
          %v2487 = vld [vmem:[#allocation2 + $0x28] sm:$0xff]
          %v2488 = vld [vmem:[#allocation2 + $0x30] sm:$0xff]
          %v2489 = vld [vmem:[#allocation2 + $0x38] sm:$0xff]
          %v2490 = vld [vmem:[#allocation2 + $0x40] sm:$0xff]
          %v2491 = vld [vmem:[#allocation2 + $0x48] sm:$0xff]
          %v2492 = vld [vmem:[#allocation2 + $0x50] sm:$0xff]
          %v2493 = vld [vmem:[#allocation2 + $0x58] sm:$0xff]
          %v2494 = vld [vmem:[#allocation2 + $0x60] sm:$0xff]
          %v2495 = vld [vmem:[#allocation2 + $0x68] sm:$0xff]
          %v2496 = vld [vmem:[#allocation2 + $0x70] sm:$0xff]
          %v2497 = vld [vmem:[#allocation2 + $0x78] sm:$0xff]
          %v2498 = vld [vmem:[#allocation2 + $0x80] sm:$0xff]
          %v2499 = vld [vmem:[#allocation2 + $0x88] sm:$0xff]
          %v2500 = vld [vmem:[#allocation2 + $0x90] sm:$0xff]
          %v2501 = vld [vmem:[#allocation2 + $0x98] sm:$0xff]
          %v2502 = vld [vmem:[#allocation2 + $0xa0] sm:$0xff]
          %v2503 = vld [vmem:[#allocation2 + $0xa8] sm:$0xff]
          %v2504 = vld [vmem:[#allocation2 + $0xb0] sm:$0xff]
          %v2505 = vld [vmem:[#allocation2 + $0xb8] sm:$0xff]
          %v2506 = vld [vmem:[#allocation2 + $0xc0] sm:$0xff]
          %v2507 = vld [vmem:[#allocation2 + $0xc8] sm:$0xff]
          %v2508 = vld [vmem:[#allocation2 + $0xd0] sm:$0xff]
          %v2509 = vld [vmem:[#allocation2 + $0xd8] sm:$0xff]
          %v2510 = vld [vmem:[#allocation2 + $0xe0] sm:$0xff]
          %v2511 = vld [vmem:[#allocation2 + $0xe8] sm:$0xff]
          %v2512 = vld [vmem:[#allocation2 + $0xf0] sm:$0xff]
          %v2513 = vld [vmem:[#allocation2 + $0xf8] sm:$0xff]
          %v2514 = vld [vmem:[#allocation2 + $0x100] sm:$0xff]
          %v2515 = vld [vmem:[#allocation2 + $0x108] sm:$0xff]
          %v2516 = vld [vmem:[#allocation2 + $0x110] sm:$0xff]
          %v2517 = vld [vmem:[#allocation2 + $0x118] sm:$0xff]
          %v2518 = vld [vmem:[#allocation2 + $0x120] sm:$0xff]
          %v2519 = vld [vmem:[#allocation2 + $0x128] sm:$0xff]
          %v2520 = vld [vmem:[#allocation2 + $0x130] sm:$0xff]
          %v2521 = vld [vmem:[#allocation2 + $0x138] sm:$0xff]
          %v2522 = vld [vmem:[#allocation2 + $0x140] sm:$0xff]
          %v2523 = vld [vmem:[#allocation2 + $0x148] sm:$0xff]
          %v2524 = vld [vmem:[#allocation2 + $0x150] sm:$0xff]
          %v2525 = vld [vmem:[#allocation2 + $0x158] sm:$0xff]
          %v2526 = vld [vmem:[#allocation2 + $0x160] sm:$0xff]
          %v2527 = vld [vmem:[#allocation2 + $0x168] sm:$0xff]
          %v2528 = vld [vmem:[#allocation2 + $0x170] sm:$0xff]
          %v2529 = vld [vmem:[#allocation2 + $0x178] sm:$0xff]
          %v2530 = vld [vmem:[#allocation2 + $0x180] sm:$0xff]
          %v2531 = vld [vmem:[#allocation2 + $0x188] sm:$0xff]
          %v2532 = vld [vmem:[#allocation2 + $0x190] sm:$0xff]
          %v2533 = vld [vmem:[#allocation2 + $0x198] sm:$0xff]
          %v2534 = vld [vmem:[#allocation2 + $0x1a0] sm:$0xff]
          %v2535 = vld [vmem:[#allocation2 + $0x1a8] sm:$0xff]
          %v2536 = vld [vmem:[#allocation2 + $0x1b0] sm:$0xff]
          %v2537 = vld [vmem:[#allocation2 + $0x1b8] sm:$0xff]
          %v2538 = vld [vmem:[#allocation2 + $0x1c0] sm:$0xff]
          %v2539 = vld [vmem:[#allocation2 + $0x1c8] sm:$0xff]
          %v2540 = vld [vmem:[#allocation2 + $0x1d0] sm:$0xff]
          %v2541 = vld [vmem:[#allocation2 + $0x1d8] sm:$0xff]
          %v2542 = vld [vmem:[#allocation2 + $0x1e0] sm:$0xff]
          %v2543 = vld [vmem:[#allocation2 + $0x1e8] sm:$0xff]
          %v2544 = vld [vmem:[#allocation2 + $0x1f0] sm:$0xff]
          %v2545 = vld [vmem:[#allocation2 + $0x1f8] sm:$0xff]
          %v2546 = vld [vmem:[#allocation2 + $0x200] sm:$0xff]
          %v2547 = vld [vmem:[#allocation2 + $0x208] sm:$0xff]
          %v2548 = vld [vmem:[#allocation2 + $0x210] sm:$0xff]
          %v2549 = vld [vmem:[#allocation2 + $0x218] sm:$0xff]
          %v2550 = vld [vmem:[#allocation2 + $0x220] sm:$0xff]
          %v2551 = vld [vmem:[#allocation2 + $0x228] sm:$0xff]
          %v2552 = vld [vmem:[#allocation2 + $0x230] sm:$0xff]
          %v2553 = vld [vmem:[#allocation2 + $0x238] sm:$0xff]
          %v2554 = vld [vmem:[#allocation2 + $0x240] sm:$0xff]
          %v2555 = vld [vmem:[#allocation2 + $0x248] sm:$0xff]
          %v2556 = vld [vmem:[#allocation2 + $0x250] sm:$0xff]
          %v2557 = vld [vmem:[#allocation2 + $0x258] sm:$0xff]
          %v2558 = vld [vmem:[#allocation2 + $0x260] sm:$0xff]
          %v2559 = vld [vmem:[#allocation2 + $0x268] sm:$0xff]
          %v2560 = vld [vmem:[#allocation2 + $0x270] sm:$0xff]
          %v2561 = vld [vmem:[#allocation2 + $0x278] sm:$0xff]
          %v2562 = vld [vmem:[#allocation2 + $0x280] sm:$0xff]
          %v2563 = vld [vmem:[#allocation2 + $0x288] sm:$0xff]
          %v2564 = vld [vmem:[#allocation2 + $0x290] sm:$0xff]
          %v2565 = vld [vmem:[#allocation2 + $0x298] sm:$0xff]
          %v2566 = vld [vmem:[#allocation2 + $0x2a0] sm:$0xff]
          %v2567 = vld [vmem:[#allocation2 + $0x2a8] sm:$0xff]
          %v2568 = vld [vmem:[#allocation2 + $0x2b0] sm:$0xff]
          %v2569 = vld [vmem:[#allocation2 + $0x2b8] sm:$0xff]
          %v2570 = vld [vmem:[#allocation2 + $0x2c0] sm:$0xff]
          %v2571 = vld [vmem:[#allocation2 + $0x2c8] sm:$0xff]
          %v2572 = vld [vmem:[#allocation2 + $0x2d0] sm:$0xff]
          %v2573 = vld [vmem:[#allocation2 + $0x2d8] sm:$0xff]
          %v2574 = vld [vmem:[#allocation2 + $0x2e0] sm:$0xff]
          %v2575 = vld [vmem:[#allocation2 + $0x2e8] sm:$0xff]
          %v2576 = vld [vmem:[#allocation2 + $0x2f0] sm:$0xff]
          %v2577 = vld [vmem:[#allocation2 + $0x2f8] sm:$0xff]
          %v2578 = vld [vmem:[#allocation2 + $0x300] sm:$0xff]
          %v2579 = vld [vmem:[#allocation2 + $0x308] sm:$0xff]
          %v2580 = vld [vmem:[#allocation2 + $0x310] sm:$0xff]
          %v2581 = vld [vmem:[#allocation2 + $0x318] sm:$0xff]
          %v2582 = vld [vmem:[#allocation2 + $0x320] sm:$0xff]
          %v2583 = vld [vmem:[#allocation2 + $0x328] sm:$0xff]
          %v2584 = vld [vmem:[#allocation2 + $0x330] sm:$0xff]
          %v2585 = vld [vmem:[#allocation2 + $0x338] sm:$0xff]
          %v2586 = vld [vmem:[#allocation2 + $0x340] sm:$0xff]
          %v2587 = vld [vmem:[#allocation2 + $0x348] sm:$0xff]
          %v2588 = vld [vmem:[#allocation2 + $0x350] sm:$0xff]
          %v2589 = vld [vmem:[#allocation2 + $0x358] sm:$0xff]
          %v2590 = vld [vmem:[#allocation2 + $0x360] sm:$0xff]
          %v2591 = vld [vmem:[#allocation2 + $0x368] sm:$0xff]
          %v2592 = vld [vmem:[#allocation2 + $0x370] sm:$0xff]
          %v2593 = vld [vmem:[#allocation2 + $0x378] sm:$0xff]
          %v2594 = vld [vmem:[#allocation2 + $0x380] sm:$0xff]
          %v2595 = vld [vmem:[#allocation2 + $0x388] sm:$0xff]
          %v2596 = vld [vmem:[#allocation2 + $0x390] sm:$0xff]
          %v2597 = vld [vmem:[#allocation2 + $0x398] sm:$0xff]
          %v2598 = vld [vmem:[#allocation2 + $0x3a0] sm:$0xff]
          %v2599 = vld [vmem:[#allocation2 + $0x3a8] sm:$0xff]
          %v2600 = vld [vmem:[#allocation2 + $0x3b0] sm:$0xff]
          %v2601 = vld [vmem:[#allocation2 + $0x3b8] sm:$0xff]
          %v2602 = vld [vmem:[#allocation2 + $0x3c0] sm:$0xff]
          %v2603 = vld [vmem:[#allocation2 + $0x3c8] sm:$0xff]
          %v2604 = vld [vmem:[#allocation2 + $0x3d0] sm:$0xff]
          %v2605 = vld [vmem:[#allocation2 + $0x3d8] sm:$0xff]
          %v2606 = vld [vmem:[#allocation2 + $0x3e0] sm:$0xff]
          %v2607 = vld [vmem:[#allocation2 + $0x3e8] sm:$0xff]
          %v2608 = vld [vmem:[#allocation2 + $0x3f0] sm:$0xff]
          %v2609 = vld [vmem:[#allocation2 + $0x3f8] sm:$0xff]
          %v2610 = vpack.c.bf16 %v2484, %v2482
          %v2611 = vpack.c.bf16 %v2485, %v2483
          %v2612 = vpack.c.bf16 %v2488, %v2486
          %v2613 = vpack.c.bf16 %v2489, %v2487
          %v2614 = vpack.c.bf16 %v2492, %v2490
          %v2615 = vpack.c.bf16 %v2493, %v2491
          %v2616 = vpack.c.bf16 %v2496, %v2494
          %v2617 = vpack.c.bf16 %v2497, %v2495
          %v2618 = vpack.c.bf16 %v2500, %v2498
          %v2619 = vpack.c.bf16 %v2501, %v2499
          %v2620 = vpack.c.bf16 %v2504, %v2502
          %v2621 = vpack.c.bf16 %v2505, %v2503
          %v2622 = vpack.c.bf16 %v2508, %v2506
          %v2623 = vpack.c.bf16 %v2509, %v2507
          %v2624 = vpack.c.bf16 %v2512, %v2510
          %v2625 = vpack.c.bf16 %v2513, %v2511
          %v2626 = vpack.c.bf16 %v2516, %v2514
          %v2627 = vpack.c.bf16 %v2517, %v2515
          %v2628 = vpack.c.bf16 %v2520, %v2518
          %v2629 = vpack.c.bf16 %v2521, %v2519
          %v2630 = vpack.c.bf16 %v2524, %v2522
          %v2631 = vpack.c.bf16 %v2525, %v2523
          %v2632 = vpack.c.bf16 %v2528, %v2526
          %v2633 = vpack.c.bf16 %v2529, %v2527
          %v2634 = vpack.c.bf16 %v2532, %v2530
          %v2635 = vpack.c.bf16 %v2533, %v2531
          %v2636 = vpack.c.bf16 %v2536, %v2534
          %v2637 = vpack.c.bf16 %v2537, %v2535
          %v2638 = vpack.c.bf16 %v2540, %v2538
          %v2639 = vpack.c.bf16 %v2541, %v2539
          %v2640 = vpack.c.bf16 %v2544, %v2542
          %v2641 = vpack.c.bf16 %v2545, %v2543
          %v2642 = vpack.c.bf16 %v2548, %v2546
          %v2643 = vpack.c.bf16 %v2549, %v2547
          %v2644 = vpack.c.bf16 %v2552, %v2550
          %v2645 = vpack.c.bf16 %v2553, %v2551
          %v2646 = vpack.c.bf16 %v2556, %v2554
          %v2647 = vpack.c.bf16 %v2557, %v2555
          %v2648 = vpack.c.bf16 %v2560, %v2558
          %v2649 = vpack.c.bf16 %v2561, %v2559
          %v2650 = vpack.c.bf16 %v2564, %v2562
          %v2651 = vpack.c.bf16 %v2565, %v2563
          %v2652 = vpack.c.bf16 %v2568, %v2566
          %v2653 = vpack.c.bf16 %v2569, %v2567
          %v2654 = vpack.c.bf16 %v2572, %v2570
          %v2655 = vpack.c.bf16 %v2573, %v2571
          %v2656 = vpack.c.bf16 %v2576, %v2574
          %v2657 = vpack.c.bf16 %v2577, %v2575
          %v2658 = vpack.c.bf16 %v2580, %v2578
          %v2659 = vpack.c.bf16 %v2581, %v2579
          %v2660 = vpack.c.bf16 %v2584, %v2582
          %v2661 = vpack.c.bf16 %v2585, %v2583
          %v2662 = vpack.c.bf16 %v2588, %v2586
          %v2663 = vpack.c.bf16 %v2589, %v2587
          %v2664 = vpack.c.bf16 %v2592, %v2590
          %v2665 = vpack.c.bf16 %v2593, %v2591
          %v2666 = vpack.c.bf16 %v2596, %v2594
          %v2667 = vpack.c.bf16 %v2597, %v2595
          %v2668 = vpack.c.bf16 %v2600, %v2598
          %v2669 = vpack.c.bf16 %v2601, %v2599
          %v2670 = vpack.c.bf16 %v2604, %v2602
          %v2671 = vpack.c.bf16 %v2605, %v2603
          %v2672 = vpack.c.bf16 %v2608, %v2606
          %v2673 = vpack.c.bf16 %v2609, %v2607
          %v2674 = vld [vmem:[%s3] sm:$0xf]
          %v2675 = vld [vmem:[%s3 + $0x4] sm:$0xf]
          %v2676 = vld [vmem:[%s3 + $0x8] sm:$0xf]
          %v2677 = vld [vmem:[%s3 + $0xc] sm:$0xf]
          %v2678 = vld [vmem:[%s3 + $0x10] sm:$0xf]
          %v2679 = vld [vmem:[%s3 + $0x14] sm:$0xf]
          %v2680 = vld [vmem:[%s3 + $0x18] sm:$0xf]
          %v2681 = vld [vmem:[%s3 + $0x1c] sm:$0xf]
          %v2682 = vld [vmem:[%s3 + $0x20] sm:$0xf]
          %v2683 = vld [vmem:[%s3 + $0x24] sm:$0xf]
          %v2684 = vld [vmem:[%s3 + $0x28] sm:$0xf]
          %v2685 = vld [vmem:[%s3 + $0x2c] sm:$0xf]
          %v2686 = vld [vmem:[%s3 + $0x30] sm:$0xf]
          %v2687 = vld [vmem:[%s3 + $0x34] sm:$0xf]
          %v2688 = vld [vmem:[%s3 + $0x38] sm:$0xf]
          %v2689 = vld [vmem:[%s3 + $0x3c] sm:$0xf]
          %v2690 = vld [vmem:[%s3 + $0x40] sm:$0xf]
          %v2691 = vld [vmem:[%s3 + $0x44] sm:$0xf]
          %v2692 = vld [vmem:[%s3 + $0x48] sm:$0xf]
          %v2693 = vld [vmem:[%s3 + $0x4c] sm:$0xf]
          %v2694 = vld [vmem:[%s3 + $0x50] sm:$0xf]
          %v2695 = vld [vmem:[%s3 + $0x54] sm:$0xf]
          %v2696 = vld [vmem:[%s3 + $0x58] sm:$0xf]
          %v2697 = vld [vmem:[%s3 + $0x5c] sm:$0xf]
          %v2698 = vld [vmem:[%s3 + $0x60] sm:$0xf]
          %v2699 = vld [vmem:[%s3 + $0x64] sm:$0xf]
          %v2700 = vld [vmem:[%s3 + $0x68] sm:$0xf]
          %v2701 = vld [vmem:[%s3 + $0x6c] sm:$0xf]
          %v2702 = vld [vmem:[%s3 + $0x70] sm:$0xf]
          %v2703 = vld [vmem:[%s3 + $0x74] sm:$0xf]
          %v2704 = vld [vmem:[%s3 + $0x78] sm:$0xf]
          %v2705 = vld [vmem:[%s3 + $0x7c] sm:$0xf]
          %v2706 = vld [vmem:[%s4] sm:$0x1]
          %v2708 = vlaneseq
          %v2709 = vshrl.u32 %v2708, 7
          %v2710 = vsub.s32 0, %v2709
          %v2711 = vrot.slane %v2706, %v2710
          %v2745 = vunpack.c.l.b16 %v2674
          %v2746 = vunpack.c.l.b16 %v2675
          %v2747 = vunpack.c.l.b16 %v2676
          %v2748 = vunpack.c.l.b16 %v2677
          %v2749 = vunpack.c.l.b16 %v2678
          %v2750 = vunpack.c.l.b16 %v2679
          %v2751 = vunpack.c.l.b16 %v2680
          %v2752 = vunpack.c.l.b16 %v2681
          %v2753 = vunpack.c.l.b16 %v2682
          %v2754 = vunpack.c.l.b16 %v2683
          %v2755 = vunpack.c.l.b16 %v2684
          %v2756 = vunpack.c.l.b16 %v2685
          %v2757 = vunpack.c.l.b16 %v2686
          %v2758 = vunpack.c.l.b16 %v2687
          %v2759 = vunpack.c.l.b16 %v2688
          %v2760 = vunpack.c.l.b16 %v2689
          %v2761 = vunpack.c.l.b16 %v2690
          %v2762 = vunpack.c.l.b16 %v2691
          %v2763 = vunpack.c.l.b16 %v2692
          %v2764 = vunpack.c.l.b16 %v2693
          %v2765 = vunpack.c.l.b16 %v2694
          %v2766 = vunpack.c.l.b16 %v2695
          %v2767 = vunpack.c.l.b16 %v2696
          %v2768 = vunpack.c.l.b16 %v2697
          %v2769 = vunpack.c.l.b16 %v2698
          %v2770 = vunpack.c.l.b16 %v2699
          %v2771 = vunpack.c.l.b16 %v2700
          %v2772 = vunpack.c.l.b16 %v2701
          %v2773 = vunpack.c.l.b16 %v2702
          %v2774 = vunpack.c.l.b16 %v2703
          %v2775 = vunpack.c.l.b16 %v2704
          %v2776 = vunpack.c.l.b16 %v2705
          %v2777 = vpack.c.b16 %v2746, %v2745
          %v2778 = vpack.c.b16 %v2748, %v2747
          %v2779 = vpack.c.b16 %v2750, %v2749
          %v2780 = vpack.c.b16 %v2752, %v2751
          %v2781 = vpack.c.b16 %v2754, %v2753
          %v2782 = vpack.c.b16 %v2756, %v2755
          %v2783 = vpack.c.b16 %v2758, %v2757
          %v2784 = vpack.c.b16 %v2760, %v2759
          %v2785 = vpack.c.b16 %v2762, %v2761
          %v2786 = vpack.c.b16 %v2764, %v2763
          %v2787 = vpack.c.b16 %v2766, %v2765
          %v2788 = vpack.c.b16 %v2768, %v2767
          %v2789 = vpack.c.b16 %v2770, %v2769
          %v2790 = vpack.c.b16 %v2772, %v2771
          %v2791 = vpack.c.b16 %v2774, %v2773
          %v2792 = vpack.c.b16 %v2776, %v2775
          %2809 = vmatprep.subr.bf16.mxu0 0
          %2810 = vmatpush1.bf16.msra.mxu0 %v2777
          %2811 = vmatprep.subr.bf16.mxu0 0
          %2812 = vmatpush1.bf16.msra.mxu0 %v2778
          %2813 = vmatprep.subr.bf16.mxu0 0
          %2814 = vmatpush1.bf16.msra.mxu0 %v2779
          %2815 = vmatprep.subr.bf16.mxu0 0
          %2816 = vmatpush1.bf16.msra.mxu0 %v2780
          %2817 = vmatprep.subr.bf16.mxu0 0
          %2818 = vmatpush1.bf16.msra.mxu0 %v2781
          %2819 = vmatprep.subr.bf16.mxu0 0
          %2820 = vmatpush1.bf16.msra.mxu0 %v2782
          %2821 = vmatprep.subr.bf16.mxu0 0
          %2822 = vmatpush1.bf16.msra.mxu0 %v2783
          %2823 = vmatprep.subr.bf16.mxu0 0
          %2824 = vmatpush1.bf16.msra.mxu0 %v2784
          %2825 = vmatprep.subr.bf16.mxu0 0
          %2826 = vmatpush1.bf16.msra.mxu0 %v2785
          %2827 = vmatprep.subr.bf16.mxu0 0
          %2828 = vmatpush1.bf16.msra.mxu0 %v2786
          %2829 = vmatprep.subr.bf16.mxu0 0
          %2830 = vmatpush1.bf16.msra.mxu0 %v2787
          %2831 = vmatprep.subr.bf16.mxu0 0
          %2832 = vmatpush1.bf16.msra.mxu0 %v2788
          %2833 = vmatprep.subr.bf16.mxu0 0
          %2834 = vmatpush1.bf16.msra.mxu0 %v2789
          %2835 = vmatprep.subr.bf16.mxu0 0
          %2836 = vmatpush1.bf16.msra.mxu0 %v2790
          %2837 = vmatprep.subr.bf16.mxu0 0
          %2838 = vmatpush1.bf16.msra.mxu0 %v2791
          %2839 = vmatprep.subr.bf16.mxu0 0
          %2840 = vmatpush1.bf16.msra.mxu0 %v2792
          %2841 = vmatprep.mubr.bf16.mxu0 %v2611
          %2842 = vmatmul.mubr.bf16.gmra.mrb[0].mxu0 %v2610
          %v2843 = vpop.f32.mrb[0].mxu0
          %v2844 = vadd.f32 %v2711, %v2843
          %v2845 = vpop.f32.mrb[0].mxu0
          %v2846 = vpop.f32.mrb[0].mxu0
          %v2847 = vadd.f32 %v2711, %v2846
          %v2848 = vpop.f32.mrb[0].mxu0
          %2849 = vmatprep.mubr.bf16.mxu0 %v2613
          %2850 = vmatmul.mubr.bf16.gmra.mrb[0].mxu0 %v2612
          %v2851 = vpop.f32.mrb[0].mxu0
          %v2852 = vadd.f32 %v2711, %v2851
          %v2853 = vpop.f32.mrb[0].mxu0
          %v2854 = vpop.f32.mrb[0].mxu0
          %v2855 = vadd.f32 %v2711, %v2854
          %v2856 = vpop.f32.mrb[0].mxu0
          %2857 = vmatprep.mubr.bf16.mxu0 %v2615
          %2858 = vmatmul.mubr.bf16.gmra.mrb[0].mxu0 %v2614
          %v2859 = vpop.f32.mrb[0].mxu0
          %v2860 = vadd.f32 %v2711, %v2859
          %v2861 = vpop.f32.mrb[0].mxu0
          %v2862 = vpop.f32.mrb[0].mxu0
          %v2863 = vadd.f32 %v2711, %v2862
          %v2864 = vpop.f32.mrb[0].mxu0
          %2865 = vmatprep.mubr.bf16.mxu0 %v2617
          %2866 = vmatmul.mubr.bf16.gmra.mrb[0].mxu0 %v2616
          %v2867 = vpop.f32.mrb[0].mxu0
          %v2868 = vadd.f32 %v2711, %v2867
          %v2869 = vpop.f32.mrb[0].mxu0
          %v2870 = vpop.f32.mrb[0].mxu0
          %v2871 = vadd.f32 %v2711, %v2870
          %v2872 = vpop.f32.mrb[0].mxu0
          %2873 = vmatprep.mubr.bf16.mxu0 %v2619
          %2874 = vmatmul.mubr.bf16.gmra.mrb[0].mxu0 %v2618
          %v2875 = vpop.f32.mrb[0].mxu0
          %v2876 = vadd.f32 %v2711, %v2875
          %v2877 = vpop.f32.mrb[0].mxu0
          %v2878 = vpop.f32.mrb[0].mxu0
          %v2879 = vadd.f32 %v2711, %v2878
          %v2880 = vpop.f32.mrb[0].mxu0
          %2881 = vmatprep.mubr.bf16.mxu0 %v2621
          %2882 = vmatmul.mubr.bf16.gmra.mrb[0].mxu0 %v2620
          %v2883 = vpop.f32.mrb[0].mxu0
          %v2884 = vadd.f32 %v2711, %v2883
          %v2885 = vpop.f32.mrb[0].mxu0
          %v2886 = vpop.f32.mrb[0].mxu0
          %v2887 = vadd.f32 %v2711, %v2886
          %v2888 = vpop.f32.mrb[0].mxu0
          %2889 = vmatprep.mubr.bf16.mxu0 %v2623
          %2890 = vmatmul.mubr.bf16.gmra.mrb[0].mxu0 %v2622
          %v2891 = vpop.f32.mrb[0].mxu0
          %v2892 = vadd.f32 %v2711, %v2891
          %v2893 = vpop.f32.mrb[0].mxu0
          %v2894 = vpop.f32.mrb[0].mxu0
          %v2895 = vadd.f32 %v2711, %v2894
          %v2896 = vpop.f32.mrb[0].mxu0
          %2897 = vmatprep.mubr.bf16.mxu0 %v2625
          %2898 = vmatmul.mubr.bf16.gmra.mrb[0].mxu0 %v2624
          %v2899 = vpop.f32.mrb[0].mxu0
          %v2900 = vadd.f32 %v2711, %v2899
          %v2901 = vpop.f32.mrb[0].mxu0
          %v2902 = vpop.f32.mrb[0].mxu0
          %v2903 = vadd.f32 %v2711, %v2902
          %v2904 = vpop.f32.mrb[0].mxu0
          %2905 = vmatprep.mubr.bf16.mxu0 %v2627
          %2906 = vmatmul.mubr.bf16.gmra.mrb[0].mxu0 %v2626
          %v2907 = vpop.f32.mrb[0].mxu0
          %v2908 = vadd.f32 %v2711, %v2907
          %v2909 = vpop.f32.mrb[0].mxu0
          %v2910 = vpop.f32.mrb[0].mxu0
          %v2911 = vadd.f32 %v2711, %v2910
          %v2912 = vpop.f32.mrb[0].mxu0
          %2913 = vmatprep.mubr.bf16.mxu0 %v2629
          %2914 = vmatmul.mubr.bf16.gmra.mrb[0].mxu0 %v2628
          %v2915 = vpop.f32.mrb[0].mxu0
          %v2916 = vadd.f32 %v2711, %v2915
          %v2917 = vpop.f32.mrb[0].mxu0
          %v2918 = vpop.f32.mrb[0].mxu0
          %v2919 = vadd.f32 %v2711, %v2918
          %v2920 = vpop.f32.mrb[0].mxu0
          %2921 = vmatprep.mubr.bf16.mxu0 %v2631
          %2922 = vmatmul.mubr.bf16.gmra.mrb[0].mxu0 %v2630
          %v2923 = vpop.f32.mrb[0].mxu0
          %v2924 = vadd.f32 %v2711, %v2923
          %v2925 = vpop.f32.mrb[0].mxu0
          %v2926 = vpop.f32.mrb[0].mxu0
          %v2927 = vadd.f32 %v2711, %v2926
          %v2928 = vpop.f32.mrb[0].mxu0
          %2929 = vmatprep.mubr.bf16.mxu0 %v2633
          %2930 = vmatmul.mubr.bf16.gmra.mrb[0].mxu0 %v2632
          %v2931 = vpop.f32.mrb[0].mxu0
          %v2932 = vadd.f32 %v2711, %v2931
          %v2933 = vpop.f32.mrb[0].mxu0
          %v2934 = vpop.f32.mrb[0].mxu0
          %v2935 = vadd.f32 %v2711, %v2934
          %v2936 = vpop.f32.mrb[0].mxu0
          %2937 = vmatprep.mubr.bf16.mxu0 %v2635
          %2938 = vmatmul.mubr.bf16.gmra.mrb[0].mxu0 %v2634
          %v2939 = vpop.f32.mrb[0].mxu0
          %v2940 = vadd.f32 %v2711, %v2939
          %v2941 = vpop.f32.mrb[0].mxu0
          %v2942 = vpop.f32.mrb[0].mxu0
          %v2943 = vadd.f32 %v2711, %v2942
          %v2944 = vpop.f32.mrb[0].mxu0
          %2945 = vmatprep.mubr.bf16.mxu0 %v2637
          %2946 = vmatmul.mubr.bf16.gmra.mrb[0].mxu0 %v2636
          %v2947 = vpop.f32.mrb[0].mxu0
          %v2948 = vadd.f32 %v2711, %v2947
          %v2949 = vpop.f32.mrb[0].mxu0
          %v2950 = vpop.f32.mrb[0].mxu0
          %v2951 = vadd.f32 %v2711, %v2950
          %v2952 = vpop.f32.mrb[0].mxu0
          %2953 = vmatprep.mubr.bf16.mxu0 %v2639
          %2954 = vmatmul.mubr.bf16.gmra.mrb[0].mxu0 %v2638
          %v2955 = vpop.f32.mrb[0].mxu0
          %v2956 = vadd.f32 %v2711, %v2955
          %v2957 = vpop.f32.mrb[0].mxu0
          %v2958 = vpop.f32.mrb[0].mxu0
          %v2959 = vadd.f32 %v2711, %v2958
          %v2960 = vpop.f32.mrb[0].mxu0
          %2961 = vmatprep.mubr.bf16.mxu0 %v2641
          %2962 = vmatmul.mubr.bf16.gmra.mrb[0].mxu0 %v2640
          %v2963 = vpop.f32.mrb[0].mxu0
          %v2964 = vadd.f32 %v2711, %v2963
          %v2965 = vpop.f32.mrb[0].mxu0
          %v2966 = vpop.f32.mrb[0].mxu0
          %v2967 = vadd.f32 %v2711, %v2966
          %v2968 = vpop.f32.mrb[0].mxu0
          %2969 = vmatprep.mubr.bf16.mxu0 %v2643
          %2970 = vmatmul.mubr.bf16.gmra.mrb[0].mxu0 %v2642
          %v2971 = vpop.f32.mrb[0].mxu0
          %v2972 = vadd.f32 %v2711, %v2971
          %v2973 = vpop.f32.mrb[0].mxu0
          %v2974 = vpop.f32.mrb[0].mxu0
          %v2975 = vadd.f32 %v2711, %v2974
          %v2976 = vpop.f32.mrb[0].mxu0
          %2977 = vmatprep.mubr.bf16.mxu0 %v2645
          %2978 = vmatmul.mubr.bf16.gmra.mrb[0].mxu0 %v2644
          %v2979 = vpop.f32.mrb[0].mxu0
          %v2980 = vadd.f32 %v2711, %v2979
          %v2981 = vpop.f32.mrb[0].mxu0
          %v2982 = vpop.f32.mrb[0].mxu0
          %v2983 = vadd.f32 %v2711, %v2982
          %v2984 = vpop.f32.mrb[0].mxu0
          %2985 = vmatprep.mubr.bf16.mxu0 %v2647
          %2986 = vmatmul.mubr.bf16.gmra.mrb[0].mxu0 %v2646
          %v2987 = vpop.f32.mrb[0].mxu0
          %v2988 = vadd.f32 %v2711, %v2987
          %v2989 = vpop.f32.mrb[0].mxu0
          %v2990 = vpop.f32.mrb[0].mxu0
          %v2991 = vadd.f32 %v2711, %v2990
          %v2992 = vpop.f32.mrb[0].mxu0
          %2993 = vmatprep.mubr.bf16.mxu0 %v2649
          %2994 = vmatmul.mubr.bf16.gmra.mrb[0].mxu0 %v2648
          %v2995 = vpop.f32.mrb[0].mxu0
          %v2996 = vadd.f32 %v2711, %v2995
          %v2997 = vpop.f32.mrb[0].mxu0
          %v2998 = vpop.f32.mrb[0].mxu0
          %v2999 = vadd.f32 %v2711, %v2998
          %v3000 = vpop.f32.mrb[0].mxu0
          %3001 = vmatprep.mubr.bf16.mxu0 %v2651
          %3002 = vmatmul.mubr.bf16.gmra.mrb[0].mxu0 %v2650
          %v3003 = vpop.f32.mrb[0].mxu0
          %v3004 = vadd.f32 %v2711, %v3003
          %v3005 = vpop.f32.mrb[0].mxu0
          %v3006 = vpop.f32.mrb[0].mxu0
          %v3007 = vadd.f32 %v2711, %v3006
          %v3008 = vpop.f32.mrb[0].mxu0
          %3009 = vmatprep.mubr.bf16.mxu0 %v2653
          %3010 = vmatmul.mubr.bf16.gmra.mrb[0].mxu0 %v2652
          %v3011 = vpop.f32.mrb[0].mxu0
          %v3012 = vadd.f32 %v2711, %v3011
          %v3013 = vpop.f32.mrb[0].mxu0
          %v3014 = vpop.f32.mrb[0].mxu0
          %v3015 = vadd.f32 %v2711, %v3014
          %v3016 = vpop.f32.mrb[0].mxu0
          %3017 = vmatprep.mubr.bf16.mxu0 %v2655
          %3018 = vmatmul.mubr.bf16.gmra.mrb[0].mxu0 %v2654
          %v3019 = vpop.f32.mrb[0].mxu0
          %v3020 = vadd.f32 %v2711, %v3019
          %v3021 = vpop.f32.mrb[0].mxu0
          %v3022 = vpop.f32.mrb[0].mxu0
          %v3023 = vadd.f32 %v2711, %v3022
          %v3024 = vpop.f32.mrb[0].mxu0
          %3025 = vmatprep.mubr.bf16.mxu0 %v2657
          %3026 = vmatmul.mubr.bf16.gmra.mrb[0].mxu0 %v2656
          %v3027 = vpop.f32.mrb[0].mxu0
          %v3028 = vadd.f32 %v2711, %v3027
          %v3029 = vpop.f32.mrb[0].mxu0
          %v3030 = vpop.f32.mrb[0].mxu0
          %v3031 = vadd.f32 %v2711, %v3030
          %v3032 = vpop.f32.mrb[0].mxu0
          %3033 = vmatprep.mubr.bf16.mxu0 %v2659
          %3034 = vmatmul.mubr.bf16.gmra.mrb[0].mxu0 %v2658
          %v3035 = vpop.f32.mrb[0].mxu0
          %v3036 = vadd.f32 %v2711, %v3035
          %v3037 = vpop.f32.mrb[0].mxu0
          %v3038 = vpop.f32.mrb[0].mxu0
          %v3039 = vadd.f32 %v2711, %v3038
          %v3040 = vpop.f32.mrb[0].mxu0
          %3041 = vmatprep.mubr.bf16.mxu0 %v2661
          %3042 = vmatmul.mubr.bf16.gmra.mrb[0].mxu0 %v2660
          %v3043 = vpop.f32.mrb[0].mxu0
          %v3044 = vadd.f32 %v2711, %v3043
          %v3045 = vpop.f32.mrb[0].mxu0
          %v3046 = vpop.f32.mrb[0].mxu0
          %v3047 = vadd.f32 %v2711, %v3046
          %v3048 = vpop.f32.mrb[0].mxu0
          %3049 = vmatprep.mubr.bf16.mxu0 %v2663
          %3050 = vmatmul.mubr.bf16.gmra.mrb[0].mxu0 %v2662
          %v3051 = vpop.f32.mrb[0].mxu0
          %v3052 = vadd.f32 %v2711, %v3051
          %v3053 = vpop.f32.mrb[0].mxu0
          %v3054 = vpop.f32.mrb[0].mxu0
          %v3055 = vadd.f32 %v2711, %v3054
          %v3056 = vpop.f32.mrb[0].mxu0
          %3057 = vmatprep.mubr.bf16.mxu0 %v2665
          %3058 = vmatmul.mubr.bf16.gmra.mrb[0].mxu0 %v2664
          %v3059 = vpop.f32.mrb[0].mxu0
          %v3060 = vadd.f32 %v2711, %v3059
          %v3061 = vpop.f32.mrb[0].mxu0
          %v3062 = vpop.f32.mrb[0].mxu0
          %v3063 = vadd.f32 %v2711, %v3062
          %v3064 = vpop.f32.mrb[0].mxu0
          %3065 = vmatprep.mubr.bf16.mxu0 %v2667
          %3066 = vmatmul.mubr.bf16.gmra.mrb[0].mxu0 %v2666
          %v3067 = vpop.f32.mrb[0].mxu0
          %v3068 = vadd.f32 %v2711, %v3067
          %v3069 = vpop.f32.mrb[0].mxu0
          %v3070 = vpop.f32.mrb[0].mxu0
          %v3071 = vadd.f32 %v2711, %v3070
          %v3072 = vpop.f32.mrb[0].mxu0
          %3073 = vmatprep.mubr.bf16.mxu0 %v2669
          %3074 = vmatmul.mubr.bf16.gmra.mrb[0].mxu0 %v2668
          %v3075 = vpop.f32.mrb[0].mxu0
          %v3076 = vadd.f32 %v2711, %v3075
          %v3077 = vpop.f32.mrb[0].mxu0
          %v3078 = vpop.f32.mrb[0].mxu0
          %v3079 = vadd.f32 %v2711, %v3078
          %v3080 = vpop.f32.mrb[0].mxu0
          %3081 = vmatprep.mubr.bf16.mxu0 %v2671
          %3082 = vmatmul.mubr.bf16.gmra.mrb[0].mxu0 %v2670
          %v3083 = vpop.f32.mrb[0].mxu0
          %v3084 = vadd.f32 %v2711, %v3083
          %v3085 = vpop.f32.mrb[0].mxu0
          %v3086 = vpop.f32.mrb[0].mxu0
          %v3087 = vadd.f32 %v2711, %v3086
          %v3088 = vpop.f32.mrb[0].mxu0
          %3089 = vmatprep.mubr.bf16.mxu0 %v2673
          %3090 = vmatmul.mubr.bf16.gmra.mrb[0].mxu0 %v2672
          %v3091 = vpop.f32.mrb[0].mxu0
          %v3092 = vadd.f32 %v2711, %v3091
          %v3093 = vpop.f32.mrb[0].mxu0
          %v3094 = vpop.f32.mrb[0].mxu0
          %v3095 = vadd.f32 %v2711, %v3094
          %v3096 = vpop.f32.mrb[0].mxu0
          %3097 = vdwg.mxu0
          %v3098 = vmax.f32 %v2844, 0.0
          %v3099 = vmax.f32 %v2847, 0.0
          %v3100 = vmax.f32 %v2852, 0.0
          %v3101 = vmax.f32 %v2855, 0.0
          %v3102 = vmax.f32 %v2860, 0.0
          %v3103 = vmax.f32 %v2863, 0.0
          %v3104 = vmax.f32 %v2868, 0.0
          %v3105 = vmax.f32 %v2871, 0.0
          %v3106 = vmax.f32 %v2876, 0.0
          %v3107 = vmax.f32 %v2879, 0.0
          %v3108 = vmax.f32 %v2884, 0.0
          %v3109 = vmax.f32 %v2887, 0.0
          %v3110 = vmax.f32 %v2892, 0.0
          %v3111 = vmax.f32 %v2895, 0.0
          %v3112 = vmax.f32 %v2900, 0.0
          %v3113 = vmax.f32 %v2903, 0.0
          %v3114 = vmax.f32 %v2908, 0.0
          %v3115 = vmax.f32 %v2911, 0.0
          %v3116 = vmax.f32 %v2916, 0.0
          %v3117 = vmax.f32 %v2919, 0.0
          %v3118 = vmax.f32 %v2924, 0.0
          %v3119 = vmax.f32 %v2927, 0.0
          %v3120 = vmax.f32 %v2932, 0.0
          %v3121 = vmax.f32 %v2935, 0.0
          %v3122 = vmax.f32 %v2940, 0.0
          %v3123 = vmax.f32 %v2943, 0.0
          %v3124 = vmax.f32 %v2948, 0.0
          %v3125 = vmax.f32 %v2951, 0.0
          %v3126 = vmax.f32 %v2956, 0.0
          %v3127 = vmax.f32 %v2959, 0.0
          %v3128 = vmax.f32 %v2964, 0.0
          %v3129 = vmax.f32 %v2967, 0.0
          %v3130 = vmax.f32 %v2972, 0.0
          %v3131 = vmax.f32 %v2975, 0.0
          %v3132 = vmax.f32 %v2980, 0.0
          %v3133 = vmax.f32 %v2983, 0.0
          %v3134 = vmax.f32 %v2988, 0.0
          %v3135 = vmax.f32 %v2991, 0.0
          %v3136 = vmax.f32 %v2996, 0.0
          %v3137 = vmax.f32 %v2999, 0.0
          %v3138 = vmax.f32 %v3004, 0.0
          %v3139 = vmax.f32 %v3007, 0.0
          %v3140 = vmax.f32 %v3012, 0.0
          %v3141 = vmax.f32 %v3015, 0.0
          %v3142 = vmax.f32 %v3020, 0.0
          %v3143 = vmax.f32 %v3023, 0.0
          %v3144 = vmax.f32 %v3028, 0.0
          %v3145 = vmax.f32 %v3031, 0.0
          %v3146 = vmax.f32 %v3036, 0.0
          %v3147 = vmax.f32 %v3039, 0.0
          %v3148 = vmax.f32 %v3044, 0.0
          %v3149 = vmax.f32 %v3047, 0.0
          %v3150 = vmax.f32 %v3052, 0.0
          %v3151 = vmax.f32 %v3055, 0.0
          %v3152 = vmax.f32 %v3060, 0.0
          %v3153 = vmax.f32 %v3063, 0.0
          %v3154 = vmax.f32 %v3068, 0.0
          %v3155 = vmax.f32 %v3071, 0.0
          %v3156 = vmax.f32 %v3076, 0.0
          %v3157 = vmax.f32 %v3079, 0.0
          %v3158 = vmax.f32 %v3084, 0.0
          %v3159 = vmax.f32 %v3087, 0.0
          %v3160 = vmax.f32 %v3092, 0.0
          %v3161 = vmax.f32 %v3095, 0.0
          %v3162 = vpack.c.bf16 %v3099, %v3098
          %v3163 = vpack.c.bf16 %v3101, %v3100
          %v3164 = vpack.c.bf16 %v3103, %v3102
          %v3165 = vpack.c.bf16 %v3105, %v3104
          %v3166 = vpack.c.bf16 %v3107, %v3106
          %v3167 = vpack.c.bf16 %v3109, %v3108
          %v3168 = vpack.c.bf16 %v3111, %v3110
          %v3169 = vpack.c.bf16 %v3113, %v3112
          %v3170 = vpack.c.bf16 %v3115, %v3114
          %v3171 = vpack.c.bf16 %v3117, %v3116
          %v3172 = vpack.c.bf16 %v3119, %v3118
          %v3173 = vpack.c.bf16 %v3121, %v3120
          %v3174 = vpack.c.bf16 %v3123, %v3122
          %v3175 = vpack.c.bf16 %v3125, %v3124
          %v3176 = vpack.c.bf16 %v3127, %v3126
          %v3177 = vpack.c.bf16 %v3129, %v3128
          %v3178 = vpack.c.bf16 %v3131, %v3130
          %v3179 = vpack.c.bf16 %v3133, %v3132
          %v3180 = vpack.c.bf16 %v3135, %v3134
          %v3181 = vpack.c.bf16 %v3137, %v3136
          %v3182 = vpack.c.bf16 %v3139, %v3138
          %v3183 = vpack.c.bf16 %v3141, %v3140
          %v3184 = vpack.c.bf16 %v3143, %v3142
          %v3185 = vpack.c.bf16 %v3145, %v3144
          %v3186 = vpack.c.bf16 %v3147, %v3146
          %v3187 = vpack.c.bf16 %v3149, %v3148
          %v3188 = vpack.c.bf16 %v3151, %v3150
          %v3189 = vpack.c.bf16 %v3153, %v3152
          %v3190 = vpack.c.bf16 %v3155, %v3154
          %v3191 = vpack.c.bf16 %v3157, %v3156
          %v3192 = vpack.c.bf16 %v3159, %v3158
          %v3193 = vpack.c.bf16 %v3161, %v3160
          %v3226 = vunpack.c.l.b16 %v3162
          %v3227 = vunpack.c.h.b16 %v3162
          %v3228 = vunpack.c.l.b16 %v3163
          %v3229 = vunpack.c.h.b16 %v3163
          %v3230 = vunpack.c.l.b16 %v3164
          %v3231 = vunpack.c.h.b16 %v3164
          %v3232 = vunpack.c.l.b16 %v3165
          %v3233 = vunpack.c.h.b16 %v3165
          %v3234 = vunpack.c.l.b16 %v3166
          %v3235 = vunpack.c.h.b16 %v3166
          %v3236 = vunpack.c.l.b16 %v3167
          %v3237 = vunpack.c.h.b16 %v3167
          %v3238 = vunpack.c.l.b16 %v3168
          %v3239 = vunpack.c.h.b16 %v3168
          %v3240 = vunpack.c.l.b16 %v3169
          %v3241 = vunpack.c.h.b16 %v3169
          %v3242 = vunpack.c.l.b16 %v3170
          %v3243 = vunpack.c.h.b16 %v3170
          %v3244 = vunpack.c.l.b16 %v3171
          %v3245 = vunpack.c.h.b16 %v3171
          %v3246 = vunpack.c.l.b16 %v3172
          %v3247 = vunpack.c.h.b16 %v3172
          %v3248 = vunpack.c.l.b16 %v3173
          %v3249 = vunpack.c.h.b16 %v3173
          %v3250 = vunpack.c.l.b16 %v3174
          %v3251 = vunpack.c.h.b16 %v3174
          %v3252 = vunpack.c.l.b16 %v3175
          %v3253 = vunpack.c.h.b16 %v3175
          %v3254 = vunpack.c.l.b16 %v3176
          %v3255 = vunpack.c.h.b16 %v3176
          %v3256 = vunpack.c.l.b16 %v3177
          %v3257 = vunpack.c.h.b16 %v3177
          %v3258 = vunpack.c.l.b16 %v3178
          %v3259 = vunpack.c.h.b16 %v3178
          %v3260 = vunpack.c.l.b16 %v3179
          %v3261 = vunpack.c.h.b16 %v3179
          %v3262 = vunpack.c.l.b16 %v3180
          %v3263 = vunpack.c.h.b16 %v3180
          %v3264 = vunpack.c.l.b16 %v3181
          %v3265 = vunpack.c.h.b16 %v3181
          %v3266 = vunpack.c.l.b16 %v3182
          %v3267 = vunpack.c.h.b16 %v3182
          %v3268 = vunpack.c.l.b16 %v3183
          %v3269 = vunpack.c.h.b16 %v3183
          %v3270 = vunpack.c.l.b16 %v3184
          %v3271 = vunpack.c.h.b16 %v3184
          %v3272 = vunpack.c.l.b16 %v3185
          %v3273 = vunpack.c.h.b16 %v3185
          %v3274 = vunpack.c.l.b16 %v3186
          %v3275 = vunpack.c.h.b16 %v3186
          %v3276 = vunpack.c.l.b16 %v3187
          %v3277 = vunpack.c.h.b16 %v3187
          %v3278 = vunpack.c.l.b16 %v3188
          %v3279 = vunpack.c.h.b16 %v3188
          %v3280 = vunpack.c.l.b16 %v3189
          %v3281 = vunpack.c.h.b16 %v3189
          %v3282 = vunpack.c.l.b16 %v3190
          %v3283 = vunpack.c.h.b16 %v3190
          %v3284 = vunpack.c.l.b16 %v3191
          %v3285 = vunpack.c.h.b16 %v3191
          %v3286 = vunpack.c.l.b16 %v3192
          %v3287 = vunpack.c.h.b16 %v3192
          %v3288 = vunpack.c.l.b16 %v3193
          %v3289 = vunpack.c.h.b16 %v3193
          %v3290 = vpack.c.b16 %v3226, %v3226
          %v3291 = vpack.c.b16 %v3227, %v3227
          %v3292 = vpack.c.b16 %v3228, %v3228
          %v3293 = vpack.c.b16 %v3229, %v3229
          %v3294 = vpack.c.b16 %v3230, %v3230
          %v3295 = vpack.c.b16 %v3231, %v3231
          %v3296 = vpack.c.b16 %v3232, %v3232
          %v3297 = vpack.c.b16 %v3233, %v3233
          %v3298 = vpack.c.b16 %v3234, %v3234
          %v3299 = vpack.c.b16 %v3235, %v3235
          %v3300 = vpack.c.b16 %v3236, %v3236
          %v3301 = vpack.c.b16 %v3237, %v3237
          %v3302 = vpack.c.b16 %v3238, %v3238
          %v3303 = vpack.c.b16 %v3239, %v3239
          %v3304 = vpack.c.b16 %v3240, %v3240
          %v3305 = vpack.c.b16 %v3241, %v3241
          %v3306 = vpack.c.b16 %v3242, %v3242
          %v3307 = vpack.c.b16 %v3243, %v3243
          %v3308 = vpack.c.b16 %v3244, %v3244
          %v3309 = vpack.c.b16 %v3245, %v3245
          %v3310 = vpack.c.b16 %v3246, %v3246
          %v3311 = vpack.c.b16 %v3247, %v3247
          %v3312 = vpack.c.b16 %v3248, %v3248
          %v3313 = vpack.c.b16 %v3249, %v3249
          %v3314 = vpack.c.b16 %v3250, %v3250
          %v3315 = vpack.c.b16 %v3251, %v3251
          %v3316 = vpack.c.b16 %v3252, %v3252
          %v3317 = vpack.c.b16 %v3253, %v3253
          %v3318 = vpack.c.b16 %v3254, %v3254
          %v3319 = vpack.c.b16 %v3255, %v3255
          %v3320 = vpack.c.b16 %v3256, %v3256
          %v3321 = vpack.c.b16 %v3257, %v3257
          %v3322 = vpack.c.b16 %v3258, %v3258
          %v3323 = vpack.c.b16 %v3259, %v3259
          %v3324 = vpack.c.b16 %v3260, %v3260
          %v3325 = vpack.c.b16 %v3261, %v3261
          %v3326 = vpack.c.b16 %v3262, %v3262
          %v3327 = vpack.c.b16 %v3263, %v3263
          %v3328 = vpack.c.b16 %v3264, %v3264
          %v3329 = vpack.c.b16 %v3265, %v3265
          %v3330 = vpack.c.b16 %v3266, %v3266
          %v3331 = vpack.c.b16 %v3267, %v3267
          %v3332 = vpack.c.b16 %v3268, %v3268
          %v3333 = vpack.c.b16 %v3269, %v3269
          %v3334 = vpack.c.b16 %v3270, %v3270
          %v3335 = vpack.c.b16 %v3271, %v3271
          %v3336 = vpack.c.b16 %v3272, %v3272
          %v3337 = vpack.c.b16 %v3273, %v3273
          %v3338 = vpack.c.b16 %v3274, %v3274
          %v3339 = vpack.c.b16 %v3275, %v3275
          %v3340 = vpack.c.b16 %v3276, %v3276
          %v3341 = vpack.c.b16 %v3277, %v3277
          %v3342 = vpack.c.b16 %v3278, %v3278
          %v3343 = vpack.c.b16 %v3279, %v3279
          %v3344 = vpack.c.b16 %v3280, %v3280
          %v3345 = vpack.c.b16 %v3281, %v3281
          %v3346 = vpack.c.b16 %v3282, %v3282
          %v3347 = vpack.c.b16 %v3283, %v3283
          %v3348 = vpack.c.b16 %v3284, %v3284
          %v3349 = vpack.c.b16 %v3285, %v3285
          %v3350 = vpack.c.b16 %v3286, %v3286
          %v3351 = vpack.c.b16 %v3287, %v3287
          %v3352 = vpack.c.b16 %v3288, %v3288
          %v3353 = vpack.c.b16 %v3289, %v3289
          %3418 = vst [vmem:[%s411] sm:$0xf] %v3290
          %3419 = vst [vmem:[%s411 + $0x4] sm:$0xf] %v3291
          %3420 = vst [vmem:[%s411 + $0x8] sm:$0xf] %v3292
          %3421 = vst [vmem:[%s411 + $0xc] sm:$0xf] %v3293
          %3422 = vst [vmem:[%s411 + $0x10] sm:$0xf] %v3294
          %3423 = vst [vmem:[%s411 + $0x14] sm:$0xf] %v3295
          %3424 = vst [vmem:[%s411 + $0x18] sm:$0xf] %v3296
          %3425 = vst [vmem:[%s411 + $0x1c] sm:$0xf] %v3297
          %3426 = vst [vmem:[%s411 + $0x20] sm:$0xf] %v3298
          %3427 = vst [vmem:[%s411 + $0x24] sm:$0xf] %v3299
          %3428 = vst [vmem:[%s411 + $0x28] sm:$0xf] %v3300
          %3429 = vst [vmem:[%s411 + $0x2c] sm:$0xf] %v3301
          %3430 = vst [vmem:[%s411 + $0x30] sm:$0xf] %v3302
          %3431 = vst [vmem:[%s411 + $0x34] sm:$0xf] %v3303
          %3432 = vst [vmem:[%s411 + $0x38] sm:$0xf] %v3304
          %3433 = vst [vmem:[%s411 + $0x3c] sm:$0xf] %v3305
          %3434 = vst [vmem:[%s411 + $0x40] sm:$0xf] %v3306
          %3435 = vst [vmem:[%s411 + $0x44] sm:$0xf] %v3307
          %3436 = vst [vmem:[%s411 + $0x48] sm:$0xf] %v3308
          %3437 = vst [vmem:[%s411 + $0x4c] sm:$0xf] %v3309
          %3438 = vst [vmem:[%s411 + $0x50] sm:$0xf] %v3310
          %3439 = vst [vmem:[%s411 + $0x54] sm:$0xf] %v3311
          %3440 = vst [vmem:[%s411 + $0x58] sm:$0xf] %v3312
          %3441 = vst [vmem:[%s411 + $0x5c] sm:$0xf] %v3313
          %3442 = vst [vmem:[%s411 + $0x60] sm:$0xf] %v3314
          %3443 = vst [vmem:[%s411 + $0x64] sm:$0xf] %v3315
          %3444 = vst [vmem:[%s411 + $0x68] sm:$0xf] %v3316
          %3445 = vst [vmem:[%s411 + $0x6c] sm:$0xf] %v3317
          %3446 = vst [vmem:[%s411 + $0x70] sm:$0xf] %v3318
          %3447 = vst [vmem:[%s411 + $0x74] sm:$0xf] %v3319
          %3448 = vst [vmem:[%s411 + $0x78] sm:$0xf] %v3320
          %3449 = vst [vmem:[%s411 + $0x7c] sm:$0xf] %v3321
          %3450 = vst [vmem:[%s411 + $0x80] sm:$0xf] %v3322
          %3451 = vst [vmem:[%s411 + $0x84] sm:$0xf] %v3323
          %3452 = vst [vmem:[%s411 + $0x88] sm:$0xf] %v3324
          %3453 = vst [vmem:[%s411 + $0x8c] sm:$0xf] %v3325
          %3454 = vst [vmem:[%s411 + $0x90] sm:$0xf] %v3326
          %3455 = vst [vmem:[%s411 + $0x94] sm:$0xf] %v3327
          %3456 = vst [vmem:[%s411 + $0x98] sm:$0xf] %v3328
          %3457 = vst [vmem:[%s411 + $0x9c] sm:$0xf] %v3329
          %3458 = vst [vmem:[%s411 + $0xa0] sm:$0xf] %v3330
          %3459 = vst [vmem:[%s411 + $0xa4] sm:$0xf] %v3331
          %3460 = vst [vmem:[%s411 + $0xa8] sm:$0xf] %v3332
          %3461 = vst [vmem:[%s411 + $0xac] sm:$0xf] %v3333
          %3462 = vst [vmem:[%s411 + $0xb0] sm:$0xf] %v3334
          %3463 = vst [vmem:[%s411 + $0xb4] sm:$0xf] %v3335
          %3464 = vst [vmem:[%s411 + $0xb8] sm:$0xf] %v3336
          %3465 = vst [vmem:[%s411 + $0xbc] sm:$0xf] %v3337
          %3466 = vst [vmem:[%s411 + $0xc0] sm:$0xf] %v3338
          %3467 = vst [vmem:[%s411 + $0xc4] sm:$0xf] %v3339
          %3468 = vst [vmem:[%s411 + $0xc8] sm:$0xf] %v3340
          %3469 = vst [vmem:[%s411 + $0xcc] sm:$0xf] %v3341
          %3470 = vst [vmem:[%s411 + $0xd0] sm:$0xf] %v3342
          %3471 = vst [vmem:[%s411 + $0xd4] sm:$0xf] %v3343
          %3472 = vst [vmem:[%s411 + $0xd8] sm:$0xf] %v3344
          %3473 = vst [vmem:[%s411 + $0xdc] sm:$0xf] %v3345
          %3474 = vst [vmem:[%s411 + $0xe0] sm:$0xf] %v3346
          %3475 = vst [vmem:[%s411 + $0xe4] sm:$0xf] %v3347
          %3476 = vst [vmem:[%s411 + $0xe8] sm:$0xf] %v3348
          %3477 = vst [vmem:[%s411 + $0xec] sm:$0xf] %v3349
          %3478 = vst [vmem:[%s411 + $0xf0] sm:$0xf] %v3350
          %3479 = vst [vmem:[%s411 + $0xf4] sm:$0xf] %v3351
          %3480 = vst [vmem:[%s411 + $0xf8] sm:$0xf] %v3352
          %3481 = vst [vmem:[%s411 + $0xfc] sm:$0xf] %v3353
        $region71: #{gnn_boundary_classifier_forward.2} parent=58 // pred_fallthru
          _
        %s3482 = smul.u32 64, %s20
        %p3483 = scmp.lt.s32.totalorder %s3482, 191
        %s3484 = scalar_select %p3483, %s3482, 191
        %s3485 = smul.addr %s3484, 4
        %s3486 = scalar_lea.vmem %s5, %s3485
        // Predicated region
        $region72: #{gnn_boundary_classifier_forward.2} parent=58 // pred_check
          %p3487 = pneg %p163
        $region73: #{gnn_boundary_classifier_forward.2} parent=58 // pred_check_branch
          %3489 = sbr.rel (%p3487) target = $region75
        $region74: #{gnn_boundary_classifier_forward.2} parent=58 // pred_region
          %s3490 = smul.u32 64, %s20
        $region75: #{gnn_boundary_classifier_forward.2} parent=58 // pred_fallthru
          _
      $region59: #{gnn_boundary_classifier_forward.2} parent=5 // pred_fallthru
        _
      %p3491 = scmp.le.s32.totalorder 2, %s11
      // Predicated region
      $region76: #{gnn_boundary_classifier_forward.2} parent=5 // pred_check
        %p3492 = pneg %p3491
      $region77: #{gnn_boundary_classifier_forward.2} parent=5 // pred_check_branch
        %3494 = sbr.rel (%p3492) target = $region79
      $region78: #{gnn_boundary_classifier_forward.2} parent=5 // pred_region
        %s3495 = ssub.s32 %s11, 2
        // Predicated region
        $region80: #{gnn_boundary_classifier_forward.2} parent=78 // pred_check
          %p3496 = pneg %p169
        $region81: #{gnn_boundary_classifier_forward.2} parent=78 // pred_check_branch
          %3498 = sbr.rel (%p3496) target = $region83
        $region82: #{gnn_boundary_classifier_forward.2} parent=78 // pred_region
          %s3499 = smul.u32 64, %s22
          %p3500 = scmp.lt.s32.totalorder %s3499, 191
          %s3501 = scalar_select %p3500, %s3499, 191
          %s3502 = smul.addr %s3501, 4
          %s3503 = scalar_lea.vmem %s5, %s3502
        $region83: #{gnn_boundary_classifier_forward.2} parent=78 // pred_fallthru
          _
      $region79: #{gnn_boundary_classifier_forward.2} parent=5 // pred_fallthru
        _
    $region6: #{gnn_boundary_classifier_forward.2} parent=1 // loop_footer
      %s15 = sadd.s32 1, %s11
    $region7: #{gnn_boundary_classifier_forward.2} parent=1 // loop_footer_branch
      %10 = sbr.rel target = $region3
    $region8: #{gnn_boundary_classifier_forward.2} parent=1 // loop_exit
      _

</llo_original>
